<compile_context>
chip_gen: v7x
topology: tpu7x:2x2x1
jax: 0.10.0
libtpu: 0.0.40
codegen_flags: <defaults>
</compile_context>

<pallas_src>
import functools
import math

import jax
import jax.numpy as jnp
from jax.experimental import pallas as pl
from jax.experimental.pallas import tpu as pltpu


def _round_up(x, m):
    return -(-x // m) * m


def _satnerf_kernel(*refs, beta_min, has_fine):
    """Accumulates per-ray color / log(beta) partials into the output buffers.

    Inputs (blocks): weights_c (T,S), beta_c (T,S), rgb_c (T,3), gt (T,3)
                     [+ weights_f (T,S), rgb_f (T,3)]
    Outputs (resident accumulators): color_c (T,1), logbeta_c (T,1)
                     [+ color_f (T,1), logbeta_f (T,1)]
    """
    if has_fine:
        (wc_ref, b_ref, rc_ref, gt_ref, wf_ref, rf_ref,
         cc_ref, lc_ref, cf_ref, lf_ref) = refs
    else:
        (wc_ref, b_ref, rc_ref, gt_ref, cc_ref, lc_ref) = refs

    i = pl.program_id(1)  # inner (reduction) axis

    @pl.when(i == 0)
    def _init():
        cc_ref[...] = jnp.zeros_like(cc_ref)
        lc_ref[...] = jnp.zeros_like(lc_ref)
        if has_fine:
            cf_ref[...] = jnp.zeros_like(cf_ref)
            lf_ref[...] = jnp.zeros_like(lf_ref)

    b = b_ref[...].astype(jnp.float32)       # (tile, S)
    gt = gt_ref[...].astype(jnp.float32)     # (tile, 3)

    def accum(w_ref, rgb_ref, color_ref, logbeta_ref):
        w = w_ref[...].astype(jnp.float32)                          # (tile, S)
        beta = jnp.sum(w * b, axis=-1, keepdims=True) + beta_min    # (tile, 1)
        diff = rgb_ref[...].astype(jnp.float32) - gt                # (tile, 3)
        sq = jnp.sum(diff * diff, axis=-1, keepdims=True)           # (tile, 1) XLU
        inv_2b2 = 0.5 / (beta * beta)                               # (tile, 1)
        color_ref[...] += sq * inv_2b2                              # VPU accumulate
        logbeta_ref[...] += jnp.log(beta)                           # EUP log, VPU add

    accum(wc_ref, rc_ref, cc_ref, lc_ref)
    if has_fine:
        accum(wf_ref, rf_ref, cf_ref, lf_ref)


def _choose_tile(n_rays, n_samples, n_sample_arrays, tile_rays):
    """Biggest ray tile that keeps the double-buffered sample arrays <= ~16 MiB."""
    vmem_budget = 16 * 1024 * 1024
    cap = vmem_budget // max(1, 2 * n_sample_arrays * n_samples * 4)
    cap = max(8, (cap // 8) * 8)
    tile = min(tile_rays, cap, _round_up(n_rays, 8))
    return max(8, _round_up(tile, 8))


@functools.partial(jax.jit, static_argnames=("beta_min", "has_fine", "tile_rays"))
def _satnerf_terms_pallas(weights_c, beta_c, rgb_c, gt, weights_f, rgb_f,
                          *, beta_min, has_fine, tile_rays):
    """Returns (coarse_color, coarse_logbeta[, fine_color, fine_logbeta])."""
    n_rays, n_samples = weights_c.shape
    n_typ = 2 if has_fine else 1

    # --- tiling: big ray tiles, up to 2-way TensorCore-parallel split -------
    tile = _choose_tile(n_rays, n_samples, n_typ + 1, tile_rays)
    n_tiles = -(-n_rays // tile)
    n_par = 2 if n_tiles >= 2 else 1          # leading "parallel" axis (v7x 2 TCs)
    n_inner = -(-n_tiles // n_par)            # sequential reduction steps per chunk
    padded = n_par * n_inner * tile
    n_pad = padded - n_rays

    def pad_rows(x):
        if n_pad == 0:
            return x
        return jnp.pad(x, ((0, n_pad),) + ((0, 0),) * (x.ndim - 1))

    weights_c = pad_rows(weights_c)
    beta_c = pad_rows(beta_c)
    rgb_c = pad_rows(rgb_c)
    gt = pad_rows(gt)
    operands = [weights_c, beta_c, rgb_c, gt]
    if has_fine:
        operands += [pad_rows(weights_f), pad_rows(rgb_f)]

    samp_spec = pl.BlockSpec((tile, n_samples), lambda c, i: (c * n_inner + i, 0))
    rgb_spec = pl.BlockSpec((tile, 3), lambda c, i: (c * n_inner + i, 0))
    acc_out_spec = pl.BlockSpec((tile, 1), lambda c, i: (c, 0))

    in_specs = [samp_spec, samp_spec, rgb_spec, rgb_spec]
    if has_fine:
        in_specs += [samp_spec, rgb_spec]

    out_shape = (jax.ShapeDtypeStruct((n_par * tile, 1), jnp.float32),) * (2 * n_typ)
    out_specs = [acc_out_spec] * (2 * n_typ)

    bytes_accessed = (sum(int(x.size) * x.dtype.itemsize for x in operands)
                      + 2 * n_typ * (n_par * tile) * 4)
    cost = pl.CostEstimate(
        flops=int(n_typ * padded * (2 * n_samples + 14)),
        transcendentals=int(n_typ * padded * 2),   # log + divide per ray
        bytes_accessed=int(bytes_accessed))

    outs = pl.pallas_call(
        functools.partial(_satnerf_kernel, beta_min=beta_min, has_fine=has_fine),
        out_shape=out_shape,
        grid_spec=pltpu.PrefetchScalarGridSpec(
            num_scalar_prefetch=0,
            grid=(n_par, n_inner),
            in_specs=in_specs,
            out_specs=out_specs,
        ),
        compiler_params=pltpu.CompilerParams(
            dimension_semantics=("parallel", "arbitrary")),
        cost_estimate=cost,
    )(*operands)

    # Padded rows contribute exactly 0 to color (rgb and gt padded with zeros)
    # and exactly log(beta_min) to logbeta (weights/beta padded with zeros)
    # -> correct with the unpadded N.
    pad_log_corr = float(n_pad) * math.log(beta_min)

    def finish(color_acc, logbeta_acc):
        color = jnp.sum(color_acc) / jnp.float32(n_rays * 3)
        logbeta = (3.0 + (jnp.sum(logbeta_acc) - pad_log_corr)
                   / jnp.float32(n_rays)) / 2.0
        return color, logbeta

    results = finish(outs[0], outs[1])
    if has_fine:
        results = results + finish(outs[2], outs[3])
    return results


class SatNerfLossPallas:
    """JAX/Pallas port of SatNerfLoss (beta_min=0.05, default lambda_sc=0.0)."""

    def __init__(self, lambda_sc=0.0, beta_min=0.05, tile_rays=1024):
        self.lambda_sc = lambda_sc
        self.beta_min = beta_min
        self.tile_rays = tile_rays

    @staticmethod
    def _solar_correction(loss_dict, inputs, typ, lambda_sc):
        # TODO(synk): solar_correction (only active when lambda_sc > 0) runs in
        # plain JAX and is not fused into the Pallas kernel (off by default).
        sun_sc = jnp.squeeze(inputs[f'sun_sc_{typ}'])
        term2 = jnp.sum(
            jnp.square(jax.lax.stop_gradient(inputs[f'transparency_sc_{typ}']) - sun_sc), -1)
        term3 = 1 - jnp.sum(
            jax.lax.stop_gradient(inputs[f'weights_sc_{typ}']) * sun_sc, -1)
        loss_dict[f'{typ}_sc_term2'] = lambda_sc / 3.0 * jnp.mean(term2)
        loss_dict[f'{typ}_sc_term3'] = lambda_sc / 3.0 * jnp.mean(term3)
        return loss_dict

    def __call__(self, inputs, targets):
        gt = jnp.asarray(targets)
        n_rays = gt.shape[0]
        has_fine = 'rgb_fine' in inputs

        weights_c = jnp.asarray(inputs['weights_coarse'])
        beta_c = jnp.asarray(inputs['beta_coarse']).reshape(n_rays, -1)
        rgb_c = jnp.asarray(inputs['rgb_coarse'])
        weights_f = jnp.asarray(inputs['weights_fine']) if has_fine else None
        rgb_f = jnp.asarray(inputs['rgb_fine']) if has_fine else None

        terms = _satnerf_terms_pallas(
            weights_c, beta_c, rgb_c, gt, weights_f, rgb_f,
            beta_min=self.beta_min, has_fine=has_fine, tile_rays=self.tile_rays)

        loss_dict = {'coarse_color': terms[0], 'coarse_logbeta': terms[1]}
        if self.lambda_sc > 0:
            loss_dict = self._solar_correction(loss_dict, inputs, 'coarse', self.lambda_sc)
        if has_fine:
            loss_dict['fine_color'] = terms[2]
            loss_dict['fine_logbeta'] = terms[3]
            if self.lambda_sc > 0:
                loss_dict = self._solar_correction(loss_dict, inputs, 'fine', self.lambda_sc)

        loss = sum(loss_dict.values())
        return loss, loss_dict


if __name__ == "__main__":
    key = jax.random.PRNGKey(0)
    ks = jax.random.split(key, 6)

    n_rays, n_samples = 2000, 64   # exercises padding (-> 2048), grid (2, 1)

    def make_weights(k):
        w = jax.random.uniform(k, (n_rays, n_samples), jnp.float32)
        return w / jnp.sum(w, axis=-1, keepdims=True)

    inputs = {
        'weights_coarse': make_weights(ks[0]),
        'weights_fine': make_weights(ks[1]),
        'beta_coarse': jax.random.uniform(ks[2], (n_rays, n_samples, 1),
                                          jnp.float32, 0.0, 0.5),
        'rgb_coarse': jax.random.uniform(ks[3], (n_rays, 3), jnp.float32),
        'rgb_fine': jax.random.uniform(ks[4], (n_rays, 3), jnp.float32),
    }
    targets = jax.random.uniform(ks[5], (n_rays, 3), jnp.float32)

    loss_fn = SatNerfLossPallas(lambda_sc=0.0)
    loss, loss_dict = loss_fn(inputs, targets)
    loss = jax.block_until_ready(loss)

    # pure-JAX reference (same math as the PyTorch module)
    def ref_ual(d, typ, beta_min=0.05):
        beta = jnp.sum(inputs[f'weights_{typ}'][..., None] * inputs['beta_coarse'],
                       -2) + beta_min
        d[f'{typ}_color'] = jnp.mean((inputs[f'rgb_{typ}'] - targets) ** 2
                                     / (2 * beta ** 2))
        d[f'{typ}_logbeta'] = (3 + jnp.mean(jnp.log(beta))) / 2
        return d

    ref_dict = ref_ual({}, 'coarse')
    ref_dict = ref_ual(ref_dict, 'fine')
    ref_loss = sum(ref_dict.values())

    for name, ref_val in ref_dict.items():
        assert jnp.allclose(loss_dict[name], ref_val, rtol=1e-4, atol=1e-5), (
            name, loss_dict[name], ref_val)
    assert jnp.allclose(loss, ref_loss, rtol=1e-4, atol=1e-5), (loss, ref_loss)

    print("KERNEL_OK")
</pallas_src>

<mosaic_0001>
module attributes {stable_mosaic.version = 11 : i64} {
  func.func @_satnerf_kernel(%arg0: i32, %arg1: i32, %arg2: memref<1024x64xf32, #tpu.memory_space<vmem>>, %arg3: memref<1024x64xf32, #tpu.memory_space<vmem>>, %arg4: memref<1024x3xf32, #tpu.memory_space<vmem>>, %arg5: memref<1024x3xf32, #tpu.memory_space<vmem>>, %arg6: memref<1024x64xf32, #tpu.memory_space<vmem>>, %arg7: memref<1024x3xf32, #tpu.memory_space<vmem>>, %arg8: memref<1024x1xf32, #tpu.memory_space<vmem>>, %arg9: memref<1024x1xf32, #tpu.memory_space<vmem>>, %arg10: memref<1024x1xf32, #tpu.memory_space<vmem>>, %arg11: memref<1024x1xf32, #tpu.memory_space<vmem>>) attributes {dimension_semantics = [#tpu.dimension_semantics<parallel>, #tpu.dimension_semantics<arbitrary>], iteration_bounds = array<i64: 2, 1>, scalar_prefetch = 0 : i64, scratch_operands = 0 : i64, tpu.core_type = #tpu.core_type<tc>, window_params = [{transform_indices = @transform_0, window_bounds = array<i64: 1024, 64>}, {transform_indices = @transform_1, window_bounds = array<i64: 1024, 64>}, {transform_indices = @transform_2, window_bounds = array<i64: 1024, 3>}, {transform_indices = @transform_3, window_bounds = array<i64: 1024, 3>}, {transform_indices = @transform_4, window_bounds = array<i64: 1024, 64>}, {transform_indices = @transform_5, window_bounds = array<i64: 1024, 3>}, {transform_indices = @transform_6, window_bounds = array<i64: 1024, 1>}, {transform_indices = @transform_7, window_bounds = array<i64: 1024, 1>}, {transform_indices = @transform_8, window_bounds = array<i64: 1024, 1>}, {transform_indices = @transform_9, window_bounds = array<i64: 1024, 1>}]} {
    %c0_i32 = arith.constant 0 : i32
    %0 = arith.cmpi eq, %arg1, %c0_i32 : i32
    %1 = arith.extui %0 : i1 to i32
    %c0_i32_0 = arith.constant 0 : i32
    %2 = arith.cmpi ne, %1, %c0_i32_0 : i32
    scf.if %2 {
      %cst_35 = arith.constant 0.000000e+00 : f32
      %49 = vector.broadcast %cst_35 : f32 to vector<1024x1xf32>
      %c0_36 = arith.constant 0 : index
      %c0_37 = arith.constant 0 : index
      %50 = vector.load %arg8[%c0_36, %c0_37] : memref<1024x1xf32, #tpu.memory_space<vmem>>, vector<1024x1xf32>
      tpu.vector_store %arg8[%c0_36, %c0_37], %49 {strides = array<i32>} : memref<1024x1xf32, #tpu.memory_space<vmem>>, vector<1024x1xf32>,
      %cst_38 = arith.constant 0.000000e+00 : f32
      %51 = vector.broadcast %cst_38 : f32 to vector<1024x1xf32>
      %c0_39 = arith.constant 0 : index
      %c0_40 = arith.constant 0 : index
      %52 = vector.load %arg9[%c0_39, %c0_40] : memref<1024x1xf32, #tpu.memory_space<vmem>>, vector<1024x1xf32>
      tpu.vector_store %arg9[%c0_39, %c0_40], %51 {strides = array<i32>} : memref<1024x1xf32, #tpu.memory_space<vmem>>, vector<1024x1xf32>,
      %cst_41 = arith.constant 0.000000e+00 : f32
      %53 = vector.broadcast %cst_41 : f32 to vector<1024x1xf32>
      %c0_42 = arith.constant 0 : index
      %c0_43 = arith.constant 0 : index
      %54 = vector.load %arg10[%c0_42, %c0_43] : memref<1024x1xf32, #tpu.memory_space<vmem>>, vector<1024x1xf32>
      tpu.vector_store %arg10[%c0_42, %c0_43], %53 {strides = array<i32>} : memref<1024x1xf32, #tpu.memory_space<vmem>>, vector<1024x1xf32>,
      %cst_44 = arith.constant 0.000000e+00 : f32
      %55 = vector.broadcast %cst_44 : f32 to vector<1024x1xf32>
      %c0_45 = arith.constant 0 : index
      %c0_46 = arith.constant 0 : index
      %56 = vector.load %arg11[%c0_45, %c0_46] : memref<1024x1xf32, #tpu.memory_space<vmem>>, vector<1024x1xf32>
      tpu.vector_store %arg11[%c0_45, %c0_46], %55 {strides = array<i32>} : memref<1024x1xf32, #tpu.memory_space<vmem>>, vector<1024x1xf32>,
    } else {
    }
    %c0 = arith.constant 0 : index
    %c0_1 = arith.constant 0 : index
    %3 = vector.load %arg3[%c0, %c0_1] : memref<1024x64xf32, #tpu.memory_space<vmem>>, vector<1024x64xf32>
    %c0_2 = arith.constant 0 : index
    %c0_3 = arith.constant 0 : index
    %4 = vector.load %arg5[%c0_2, %c0_3] : memref<1024x3xf32, #tpu.memory_space<vmem>>, vector<1024x3xf32>
    %c0_4 = arith.constant 0 : index
    %c0_5 = arith.constant 0 : index
    %5 = vector.load %arg2[%c0_4, %c0_5] : memref<1024x64xf32, #tpu.memory_space<vmem>>, vector<1024x64xf32>
    %6 = arith.mulf %5, %3 : vector<1024x64xf32>
    %cst = arith.constant dense<0.000000e+00> : vector<1024xf32>
    %7 = vector.multi_reduction <add>, %6, %cst [1] : vector<1024x64xf32> to vector<1024xf32>
    %8 = vector.shape_cast %7 : vector<1024xf32> to vector<1024x1xf32>
    %cst_6 = arith.constant 5.000000e-02 : f32
    %9 = vector.broadcast %cst_6 : f32 to vector<1024x1xf32>
    %10 = arith.addf %8, %9 : vector<1024x1xf32>
    %c0_7 = arith.constant 0 : index
    %c0_8 = arith.constant 0 : index
    %11 = vector.load %arg4[%c0_7, %c0_8] : memref<1024x3xf32, #tpu.memory_space<vmem>>, vector<1024x3xf32>
    %12 = arith.subf %11, %4 : vector<1024x3xf32>
    %13 = arith.mulf %12, %12 : vector<1024x3xf32>
    %cst_9 = arith.constant dense<0.000000e+00> : vector<1024xf32>
    %14 = vector.multi_reduction <add>, %13, %cst_9 [1] : vector<1024x3xf32> to vector<1024xf32>
    %15 = vector.shape_cast %14 : vector<1024xf32> to vector<1024x1xf32>
    %16 = arith.mulf %10, %10 : vector<1024x1xf32>
    %cst_10 = arith.constant 5.000000e-01 : f32
    %17 = vector.broadcast %cst_10 : f32 to vector<1024x1xf32>
    %18 = arith.divf %17, %16 : vector<1024x1xf32>
    %c0_11 = arith.constant 0 : index
    %c0_12 = arith.constant 0 : index
    %19 = vector.load %arg8[%c0_11, %c0_12] : memref<1024x1xf32, #tpu.memory_space<vmem>>, vector<1024x1xf32>
    %20 = arith.mulf %15, %18 : vector<1024x1xf32>
    %21 = arith.addf %19, %20 : vector<1024x1xf32>
    %c0_13 = arith.constant 0 : index
    %c0_14 = arith.constant 0 : index
    %22 = vector.load %arg8[%c0_13, %c0_14] : memref<1024x1xf32, #tpu.memory_space<vmem>>, vector<1024x1xf32>
    tpu.vector_store %arg8[%c0_13, %c0_14], %21 {strides = array<i32>} : memref<1024x1xf32, #tpu.memory_space<vmem>>, vector<1024x1xf32>,
    %c0_15 = arith.constant 0 : index
    %c0_16 = arith.constant 0 : index
    %23 = vector.load %arg9[%c0_15, %c0_16] : memref<1024x1xf32, #tpu.memory_space<vmem>>, vector<1024x1xf32>
    %24 = math.log %10 : vector<1024x1xf32>
    %25 = arith.addf %23, %24 : vector<1024x1xf32>
    %c0_17 = arith.constant 0 : index
    %c0_18 = arith.constant 0 : index
    %26 = vector.load %arg9[%c0_17, %c0_18] : memref<1024x1xf32, #tpu.memory_space<vmem>>, vector<1024x1xf32>
    tpu.vector_store %arg9[%c0_17, %c0_18], %25 {strides = array<i32>} : memref<1024x1xf32, #tpu.memory_space<vmem>>, vector<1024x1xf32>,
    %c0_19 = arith.constant 0 : index
    %c0_20 = arith.constant 0 : index
    %27 = vector.load %arg6[%c0_19, %c0_20] : memref<1024x64xf32, #tpu.memory_space<vmem>>, vector<1024x64xf32>
    %28 = arith.mulf %27, %3 : vector<1024x64xf32>
    %cst_21 = arith.constant dense<0.000000e+00> : vector<1024xf32>
    %29 = vector.multi_reduction <add>, %28, %cst_21 [1] : vector<1024x64xf32> to vector<1024xf32>
    %30 = vector.shape_cast %29 : vector<1024xf32> to vector<1024x1xf32>
    %cst_22 = arith.constant 5.000000e-02 : f32
    %31 = vector.broadcast %cst_22 : f32 to vector<1024x1xf32>
    %32 = arith.addf %30, %31 : vector<1024x1xf32>
    %c0_23 = arith.constant 0 : index
    %c0_24 = arith.constant 0 : index
    %33 = vector.load %arg7[%c0_23, %c0_24] : memref<1024x3xf32, #tpu.memory_space<vmem>>, vector<1024x3xf32>
    %34 = arith.subf %33, %4 : vector<1024x3xf32>
    %35 = arith.mulf %34, %34 : vector<1024x3xf32>
    %cst_25 = arith.constant dense<0.000000e+00> : vector<1024xf32>
    %36 = vector.multi_reduction <add>, %35, %cst_25 [1] : vector<1024x3xf32> to vector<1024xf32>
    %37 = vector.shape_cast %36 : vector<1024xf32> to vector<1024x1xf32>
    %38 = arith.mulf %32, %32 : vector<1024x1xf32>
    %cst_26 = arith.constant 5.000000e-01 : f32
    %39 = vector.broadcast %cst_26 : f32 to vector<1024x1xf32>
    %40 = arith.divf %39, %38 : vector<1024x1xf32>
    %c0_27 = arith.constant 0 : index
    %c0_28 = arith.constant 0 : index
    %41 = vector.load %arg10[%c0_27, %c0_28] : memref<1024x1xf32, #tpu.memory_space<vmem>>, vector<1024x1xf32>
    %42 = arith.mulf %37, %40 : vector<1024x1xf32>
    %43 = arith.addf %41, %42 : vector<1024x1xf32>
    %c0_29 = arith.constant 0 : index
    %c0_30 = arith.constant 0 : index
    %44 = vector.load %arg10[%c0_29, %c0_30] : memref<1024x1xf32, #tpu.memory_space<vmem>>, vector<1024x1xf32>
    tpu.vector_store %arg10[%c0_29, %c0_30], %43 {strides = array<i32>} : memref<1024x1xf32, #tpu.memory_space<vmem>>, vector<1024x1xf32>,
    %c0_31 = arith.constant 0 : index
    %c0_32 = arith.constant 0 : index
    %45 = vector.load %arg11[%c0_31, %c0_32] : memref<1024x1xf32, #tpu.memory_space<vmem>>, vector<1024x1xf32>
    %46 = math.log %32 : vector<1024x1xf32>
    %47 = arith.addf %45, %46 : vector<1024x1xf32>
    %c0_33 = arith.constant 0 : index
    %c0_34 = arith.constant 0 : index
    %48 = vector.load %arg11[%c0_33, %c0_34] : memref<1024x1xf32, #tpu.memory_space<vmem>>, vector<1024x1xf32>
    tpu.vector_store %arg11[%c0_33, %c0_34], %47 {strides = array<i32>} : memref<1024x1xf32, #tpu.memory_space<vmem>>, vector<1024x1xf32>,
    return
  }
  func.func @transform_0(%arg0: i32, %arg1: i32) -> (i32, i32) {
    %c1_i32 = arith.constant 1 : i32
    %0 = arith.muli %arg0, %c1_i32 : i32
    %1 = arith.addi %0, %arg1 : i32
    %c0_i32 = arith.constant 0 : i32
    %c0_i32_0 = arith.constant 0 : i32
    return %1, %c0_i32 : i32, i32
  }
  func.func @transform_1(%arg0: i32, %arg1: i32) -> (i32, i32) {
    %c1_i32 = arith.constant 1 : i32
    %0 = arith.muli %arg0, %c1_i32 : i32
    %1 = arith.addi %0, %arg1 : i32
    %c0_i32 = arith.constant 0 : i32
    %c0_i32_0 = arith.constant 0 : i32
    return %1, %c0_i32 : i32, i32
  }
  func.func @transform_2(%arg0: i32, %arg1: i32) -> (i32, i32) {
    %c1_i32 = arith.constant 1 : i32
    %0 = arith.muli %arg0, %c1_i32 : i32
    %1 = arith.addi %0, %arg1 : i32
    %c0_i32 = arith.constant 0 : i32
    %c0_i32_0 = arith.constant 0 : i32
    return %1, %c0_i32 : i32, i32
  }
  func.func @transform_3(%arg0: i32, %arg1: i32) -> (i32, i32) {
    %c1_i32 = arith.constant 1 : i32
    %0 = arith.muli %arg0, %c1_i32 : i32
    %1 = arith.addi %0, %arg1 : i32
    %c0_i32 = arith.constant 0 : i32
    %c0_i32_0 = arith.constant 0 : i32
    return %1, %c0_i32 : i32, i32
  }
  func.func @transform_4(%arg0: i32, %arg1: i32) -> (i32, i32) {
    %c1_i32 = arith.constant 1 : i32
    %0 = arith.muli %arg0, %c1_i32 : i32
    %1 = arith.addi %0, %arg1 : i32
    %c0_i32 = arith.constant 0 : i32
    %c0_i32_0 = arith.constant 0 : i32
    return %1, %c0_i32 : i32, i32
  }
  func.func @transform_5(%arg0: i32, %arg1: i32) -> (i32, i32) {
    %c1_i32 = arith.constant 1 : i32
    %0 = arith.muli %arg0, %c1_i32 : i32
    %1 = arith.addi %0, %arg1 : i32
    %c0_i32 = arith.constant 0 : i32
    %c0_i32_0 = arith.constant 0 : i32
    return %1, %c0_i32 : i32, i32
  }
  func.func @transform_6(%arg0: i32, %arg1: i32) -> (i32, i32) {
    %c0_i32 = arith.constant 0 : i32
    %c0_i32_0 = arith.constant 0 : i32
    return %arg0, %c0_i32 : i32, i32
  }
  func.func @transform_7(%arg0: i32, %arg1: i32) -> (i32, i32) {
    %c0_i32 = arith.constant 0 : i32
    %c0_i32_0 = arith.constant 0 : i32
    return %arg0, %c0_i32 : i32, i32
  }
  func.func @transform_8(%arg0: i32, %arg1: i32) -> (i32, i32) {
    %c0_i32 = arith.constant 0 : i32
    %c0_i32_0 = arith.constant 0 : i32
    return %arg0, %c0_i32 : i32, i32
  }
  func.func @transform_9(%arg0: i32, %arg1: i32) -> (i32, i32) {
    %c0_i32 = arith.constant 0 : i32
    %c0_i32_0 = arith.constant 0 : i32
    return %arg0, %c0_i32 : i32, i32
  }
}

</mosaic_0001>

<llo_original>
// kernel: _satnerf_terms_pallas.1
$region0: #{_satnerf_terms_pallas.1}
  #allocation0 [shape = 'u32[]', space=smem, size = 0x4, offset = 0x4, fixed_abs, tag = 'smem constant byte address 0x4 - core index']
  #allocation1 [shape = 'u32[144,128]{1,0:T(1,128)}', space=vmem, size = 0x12000, scoped, tag = 'internal scratch']
  %s0 = inlined_call_operand.vmem [shape: f32[2048,64], index: 0, kind: input, shape index: {}]
  %s1 = inlined_call_operand.vmem [shape: f32[2048,64], index: 1, kind: input, shape index: {}]
  %s2 = inlined_call_operand.vmem [shape: f32[2048,3], index: 2, kind: input, shape index: {}]
  %s3 = inlined_call_operand.vmem [shape: f32[2048,3], index: 3, kind: input, shape index: {}]
  %s4 = inlined_call_operand.vmem [shape: f32[2048,64], index: 4, kind: input, shape index: {}]
  %s5 = inlined_call_operand.vmem [shape: f32[2048,3], index: 5, kind: input, shape index: {}]
  %s6 = inlined_call_operand.vmem [shape: f32[2048,1], index: 6, kind: output, shape index: {0}]
  %s7 = inlined_call_operand.vmem [shape: f32[2048,1], index: 7, kind: output, shape index: {1}]
  %s8 = inlined_call_operand.vmem [shape: f32[2048,1], index: 8, kind: output, shape index: {2}]
  %s9 = inlined_call_operand.vmem [shape: f32[2048,1], index: 9, kind: output, shape index: {3}]
  %10 = xla_tuple %s6, %s7, %s8, %s9
  %s11 = sld [smem:[#allocation0]]
  $region85: #{_satnerf_terms_pallas.1} parent=0
    _
  %s13 = ssub.s32 1, %s11
  %s14 = scalar_select 0, %s13, %s11
  loop: start=0, step=1, limit=4
  $region2: #{_satnerf_terms_pallas.1} parent=0 // loop_pre_header
    _
  $region3: #{_satnerf_terms_pallas.1} parent=0 // loop_header
    %s16 = sphi 0, %s20
    %p17 = scmp.ge.s32.totalorder %s16, 4
    %s23 = sphi 0, %s35
    %s24 = sphi 0, %s31
    %s25 = sphi 0, %s23
    %s26 = sphi 0, %s24
    %s27 = sphi 0, %s25
    %s28 = sphi 0, %s26
    %s40 = sphi 0, %s42
    %s43 = sphi 0, %s40
    %s44 = sphi 0, %s43
    %s60 = sphi 0, %s44
    %s68 = sphi 0, %s70
    %s71 = sphi 0, %s68
    %s72 = sphi 0, %s71
    %s88 = sphi 0, %s72
    %s96 = sphi 0, %s98
    %s99 = sphi 0, %s96
    %s100 = sphi 0, %s99
    %s116 = sphi 0, %s100
    %s124 = sphi 0, %s126
    %s127 = sphi 0, %s124
    %s128 = sphi 0, %s127
    %s144 = sphi 0, %s128
    %s152 = sphi 0, %s154
    %s155 = sphi 0, %s152
    %s156 = sphi 0, %s155
    %s172 = sphi 0, %s156
    %s180 = sphi 0, %s182
    %s183 = sphi 0, %s180
    %s184 = sphi 0, %s183
    %s200 = sphi 0, %s184
    %s206 = sphi 0, %s208
    %s209 = sphi 0, %s206
    %s210 = sphi 0, %s209
    %s226 = sphi 0, %s210
    %s232 = sphi 0, %s234
    %s235 = sphi 0, %s232
    %s236 = sphi 0, %s235
    %s252 = sphi 0, %s236
    %s258 = sphi 0, %s260
    %s261 = sphi 0, %s258
    %s262 = sphi 0, %s261
    %s278 = sphi 0, %s262
    %s284 = sphi 0, %s286
    %s287 = sphi 0, %s284
    %s288 = sphi 0, %s287
    %s304 = sphi 0, %s288
  $region4: #{_satnerf_terms_pallas.1} parent=0 // loop_header_branch
    %19 = sbr.rel (%p17) target = $region8
  $region5: #{_satnerf_terms_pallas.1} parent=0 // loop_body
    %s21 = ssub.s32 %s16, 1
    %s22 = ssub.s32 %s16, 2
    %s29 = sadd.s32 1, %s24
    %p30 = scmp.ge.s32.totalorder %s29, 1
    %s31 = scalar_select %p30, 0, %s29
    %s32 = sadd.s32 1, %s23
    %s33 = scalar_select %p30, %s32, %s23
    %p34 = scmp.ge.s32.totalorder %s33, 2
    %s35 = scalar_select %p34, 0, %s33
    %s36 = sadd.s32 %s23, %s24
    %s37 = sadd.s32 %s35, %s31
    %s38 = ssub.s32 %s36, %s37
    %p39 = scmp.eq.s32.totalorder %s38, 0
    %s41 = sadd.s32 %s40, 1
    %s42 = scalar_select %p39, %s40, %s41
    %p45 = pneg %p39
    %p46 = scmp.eq.s32.totalorder %s16, 1
    %p47 = por %p45, %p46
    %p48 = scmp.ne.s32.totalorder %s40, %s43
    %p49 = scmp.eq.s32.totalorder %s16, 0
    %p50 = por %p48, %p49
    %p51 = scmp.ne.s32.totalorder %s40, %s43
    %p52 = scmp.eq.s32.totalorder %s21, 1
    %p53 = por %p51, %p52
    %p54 = scmp.ne.s32.totalorder %s43, %s44
    %p55 = scmp.eq.s32.totalorder %s21, 0
    %p56 = por %p54, %p55
    %p57 = scmp.ne.s32.totalorder %s43, %s44
    %p58 = scmp.eq.s32.totalorder %s22, 1
    %p59 = por %p57, %p58
    %p61 = scmp.ne.s32.totalorder %s44, %s60
    %p62 = scmp.eq.s32.totalorder %s22, 0
    %p63 = por %p61, %p62
    %s64 = sadd.s32 %s23, %s24
    %s65 = sadd.s32 %s35, %s31
    %s66 = ssub.s32 %s64, %s65
    %p67 = scmp.eq.s32.totalorder %s66, 0
    %s69 = sadd.s32 %s68, 1
    %s70 = scalar_select %p67, %s68, %s69
    %p73 = pneg %p67
    %p74 = scmp.eq.s32.totalorder %s16, 1
    %p75 = por %p73, %p74
    %p76 = scmp.ne.s32.totalorder %s68, %s71
    %p77 = scmp.eq.s32.totalorder %s16, 0
    %p78 = por %p76, %p77
    %p79 = scmp.ne.s32.totalorder %s68, %s71
    %p80 = scmp.eq.s32.totalorder %s21, 1
    %p81 = por %p79, %p80
    %p82 = scmp.ne.s32.totalorder %s71, %s72
    %p83 = scmp.eq.s32.totalorder %s21, 0
    %p84 = por %p82, %p83
    %p85 = scmp.ne.s32.totalorder %s71, %s72
    %p86 = scmp.eq.s32.totalorder %s22, 1
    %p87 = por %p85, %p86
    %p89 = scmp.ne.s32.totalorder %s72, %s88
    %p90 = scmp.eq.s32.totalorder %s22, 0
    %p91 = por %p89, %p90
    %s92 = sadd.s32 %s23, %s24
    %s93 = sadd.s32 %s35, %s31
    %s94 = ssub.s32 %s92, %s93
    %p95 = scmp.eq.s32.totalorder %s94, 0
    %s97 = sadd.s32 %s96, 1
    %s98 = scalar_select %p95, %s96, %s97
    %p101 = pneg %p95
    %p102 = scmp.eq.s32.totalorder %s16, 1
    %p103 = por %p101, %p102
    %p104 = scmp.ne.s32.totalorder %s96, %s99
    %p105 = scmp.eq.s32.totalorder %s16, 0
    %p106 = por %p104, %p105
    %p107 = scmp.ne.s32.totalorder %s96, %s99
    %p108 = scmp.eq.s32.totalorder %s21, 1
    %p109 = por %p107, %p108
    %p110 = scmp.ne.s32.totalorder %s99, %s100
    %p111 = scmp.eq.s32.totalorder %s21, 0
    %p112 = por %p110, %p111
    %p113 = scmp.ne.s32.totalorder %s99, %s100
    %p114 = scmp.eq.s32.totalorder %s22, 1
    %p115 = por %p113, %p114
    %p117 = scmp.ne.s32.totalorder %s100, %s116
    %p118 = scmp.eq.s32.totalorder %s22, 0
    %p119 = por %p117, %p118
    %s120 = sadd.s32 %s23, %s24
    %s121 = sadd.s32 %s35, %s31
    %s122 = ssub.s32 %s120, %s121
    %p123 = scmp.eq.s32.totalorder %s122, 0
    %s125 = sadd.s32 %s124, 1
    %s126 = scalar_select %p123, %s124, %s125
    %p129 = pneg %p123
    %p130 = scmp.eq.s32.totalorder %s16, 1
    %p131 = por %p129, %p130
    %p132 = scmp.ne.s32.totalorder %s124, %s127
    %p133 = scmp.eq.s32.totalorder %s16, 0
    %p134 = por %p132, %p133
    %p135 = scmp.ne.s32.totalorder %s124, %s127
    %p136 = scmp.eq.s32.totalorder %s21, 1
    %p137 = por %p135, %p136
    %p138 = scmp.ne.s32.totalorder %s127, %s128
    %p139 = scmp.eq.s32.totalorder %s21, 0
    %p140 = por %p138, %p139
    %p141 = scmp.ne.s32.totalorder %s127, %s128
    %p142 = scmp.eq.s32.totalorder %s22, 1
    %p143 = por %p141, %p142
    %p145 = scmp.ne.s32.totalorder %s128, %s144
    %p146 = scmp.eq.s32.totalorder %s22, 0
    %p147 = por %p145, %p146
    %s148 = sadd.s32 %s23, %s24
    %s149 = sadd.s32 %s35, %s31
    %s150 = ssub.s32 %s148, %s149
    %p151 = scmp.eq.s32.totalorder %s150, 0
    %s153 = sadd.s32 %s152, 1
    %s154 = scalar_select %p151, %s152, %s153
    %p157 = pneg %p151
    %p158 = scmp.eq.s32.totalorder %s16, 1
    %p159 = por %p157, %p158
    %p160 = scmp.ne.s32.totalorder %s152, %s155
    %p161 = scmp.eq.s32.totalorder %s16, 0
    %p162 = por %p160, %p161
    %p163 = scmp.ne.s32.totalorder %s152, %s155
    %p164 = scmp.eq.s32.totalorder %s21, 1
    %p165 = por %p163, %p164
    %p166 = scmp.ne.s32.totalorder %s155, %s156
    %p167 = scmp.eq.s32.totalorder %s21, 0
    %p168 = por %p166, %p167
    %p169 = scmp.ne.s32.totalorder %s155, %s156
    %p170 = scmp.eq.s32.totalorder %s22, 1
    %p171 = por %p169, %p170
    %p173 = scmp.ne.s32.totalorder %s156, %s172
    %p174 = scmp.eq.s32.totalorder %s22, 0
    %p175 = por %p173, %p174
    %s176 = sadd.s32 %s23, %s24
    %s177 = sadd.s32 %s35, %s31
    %s178 = ssub.s32 %s176, %s177
    %p179 = scmp.eq.s32.totalorder %s178, 0
    %s181 = sadd.s32 %s180, 1
    %s182 = scalar_select %p179, %s180, %s181
    %p185 = pneg %p179
    %p186 = scmp.eq.s32.totalorder %s16, 1
    %p187 = por %p185, %p186
    %p188 = scmp.ne.s32.totalorder %s180, %s183
    %p189 = scmp.eq.s32.totalorder %s16, 0
    %p190 = por %p188, %p189
    %p191 = scmp.ne.s32.totalorder %s180, %s183
    %p192 = scmp.eq.s32.totalorder %s21, 1
    %p193 = por %p191, %p192
    %p194 = scmp.ne.s32.totalorder %s183, %s184
    %p195 = scmp.eq.s32.totalorder %s21, 0
    %p196 = por %p194, %p195
    %p197 = scmp.ne.s32.totalorder %s183, %s184
    %p198 = scmp.eq.s32.totalorder %s22, 1
    %p199 = por %p197, %p198
    %p201 = scmp.ne.s32.totalorder %s184, %s200
    %p202 = scmp.eq.s32.totalorder %s22, 0
    %p203 = por %p201, %p202
    %s204 = ssub.s32 %s23, %s35
    %p205 = scmp.eq.s32.totalorder %s204, 0
    %s207 = sadd.s32 %s206, 1
    %s208 = scalar_select %p205, %s206, %s207
    %p211 = pneg %p205
    %p212 = scmp.eq.s32.totalorder %s16, 1
    %p213 = por %p211, %p212
    %p214 = scmp.ne.s32.totalorder %s206, %s209
    %p215 = scmp.eq.s32.totalorder %s16, 0
    %p216 = por %p214, %p215
    %p217 = scmp.ne.s32.totalorder %s206, %s209
    %p218 = scmp.eq.s32.totalorder %s21, 1
    %p219 = por %p217, %p218
    %p220 = scmp.ne.s32.totalorder %s209, %s210
    %p221 = scmp.eq.s32.totalorder %s21, 0
    %p222 = por %p220, %p221
    %p223 = scmp.ne.s32.totalorder %s209, %s210
    %p224 = scmp.eq.s32.totalorder %s22, 1
    %p225 = por %p223, %p224
    %p227 = scmp.ne.s32.totalorder %s210, %s226
    %p228 = scmp.eq.s32.totalorder %s22, 0
    %p229 = por %p227, %p228
    %s230 = ssub.s32 %s23, %s35
    %p231 = scmp.eq.s32.totalorder %s230, 0
    %s233 = sadd.s32 %s232, 1
    %s234 = scalar_select %p231, %s232, %s233
    %p237 = pneg %p231
    %p238 = scmp.eq.s32.totalorder %s16, 1
    %p239 = por %p237, %p238
    %p240 = scmp.ne.s32.totalorder %s232, %s235
    %p241 = scmp.eq.s32.totalorder %s16, 0
    %p242 = por %p240, %p241
    %p243 = scmp.ne.s32.totalorder %s232, %s235
    %p244 = scmp.eq.s32.totalorder %s21, 1
    %p245 = por %p243, %p244
    %p246 = scmp.ne.s32.totalorder %s235, %s236
    %p247 = scmp.eq.s32.totalorder %s21, 0
    %p248 = por %p246, %p247
    %p249 = scmp.ne.s32.totalorder %s235, %s236
    %p250 = scmp.eq.s32.totalorder %s22, 1
    %p251 = por %p249, %p250
    %p253 = scmp.ne.s32.totalorder %s236, %s252
    %p254 = scmp.eq.s32.totalorder %s22, 0
    %p255 = por %p253, %p254
    %s256 = ssub.s32 %s23, %s35
    %p257 = scmp.eq.s32.totalorder %s256, 0
    %s259 = sadd.s32 %s258, 1
    %s260 = scalar_select %p257, %s258, %s259
    %p263 = pneg %p257
    %p264 = scmp.eq.s32.totalorder %s16, 1
    %p265 = por %p263, %p264
    %p266 = scmp.ne.s32.totalorder %s258, %s261
    %p267 = scmp.eq.s32.totalorder %s16, 0
    %p268 = por %p266, %p267
    %p269 = scmp.ne.s32.totalorder %s258, %s261
    %p270 = scmp.eq.s32.totalorder %s21, 1
    %p271 = por %p269, %p270
    %p272 = scmp.ne.s32.totalorder %s261, %s262
    %p273 = scmp.eq.s32.totalorder %s21, 0
    %p274 = por %p272, %p273
    %p275 = scmp.ne.s32.totalorder %s261, %s262
    %p276 = scmp.eq.s32.totalorder %s22, 1
    %p277 = por %p275, %p276
    %p279 = scmp.ne.s32.totalorder %s262, %s278
    %p280 = scmp.eq.s32.totalorder %s22, 0
    %p281 = por %p279, %p280
    %s282 = ssub.s32 %s23, %s35
    %p283 = scmp.eq.s32.totalorder %s282, 0
    %s285 = sadd.s32 %s284, 1
    %s286 = scalar_select %p283, %s284, %s285
    %p289 = pneg %p283
    %p290 = scmp.eq.s32.totalorder %s16, 1
    %p291 = por %p289, %p290
    %p292 = scmp.ne.s32.totalorder %s284, %s287
    %p293 = scmp.eq.s32.totalorder %s16, 0
    %p294 = por %p292, %p293
    %p295 = scmp.ne.s32.totalorder %s284, %s287
    %p296 = scmp.eq.s32.totalorder %s21, 1
    %p297 = por %p295, %p296
    %p298 = scmp.ne.s32.totalorder %s287, %s288
    %p299 = scmp.eq.s32.totalorder %s21, 0
    %p300 = por %p298, %p299
    %p301 = scmp.ne.s32.totalorder %s287, %s288
    %p302 = scmp.eq.s32.totalorder %s22, 1
    %p303 = por %p301, %p302
    %p305 = scmp.ne.s32.totalorder %s288, %s304
    %p306 = scmp.eq.s32.totalorder %s22, 0
    %p307 = por %p305, %p306
    %p308 = scmp.le.s32.totalorder 1, %s16
    %p309 = scmp.lt.s32.totalorder %s16, 3
    %p310 = pnand %p308, %p309
    %p311 = pneg %p310
    // Predicated region
    $region9: #{_satnerf_terms_pallas.1} parent=5 // pred_check
      _
    $region10: #{_satnerf_terms_pallas.1} parent=5 // pred_check_branch
      %313 = sbr.rel (%p310) target = $region12
    $region11: #{_satnerf_terms_pallas.1} parent=5 // pred_region
      %s314 = ssub.s32 %s16, 1
    $region12: #{_satnerf_terms_pallas.1} parent=5 // pred_fallthru
      _
    %p315 = scmp.lt.s32.totalorder %s16, 2
    // Predicated region
    $region13: #{_satnerf_terms_pallas.1} parent=5 // pred_check
      %p316 = pneg %p315
    $region14: #{_satnerf_terms_pallas.1} parent=5 // pred_check_branch
      %318 = sbr.rel (%p316) target = $region16
    $region15: #{_satnerf_terms_pallas.1} parent=5 // pred_region
      // Predicated region
      $region17: #{_satnerf_terms_pallas.1} parent=15 // pred_check
        %p319 = pneg %p50
      $region18: #{_satnerf_terms_pallas.1} parent=15 // pred_check_branch
        %321 = sbr.rel (%p319) target = $region20
      $region19: #{_satnerf_terms_pallas.1} parent=15 // pred_region
        %s322 = sadd.s32 %s23, %s24
        %s323 = smul.u32 128, %s322
        %p324 = scmp.lt.s32.totalorder %s323, 255
        %s325 = scalar_select %p324, %s323, 255
        %s326 = smul.addr %s325, 8
        %s327 = scalar_lea.vmem %s0, %s326
        %s328 = sadd.s32 %s23, %s24
        %s329 = smul.u32 128, %s328
      $region20: #{_satnerf_terms_pallas.1} parent=15 // pred_fallthru
        _
      // Predicated region
      $region21: #{_satnerf_terms_pallas.1} parent=15 // pred_check
        %p330 = pneg %p78
      $region22: #{_satnerf_terms_pallas.1} parent=15 // pred_check_branch
        %332 = sbr.rel (%p330) target = $region24
      $region23: #{_satnerf_terms_pallas.1} parent=15 // pred_region
        %s333 = sadd.s32 %s23, %s24
        %s334 = smul.u32 128, %s333
        %p335 = scmp.lt.s32.totalorder %s334, 255
        %s336 = scalar_select %p335, %s334, 255
        %s337 = smul.addr %s336, 8
        %s338 = scalar_lea.vmem %s1, %s337
        %s339 = sadd.s32 %s23, %s24
        %s340 = smul.u32 128, %s339
      $region24: #{_satnerf_terms_pallas.1} parent=15 // pred_fallthru
        _
      // Predicated region
      $region25: #{_satnerf_terms_pallas.1} parent=15 // pred_check
        %p341 = pneg %p106
      $region26: #{_satnerf_terms_pallas.1} parent=15 // pred_check_branch
        %343 = sbr.rel (%p341) target = $region28
      $region27: #{_satnerf_terms_pallas.1} parent=15 // pred_region
        %s344 = sadd.s32 %s23, %s24
        %s345 = smul.u32 128, %s344
        %p346 = scmp.lt.s32.totalorder %s345, 255
        %s347 = scalar_select %p346, %s345, 255
        %s348 = smul.addr %s347, 8
        %s349 = scalar_lea.vmem %s2, %s348
        %s350 = sadd.s32 %s23, %s24
        %s351 = smul.u32 128, %s350
      $region28: #{_satnerf_terms_pallas.1} parent=15 // pred_fallthru
        _
      // Predicated region
      $region29: #{_satnerf_terms_pallas.1} parent=15 // pred_check
        %p352 = pneg %p134
      $region30: #{_satnerf_terms_pallas.1} parent=15 // pred_check_branch
        %354 = sbr.rel (%p352) target = $region32
      $region31: #{_satnerf_terms_pallas.1} parent=15 // pred_region
        %s355 = sadd.s32 %s23, %s24
        %s356 = smul.u32 128, %s355
        %p357 = scmp.lt.s32.totalorder %s356, 255
        %s358 = scalar_select %p357, %s356, 255
        %s359 = smul.addr %s358, 8
        %s360 = scalar_lea.vmem %s3, %s359
        %s361 = sadd.s32 %s23, %s24
        %s362 = smul.u32 128, %s361
      $region32: #{_satnerf_terms_pallas.1} parent=15 // pred_fallthru
        _
      // Predicated region
      $region33: #{_satnerf_terms_pallas.1} parent=15 // pred_check
        %p363 = pneg %p162
      $region34: #{_satnerf_terms_pallas.1} parent=15 // pred_check_branch
        %365 = sbr.rel (%p363) target = $region36
      $region35: #{_satnerf_terms_pallas.1} parent=15 // pred_region
        %s366 = sadd.s32 %s23, %s24
        %s367 = smul.u32 128, %s366
        %p368 = scmp.lt.s32.totalorder %s367, 255
        %s369 = scalar_select %p368, %s367, 255
        %s370 = smul.addr %s369, 8
        %s371 = scalar_lea.vmem %s4, %s370
        %s372 = sadd.s32 %s23, %s24
        %s373 = smul.u32 128, %s372
      $region36: #{_satnerf_terms_pallas.1} parent=15 // pred_fallthru
        _
      // Predicated region
      $region37: #{_satnerf_terms_pallas.1} parent=15 // pred_check
        %p374 = pneg %p190
      $region38: #{_satnerf_terms_pallas.1} parent=15 // pred_check_branch
        %376 = sbr.rel (%p374) target = $region40
      $region39: #{_satnerf_terms_pallas.1} parent=15 // pred_region
        %s377 = sadd.s32 %s23, %s24
        %s378 = smul.u32 128, %s377
        %p379 = scmp.lt.s32.totalorder %s378, 255
        %s380 = scalar_select %p379, %s378, 255
        %s381 = smul.addr %s380, 8
        %s382 = scalar_lea.vmem %s5, %s381
        %s383 = sadd.s32 %s23, %s24
        %s384 = smul.u32 128, %s383
      $region40: #{_satnerf_terms_pallas.1} parent=15 // pred_fallthru
        _
    $region16: #{_satnerf_terms_pallas.1} parent=5 // pred_fallthru
      _
    %p385 = scmp.le.s32.totalorder 1, %s16
    %p386 = scmp.lt.s32.totalorder %s16, 3
    %p387 = pnand %p385, %p386
    %p388 = pneg %p387
    // Predicated region
    $region41: #{_satnerf_terms_pallas.1} parent=5 // pred_check
      _
    $region42: #{_satnerf_terms_pallas.1} parent=5 // pred_check_branch
      %390 = sbr.rel (%p387) target = $region44
    $region43: #{_satnerf_terms_pallas.1} parent=5 // pred_region
      %s391 = ssub.s32 %s16, 1
      %s392 = sadd.s32 %s25, %s26
      %s393 = smul.u32 128, %s392
      %p394 = scmp.lt.s32.totalorder %s393, 255
      %s395 = scalar_select %p394, %s393, 255
      %s396 = smul.addr %s395, 8
      %s397 = scalar_lea.vmem %s0, %s396
      %p398 = pneg %p56
      %p399 = pneg %p53
      %s400 = sadd.s32 %s25, %s26
      %s401 = smul.u32 128, %s400
      %p402 = scmp.lt.s32.totalorder %s401, 255
      %s403 = scalar_select %p402, %s401, 255
      %s404 = smul.addr %s403, 8
      %s405 = scalar_lea.vmem %s1, %s404
      %p406 = pneg %p84
      %p407 = pneg %p81
      %s408 = sadd.s32 %s25, %s26
      %s409 = smul.u32 128, %s408
      %p410 = scmp.lt.s32.totalorder %s409, 255
      %s411 = scalar_select %p410, %s409, 255
      %s412 = smul.addr %s411, 8
      %s413 = scalar_lea.vmem %s2, %s412
      %p414 = pneg %p112
      %p415 = pneg %p109
      %s416 = sadd.s32 %s25, %s26
      %s417 = smul.u32 128, %s416
      %p418 = scmp.lt.s32.totalorder %s417, 255
      %s419 = scalar_select %p418, %s417, 255
      %s420 = smul.addr %s419, 8
      %s421 = scalar_lea.vmem %s3, %s420
      %p422 = pneg %p140
      %p423 = pneg %p137
      %s424 = sadd.s32 %s25, %s26
      %s425 = smul.u32 128, %s424
      %p426 = scmp.lt.s32.totalorder %s425, 255
      %s427 = scalar_select %p426, %s425, 255
      %s428 = smul.addr %s427, 8
      %s429 = scalar_lea.vmem %s4, %s428
      %p430 = pneg %p168
      %p431 = pneg %p165
      %s432 = sadd.s32 %s25, %s26
      %s433 = smul.u32 128, %s432
      %p434 = scmp.lt.s32.totalorder %s433, 255
      %s435 = scalar_select %p434, %s433, 255
      %s436 = smul.addr %s435, 8
      %s437 = scalar_lea.vmem %s5, %s436
      %p438 = pneg %p196
      %p439 = pneg %p193
      %p440 = pneg %p222
      %p441 = pneg %p219
      %s442 = smul.u32 128, %s25
      %p443 = scmp.lt.s32.totalorder %s442, 255
      %s444 = scalar_select %p443, %s442, 255
      %s445 = smul.addr %s444, 8
      %s446 = scalar_lea.vmem %s6, %s445
      %p447 = pneg %p248
      %p448 = pneg %p245
      %s449 = smul.u32 128, %s25
      %p450 = scmp.lt.s32.totalorder %s449, 255
      %s451 = scalar_select %p450, %s449, 255
      %s452 = smul.addr %s451, 8
      %s453 = scalar_lea.vmem %s7, %s452
      %p454 = pneg %p274
      %p455 = pneg %p271
      %s456 = smul.u32 128, %s25
      %p457 = scmp.lt.s32.totalorder %s456, 255
      %s458 = scalar_select %p457, %s456, 255
      %s459 = smul.addr %s458, 8
      %s460 = scalar_lea.vmem %s8, %s459
      %p461 = pneg %p300
      %p462 = pneg %p297
      %s463 = smul.u32 128, %s25
      %p464 = scmp.lt.s32.totalorder %s463, 255
      %s465 = scalar_select %p464, %s463, 255
      %s466 = smul.addr %s465, 8
      %s467 = scalar_lea.vmem %s9, %s466
      %s468 = sadd.s32 %s25, %s26
      %s469 = smul.u32 128, %s468
      %p470 = scmp.lt.s32.totalorder %s469, 255
      %s471 = scalar_select %p470, %s469, 255
      %s472 = smul.addr %s471, 8
      %s473 = scalar_lea.vmem %s0, %s472
      %s474 = sadd.s32 %s25, %s26
      %s475 = smul.u32 128, %s474
      %s476 = sadd.s32 %s25, %s26
      %s477 = smul.u32 128, %s476
      %p478 = scmp.lt.s32.totalorder %s477, 255
      %s479 = scalar_select %p478, %s477, 255
      %s480 = smul.addr %s479, 8
      %s481 = scalar_lea.vmem %s1, %s480
      %s482 = sadd.s32 %s25, %s26
      %s483 = smul.u32 128, %s482
      %s484 = sadd.s32 %s25, %s26
      %s485 = smul.u32 128, %s484
      %p486 = scmp.lt.s32.totalorder %s485, 255
      %s487 = scalar_select %p486, %s485, 255
      %s488 = smul.addr %s487, 8
      %s489 = scalar_lea.vmem %s2, %s488
      %s490 = sadd.s32 %s25, %s26
      %s491 = smul.u32 128, %s490
      %s492 = sadd.s32 %s25, %s26
      %s493 = smul.u32 128, %s492
      %p494 = scmp.lt.s32.totalorder %s493, 255
      %s495 = scalar_select %p494, %s493, 255
      %s496 = smul.addr %s495, 8
      %s497 = scalar_lea.vmem %s3, %s496
      %s498 = sadd.s32 %s25, %s26
      %s499 = smul.u32 128, %s498
      %s500 = sadd.s32 %s25, %s26
      %s501 = smul.u32 128, %s500
      %p502 = scmp.lt.s32.totalorder %s501, 255
      %s503 = scalar_select %p502, %s501, 255
      %s504 = smul.addr %s503, 8
      %s505 = scalar_lea.vmem %s4, %s504
      %s506 = sadd.s32 %s25, %s26
      %s507 = smul.u32 128, %s506
      %s508 = sadd.s32 %s25, %s26
      %s509 = smul.u32 128, %s508
      %p510 = scmp.lt.s32.totalorder %s509, 255
      %s511 = scalar_select %p510, %s509, 255
      %s512 = smul.addr %s511, 8
      %s513 = scalar_lea.vmem %s5, %s512
      %s514 = sadd.s32 %s25, %s26
      %s515 = smul.u32 128, %s514
      %s516 = smul.u32 128, %s25
      %p517 = scmp.lt.s32.totalorder %s516, 255
      %s518 = scalar_select %p517, %s516, 255
      %s519 = smul.addr %s518, 8
      %s520 = scalar_lea.vmem %s6, %s519
      %s521 = smul.u32 128, %s25
      %s522 = smul.u32 128, %s25
      %p523 = scmp.lt.s32.totalorder %s522, 255
      %s524 = scalar_select %p523, %s522, 255
      %s525 = smul.addr %s524, 8
      %s526 = scalar_lea.vmem %s7, %s525
      %s527 = smul.u32 128, %s25
      %s528 = smul.u32 128, %s25
      %p529 = scmp.lt.s32.totalorder %s528, 255
      %s530 = scalar_select %p529, %s528, 255
      %s531 = smul.addr %s530, 8
      %s532 = scalar_lea.vmem %s8, %s531
      %s533 = smul.u32 128, %s25
      %s534 = smul.u32 128, %s25
      %p535 = scmp.lt.s32.totalorder %s534, 255
      %s536 = scalar_select %p535, %s534, 255
      %s537 = smul.addr %s536, 8
      %s538 = scalar_lea.vmem %s9, %s537
      %s539 = smul.u32 128, %s25
      %p540 = scmp.eq.s32.totalorder %s26, 0
      // Predicated region
      $region45: #{_satnerf_terms_pallas.1} parent=43 // pred_check
        %p541 = pneg %p540
      $region46: #{_satnerf_terms_pallas.1} parent=43 // pred_check_branch
        %543 = sbr.rel (%p541) target = $region48
      $region47: #{_satnerf_terms_pallas.1} parent=43 // pred_region
        %vm544 = vcmask 7168
        %545 = vst.msk [vmem:[%s520] sm:$0xff] %vm544, 0.0
        %546 = vst.msk [vmem:[%s520 + $0x8] sm:$0xff] %vm544, 0.0
        %547 = vst.msk [vmem:[%s520 + $0x10] sm:$0xff] %vm544, 0.0
        %548 = vst.msk [vmem:[%s520 + $0x18] sm:$0xff] %vm544, 0.0
        %549 = vst.msk [vmem:[%s520 + $0x20] sm:$0xff] %vm544, 0.0
        %550 = vst.msk [vmem:[%s520 + $0x28] sm:$0xff] %vm544, 0.0
        %551 = vst.msk [vmem:[%s520 + $0x30] sm:$0xff] %vm544, 0.0
        %552 = vst.msk [vmem:[%s520 + $0x38] sm:$0xff] %vm544, 0.0
        %553 = vst.msk [vmem:[%s520 + $0x40] sm:$0xff] %vm544, 0.0
        %554 = vst.msk [vmem:[%s520 + $0x48] sm:$0xff] %vm544, 0.0
        %555 = vst.msk [vmem:[%s520 + $0x50] sm:$0xff] %vm544, 0.0
        %556 = vst.msk [vmem:[%s520 + $0x58] sm:$0xff] %vm544, 0.0
        %557 = vst.msk [vmem:[%s520 + $0x60] sm:$0xff] %vm544, 0.0
        %558 = vst.msk [vmem:[%s520 + $0x68] sm:$0xff] %vm544, 0.0
        %559 = vst.msk [vmem:[%s520 + $0x70] sm:$0xff] %vm544, 0.0
        %560 = vst.msk [vmem:[%s520 + $0x78] sm:$0xff] %vm544, 0.0
        %561 = vst.msk [vmem:[%s520 + $0x80] sm:$0xff] %vm544, 0.0
        %562 = vst.msk [vmem:[%s520 + $0x88] sm:$0xff] %vm544, 0.0
        %563 = vst.msk [vmem:[%s520 + $0x90] sm:$0xff] %vm544, 0.0
        %564 = vst.msk [vmem:[%s520 + $0x98] sm:$0xff] %vm544, 0.0
        %565 = vst.msk [vmem:[%s520 + $0xa0] sm:$0xff] %vm544, 0.0
        %566 = vst.msk [vmem:[%s520 + $0xa8] sm:$0xff] %vm544, 0.0
        %567 = vst.msk [vmem:[%s520 + $0xb0] sm:$0xff] %vm544, 0.0
        %568 = vst.msk [vmem:[%s520 + $0xb8] sm:$0xff] %vm544, 0.0
        %569 = vst.msk [vmem:[%s520 + $0xc0] sm:$0xff] %vm544, 0.0
        %570 = vst.msk [vmem:[%s520 + $0xc8] sm:$0xff] %vm544, 0.0
        %571 = vst.msk [vmem:[%s520 + $0xd0] sm:$0xff] %vm544, 0.0
        %572 = vst.msk [vmem:[%s520 + $0xd8] sm:$0xff] %vm544, 0.0
        %573 = vst.msk [vmem:[%s520 + $0xe0] sm:$0xff] %vm544, 0.0
        %574 = vst.msk [vmem:[%s520 + $0xe8] sm:$0xff] %vm544, 0.0
        %575 = vst.msk [vmem:[%s520 + $0xf0] sm:$0xff] %vm544, 0.0
        %576 = vst.msk [vmem:[%s520 + $0xf8] sm:$0xff] %vm544, 0.0
        %577 = vst.msk [vmem:[%s520 + $0x100] sm:$0xff] %vm544, 0.0
        %578 = vst.msk [vmem:[%s520 + $0x108] sm:$0xff] %vm544, 0.0
        %579 = vst.msk [vmem:[%s520 + $0x110] sm:$0xff] %vm544, 0.0
        %580 = vst.msk [vmem:[%s520 + $0x118] sm:$0xff] %vm544, 0.0
        %581 = vst.msk [vmem:[%s520 + $0x120] sm:$0xff] %vm544, 0.0
        %582 = vst.msk [vmem:[%s520 + $0x128] sm:$0xff] %vm544, 0.0
        %583 = vst.msk [vmem:[%s520 + $0x130] sm:$0xff] %vm544, 0.0
        %584 = vst.msk [vmem:[%s520 + $0x138] sm:$0xff] %vm544, 0.0
        %585 = vst.msk [vmem:[%s520 + $0x140] sm:$0xff] %vm544, 0.0
        %586 = vst.msk [vmem:[%s520 + $0x148] sm:$0xff] %vm544, 0.0
        %587 = vst.msk [vmem:[%s520 + $0x150] sm:$0xff] %vm544, 0.0
        %588 = vst.msk [vmem:[%s520 + $0x158] sm:$0xff] %vm544, 0.0
        %589 = vst.msk [vmem:[%s520 + $0x160] sm:$0xff] %vm544, 0.0
        %590 = vst.msk [vmem:[%s520 + $0x168] sm:$0xff] %vm544, 0.0
        %591 = vst.msk [vmem:[%s520 + $0x170] sm:$0xff] %vm544, 0.0
        %592 = vst.msk [vmem:[%s520 + $0x178] sm:$0xff] %vm544, 0.0
        %593 = vst.msk [vmem:[%s520 + $0x180] sm:$0xff] %vm544, 0.0
        %594 = vst.msk [vmem:[%s520 + $0x188] sm:$0xff] %vm544, 0.0
        %595 = vst.msk [vmem:[%s520 + $0x190] sm:$0xff] %vm544, 0.0
        %596 = vst.msk [vmem:[%s520 + $0x198] sm:$0xff] %vm544, 0.0
        %597 = vst.msk [vmem:[%s520 + $0x1a0] sm:$0xff] %vm544, 0.0
        %598 = vst.msk [vmem:[%s520 + $0x1a8] sm:$0xff] %vm544, 0.0
        %599 = vst.msk [vmem:[%s520 + $0x1b0] sm:$0xff] %vm544, 0.0
        %600 = vst.msk [vmem:[%s520 + $0x1b8] sm:$0xff] %vm544, 0.0
        %601 = vst.msk [vmem:[%s520 + $0x1c0] sm:$0xff] %vm544, 0.0
        %602 = vst.msk [vmem:[%s520 + $0x1c8] sm:$0xff] %vm544, 0.0
        %603 = vst.msk [vmem:[%s520 + $0x1d0] sm:$0xff] %vm544, 0.0
        %604 = vst.msk [vmem:[%s520 + $0x1d8] sm:$0xff] %vm544, 0.0
        %605 = vst.msk [vmem:[%s520 + $0x1e0] sm:$0xff] %vm544, 0.0
        %606 = vst.msk [vmem:[%s520 + $0x1e8] sm:$0xff] %vm544, 0.0
        %607 = vst.msk [vmem:[%s520 + $0x1f0] sm:$0xff] %vm544, 0.0
        %608 = vst.msk [vmem:[%s520 + $0x1f8] sm:$0xff] %vm544, 0.0
        %609 = vst.msk [vmem:[%s520 + $0x200] sm:$0xff] %vm544, 0.0
        %610 = vst.msk [vmem:[%s520 + $0x208] sm:$0xff] %vm544, 0.0
        %611 = vst.msk [vmem:[%s520 + $0x210] sm:$0xff] %vm544, 0.0
        %612 = vst.msk [vmem:[%s520 + $0x218] sm:$0xff] %vm544, 0.0
        %613 = vst.msk [vmem:[%s520 + $0x220] sm:$0xff] %vm544, 0.0
        %614 = vst.msk [vmem:[%s520 + $0x228] sm:$0xff] %vm544, 0.0
        %615 = vst.msk [vmem:[%s520 + $0x230] sm:$0xff] %vm544, 0.0
        %616 = vst.msk [vmem:[%s520 + $0x238] sm:$0xff] %vm544, 0.0
        %617 = vst.msk [vmem:[%s520 + $0x240] sm:$0xff] %vm544, 0.0
        %618 = vst.msk [vmem:[%s520 + $0x248] sm:$0xff] %vm544, 0.0
        %619 = vst.msk [vmem:[%s520 + $0x250] sm:$0xff] %vm544, 0.0
        %620 = vst.msk [vmem:[%s520 + $0x258] sm:$0xff] %vm544, 0.0
        %621 = vst.msk [vmem:[%s520 + $0x260] sm:$0xff] %vm544, 0.0
        %622 = vst.msk [vmem:[%s520 + $0x268] sm:$0xff] %vm544, 0.0
        %623 = vst.msk [vmem:[%s520 + $0x270] sm:$0xff] %vm544, 0.0
        %624 = vst.msk [vmem:[%s520 + $0x278] sm:$0xff] %vm544, 0.0
        %625 = vst.msk [vmem:[%s520 + $0x280] sm:$0xff] %vm544, 0.0
        %626 = vst.msk [vmem:[%s520 + $0x288] sm:$0xff] %vm544, 0.0
        %627 = vst.msk [vmem:[%s520 + $0x290] sm:$0xff] %vm544, 0.0
        %628 = vst.msk [vmem:[%s520 + $0x298] sm:$0xff] %vm544, 0.0
        %629 = vst.msk [vmem:[%s520 + $0x2a0] sm:$0xff] %vm544, 0.0
        %630 = vst.msk [vmem:[%s520 + $0x2a8] sm:$0xff] %vm544, 0.0
        %631 = vst.msk [vmem:[%s520 + $0x2b0] sm:$0xff] %vm544, 0.0
        %632 = vst.msk [vmem:[%s520 + $0x2b8] sm:$0xff] %vm544, 0.0
        %633 = vst.msk [vmem:[%s520 + $0x2c0] sm:$0xff] %vm544, 0.0
        %634 = vst.msk [vmem:[%s520 + $0x2c8] sm:$0xff] %vm544, 0.0
        %635 = vst.msk [vmem:[%s520 + $0x2d0] sm:$0xff] %vm544, 0.0
        %636 = vst.msk [vmem:[%s520 + $0x2d8] sm:$0xff] %vm544, 0.0
        %637 = vst.msk [vmem:[%s520 + $0x2e0] sm:$0xff] %vm544, 0.0
        %638 = vst.msk [vmem:[%s520 + $0x2e8] sm:$0xff] %vm544, 0.0
        %639 = vst.msk [vmem:[%s520 + $0x2f0] sm:$0xff] %vm544, 0.0
        %640 = vst.msk [vmem:[%s520 + $0x2f8] sm:$0xff] %vm544, 0.0
        %641 = vst.msk [vmem:[%s520 + $0x300] sm:$0xff] %vm544, 0.0
        %642 = vst.msk [vmem:[%s520 + $0x308] sm:$0xff] %vm544, 0.0
        %643 = vst.msk [vmem:[%s520 + $0x310] sm:$0xff] %vm544, 0.0
        %644 = vst.msk [vmem:[%s520 + $0x318] sm:$0xff] %vm544, 0.0
        %645 = vst.msk [vmem:[%s520 + $0x320] sm:$0xff] %vm544, 0.0
        %646 = vst.msk [vmem:[%s520 + $0x328] sm:$0xff] %vm544, 0.0
        %647 = vst.msk [vmem:[%s520 + $0x330] sm:$0xff] %vm544, 0.0
        %648 = vst.msk [vmem:[%s520 + $0x338] sm:$0xff] %vm544, 0.0
        %649 = vst.msk [vmem:[%s520 + $0x340] sm:$0xff] %vm544, 0.0
        %650 = vst.msk [vmem:[%s520 + $0x348] sm:$0xff] %vm544, 0.0
        %651 = vst.msk [vmem:[%s520 + $0x350] sm:$0xff] %vm544, 0.0
        %652 = vst.msk [vmem:[%s520 + $0x358] sm:$0xff] %vm544, 0.0
        %653 = vst.msk [vmem:[%s520 + $0x360] sm:$0xff] %vm544, 0.0
        %654 = vst.msk [vmem:[%s520 + $0x368] sm:$0xff] %vm544, 0.0
        %655 = vst.msk [vmem:[%s520 + $0x370] sm:$0xff] %vm544, 0.0
        %656 = vst.msk [vmem:[%s520 + $0x378] sm:$0xff] %vm544, 0.0
        %657 = vst.msk [vmem:[%s520 + $0x380] sm:$0xff] %vm544, 0.0
        %658 = vst.msk [vmem:[%s520 + $0x388] sm:$0xff] %vm544, 0.0
        %659 = vst.msk [vmem:[%s520 + $0x390] sm:$0xff] %vm544, 0.0
        %660 = vst.msk [vmem:[%s520 + $0x398] sm:$0xff] %vm544, 0.0
        %661 = vst.msk [vmem:[%s520 + $0x3a0] sm:$0xff] %vm544, 0.0
        %662 = vst.msk [vmem:[%s520 + $0x3a8] sm:$0xff] %vm544, 0.0
        %663 = vst.msk [vmem:[%s520 + $0x3b0] sm:$0xff] %vm544, 0.0
        %664 = vst.msk [vmem:[%s520 + $0x3b8] sm:$0xff] %vm544, 0.0
        %665 = vst.msk [vmem:[%s520 + $0x3c0] sm:$0xff] %vm544, 0.0
        %666 = vst.msk [vmem:[%s520 + $0x3c8] sm:$0xff] %vm544, 0.0
        %667 = vst.msk [vmem:[%s520 + $0x3d0] sm:$0xff] %vm544, 0.0
        %668 = vst.msk [vmem:[%s520 + $0x3d8] sm:$0xff] %vm544, 0.0
        %669 = vst.msk [vmem:[%s520 + $0x3e0] sm:$0xff] %vm544, 0.0
        %670 = vst.msk [vmem:[%s520 + $0x3e8] sm:$0xff] %vm544, 0.0
        %671 = vst.msk [vmem:[%s520 + $0x3f0] sm:$0xff] %vm544, 0.0
        %672 = vst.msk [vmem:[%s520 + $0x3f8] sm:$0xff] %vm544, 0.0
        %673 = vst.msk [vmem:[%s526] sm:$0xff] %vm544, 0.0
        %674 = vst.msk [vmem:[%s526 + $0x8] sm:$0xff] %vm544, 0.0
        %675 = vst.msk [vmem:[%s526 + $0x10] sm:$0xff] %vm544, 0.0
        %676 = vst.msk [vmem:[%s526 + $0x18] sm:$0xff] %vm544, 0.0
        %677 = vst.msk [vmem:[%s526 + $0x20] sm:$0xff] %vm544, 0.0
        %678 = vst.msk [vmem:[%s526 + $0x28] sm:$0xff] %vm544, 0.0
        %679 = vst.msk [vmem:[%s526 + $0x30] sm:$0xff] %vm544, 0.0
        %680 = vst.msk [vmem:[%s526 + $0x38] sm:$0xff] %vm544, 0.0
        %681 = vst.msk [vmem:[%s526 + $0x40] sm:$0xff] %vm544, 0.0
        %682 = vst.msk [vmem:[%s526 + $0x48] sm:$0xff] %vm544, 0.0
        %683 = vst.msk [vmem:[%s526 + $0x50] sm:$0xff] %vm544, 0.0
        %684 = vst.msk [vmem:[%s526 + $0x58] sm:$0xff] %vm544, 0.0
        %685 = vst.msk [vmem:[%s526 + $0x60] sm:$0xff] %vm544, 0.0
        %686 = vst.msk [vmem:[%s526 + $0x68] sm:$0xff] %vm544, 0.0
        %687 = vst.msk [vmem:[%s526 + $0x70] sm:$0xff] %vm544, 0.0
        %688 = vst.msk [vmem:[%s526 + $0x78] sm:$0xff] %vm544, 0.0
        %689 = vst.msk [vmem:[%s526 + $0x80] sm:$0xff] %vm544, 0.0
        %690 = vst.msk [vmem:[%s526 + $0x88] sm:$0xff] %vm544, 0.0
        %691 = vst.msk [vmem:[%s526 + $0x90] sm:$0xff] %vm544, 0.0
        %692 = vst.msk [vmem:[%s526 + $0x98] sm:$0xff] %vm544, 0.0
        %693 = vst.msk [vmem:[%s526 + $0xa0] sm:$0xff] %vm544, 0.0
        %694 = vst.msk [vmem:[%s526 + $0xa8] sm:$0xff] %vm544, 0.0
        %695 = vst.msk [vmem:[%s526 + $0xb0] sm:$0xff] %vm544, 0.0
        %696 = vst.msk [vmem:[%s526 + $0xb8] sm:$0xff] %vm544, 0.0
        %697 = vst.msk [vmem:[%s526 + $0xc0] sm:$0xff] %vm544, 0.0
        %698 = vst.msk [vmem:[%s526 + $0xc8] sm:$0xff] %vm544, 0.0
        %699 = vst.msk [vmem:[%s526 + $0xd0] sm:$0xff] %vm544, 0.0
        %700 = vst.msk [vmem:[%s526 + $0xd8] sm:$0xff] %vm544, 0.0
        %701 = vst.msk [vmem:[%s526 + $0xe0] sm:$0xff] %vm544, 0.0
        %702 = vst.msk [vmem:[%s526 + $0xe8] sm:$0xff] %vm544, 0.0
        %703 = vst.msk [vmem:[%s526 + $0xf0] sm:$0xff] %vm544, 0.0
        %704 = vst.msk [vmem:[%s526 + $0xf8] sm:$0xff] %vm544, 0.0
        %705 = vst.msk [vmem:[%s526 + $0x100] sm:$0xff] %vm544, 0.0
        %706 = vst.msk [vmem:[%s526 + $0x108] sm:$0xff] %vm544, 0.0
        %707 = vst.msk [vmem:[%s526 + $0x110] sm:$0xff] %vm544, 0.0
        %708 = vst.msk [vmem:[%s526 + $0x118] sm:$0xff] %vm544, 0.0
        %709 = vst.msk [vmem:[%s526 + $0x120] sm:$0xff] %vm544, 0.0
        %710 = vst.msk [vmem:[%s526 + $0x128] sm:$0xff] %vm544, 0.0
        %711 = vst.msk [vmem:[%s526 + $0x130] sm:$0xff] %vm544, 0.0
        %712 = vst.msk [vmem:[%s526 + $0x138] sm:$0xff] %vm544, 0.0
        %713 = vst.msk [vmem:[%s526 + $0x140] sm:$0xff] %vm544, 0.0
        %714 = vst.msk [vmem:[%s526 + $0x148] sm:$0xff] %vm544, 0.0
        %715 = vst.msk [vmem:[%s526 + $0x150] sm:$0xff] %vm544, 0.0
        %716 = vst.msk [vmem:[%s526 + $0x158] sm:$0xff] %vm544, 0.0
        %717 = vst.msk [vmem:[%s526 + $0x160] sm:$0xff] %vm544, 0.0
        %718 = vst.msk [vmem:[%s526 + $0x168] sm:$0xff] %vm544, 0.0
        %719 = vst.msk [vmem:[%s526 + $0x170] sm:$0xff] %vm544, 0.0
        %720 = vst.msk [vmem:[%s526 + $0x178] sm:$0xff] %vm544, 0.0
        %721 = vst.msk [vmem:[%s526 + $0x180] sm:$0xff] %vm544, 0.0
        %722 = vst.msk [vmem:[%s526 + $0x188] sm:$0xff] %vm544, 0.0
        %723 = vst.msk [vmem:[%s526 + $0x190] sm:$0xff] %vm544, 0.0
        %724 = vst.msk [vmem:[%s526 + $0x198] sm:$0xff] %vm544, 0.0
        %725 = vst.msk [vmem:[%s526 + $0x1a0] sm:$0xff] %vm544, 0.0
        %726 = vst.msk [vmem:[%s526 + $0x1a8] sm:$0xff] %vm544, 0.0
        %727 = vst.msk [vmem:[%s526 + $0x1b0] sm:$0xff] %vm544, 0.0
        %728 = vst.msk [vmem:[%s526 + $0x1b8] sm:$0xff] %vm544, 0.0
        %729 = vst.msk [vmem:[%s526 + $0x1c0] sm:$0xff] %vm544, 0.0
        %730 = vst.msk [vmem:[%s526 + $0x1c8] sm:$0xff] %vm544, 0.0
        %731 = vst.msk [vmem:[%s526 + $0x1d0] sm:$0xff] %vm544, 0.0
        %732 = vst.msk [vmem:[%s526 + $0x1d8] sm:$0xff] %vm544, 0.0
        %733 = vst.msk [vmem:[%s526 + $0x1e0] sm:$0xff] %vm544, 0.0
        %734 = vst.msk [vmem:[%s526 + $0x1e8] sm:$0xff] %vm544, 0.0
        %735 = vst.msk [vmem:[%s526 + $0x1f0] sm:$0xff] %vm544, 0.0
        %736 = vst.msk [vmem:[%s526 + $0x1f8] sm:$0xff] %vm544, 0.0
        %737 = vst.msk [vmem:[%s526 + $0x200] sm:$0xff] %vm544, 0.0
        %738 = vst.msk [vmem:[%s526 + $0x208] sm:$0xff] %vm544, 0.0
        %739 = vst.msk [vmem:[%s526 + $0x210] sm:$0xff] %vm544, 0.0
        %740 = vst.msk [vmem:[%s526 + $0x218] sm:$0xff] %vm544, 0.0
        %741 = vst.msk [vmem:[%s526 + $0x220] sm:$0xff] %vm544, 0.0
        %742 = vst.msk [vmem:[%s526 + $0x228] sm:$0xff] %vm544, 0.0
        %743 = vst.msk [vmem:[%s526 + $0x230] sm:$0xff] %vm544, 0.0
        %744 = vst.msk [vmem:[%s526 + $0x238] sm:$0xff] %vm544, 0.0
        %745 = vst.msk [vmem:[%s526 + $0x240] sm:$0xff] %vm544, 0.0
        %746 = vst.msk [vmem:[%s526 + $0x248] sm:$0xff] %vm544, 0.0
        %747 = vst.msk [vmem:[%s526 + $0x250] sm:$0xff] %vm544, 0.0
        %748 = vst.msk [vmem:[%s526 + $0x258] sm:$0xff] %vm544, 0.0
        %749 = vst.msk [vmem:[%s526 + $0x260] sm:$0xff] %vm544, 0.0
        %750 = vst.msk [vmem:[%s526 + $0x268] sm:$0xff] %vm544, 0.0
        %751 = vst.msk [vmem:[%s526 + $0x270] sm:$0xff] %vm544, 0.0
        %752 = vst.msk [vmem:[%s526 + $0x278] sm:$0xff] %vm544, 0.0
        %753 = vst.msk [vmem:[%s526 + $0x280] sm:$0xff] %vm544, 0.0
        %754 = vst.msk [vmem:[%s526 + $0x288] sm:$0xff] %vm544, 0.0
        %755 = vst.msk [vmem:[%s526 + $0x290] sm:$0xff] %vm544, 0.0
        %756 = vst.msk [vmem:[%s526 + $0x298] sm:$0xff] %vm544, 0.0
        %757 = vst.msk [vmem:[%s526 + $0x2a0] sm:$0xff] %vm544, 0.0
        %758 = vst.msk [vmem:[%s526 + $0x2a8] sm:$0xff] %vm544, 0.0
        %759 = vst.msk [vmem:[%s526 + $0x2b0] sm:$0xff] %vm544, 0.0
        %760 = vst.msk [vmem:[%s526 + $0x2b8] sm:$0xff] %vm544, 0.0
        %761 = vst.msk [vmem:[%s526 + $0x2c0] sm:$0xff] %vm544, 0.0
        %762 = vst.msk [vmem:[%s526 + $0x2c8] sm:$0xff] %vm544, 0.0
        %763 = vst.msk [vmem:[%s526 + $0x2d0] sm:$0xff] %vm544, 0.0
        %764 = vst.msk [vmem:[%s526 + $0x2d8] sm:$0xff] %vm544, 0.0
        %765 = vst.msk [vmem:[%s526 + $0x2e0] sm:$0xff] %vm544, 0.0
        %766 = vst.msk [vmem:[%s526 + $0x2e8] sm:$0xff] %vm544, 0.0
        %767 = vst.msk [vmem:[%s526 + $0x2f0] sm:$0xff] %vm544, 0.0
        %768 = vst.msk [vmem:[%s526 + $0x2f8] sm:$0xff] %vm544, 0.0
        %769 = vst.msk [vmem:[%s526 + $0x300] sm:$0xff] %vm544, 0.0
        %770 = vst.msk [vmem:[%s526 + $0x308] sm:$0xff] %vm544, 0.0
        %771 = vst.msk [vmem:[%s526 + $0x310] sm:$0xff] %vm544, 0.0
        %772 = vst.msk [vmem:[%s526 + $0x318] sm:$0xff] %vm544, 0.0
        %773 = vst.msk [vmem:[%s526 + $0x320] sm:$0xff] %vm544, 0.0
        %774 = vst.msk [vmem:[%s526 + $0x328] sm:$0xff] %vm544, 0.0
        %775 = vst.msk [vmem:[%s526 + $0x330] sm:$0xff] %vm544, 0.0
        %776 = vst.msk [vmem:[%s526 + $0x338] sm:$0xff] %vm544, 0.0
        %777 = vst.msk [vmem:[%s526 + $0x340] sm:$0xff] %vm544, 0.0
        %778 = vst.msk [vmem:[%s526 + $0x348] sm:$0xff] %vm544, 0.0
        %779 = vst.msk [vmem:[%s526 + $0x350] sm:$0xff] %vm544, 0.0
        %780 = vst.msk [vmem:[%s526 + $0x358] sm:$0xff] %vm544, 0.0
        %781 = vst.msk [vmem:[%s526 + $0x360] sm:$0xff] %vm544, 0.0
        %782 = vst.msk [vmem:[%s526 + $0x368] sm:$0xff] %vm544, 0.0
        %783 = vst.msk [vmem:[%s526 + $0x370] sm:$0xff] %vm544, 0.0
        %784 = vst.msk [vmem:[%s526 + $0x378] sm:$0xff] %vm544, 0.0
        %785 = vst.msk [vmem:[%s526 + $0x380] sm:$0xff] %vm544, 0.0
        %786 = vst.msk [vmem:[%s526 + $0x388] sm:$0xff] %vm544, 0.0
        %787 = vst.msk [vmem:[%s526 + $0x390] sm:$0xff] %vm544, 0.0
        %788 = vst.msk [vmem:[%s526 + $0x398] sm:$0xff] %vm544, 0.0
        %789 = vst.msk [vmem:[%s526 + $0x3a0] sm:$0xff] %vm544, 0.0
        %790 = vst.msk [vmem:[%s526 + $0x3a8] sm:$0xff] %vm544, 0.0
        %791 = vst.msk [vmem:[%s526 + $0x3b0] sm:$0xff] %vm544, 0.0
        %792 = vst.msk [vmem:[%s526 + $0x3b8] sm:$0xff] %vm544, 0.0
        %793 = vst.msk [vmem:[%s526 + $0x3c0] sm:$0xff] %vm544, 0.0
        %794 = vst.msk [vmem:[%s526 + $0x3c8] sm:$0xff] %vm544, 0.0
        %795 = vst.msk [vmem:[%s526 + $0x3d0] sm:$0xff] %vm544, 0.0
        %796 = vst.msk [vmem:[%s526 + $0x3d8] sm:$0xff] %vm544, 0.0
        %797 = vst.msk [vmem:[%s526 + $0x3e0] sm:$0xff] %vm544, 0.0
        %798 = vst.msk [vmem:[%s526 + $0x3e8] sm:$0xff] %vm544, 0.0
        %799 = vst.msk [vmem:[%s526 + $0x3f0] sm:$0xff] %vm544, 0.0
        %800 = vst.msk [vmem:[%s526 + $0x3f8] sm:$0xff] %vm544, 0.0
        %801 = vst.msk [vmem:[%s532] sm:$0xff] %vm544, 0.0
        %802 = vst.msk [vmem:[%s532 + $0x8] sm:$0xff] %vm544, 0.0
        %803 = vst.msk [vmem:[%s532 + $0x10] sm:$0xff] %vm544, 0.0
        %804 = vst.msk [vmem:[%s532 + $0x18] sm:$0xff] %vm544, 0.0
        %805 = vst.msk [vmem:[%s532 + $0x20] sm:$0xff] %vm544, 0.0
        %806 = vst.msk [vmem:[%s532 + $0x28] sm:$0xff] %vm544, 0.0
        %807 = vst.msk [vmem:[%s532 + $0x30] sm:$0xff] %vm544, 0.0
        %808 = vst.msk [vmem:[%s532 + $0x38] sm:$0xff] %vm544, 0.0
        %809 = vst.msk [vmem:[%s532 + $0x40] sm:$0xff] %vm544, 0.0
        %810 = vst.msk [vmem:[%s532 + $0x48] sm:$0xff] %vm544, 0.0
        %811 = vst.msk [vmem:[%s532 + $0x50] sm:$0xff] %vm544, 0.0
        %812 = vst.msk [vmem:[%s532 + $0x58] sm:$0xff] %vm544, 0.0
        %813 = vst.msk [vmem:[%s532 + $0x60] sm:$0xff] %vm544, 0.0
        %814 = vst.msk [vmem:[%s532 + $0x68] sm:$0xff] %vm544, 0.0
        %815 = vst.msk [vmem:[%s532 + $0x70] sm:$0xff] %vm544, 0.0
        %816 = vst.msk [vmem:[%s532 + $0x78] sm:$0xff] %vm544, 0.0
        %817 = vst.msk [vmem:[%s532 + $0x80] sm:$0xff] %vm544, 0.0
        %818 = vst.msk [vmem:[%s532 + $0x88] sm:$0xff] %vm544, 0.0
        %819 = vst.msk [vmem:[%s532 + $0x90] sm:$0xff] %vm544, 0.0
        %820 = vst.msk [vmem:[%s532 + $0x98] sm:$0xff] %vm544, 0.0
        %821 = vst.msk [vmem:[%s532 + $0xa0] sm:$0xff] %vm544, 0.0
        %822 = vst.msk [vmem:[%s532 + $0xa8] sm:$0xff] %vm544, 0.0
        %823 = vst.msk [vmem:[%s532 + $0xb0] sm:$0xff] %vm544, 0.0
        %824 = vst.msk [vmem:[%s532 + $0xb8] sm:$0xff] %vm544, 0.0
        %825 = vst.msk [vmem:[%s532 + $0xc0] sm:$0xff] %vm544, 0.0
        %826 = vst.msk [vmem:[%s532 + $0xc8] sm:$0xff] %vm544, 0.0
        %827 = vst.msk [vmem:[%s532 + $0xd0] sm:$0xff] %vm544, 0.0
        %828 = vst.msk [vmem:[%s532 + $0xd8] sm:$0xff] %vm544, 0.0
        %829 = vst.msk [vmem:[%s532 + $0xe0] sm:$0xff] %vm544, 0.0
        %830 = vst.msk [vmem:[%s532 + $0xe8] sm:$0xff] %vm544, 0.0
        %831 = vst.msk [vmem:[%s532 + $0xf0] sm:$0xff] %vm544, 0.0
        %832 = vst.msk [vmem:[%s532 + $0xf8] sm:$0xff] %vm544, 0.0
        %833 = vst.msk [vmem:[%s532 + $0x100] sm:$0xff] %vm544, 0.0
        %834 = vst.msk [vmem:[%s532 + $0x108] sm:$0xff] %vm544, 0.0
        %835 = vst.msk [vmem:[%s532 + $0x110] sm:$0xff] %vm544, 0.0
        %836 = vst.msk [vmem:[%s532 + $0x118] sm:$0xff] %vm544, 0.0
        %837 = vst.msk [vmem:[%s532 + $0x120] sm:$0xff] %vm544, 0.0
        %838 = vst.msk [vmem:[%s532 + $0x128] sm:$0xff] %vm544, 0.0
        %839 = vst.msk [vmem:[%s532 + $0x130] sm:$0xff] %vm544, 0.0
        %840 = vst.msk [vmem:[%s532 + $0x138] sm:$0xff] %vm544, 0.0
        %841 = vst.msk [vmem:[%s532 + $0x140] sm:$0xff] %vm544, 0.0
        %842 = vst.msk [vmem:[%s532 + $0x148] sm:$0xff] %vm544, 0.0
        %843 = vst.msk [vmem:[%s532 + $0x150] sm:$0xff] %vm544, 0.0
        %844 = vst.msk [vmem:[%s532 + $0x158] sm:$0xff] %vm544, 0.0
        %845 = vst.msk [vmem:[%s532 + $0x160] sm:$0xff] %vm544, 0.0
        %846 = vst.msk [vmem:[%s532 + $0x168] sm:$0xff] %vm544, 0.0
        %847 = vst.msk [vmem:[%s532 + $0x170] sm:$0xff] %vm544, 0.0
        %848 = vst.msk [vmem:[%s532 + $0x178] sm:$0xff] %vm544, 0.0
        %849 = vst.msk [vmem:[%s532 + $0x180] sm:$0xff] %vm544, 0.0
        %850 = vst.msk [vmem:[%s532 + $0x188] sm:$0xff] %vm544, 0.0
        %851 = vst.msk [vmem:[%s532 + $0x190] sm:$0xff] %vm544, 0.0
        %852 = vst.msk [vmem:[%s532 + $0x198] sm:$0xff] %vm544, 0.0
        %853 = vst.msk [vmem:[%s532 + $0x1a0] sm:$0xff] %vm544, 0.0
        %854 = vst.msk [vmem:[%s532 + $0x1a8] sm:$0xff] %vm544, 0.0
        %855 = vst.msk [vmem:[%s532 + $0x1b0] sm:$0xff] %vm544, 0.0
        %856 = vst.msk [vmem:[%s532 + $0x1b8] sm:$0xff] %vm544, 0.0
        %857 = vst.msk [vmem:[%s532 + $0x1c0] sm:$0xff] %vm544, 0.0
        %858 = vst.msk [vmem:[%s532 + $0x1c8] sm:$0xff] %vm544, 0.0
        %859 = vst.msk [vmem:[%s532 + $0x1d0] sm:$0xff] %vm544, 0.0
        %860 = vst.msk [vmem:[%s532 + $0x1d8] sm:$0xff] %vm544, 0.0
        %861 = vst.msk [vmem:[%s532 + $0x1e0] sm:$0xff] %vm544, 0.0
        %862 = vst.msk [vmem:[%s532 + $0x1e8] sm:$0xff] %vm544, 0.0
        %863 = vst.msk [vmem:[%s532 + $0x1f0] sm:$0xff] %vm544, 0.0
        %864 = vst.msk [vmem:[%s532 + $0x1f8] sm:$0xff] %vm544, 0.0
        %865 = vst.msk [vmem:[%s532 + $0x200] sm:$0xff] %vm544, 0.0
        %866 = vst.msk [vmem:[%s532 + $0x208] sm:$0xff] %vm544, 0.0
        %867 = vst.msk [vmem:[%s532 + $0x210] sm:$0xff] %vm544, 0.0
        %868 = vst.msk [vmem:[%s532 + $0x218] sm:$0xff] %vm544, 0.0
        %869 = vst.msk [vmem:[%s532 + $0x220] sm:$0xff] %vm544, 0.0
        %870 = vst.msk [vmem:[%s532 + $0x228] sm:$0xff] %vm544, 0.0
        %871 = vst.msk [vmem:[%s532 + $0x230] sm:$0xff] %vm544, 0.0
        %872 = vst.msk [vmem:[%s532 + $0x238] sm:$0xff] %vm544, 0.0
        %873 = vst.msk [vmem:[%s532 + $0x240] sm:$0xff] %vm544, 0.0
        %874 = vst.msk [vmem:[%s532 + $0x248] sm:$0xff] %vm544, 0.0
        %875 = vst.msk [vmem:[%s532 + $0x250] sm:$0xff] %vm544, 0.0
        %876 = vst.msk [vmem:[%s532 + $0x258] sm:$0xff] %vm544, 0.0
        %877 = vst.msk [vmem:[%s532 + $0x260] sm:$0xff] %vm544, 0.0
        %878 = vst.msk [vmem:[%s532 + $0x268] sm:$0xff] %vm544, 0.0
        %879 = vst.msk [vmem:[%s532 + $0x270] sm:$0xff] %vm544, 0.0
        %880 = vst.msk [vmem:[%s532 + $0x278] sm:$0xff] %vm544, 0.0
        %881 = vst.msk [vmem:[%s532 + $0x280] sm:$0xff] %vm544, 0.0
        %882 = vst.msk [vmem:[%s532 + $0x288] sm:$0xff] %vm544, 0.0
        %883 = vst.msk [vmem:[%s532 + $0x290] sm:$0xff] %vm544, 0.0
        %884 = vst.msk [vmem:[%s532 + $0x298] sm:$0xff] %vm544, 0.0
        %885 = vst.msk [vmem:[%s532 + $0x2a0] sm:$0xff] %vm544, 0.0
        %886 = vst.msk [vmem:[%s532 + $0x2a8] sm:$0xff] %vm544, 0.0
        %887 = vst.msk [vmem:[%s532 + $0x2b0] sm:$0xff] %vm544, 0.0
        %888 = vst.msk [vmem:[%s532 + $0x2b8] sm:$0xff] %vm544, 0.0
        %889 = vst.msk [vmem:[%s532 + $0x2c0] sm:$0xff] %vm544, 0.0
        %890 = vst.msk [vmem:[%s532 + $0x2c8] sm:$0xff] %vm544, 0.0
        %891 = vst.msk [vmem:[%s532 + $0x2d0] sm:$0xff] %vm544, 0.0
        %892 = vst.msk [vmem:[%s532 + $0x2d8] sm:$0xff] %vm544, 0.0
        %893 = vst.msk [vmem:[%s532 + $0x2e0] sm:$0xff] %vm544, 0.0
        %894 = vst.msk [vmem:[%s532 + $0x2e8] sm:$0xff] %vm544, 0.0
        %895 = vst.msk [vmem:[%s532 + $0x2f0] sm:$0xff] %vm544, 0.0
        %896 = vst.msk [vmem:[%s532 + $0x2f8] sm:$0xff] %vm544, 0.0
        %897 = vst.msk [vmem:[%s532 + $0x300] sm:$0xff] %vm544, 0.0
        %898 = vst.msk [vmem:[%s532 + $0x308] sm:$0xff] %vm544, 0.0
        %899 = vst.msk [vmem:[%s532 + $0x310] sm:$0xff] %vm544, 0.0
        %900 = vst.msk [vmem:[%s532 + $0x318] sm:$0xff] %vm544, 0.0
        %901 = vst.msk [vmem:[%s532 + $0x320] sm:$0xff] %vm544, 0.0
        %902 = vst.msk [vmem:[%s532 + $0x328] sm:$0xff] %vm544, 0.0
        %903 = vst.msk [vmem:[%s532 + $0x330] sm:$0xff] %vm544, 0.0
        %904 = vst.msk [vmem:[%s532 + $0x338] sm:$0xff] %vm544, 0.0
        %905 = vst.msk [vmem:[%s532 + $0x340] sm:$0xff] %vm544, 0.0
        %906 = vst.msk [vmem:[%s532 + $0x348] sm:$0xff] %vm544, 0.0
        %907 = vst.msk [vmem:[%s532 + $0x350] sm:$0xff] %vm544, 0.0
        %908 = vst.msk [vmem:[%s532 + $0x358] sm:$0xff] %vm544, 0.0
        %909 = vst.msk [vmem:[%s532 + $0x360] sm:$0xff] %vm544, 0.0
        %910 = vst.msk [vmem:[%s532 + $0x368] sm:$0xff] %vm544, 0.0
        %911 = vst.msk [vmem:[%s532 + $0x370] sm:$0xff] %vm544, 0.0
        %912 = vst.msk [vmem:[%s532 + $0x378] sm:$0xff] %vm544, 0.0
        %913 = vst.msk [vmem:[%s532 + $0x380] sm:$0xff] %vm544, 0.0
        %914 = vst.msk [vmem:[%s532 + $0x388] sm:$0xff] %vm544, 0.0
        %915 = vst.msk [vmem:[%s532 + $0x390] sm:$0xff] %vm544, 0.0
        %916 = vst.msk [vmem:[%s532 + $0x398] sm:$0xff] %vm544, 0.0
        %917 = vst.msk [vmem:[%s532 + $0x3a0] sm:$0xff] %vm544, 0.0
        %918 = vst.msk [vmem:[%s532 + $0x3a8] sm:$0xff] %vm544, 0.0
        %919 = vst.msk [vmem:[%s532 + $0x3b0] sm:$0xff] %vm544, 0.0
        %920 = vst.msk [vmem:[%s532 + $0x3b8] sm:$0xff] %vm544, 0.0
        %921 = vst.msk [vmem:[%s532 + $0x3c0] sm:$0xff] %vm544, 0.0
        %922 = vst.msk [vmem:[%s532 + $0x3c8] sm:$0xff] %vm544, 0.0
        %923 = vst.msk [vmem:[%s532 + $0x3d0] sm:$0xff] %vm544, 0.0
        %924 = vst.msk [vmem:[%s532 + $0x3d8] sm:$0xff] %vm544, 0.0
        %925 = vst.msk [vmem:[%s532 + $0x3e0] sm:$0xff] %vm544, 0.0
        %926 = vst.msk [vmem:[%s532 + $0x3e8] sm:$0xff] %vm544, 0.0
        %927 = vst.msk [vmem:[%s532 + $0x3f0] sm:$0xff] %vm544, 0.0
        %928 = vst.msk [vmem:[%s532 + $0x3f8] sm:$0xff] %vm544, 0.0
        %929 = vst.msk [vmem:[%s538] sm:$0xff] %vm544, 0.0
        %930 = vst.msk [vmem:[%s538 + $0x8] sm:$0xff] %vm544, 0.0
        %931 = vst.msk [vmem:[%s538 + $0x10] sm:$0xff] %vm544, 0.0
        %932 = vst.msk [vmem:[%s538 + $0x18] sm:$0xff] %vm544, 0.0
        %933 = vst.msk [vmem:[%s538 + $0x20] sm:$0xff] %vm544, 0.0
        %934 = vst.msk [vmem:[%s538 + $0x28] sm:$0xff] %vm544, 0.0
        %935 = vst.msk [vmem:[%s538 + $0x30] sm:$0xff] %vm544, 0.0
        %936 = vst.msk [vmem:[%s538 + $0x38] sm:$0xff] %vm544, 0.0
        %937 = vst.msk [vmem:[%s538 + $0x40] sm:$0xff] %vm544, 0.0
        %938 = vst.msk [vmem:[%s538 + $0x48] sm:$0xff] %vm544, 0.0
        %939 = vst.msk [vmem:[%s538 + $0x50] sm:$0xff] %vm544, 0.0
        %940 = vst.msk [vmem:[%s538 + $0x58] sm:$0xff] %vm544, 0.0
        %941 = vst.msk [vmem:[%s538 + $0x60] sm:$0xff] %vm544, 0.0
        %942 = vst.msk [vmem:[%s538 + $0x68] sm:$0xff] %vm544, 0.0
        %943 = vst.msk [vmem:[%s538 + $0x70] sm:$0xff] %vm544, 0.0
        %944 = vst.msk [vmem:[%s538 + $0x78] sm:$0xff] %vm544, 0.0
        %945 = vst.msk [vmem:[%s538 + $0x80] sm:$0xff] %vm544, 0.0
        %946 = vst.msk [vmem:[%s538 + $0x88] sm:$0xff] %vm544, 0.0
        %947 = vst.msk [vmem:[%s538 + $0x90] sm:$0xff] %vm544, 0.0
        %948 = vst.msk [vmem:[%s538 + $0x98] sm:$0xff] %vm544, 0.0
        %949 = vst.msk [vmem:[%s538 + $0xa0] sm:$0xff] %vm544, 0.0
        %950 = vst.msk [vmem:[%s538 + $0xa8] sm:$0xff] %vm544, 0.0
        %951 = vst.msk [vmem:[%s538 + $0xb0] sm:$0xff] %vm544, 0.0
        %952 = vst.msk [vmem:[%s538 + $0xb8] sm:$0xff] %vm544, 0.0
        %953 = vst.msk [vmem:[%s538 + $0xc0] sm:$0xff] %vm544, 0.0
        %954 = vst.msk [vmem:[%s538 + $0xc8] sm:$0xff] %vm544, 0.0
        %955 = vst.msk [vmem:[%s538 + $0xd0] sm:$0xff] %vm544, 0.0
        %956 = vst.msk [vmem:[%s538 + $0xd8] sm:$0xff] %vm544, 0.0
        %957 = vst.msk [vmem:[%s538 + $0xe0] sm:$0xff] %vm544, 0.0
        %958 = vst.msk [vmem:[%s538 + $0xe8] sm:$0xff] %vm544, 0.0
        %959 = vst.msk [vmem:[%s538 + $0xf0] sm:$0xff] %vm544, 0.0
        %960 = vst.msk [vmem:[%s538 + $0xf8] sm:$0xff] %vm544, 0.0
        %961 = vst.msk [vmem:[%s538 + $0x100] sm:$0xff] %vm544, 0.0
        %962 = vst.msk [vmem:[%s538 + $0x108] sm:$0xff] %vm544, 0.0
        %963 = vst.msk [vmem:[%s538 + $0x110] sm:$0xff] %vm544, 0.0
        %964 = vst.msk [vmem:[%s538 + $0x118] sm:$0xff] %vm544, 0.0
        %965 = vst.msk [vmem:[%s538 + $0x120] sm:$0xff] %vm544, 0.0
        %966 = vst.msk [vmem:[%s538 + $0x128] sm:$0xff] %vm544, 0.0
        %967 = vst.msk [vmem:[%s538 + $0x130] sm:$0xff] %vm544, 0.0
        %968 = vst.msk [vmem:[%s538 + $0x138] sm:$0xff] %vm544, 0.0
        %969 = vst.msk [vmem:[%s538 + $0x140] sm:$0xff] %vm544, 0.0
        %970 = vst.msk [vmem:[%s538 + $0x148] sm:$0xff] %vm544, 0.0
        %971 = vst.msk [vmem:[%s538 + $0x150] sm:$0xff] %vm544, 0.0
        %972 = vst.msk [vmem:[%s538 + $0x158] sm:$0xff] %vm544, 0.0
        %973 = vst.msk [vmem:[%s538 + $0x160] sm:$0xff] %vm544, 0.0
        %974 = vst.msk [vmem:[%s538 + $0x168] sm:$0xff] %vm544, 0.0
        %975 = vst.msk [vmem:[%s538 + $0x170] sm:$0xff] %vm544, 0.0
        %976 = vst.msk [vmem:[%s538 + $0x178] sm:$0xff] %vm544, 0.0
        %977 = vst.msk [vmem:[%s538 + $0x180] sm:$0xff] %vm544, 0.0
        %978 = vst.msk [vmem:[%s538 + $0x188] sm:$0xff] %vm544, 0.0
        %979 = vst.msk [vmem:[%s538 + $0x190] sm:$0xff] %vm544, 0.0
        %980 = vst.msk [vmem:[%s538 + $0x198] sm:$0xff] %vm544, 0.0
        %981 = vst.msk [vmem:[%s538 + $0x1a0] sm:$0xff] %vm544, 0.0
        %982 = vst.msk [vmem:[%s538 + $0x1a8] sm:$0xff] %vm544, 0.0
        %983 = vst.msk [vmem:[%s538 + $0x1b0] sm:$0xff] %vm544, 0.0
        %984 = vst.msk [vmem:[%s538 + $0x1b8] sm:$0xff] %vm544, 0.0
        %985 = vst.msk [vmem:[%s538 + $0x1c0] sm:$0xff] %vm544, 0.0
        %986 = vst.msk [vmem:[%s538 + $0x1c8] sm:$0xff] %vm544, 0.0
        %987 = vst.msk [vmem:[%s538 + $0x1d0] sm:$0xff] %vm544, 0.0
        %988 = vst.msk [vmem:[%s538 + $0x1d8] sm:$0xff] %vm544, 0.0
        %989 = vst.msk [vmem:[%s538 + $0x1e0] sm:$0xff] %vm544, 0.0
        %990 = vst.msk [vmem:[%s538 + $0x1e8] sm:$0xff] %vm544, 0.0
        %991 = vst.msk [vmem:[%s538 + $0x1f0] sm:$0xff] %vm544, 0.0
        %992 = vst.msk [vmem:[%s538 + $0x1f8] sm:$0xff] %vm544, 0.0
        %993 = vst.msk [vmem:[%s538 + $0x200] sm:$0xff] %vm544, 0.0
        %994 = vst.msk [vmem:[%s538 + $0x208] sm:$0xff] %vm544, 0.0
        %995 = vst.msk [vmem:[%s538 + $0x210] sm:$0xff] %vm544, 0.0
        %996 = vst.msk [vmem:[%s538 + $0x218] sm:$0xff] %vm544, 0.0
        %997 = vst.msk [vmem:[%s538 + $0x220] sm:$0xff] %vm544, 0.0
        %998 = vst.msk [vmem:[%s538 + $0x228] sm:$0xff] %vm544, 0.0
        %999 = vst.msk [vmem:[%s538 + $0x230] sm:$0xff] %vm544, 0.0
        %1000 = vst.msk [vmem:[%s538 + $0x238] sm:$0xff] %vm544, 0.0
        %1001 = vst.msk [vmem:[%s538 + $0x240] sm:$0xff] %vm544, 0.0
        %1002 = vst.msk [vmem:[%s538 + $0x248] sm:$0xff] %vm544, 0.0
        %1003 = vst.msk [vmem:[%s538 + $0x250] sm:$0xff] %vm544, 0.0
        %1004 = vst.msk [vmem:[%s538 + $0x258] sm:$0xff] %vm544, 0.0
        %1005 = vst.msk [vmem:[%s538 + $0x260] sm:$0xff] %vm544, 0.0
        %1006 = vst.msk [vmem:[%s538 + $0x268] sm:$0xff] %vm544, 0.0
        %1007 = vst.msk [vmem:[%s538 + $0x270] sm:$0xff] %vm544, 0.0
        %1008 = vst.msk [vmem:[%s538 + $0x278] sm:$0xff] %vm544, 0.0
        %1009 = vst.msk [vmem:[%s538 + $0x280] sm:$0xff] %vm544, 0.0
        %1010 = vst.msk [vmem:[%s538 + $0x288] sm:$0xff] %vm544, 0.0
        %1011 = vst.msk [vmem:[%s538 + $0x290] sm:$0xff] %vm544, 0.0
        %1012 = vst.msk [vmem:[%s538 + $0x298] sm:$0xff] %vm544, 0.0
        %1013 = vst.msk [vmem:[%s538 + $0x2a0] sm:$0xff] %vm544, 0.0
        %1014 = vst.msk [vmem:[%s538 + $0x2a8] sm:$0xff] %vm544, 0.0
        %1015 = vst.msk [vmem:[%s538 + $0x2b0] sm:$0xff] %vm544, 0.0
        %1016 = vst.msk [vmem:[%s538 + $0x2b8] sm:$0xff] %vm544, 0.0
        %1017 = vst.msk [vmem:[%s538 + $0x2c0] sm:$0xff] %vm544, 0.0
        %1018 = vst.msk [vmem:[%s538 + $0x2c8] sm:$0xff] %vm544, 0.0
        %1019 = vst.msk [vmem:[%s538 + $0x2d0] sm:$0xff] %vm544, 0.0
        %1020 = vst.msk [vmem:[%s538 + $0x2d8] sm:$0xff] %vm544, 0.0
        %1021 = vst.msk [vmem:[%s538 + $0x2e0] sm:$0xff] %vm544, 0.0
        %1022 = vst.msk [vmem:[%s538 + $0x2e8] sm:$0xff] %vm544, 0.0
        %1023 = vst.msk [vmem:[%s538 + $0x2f0] sm:$0xff] %vm544, 0.0
        %1024 = vst.msk [vmem:[%s538 + $0x2f8] sm:$0xff] %vm544, 0.0
        %1025 = vst.msk [vmem:[%s538 + $0x300] sm:$0xff] %vm544, 0.0
        %1026 = vst.msk [vmem:[%s538 + $0x308] sm:$0xff] %vm544, 0.0
        %1027 = vst.msk [vmem:[%s538 + $0x310] sm:$0xff] %vm544, 0.0
        %1028 = vst.msk [vmem:[%s538 + $0x318] sm:$0xff] %vm544, 0.0
        %1029 = vst.msk [vmem:[%s538 + $0x320] sm:$0xff] %vm544, 0.0
        %1030 = vst.msk [vmem:[%s538 + $0x328] sm:$0xff] %vm544, 0.0
        %1031 = vst.msk [vmem:[%s538 + $0x330] sm:$0xff] %vm544, 0.0
        %1032 = vst.msk [vmem:[%s538 + $0x338] sm:$0xff] %vm544, 0.0
        %1033 = vst.msk [vmem:[%s538 + $0x340] sm:$0xff] %vm544, 0.0
        %1034 = vst.msk [vmem:[%s538 + $0x348] sm:$0xff] %vm544, 0.0
        %1035 = vst.msk [vmem:[%s538 + $0x350] sm:$0xff] %vm544, 0.0
        %1036 = vst.msk [vmem:[%s538 + $0x358] sm:$0xff] %vm544, 0.0
        %1037 = vst.msk [vmem:[%s538 + $0x360] sm:$0xff] %vm544, 0.0
        %1038 = vst.msk [vmem:[%s538 + $0x368] sm:$0xff] %vm544, 0.0
        %1039 = vst.msk [vmem:[%s538 + $0x370] sm:$0xff] %vm544, 0.0
        %1040 = vst.msk [vmem:[%s538 + $0x378] sm:$0xff] %vm544, 0.0
        %1041 = vst.msk [vmem:[%s538 + $0x380] sm:$0xff] %vm544, 0.0
        %1042 = vst.msk [vmem:[%s538 + $0x388] sm:$0xff] %vm544, 0.0
        %1043 = vst.msk [vmem:[%s538 + $0x390] sm:$0xff] %vm544, 0.0
        %1044 = vst.msk [vmem:[%s538 + $0x398] sm:$0xff] %vm544, 0.0
        %1045 = vst.msk [vmem:[%s538 + $0x3a0] sm:$0xff] %vm544, 0.0
        %1046 = vst.msk [vmem:[%s538 + $0x3a8] sm:$0xff] %vm544, 0.0
        %1047 = vst.msk [vmem:[%s538 + $0x3b0] sm:$0xff] %vm544, 0.0
        %1048 = vst.msk [vmem:[%s538 + $0x3b8] sm:$0xff] %vm544, 0.0
        %1049 = vst.msk [vmem:[%s538 + $0x3c0] sm:$0xff] %vm544, 0.0
        %1050 = vst.msk [vmem:[%s538 + $0x3c8] sm:$0xff] %vm544, 0.0
        %1051 = vst.msk [vmem:[%s538 + $0x3d0] sm:$0xff] %vm544, 0.0
        %1052 = vst.msk [vmem:[%s538 + $0x3d8] sm:$0xff] %vm544, 0.0
        %1053 = vst.msk [vmem:[%s538 + $0x3e0] sm:$0xff] %vm544, 0.0
        %1054 = vst.msk [vmem:[%s538 + $0x3e8] sm:$0xff] %vm544, 0.0
        %1055 = vst.msk [vmem:[%s538 + $0x3f0] sm:$0xff] %vm544, 0.0
        %1056 = vst.msk [vmem:[%s538 + $0x3f8] sm:$0xff] %vm544, 0.0
      $region48: #{_satnerf_terms_pallas.1} parent=43 // pred_fallthru
        _
      %v1057 = vld [vmem:[%s481] sm:$0xff]
      %v1058 = vld [vmem:[%s481 + $0x8] sm:$0xff]
      %v1059 = vld [vmem:[%s481 + $0x10] sm:$0xff]
      %v1060 = vld [vmem:[%s481 + $0x18] sm:$0xff]
      %v1061 = vld [vmem:[%s481 + $0x20] sm:$0xff]
      %v1062 = vld [vmem:[%s481 + $0x28] sm:$0xff]
      %v1063 = vld [vmem:[%s481 + $0x30] sm:$0xff]
      %v1064 = vld [vmem:[%s481 + $0x38] sm:$0xff]
      %v1065 = vld [vmem:[%s481 + $0x40] sm:$0xff]
      %v1066 = vld [vmem:[%s481 + $0x48] sm:$0xff]
      %v1067 = vld [vmem:[%s481 + $0x50] sm:$0xff]
      %v1068 = vld [vmem:[%s481 + $0x58] sm:$0xff]
      %v1069 = vld [vmem:[%s481 + $0x60] sm:$0xff]
      %v1070 = vld [vmem:[%s481 + $0x68] sm:$0xff]
      %v1071 = vld [vmem:[%s481 + $0x70] sm:$0xff]
      %v1072 = vld [vmem:[%s481 + $0x78] sm:$0xff]
      %v1073 = vld [vmem:[%s481 + $0x80] sm:$0xff]
      %v1074 = vld [vmem:[%s481 + $0x88] sm:$0xff]
      %v1075 = vld [vmem:[%s481 + $0x90] sm:$0xff]
      %v1076 = vld [vmem:[%s481 + $0x98] sm:$0xff]
      %v1077 = vld [vmem:[%s481 + $0xa0] sm:$0xff]
      %v1078 = vld [vmem:[%s481 + $0xa8] sm:$0xff]
      %v1079 = vld [vmem:[%s481 + $0xb0] sm:$0xff]
      %v1080 = vld [vmem:[%s481 + $0xb8] sm:$0xff]
      %v1081 = vld [vmem:[%s481 + $0xc0] sm:$0xff]
      %v1082 = vld [vmem:[%s481 + $0xc8] sm:$0xff]
      %v1083 = vld [vmem:[%s481 + $0xd0] sm:$0xff]
      %v1084 = vld [vmem:[%s481 + $0xd8] sm:$0xff]
      %v1085 = vld [vmem:[%s481 + $0xe0] sm:$0xff]
      %v1086 = vld [vmem:[%s481 + $0xe8] sm:$0xff]
      %v1087 = vld [vmem:[%s481 + $0xf0] sm:$0xff]
      %v1088 = vld [vmem:[%s481 + $0xf8] sm:$0xff]
      %v1089 = vld [vmem:[%s481 + $0x100] sm:$0xff]
      %v1090 = vld [vmem:[%s481 + $0x108] sm:$0xff]
      %v1091 = vld [vmem:[%s481 + $0x110] sm:$0xff]
      %v1092 = vld [vmem:[%s481 + $0x118] sm:$0xff]
      %v1093 = vld [vmem:[%s481 + $0x120] sm:$0xff]
      %v1094 = vld [vmem:[%s481 + $0x128] sm:$0xff]
      %v1095 = vld [vmem:[%s481 + $0x130] sm:$0xff]
      %v1096 = vld [vmem:[%s481 + $0x138] sm:$0xff]
      %v1097 = vld [vmem:[%s481 + $0x140] sm:$0xff]
      %v1098 = vld [vmem:[%s481 + $0x148] sm:$0xff]
      %v1099 = vld [vmem:[%s481 + $0x150] sm:$0xff]
      %v1100 = vld [vmem:[%s481 + $0x158] sm:$0xff]
      %v1101 = vld [vmem:[%s481 + $0x160] sm:$0xff]
      %v1102 = vld [vmem:[%s481 + $0x168] sm:$0xff]
      %v1103 = vld [vmem:[%s481 + $0x170] sm:$0xff]
      %v1104 = vld [vmem:[%s481 + $0x178] sm:$0xff]
      %v1105 = vld [vmem:[%s481 + $0x180] sm:$0xff]
      %v1106 = vld [vmem:[%s481 + $0x188] sm:$0xff]
      %v1107 = vld [vmem:[%s481 + $0x190] sm:$0xff]
      %v1108 = vld [vmem:[%s481 + $0x198] sm:$0xff]
      %v1109 = vld [vmem:[%s481 + $0x1a0] sm:$0xff]
      %v1110 = vld [vmem:[%s481 + $0x1a8] sm:$0xff]
      %v1111 = vld [vmem:[%s481 + $0x1b0] sm:$0xff]
      %v1112 = vld [vmem:[%s481 + $0x1b8] sm:$0xff]
      %v1113 = vld [vmem:[%s481 + $0x1c0] sm:$0xff]
      %v1114 = vld [vmem:[%s481 + $0x1c8] sm:$0xff]
      %v1115 = vld [vmem:[%s481 + $0x1d0] sm:$0xff]
      %v1116 = vld [vmem:[%s481 + $0x1d8] sm:$0xff]
      %v1117 = vld [vmem:[%s481 + $0x1e0] sm:$0xff]
      %v1118 = vld [vmem:[%s481 + $0x1e8] sm:$0xff]
      %v1119 = vld [vmem:[%s481 + $0x1f0] sm:$0xff]
      %v1120 = vld [vmem:[%s481 + $0x1f8] sm:$0xff]
      %v1121 = vld [vmem:[%s481 + $0x200] sm:$0xff]
      %v1122 = vld [vmem:[%s481 + $0x208] sm:$0xff]
      %v1123 = vld [vmem:[%s481 + $0x210] sm:$0xff]
      %v1124 = vld [vmem:[%s481 + $0x218] sm:$0xff]
      %v1125 = vld [vmem:[%s481 + $0x220] sm:$0xff]
      %v1126 = vld [vmem:[%s481 + $0x228] sm:$0xff]
      %v1127 = vld [vmem:[%s481 + $0x230] sm:$0xff]
      %v1128 = vld [vmem:[%s481 + $0x238] sm:$0xff]
      %v1129 = vld [vmem:[%s481 + $0x240] sm:$0xff]
      %v1130 = vld [vmem:[%s481 + $0x248] sm:$0xff]
      %v1131 = vld [vmem:[%s481 + $0x250] sm:$0xff]
      %v1132 = vld [vmem:[%s481 + $0x258] sm:$0xff]
      %v1133 = vld [vmem:[%s481 + $0x260] sm:$0xff]
      %v1134 = vld [vmem:[%s481 + $0x268] sm:$0xff]
      %v1135 = vld [vmem:[%s481 + $0x270] sm:$0xff]
      %v1136 = vld [vmem:[%s481 + $0x278] sm:$0xff]
      %v1137 = vld [vmem:[%s481 + $0x280] sm:$0xff]
      %v1138 = vld [vmem:[%s481 + $0x288] sm:$0xff]
      %v1139 = vld [vmem:[%s481 + $0x290] sm:$0xff]
      %v1140 = vld [vmem:[%s481 + $0x298] sm:$0xff]
      %v1141 = vld [vmem:[%s481 + $0x2a0] sm:$0xff]
      %v1142 = vld [vmem:[%s481 + $0x2a8] sm:$0xff]
      %v1143 = vld [vmem:[%s481 + $0x2b0] sm:$0xff]
      %v1144 = vld [vmem:[%s481 + $0x2b8] sm:$0xff]
      %v1145 = vld [vmem:[%s481 + $0x2c0] sm:$0xff]
      %v1146 = vld [vmem:[%s481 + $0x2c8] sm:$0xff]
      %v1147 = vld [vmem:[%s481 + $0x2d0] sm:$0xff]
      %v1148 = vld [vmem:[%s481 + $0x2d8] sm:$0xff]
      %v1149 = vld [vmem:[%s481 + $0x2e0] sm:$0xff]
      %v1150 = vld [vmem:[%s481 + $0x2e8] sm:$0xff]
      %v1151 = vld [vmem:[%s481 + $0x2f0] sm:$0xff]
      %v1152 = vld [vmem:[%s481 + $0x2f8] sm:$0xff]
      %v1153 = vld [vmem:[%s481 + $0x300] sm:$0xff]
      %v1154 = vld [vmem:[%s481 + $0x308] sm:$0xff]
      %v1155 = vld [vmem:[%s481 + $0x310] sm:$0xff]
      %v1156 = vld [vmem:[%s481 + $0x318] sm:$0xff]
      %v1157 = vld [vmem:[%s481 + $0x320] sm:$0xff]
      %v1158 = vld [vmem:[%s481 + $0x328] sm:$0xff]
      %v1159 = vld [vmem:[%s481 + $0x330] sm:$0xff]
      %v1160 = vld [vmem:[%s481 + $0x338] sm:$0xff]
      %v1161 = vld [vmem:[%s481 + $0x340] sm:$0xff]
      %v1162 = vld [vmem:[%s481 + $0x348] sm:$0xff]
      %v1163 = vld [vmem:[%s481 + $0x350] sm:$0xff]
      %v1164 = vld [vmem:[%s481 + $0x358] sm:$0xff]
      %v1165 = vld [vmem:[%s481 + $0x360] sm:$0xff]
      %v1166 = vld [vmem:[%s481 + $0x368] sm:$0xff]
      %v1167 = vld [vmem:[%s481 + $0x370] sm:$0xff]
      %v1168 = vld [vmem:[%s481 + $0x378] sm:$0xff]
      %v1169 = vld [vmem:[%s481 + $0x380] sm:$0xff]
      %v1170 = vld [vmem:[%s481 + $0x388] sm:$0xff]
      %v1171 = vld [vmem:[%s481 + $0x390] sm:$0xff]
      %v1172 = vld [vmem:[%s481 + $0x398] sm:$0xff]
      %v1173 = vld [vmem:[%s481 + $0x3a0] sm:$0xff]
      %v1174 = vld [vmem:[%s481 + $0x3a8] sm:$0xff]
      %v1175 = vld [vmem:[%s481 + $0x3b0] sm:$0xff]
      %v1176 = vld [vmem:[%s481 + $0x3b8] sm:$0xff]
      %v1177 = vld [vmem:[%s481 + $0x3c0] sm:$0xff]
      %v1178 = vld [vmem:[%s481 + $0x3c8] sm:$0xff]
      %v1179 = vld [vmem:[%s481 + $0x3d0] sm:$0xff]
      %v1180 = vld [vmem:[%s481 + $0x3d8] sm:$0xff]
      %v1181 = vld [vmem:[%s481 + $0x3e0] sm:$0xff]
      %v1182 = vld [vmem:[%s481 + $0x3e8] sm:$0xff]
      %v1183 = vld [vmem:[%s481 + $0x3f0] sm:$0xff]
      %v1184 = vld [vmem:[%s481 + $0x3f8] sm:$0xff]
      %v1185 = vld [vmem:[%s497] sm:$0xff]
      %v1186 = vld [vmem:[%s497 + $0x8] sm:$0xff]
      %v1187 = vld [vmem:[%s497 + $0x10] sm:$0xff]
      %v1188 = vld [vmem:[%s497 + $0x18] sm:$0xff]
      %v1189 = vld [vmem:[%s497 + $0x20] sm:$0xff]
      %v1190 = vld [vmem:[%s497 + $0x28] sm:$0xff]
      %v1191 = vld [vmem:[%s497 + $0x30] sm:$0xff]
      %v1192 = vld [vmem:[%s497 + $0x38] sm:$0xff]
      %v1193 = vld [vmem:[%s497 + $0x40] sm:$0xff]
      %v1194 = vld [vmem:[%s497 + $0x48] sm:$0xff]
      %v1195 = vld [vmem:[%s497 + $0x50] sm:$0xff]
      %v1196 = vld [vmem:[%s497 + $0x58] sm:$0xff]
      %v1197 = vld [vmem:[%s497 + $0x60] sm:$0xff]
      %v1198 = vld [vmem:[%s497 + $0x68] sm:$0xff]
      %v1199 = vld [vmem:[%s497 + $0x70] sm:$0xff]
      %v1200 = vld [vmem:[%s497 + $0x78] sm:$0xff]
      %v1201 = vld [vmem:[%s497 + $0x80] sm:$0xff]
      %v1202 = vld [vmem:[%s497 + $0x88] sm:$0xff]
      %v1203 = vld [vmem:[%s497 + $0x90] sm:$0xff]
      %v1204 = vld [vmem:[%s497 + $0x98] sm:$0xff]
      %v1205 = vld [vmem:[%s497 + $0xa0] sm:$0xff]
      %v1206 = vld [vmem:[%s497 + $0xa8] sm:$0xff]
      %v1207 = vld [vmem:[%s497 + $0xb0] sm:$0xff]
      %v1208 = vld [vmem:[%s497 + $0xb8] sm:$0xff]
      %v1209 = vld [vmem:[%s497 + $0xc0] sm:$0xff]
      %v1210 = vld [vmem:[%s497 + $0xc8] sm:$0xff]
      %v1211 = vld [vmem:[%s497 + $0xd0] sm:$0xff]
      %v1212 = vld [vmem:[%s497 + $0xd8] sm:$0xff]
      %v1213 = vld [vmem:[%s497 + $0xe0] sm:$0xff]
      %v1214 = vld [vmem:[%s497 + $0xe8] sm:$0xff]
      %v1215 = vld [vmem:[%s497 + $0xf0] sm:$0xff]
      %v1216 = vld [vmem:[%s497 + $0xf8] sm:$0xff]
      %v1217 = vld [vmem:[%s497 + $0x100] sm:$0xff]
      %v1218 = vld [vmem:[%s497 + $0x108] sm:$0xff]
      %v1219 = vld [vmem:[%s497 + $0x110] sm:$0xff]
      %v1220 = vld [vmem:[%s497 + $0x118] sm:$0xff]
      %v1221 = vld [vmem:[%s497 + $0x120] sm:$0xff]
      %v1222 = vld [vmem:[%s497 + $0x128] sm:$0xff]
      %v1223 = vld [vmem:[%s497 + $0x130] sm:$0xff]
      %v1224 = vld [vmem:[%s497 + $0x138] sm:$0xff]
      %v1225 = vld [vmem:[%s497 + $0x140] sm:$0xff]
      %v1226 = vld [vmem:[%s497 + $0x148] sm:$0xff]
      %v1227 = vld [vmem:[%s497 + $0x150] sm:$0xff]
      %v1228 = vld [vmem:[%s497 + $0x158] sm:$0xff]
      %v1229 = vld [vmem:[%s497 + $0x160] sm:$0xff]
      %v1230 = vld [vmem:[%s497 + $0x168] sm:$0xff]
      %v1231 = vld [vmem:[%s497 + $0x170] sm:$0xff]
      %v1232 = vld [vmem:[%s497 + $0x178] sm:$0xff]
      %v1233 = vld [vmem:[%s497 + $0x180] sm:$0xff]
      %v1234 = vld [vmem:[%s497 + $0x188] sm:$0xff]
      %v1235 = vld [vmem:[%s497 + $0x190] sm:$0xff]
      %v1236 = vld [vmem:[%s497 + $0x198] sm:$0xff]
      %v1237 = vld [vmem:[%s497 + $0x1a0] sm:$0xff]
      %v1238 = vld [vmem:[%s497 + $0x1a8] sm:$0xff]
      %v1239 = vld [vmem:[%s497 + $0x1b0] sm:$0xff]
      %v1240 = vld [vmem:[%s497 + $0x1b8] sm:$0xff]
      %v1241 = vld [vmem:[%s497 + $0x1c0] sm:$0xff]
      %v1242 = vld [vmem:[%s497 + $0x1c8] sm:$0xff]
      %v1243 = vld [vmem:[%s497 + $0x1d0] sm:$0xff]
      %v1244 = vld [vmem:[%s497 + $0x1d8] sm:$0xff]
      %v1245 = vld [vmem:[%s497 + $0x1e0] sm:$0xff]
      %v1246 = vld [vmem:[%s497 + $0x1e8] sm:$0xff]
      %v1247 = vld [vmem:[%s497 + $0x1f0] sm:$0xff]
      %v1248 = vld [vmem:[%s497 + $0x1f8] sm:$0xff]
      %v1249 = vld [vmem:[%s497 + $0x200] sm:$0xff]
      %v1250 = vld [vmem:[%s497 + $0x208] sm:$0xff]
      %v1251 = vld [vmem:[%s497 + $0x210] sm:$0xff]
      %v1252 = vld [vmem:[%s497 + $0x218] sm:$0xff]
      %v1253 = vld [vmem:[%s497 + $0x220] sm:$0xff]
      %v1254 = vld [vmem:[%s497 + $0x228] sm:$0xff]
      %v1255 = vld [vmem:[%s497 + $0x230] sm:$0xff]
      %v1256 = vld [vmem:[%s497 + $0x238] sm:$0xff]
      %v1257 = vld [vmem:[%s497 + $0x240] sm:$0xff]
      %v1258 = vld [vmem:[%s497 + $0x248] sm:$0xff]
      %v1259 = vld [vmem:[%s497 + $0x250] sm:$0xff]
      %v1260 = vld [vmem:[%s497 + $0x258] sm:$0xff]
      %v1261 = vld [vmem:[%s497 + $0x260] sm:$0xff]
      %v1262 = vld [vmem:[%s497 + $0x268] sm:$0xff]
      %v1263 = vld [vmem:[%s497 + $0x270] sm:$0xff]
      %v1264 = vld [vmem:[%s497 + $0x278] sm:$0xff]
      %v1265 = vld [vmem:[%s497 + $0x280] sm:$0xff]
      %v1266 = vld [vmem:[%s497 + $0x288] sm:$0xff]
      %v1267 = vld [vmem:[%s497 + $0x290] sm:$0xff]
      %v1268 = vld [vmem:[%s497 + $0x298] sm:$0xff]
      %v1269 = vld [vmem:[%s497 + $0x2a0] sm:$0xff]
      %v1270 = vld [vmem:[%s497 + $0x2a8] sm:$0xff]
      %v1271 = vld [vmem:[%s497 + $0x2b0] sm:$0xff]
      %v1272 = vld [vmem:[%s497 + $0x2b8] sm:$0xff]
      %v1273 = vld [vmem:[%s497 + $0x2c0] sm:$0xff]
      %v1274 = vld [vmem:[%s497 + $0x2c8] sm:$0xff]
      %v1275 = vld [vmem:[%s497 + $0x2d0] sm:$0xff]
      %v1276 = vld [vmem:[%s497 + $0x2d8] sm:$0xff]
      %v1277 = vld [vmem:[%s497 + $0x2e0] sm:$0xff]
      %v1278 = vld [vmem:[%s497 + $0x2e8] sm:$0xff]
      %v1279 = vld [vmem:[%s497 + $0x2f0] sm:$0xff]
      %v1280 = vld [vmem:[%s497 + $0x2f8] sm:$0xff]
      %v1281 = vld [vmem:[%s497 + $0x300] sm:$0xff]
      %v1282 = vld [vmem:[%s497 + $0x308] sm:$0xff]
      %v1283 = vld [vmem:[%s497 + $0x310] sm:$0xff]
      %v1284 = vld [vmem:[%s497 + $0x318] sm:$0xff]
      %v1285 = vld [vmem:[%s497 + $0x320] sm:$0xff]
      %v1286 = vld [vmem:[%s497 + $0x328] sm:$0xff]
      %v1287 = vld [vmem:[%s497 + $0x330] sm:$0xff]
      %v1288 = vld [vmem:[%s497 + $0x338] sm:$0xff]
      %v1289 = vld [vmem:[%s497 + $0x340] sm:$0xff]
      %v1290 = vld [vmem:[%s497 + $0x348] sm:$0xff]
      %v1291 = vld [vmem:[%s497 + $0x350] sm:$0xff]
      %v1292 = vld [vmem:[%s497 + $0x358] sm:$0xff]
      %v1293 = vld [vmem:[%s497 + $0x360] sm:$0xff]
      %v1294 = vld [vmem:[%s497 + $0x368] sm:$0xff]
      %v1295 = vld [vmem:[%s497 + $0x370] sm:$0xff]
      %v1296 = vld [vmem:[%s497 + $0x378] sm:$0xff]
      %v1297 = vld [vmem:[%s497 + $0x380] sm:$0xff]
      %v1298 = vld [vmem:[%s497 + $0x388] sm:$0xff]
      %v1299 = vld [vmem:[%s497 + $0x390] sm:$0xff]
      %v1300 = vld [vmem:[%s497 + $0x398] sm:$0xff]
      %v1301 = vld [vmem:[%s497 + $0x3a0] sm:$0xff]
      %v1302 = vld [vmem:[%s497 + $0x3a8] sm:$0xff]
      %v1303 = vld [vmem:[%s497 + $0x3b0] sm:$0xff]
      %v1304 = vld [vmem:[%s497 + $0x3b8] sm:$0xff]
      %v1305 = vld [vmem:[%s497 + $0x3c0] sm:$0xff]
      %v1306 = vld [vmem:[%s497 + $0x3c8] sm:$0xff]
      %v1307 = vld [vmem:[%s497 + $0x3d0] sm:$0xff]
      %v1308 = vld [vmem:[%s497 + $0x3d8] sm:$0xff]
      %v1309 = vld [vmem:[%s497 + $0x3e0] sm:$0xff]
      %v1310 = vld [vmem:[%s497 + $0x3e8] sm:$0xff]
      %v1311 = vld [vmem:[%s497 + $0x3f0] sm:$0xff]
      %v1312 = vld [vmem:[%s497 + $0x3f8] sm:$0xff]
      %v1313 = vld [vmem:[%s473] sm:$0xff]
      %v1314 = vld [vmem:[%s473 + $0x8] sm:$0xff]
      %v1315 = vld [vmem:[%s473 + $0x10] sm:$0xff]
      %v1316 = vld [vmem:[%s473 + $0x18] sm:$0xff]
      %v1317 = vld [vmem:[%s473 + $0x20] sm:$0xff]
      %v1318 = vld [vmem:[%s473 + $0x28] sm:$0xff]
      %v1319 = vld [vmem:[%s473 + $0x30] sm:$0xff]
      %v1320 = vld [vmem:[%s473 + $0x38] sm:$0xff]
      %v1321 = vld [vmem:[%s473 + $0x40] sm:$0xff]
      %v1322 = vld [vmem:[%s473 + $0x48] sm:$0xff]
      %v1323 = vld [vmem:[%s473 + $0x50] sm:$0xff]
      %v1324 = vld [vmem:[%s473 + $0x58] sm:$0xff]
      %v1325 = vld [vmem:[%s473 + $0x60] sm:$0xff]
      %v1326 = vld [vmem:[%s473 + $0x68] sm:$0xff]
      %v1327 = vld [vmem:[%s473 + $0x70] sm:$0xff]
      %v1328 = vld [vmem:[%s473 + $0x78] sm:$0xff]
      %v1329 = vld [vmem:[%s473 + $0x80] sm:$0xff]
      %v1330 = vld [vmem:[%s473 + $0x88] sm:$0xff]
      %v1331 = vld [vmem:[%s473 + $0x90] sm:$0xff]
      %v1332 = vld [vmem:[%s473 + $0x98] sm:$0xff]
      %v1333 = vld [vmem:[%s473 + $0xa0] sm:$0xff]
      %v1334 = vld [vmem:[%s473 + $0xa8] sm:$0xff]
      %v1335 = vld [vmem:[%s473 + $0xb0] sm:$0xff]
      %v1336 = vld [vmem:[%s473 + $0xb8] sm:$0xff]
      %v1337 = vld [vmem:[%s473 + $0xc0] sm:$0xff]
      %v1338 = vld [vmem:[%s473 + $0xc8] sm:$0xff]
      %v1339 = vld [vmem:[%s473 + $0xd0] sm:$0xff]
      %v1340 = vld [vmem:[%s473 + $0xd8] sm:$0xff]
      %v1341 = vld [vmem:[%s473 + $0xe0] sm:$0xff]
      %v1342 = vld [vmem:[%s473 + $0xe8] sm:$0xff]
      %v1343 = vld [vmem:[%s473 + $0xf0] sm:$0xff]
      %v1344 = vld [vmem:[%s473 + $0xf8] sm:$0xff]
      %v1345 = vld [vmem:[%s473 + $0x100] sm:$0xff]
      %v1346 = vld [vmem:[%s473 + $0x108] sm:$0xff]
      %v1347 = vld [vmem:[%s473 + $0x110] sm:$0xff]
      %v1348 = vld [vmem:[%s473 + $0x118] sm:$0xff]
      %v1349 = vld [vmem:[%s473 + $0x120] sm:$0xff]
      %v1350 = vld [vmem:[%s473 + $0x128] sm:$0xff]
      %v1351 = vld [vmem:[%s473 + $0x130] sm:$0xff]
      %v1352 = vld [vmem:[%s473 + $0x138] sm:$0xff]
      %v1353 = vld [vmem:[%s473 + $0x140] sm:$0xff]
      %v1354 = vld [vmem:[%s473 + $0x148] sm:$0xff]
      %v1355 = vld [vmem:[%s473 + $0x150] sm:$0xff]
      %v1356 = vld [vmem:[%s473 + $0x158] sm:$0xff]
      %v1357 = vld [vmem:[%s473 + $0x160] sm:$0xff]
      %v1358 = vld [vmem:[%s473 + $0x168] sm:$0xff]
      %v1359 = vld [vmem:[%s473 + $0x170] sm:$0xff]
      %v1360 = vld [vmem:[%s473 + $0x178] sm:$0xff]
      %v1361 = vld [vmem:[%s473 + $0x180] sm:$0xff]
      %v1362 = vld [vmem:[%s473 + $0x188] sm:$0xff]
      %v1363 = vld [vmem:[%s473 + $0x190] sm:$0xff]
      %v1364 = vld [vmem:[%s473 + $0x198] sm:$0xff]
      %v1365 = vld [vmem:[%s473 + $0x1a0] sm:$0xff]
      %v1366 = vld [vmem:[%s473 + $0x1a8] sm:$0xff]
      %v1367 = vld [vmem:[%s473 + $0x1b0] sm:$0xff]
      %v1368 = vld [vmem:[%s473 + $0x1b8] sm:$0xff]
      %v1369 = vld [vmem:[%s473 + $0x1c0] sm:$0xff]
      %v1370 = vld [vmem:[%s473 + $0x1c8] sm:$0xff]
      %v1371 = vld [vmem:[%s473 + $0x1d0] sm:$0xff]
      %v1372 = vld [vmem:[%s473 + $0x1d8] sm:$0xff]
      %v1373 = vld [vmem:[%s473 + $0x1e0] sm:$0xff]
      %v1374 = vld [vmem:[%s473 + $0x1e8] sm:$0xff]
      %v1375 = vld [vmem:[%s473 + $0x1f0] sm:$0xff]
      %v1376 = vld [vmem:[%s473 + $0x1f8] sm:$0xff]
      %v1377 = vld [vmem:[%s473 + $0x200] sm:$0xff]
      %v1378 = vld [vmem:[%s473 + $0x208] sm:$0xff]
      %v1379 = vld [vmem:[%s473 + $0x210] sm:$0xff]
      %v1380 = vld [vmem:[%s473 + $0x218] sm:$0xff]
      %v1381 = vld [vmem:[%s473 + $0x220] sm:$0xff]
      %v1382 = vld [vmem:[%s473 + $0x228] sm:$0xff]
      %v1383 = vld [vmem:[%s473 + $0x230] sm:$0xff]
      %v1384 = vld [vmem:[%s473 + $0x238] sm:$0xff]
      %v1385 = vld [vmem:[%s473 + $0x240] sm:$0xff]
      %v1386 = vld [vmem:[%s473 + $0x248] sm:$0xff]
      %v1387 = vld [vmem:[%s473 + $0x250] sm:$0xff]
      %v1388 = vld [vmem:[%s473 + $0x258] sm:$0xff]
      %v1389 = vld [vmem:[%s473 + $0x260] sm:$0xff]
      %v1390 = vld [vmem:[%s473 + $0x268] sm:$0xff]
      %v1391 = vld [vmem:[%s473 + $0x270] sm:$0xff]
      %v1392 = vld [vmem:[%s473 + $0x278] sm:$0xff]
      %v1393 = vld [vmem:[%s473 + $0x280] sm:$0xff]
      %v1394 = vld [vmem:[%s473 + $0x288] sm:$0xff]
      %v1395 = vld [vmem:[%s473 + $0x290] sm:$0xff]
      %v1396 = vld [vmem:[%s473 + $0x298] sm:$0xff]
      %v1397 = vld [vmem:[%s473 + $0x2a0] sm:$0xff]
      %v1398 = vld [vmem:[%s473 + $0x2a8] sm:$0xff]
      %v1399 = vld [vmem:[%s473 + $0x2b0] sm:$0xff]
      %v1400 = vld [vmem:[%s473 + $0x2b8] sm:$0xff]
      %v1401 = vld [vmem:[%s473 + $0x2c0] sm:$0xff]
      %v1402 = vld [vmem:[%s473 + $0x2c8] sm:$0xff]
      %v1403 = vld [vmem:[%s473 + $0x2d0] sm:$0xff]
      %v1404 = vld [vmem:[%s473 + $0x2d8] sm:$0xff]
      %v1405 = vld [vmem:[%s473 + $0x2e0] sm:$0xff]
      %v1406 = vld [vmem:[%s473 + $0x2e8] sm:$0xff]
      %v1407 = vld [vmem:[%s473 + $0x2f0] sm:$0xff]
      %v1408 = vld [vmem:[%s473 + $0x2f8] sm:$0xff]
      %v1409 = vld [vmem:[%s473 + $0x300] sm:$0xff]
      %v1410 = vld [vmem:[%s473 + $0x308] sm:$0xff]
      %v1411 = vld [vmem:[%s473 + $0x310] sm:$0xff]
      %v1412 = vld [vmem:[%s473 + $0x318] sm:$0xff]
      %v1413 = vld [vmem:[%s473 + $0x320] sm:$0xff]
      %v1414 = vld [vmem:[%s473 + $0x328] sm:$0xff]
      %v1415 = vld [vmem:[%s473 + $0x330] sm:$0xff]
      %v1416 = vld [vmem:[%s473 + $0x338] sm:$0xff]
      %v1417 = vld [vmem:[%s473 + $0x340] sm:$0xff]
      %v1418 = vld [vmem:[%s473 + $0x348] sm:$0xff]
      %v1419 = vld [vmem:[%s473 + $0x350] sm:$0xff]
      %v1420 = vld [vmem:[%s473 + $0x358] sm:$0xff]
      %v1421 = vld [vmem:[%s473 + $0x360] sm:$0xff]
      %v1422 = vld [vmem:[%s473 + $0x368] sm:$0xff]
      %v1423 = vld [vmem:[%s473 + $0x370] sm:$0xff]
      %v1424 = vld [vmem:[%s473 + $0x378] sm:$0xff]
      %v1425 = vld [vmem:[%s473 + $0x380] sm:$0xff]
      %v1426 = vld [vmem:[%s473 + $0x388] sm:$0xff]
      %v1427 = vld [vmem:[%s473 + $0x390] sm:$0xff]
      %v1428 = vld [vmem:[%s473 + $0x398] sm:$0xff]
      %v1429 = vld [vmem:[%s473 + $0x3a0] sm:$0xff]
      %v1430 = vld [vmem:[%s473 + $0x3a8] sm:$0xff]
      %v1431 = vld [vmem:[%s473 + $0x3b0] sm:$0xff]
      %v1432 = vld [vmem:[%s473 + $0x3b8] sm:$0xff]
      %v1433 = vld [vmem:[%s473 + $0x3c0] sm:$0xff]
      %v1434 = vld [vmem:[%s473 + $0x3c8] sm:$0xff]
      %v1435 = vld [vmem:[%s473 + $0x3d0] sm:$0xff]
      %v1436 = vld [vmem:[%s473 + $0x3d8] sm:$0xff]
      %v1437 = vld [vmem:[%s473 + $0x3e0] sm:$0xff]
      %v1438 = vld [vmem:[%s473 + $0x3e8] sm:$0xff]
      %v1439 = vld [vmem:[%s473 + $0x3f0] sm:$0xff]
      %v1440 = vld [vmem:[%s473 + $0x3f8] sm:$0xff]
      %v1441 = vmul.f32 %v1313, %v1057
      %v1442 = vmul.f32 %v1314, %v1058
      %v1443 = vmul.f32 %v1315, %v1059
      %v1444 = vmul.f32 %v1316, %v1060
      %v1445 = vmul.f32 %v1317, %v1061
      %v1446 = vmul.f32 %v1318, %v1062
      %v1447 = vmul.f32 %v1319, %v1063
      %v1448 = vmul.f32 %v1320, %v1064
      %v1449 = vmul.f32 %v1321, %v1065
      %v1450 = vmul.f32 %v1322, %v1066
      %v1451 = vmul.f32 %v1323, %v1067
      %v1452 = vmul.f32 %v1324, %v1068
      %v1453 = vmul.f32 %v1325, %v1069
      %v1454 = vmul.f32 %v1326, %v1070
      %v1455 = vmul.f32 %v1327, %v1071
      %v1456 = vmul.f32 %v1328, %v1072
      %v1457 = vmul.f32 %v1329, %v1073
      %v1458 = vmul.f32 %v1330, %v1074
      %v1459 = vmul.f32 %v1331, %v1075
      %v1460 = vmul.f32 %v1332, %v1076
      %v1461 = vmul.f32 %v1333, %v1077
      %v1462 = vmul.f32 %v1334, %v1078
      %v1463 = vmul.f32 %v1335, %v1079
      %v1464 = vmul.f32 %v1336, %v1080
      %v1465 = vmul.f32 %v1337, %v1081
      %v1466 = vmul.f32 %v1338, %v1082
      %v1467 = vmul.f32 %v1339, %v1083
      %v1468 = vmul.f32 %v1340, %v1084
      %v1469 = vmul.f32 %v1341, %v1085
      %v1470 = vmul.f32 %v1342, %v1086
      %v1471 = vmul.f32 %v1343, %v1087
      %v1472 = vmul.f32 %v1344, %v1088
      %v1473 = vmul.f32 %v1345, %v1089
      %v1474 = vmul.f32 %v1346, %v1090
      %v1475 = vmul.f32 %v1347, %v1091
      %v1476 = vmul.f32 %v1348, %v1092
      %v1477 = vmul.f32 %v1349, %v1093
      %v1478 = vmul.f32 %v1350, %v1094
      %v1479 = vmul.f32 %v1351, %v1095
      %v1480 = vmul.f32 %v1352, %v1096
      %v1481 = vmul.f32 %v1353, %v1097
      %v1482 = vmul.f32 %v1354, %v1098
      %v1483 = vmul.f32 %v1355, %v1099
      %v1484 = vmul.f32 %v1356, %v1100
      %v1485 = vmul.f32 %v1357, %v1101
      %v1486 = vmul.f32 %v1358, %v1102
      %v1487 = vmul.f32 %v1359, %v1103
      %v1488 = vmul.f32 %v1360, %v1104
      %v1489 = vmul.f32 %v1361, %v1105
      %v1490 = vmul.f32 %v1362, %v1106
      %v1491 = vmul.f32 %v1363, %v1107
      %v1492 = vmul.f32 %v1364, %v1108
      %v1493 = vmul.f32 %v1365, %v1109
      %v1494 = vmul.f32 %v1366, %v1110
      %v1495 = vmul.f32 %v1367, %v1111
      %v1496 = vmul.f32 %v1368, %v1112
      %v1497 = vmul.f32 %v1369, %v1113
      %v1498 = vmul.f32 %v1370, %v1114
      %v1499 = vmul.f32 %v1371, %v1115
      %v1500 = vmul.f32 %v1372, %v1116
      %v1501 = vmul.f32 %v1373, %v1117
      %v1502 = vmul.f32 %v1374, %v1118
      %v1503 = vmul.f32 %v1375, %v1119
      %v1504 = vmul.f32 %v1376, %v1120
      %v1505 = vmul.f32 %v1377, %v1121
      %v1506 = vmul.f32 %v1378, %v1122
      %v1507 = vmul.f32 %v1379, %v1123
      %v1508 = vmul.f32 %v1380, %v1124
      %v1509 = vmul.f32 %v1381, %v1125
      %v1510 = vmul.f32 %v1382, %v1126
      %v1511 = vmul.f32 %v1383, %v1127
      %v1512 = vmul.f32 %v1384, %v1128
      %v1513 = vmul.f32 %v1385, %v1129
      %v1514 = vmul.f32 %v1386, %v1130
      %v1515 = vmul.f32 %v1387, %v1131
      %v1516 = vmul.f32 %v1388, %v1132
      %v1517 = vmul.f32 %v1389, %v1133
      %v1518 = vmul.f32 %v1390, %v1134
      %v1519 = vmul.f32 %v1391, %v1135
      %v1520 = vmul.f32 %v1392, %v1136
      %v1521 = vmul.f32 %v1393, %v1137
      %v1522 = vmul.f32 %v1394, %v1138
      %v1523 = vmul.f32 %v1395, %v1139
      %v1524 = vmul.f32 %v1396, %v1140
      %v1525 = vmul.f32 %v1397, %v1141
      %v1526 = vmul.f32 %v1398, %v1142
      %v1527 = vmul.f32 %v1399, %v1143
      %v1528 = vmul.f32 %v1400, %v1144
      %v1529 = vmul.f32 %v1401, %v1145
      %v1530 = vmul.f32 %v1402, %v1146
      %v1531 = vmul.f32 %v1403, %v1147
      %v1532 = vmul.f32 %v1404, %v1148
      %v1533 = vmul.f32 %v1405, %v1149
      %v1534 = vmul.f32 %v1406, %v1150
      %v1535 = vmul.f32 %v1407, %v1151
      %v1536 = vmul.f32 %v1408, %v1152
      %v1537 = vmul.f32 %v1409, %v1153
      %v1538 = vmul.f32 %v1410, %v1154
      %v1539 = vmul.f32 %v1411, %v1155
      %v1540 = vmul.f32 %v1412, %v1156
      %v1541 = vmul.f32 %v1413, %v1157
      %v1542 = vmul.f32 %v1414, %v1158
      %v1543 = vmul.f32 %v1415, %v1159
      %v1544 = vmul.f32 %v1416, %v1160
      %v1545 = vmul.f32 %v1417, %v1161
      %v1546 = vmul.f32 %v1418, %v1162
      %v1547 = vmul.f32 %v1419, %v1163
      %v1548 = vmul.f32 %v1420, %v1164
      %v1549 = vmul.f32 %v1421, %v1165
      %v1550 = vmul.f32 %v1422, %v1166
      %v1551 = vmul.f32 %v1423, %v1167
      %v1552 = vmul.f32 %v1424, %v1168
      %v1553 = vmul.f32 %v1425, %v1169
      %v1554 = vmul.f32 %v1426, %v1170
      %v1555 = vmul.f32 %v1427, %v1171
      %v1556 = vmul.f32 %v1428, %v1172
      %v1557 = vmul.f32 %v1429, %v1173
      %v1558 = vmul.f32 %v1430, %v1174
      %v1559 = vmul.f32 %v1431, %v1175
      %v1560 = vmul.f32 %v1432, %v1176
      %v1561 = vmul.f32 %v1433, %v1177
      %v1562 = vmul.f32 %v1434, %v1178
      %v1563 = vmul.f32 %v1435, %v1179
      %v1564 = vmul.f32 %v1436, %v1180
      %v1565 = vmul.f32 %v1437, %v1181
      %v1566 = vmul.f32 %v1438, %v1182
      %v1567 = vmul.f32 %v1439, %v1183
      %v1568 = vmul.f32 %v1440, %v1184
      %vm1569 = vcmask 523264
      %v1570 = vsel %vm1569, %v1441, 0.0
      %1571 = vadd.xlane.f32.xlu0 %v1570
      %v1572 = vpop.xlane.xlu0 %1571
      %v1573 = vsel %vm1569, %v1442, 0.0
      %1574 = vadd.xlane.f32.xlu0 %v1573
      %v1575 = vpop.xlane.xlu0 %1574
      %v1576 = vsel %vm1569, %v1443, 0.0
      %1577 = vadd.xlane.f32.xlu0 %v1576
      %v1578 = vpop.xlane.xlu0 %1577
      %v1579 = vsel %vm1569, %v1444, 0.0
      %1580 = vadd.xlane.f32.xlu0 %v1579
      %v1581 = vpop.xlane.xlu0 %1580
      %v1582 = vsel %vm1569, %v1445, 0.0
      %1583 = vadd.xlane.f32.xlu0 %v1582
      %v1584 = vpop.xlane.xlu0 %1583
      %v1585 = vsel %vm1569, %v1446, 0.0
      %1586 = vadd.xlane.f32.xlu0 %v1585
      %v1587 = vpop.xlane.xlu0 %1586
      %v1588 = vsel %vm1569, %v1447, 0.0
      %1589 = vadd.xlane.f32.xlu0 %v1588
      %v1590 = vpop.xlane.xlu0 %1589
      %v1591 = vsel %vm1569, %v1448, 0.0
      %1592 = vadd.xlane.f32.xlu0 %v1591
      %v1593 = vpop.xlane.xlu0 %1592
      %v1594 = vsel %vm1569, %v1449, 0.0
      %1595 = vadd.xlane.f32.xlu0 %v1594
      %v1596 = vpop.xlane.xlu0 %1595
      %v1597 = vsel %vm1569, %v1450, 0.0
      %1598 = vadd.xlane.f32.xlu0 %v1597
      %v1599 = vpop.xlane.xlu0 %1598
      %v1600 = vsel %vm1569, %v1451, 0.0
      %1601 = vadd.xlane.f32.xlu0 %v1600
      %v1602 = vpop.xlane.xlu0 %1601
      %v1603 = vsel %vm1569, %v1452, 0.0
      %1604 = vadd.xlane.f32.xlu0 %v1603
      %v1605 = vpop.xlane.xlu0 %1604
      %v1606 = vsel %vm1569, %v1453, 0.0
      %1607 = vadd.xlane.f32.xlu0 %v1606
      %v1608 = vpop.xlane.xlu0 %1607
      %v1609 = vsel %vm1569, %v1454, 0.0
      %1610 = vadd.xlane.f32.xlu0 %v1609
      %v1611 = vpop.xlane.xlu0 %1610
      %v1612 = vsel %vm1569, %v1455, 0.0
      %1613 = vadd.xlane.f32.xlu0 %v1612
      %v1614 = vpop.xlane.xlu0 %1613
      %v1615 = vsel %vm1569, %v1456, 0.0
      %1616 = vadd.xlane.f32.xlu0 %v1615
      %v1617 = vpop.xlane.xlu0 %1616
      %v1618 = vsel %vm1569, %v1457, 0.0
      %1619 = vadd.xlane.f32.xlu0 %v1618
      %v1620 = vpop.xlane.xlu0 %1619
      %v1621 = vsel %vm1569, %v1458, 0.0
      %1622 = vadd.xlane.f32.xlu0 %v1621
      %v1623 = vpop.xlane.xlu0 %1622
      %v1624 = vsel %vm1569, %v1459, 0.0
      %1625 = vadd.xlane.f32.xlu0 %v1624
      %v1626 = vpop.xlane.xlu0 %1625
      %v1627 = vsel %vm1569, %v1460, 0.0
      %1628 = vadd.xlane.f32.xlu0 %v1627
      %v1629 = vpop.xlane.xlu0 %1628
      %v1630 = vsel %vm1569, %v1461, 0.0
      %1631 = vadd.xlane.f32.xlu0 %v1630
      %v1632 = vpop.xlane.xlu0 %1631
      %v1633 = vsel %vm1569, %v1462, 0.0
      %1634 = vadd.xlane.f32.xlu0 %v1633
      %v1635 = vpop.xlane.xlu0 %1634
      %v1636 = vsel %vm1569, %v1463, 0.0
      %1637 = vadd.xlane.f32.xlu0 %v1636
      %v1638 = vpop.xlane.xlu0 %1637
      %v1639 = vsel %vm1569, %v1464, 0.0
      %1640 = vadd.xlane.f32.xlu0 %v1639
      %v1641 = vpop.xlane.xlu0 %1640
      %v1642 = vsel %vm1569, %v1465, 0.0
      %1643 = vadd.xlane.f32.xlu0 %v1642
      %v1644 = vpop.xlane.xlu0 %1643
      %v1645 = vsel %vm1569, %v1466, 0.0
      %1646 = vadd.xlane.f32.xlu0 %v1645
      %v1647 = vpop.xlane.xlu0 %1646
      %v1648 = vsel %vm1569, %v1467, 0.0
      %1649 = vadd.xlane.f32.xlu0 %v1648
      %v1650 = vpop.xlane.xlu0 %1649
      %v1651 = vsel %vm1569, %v1468, 0.0
      %1652 = vadd.xlane.f32.xlu0 %v1651
      %v1653 = vpop.xlane.xlu0 %1652
      %v1654 = vsel %vm1569, %v1469, 0.0
      %1655 = vadd.xlane.f32.xlu0 %v1654
      %v1656 = vpop.xlane.xlu0 %1655
      %v1657 = vsel %vm1569, %v1470, 0.0
      %1658 = vadd.xlane.f32.xlu0 %v1657
      %v1659 = vpop.xlane.xlu0 %1658
      %v1660 = vsel %vm1569, %v1471, 0.0
      %1661 = vadd.xlane.f32.xlu0 %v1660
      %v1662 = vpop.xlane.xlu0 %1661
      %v1663 = vsel %vm1569, %v1472, 0.0
      %1664 = vadd.xlane.f32.xlu0 %v1663
      %v1665 = vpop.xlane.xlu0 %1664
      %v1666 = vsel %vm1569, %v1473, 0.0
      %1667 = vadd.xlane.f32.xlu0 %v1666
      %v1668 = vpop.xlane.xlu0 %1667
      %v1669 = vsel %vm1569, %v1474, 0.0
      %1670 = vadd.xlane.f32.xlu0 %v1669
      %v1671 = vpop.xlane.xlu0 %1670
      %v1672 = vsel %vm1569, %v1475, 0.0
      %1673 = vadd.xlane.f32.xlu0 %v1672
      %v1674 = vpop.xlane.xlu0 %1673
      %v1675 = vsel %vm1569, %v1476, 0.0
      %1676 = vadd.xlane.f32.xlu0 %v1675
      %v1677 = vpop.xlane.xlu0 %1676
      %v1678 = vsel %vm1569, %v1477, 0.0
      %1679 = vadd.xlane.f32.xlu0 %v1678
      %v1680 = vpop.xlane.xlu0 %1679
      %v1681 = vsel %vm1569, %v1478, 0.0
      %1682 = vadd.xlane.f32.xlu0 %v1681
      %v1683 = vpop.xlane.xlu0 %1682
      %v1684 = vsel %vm1569, %v1479, 0.0
      %1685 = vadd.xlane.f32.xlu0 %v1684
      %v1686 = vpop.xlane.xlu0 %1685
      %v1687 = vsel %vm1569, %v1480, 0.0
      %1688 = vadd.xlane.f32.xlu0 %v1687
      %v1689 = vpop.xlane.xlu0 %1688
      %v1690 = vsel %vm1569, %v1481, 0.0
      %1691 = vadd.xlane.f32.xlu0 %v1690
      %v1692 = vpop.xlane.xlu0 %1691
      %v1693 = vsel %vm1569, %v1482, 0.0
      %1694 = vadd.xlane.f32.xlu0 %v1693
      %v1695 = vpop.xlane.xlu0 %1694
      %v1696 = vsel %vm1569, %v1483, 0.0
      %1697 = vadd.xlane.f32.xlu0 %v1696
      %v1698 = vpop.xlane.xlu0 %1697
      %v1699 = vsel %vm1569, %v1484, 0.0
      %1700 = vadd.xlane.f32.xlu0 %v1699
      %v1701 = vpop.xlane.xlu0 %1700
      %v1702 = vsel %vm1569, %v1485, 0.0
      %1703 = vadd.xlane.f32.xlu0 %v1702
      %v1704 = vpop.xlane.xlu0 %1703
      %v1705 = vsel %vm1569, %v1486, 0.0
      %1706 = vadd.xlane.f32.xlu0 %v1705
      %v1707 = vpop.xlane.xlu0 %1706
      %v1708 = vsel %vm1569, %v1487, 0.0
      %1709 = vadd.xlane.f32.xlu0 %v1708
      %v1710 = vpop.xlane.xlu0 %1709
      %v1711 = vsel %vm1569, %v1488, 0.0
      %1712 = vadd.xlane.f32.xlu0 %v1711
      %v1713 = vpop.xlane.xlu0 %1712
      %v1714 = vsel %vm1569, %v1489, 0.0
      %1715 = vadd.xlane.f32.xlu0 %v1714
      %v1716 = vpop.xlane.xlu0 %1715
      %v1717 = vsel %vm1569, %v1490, 0.0
      %1718 = vadd.xlane.f32.xlu0 %v1717
      %v1719 = vpop.xlane.xlu0 %1718
      %v1720 = vsel %vm1569, %v1491, 0.0
      %1721 = vadd.xlane.f32.xlu0 %v1720
      %v1722 = vpop.xlane.xlu0 %1721
      %v1723 = vsel %vm1569, %v1492, 0.0
      %1724 = vadd.xlane.f32.xlu0 %v1723
      %v1725 = vpop.xlane.xlu0 %1724
      %v1726 = vsel %vm1569, %v1493, 0.0
      %1727 = vadd.xlane.f32.xlu0 %v1726
      %v1728 = vpop.xlane.xlu0 %1727
      %v1729 = vsel %vm1569, %v1494, 0.0
      %1730 = vadd.xlane.f32.xlu0 %v1729
      %v1731 = vpop.xlane.xlu0 %1730
      %v1732 = vsel %vm1569, %v1495, 0.0
      %1733 = vadd.xlane.f32.xlu0 %v1732
      %v1734 = vpop.xlane.xlu0 %1733
      %v1735 = vsel %vm1569, %v1496, 0.0
      %1736 = vadd.xlane.f32.xlu0 %v1735
      %v1737 = vpop.xlane.xlu0 %1736
      %v1738 = vsel %vm1569, %v1497, 0.0
      %1739 = vadd.xlane.f32.xlu0 %v1738
      %v1740 = vpop.xlane.xlu0 %1739
      %v1741 = vsel %vm1569, %v1498, 0.0
      %1742 = vadd.xlane.f32.xlu0 %v1741
      %v1743 = vpop.xlane.xlu0 %1742
      %v1744 = vsel %vm1569, %v1499, 0.0
      %1745 = vadd.xlane.f32.xlu0 %v1744
      %v1746 = vpop.xlane.xlu0 %1745
      %v1747 = vsel %vm1569, %v1500, 0.0
      %1748 = vadd.xlane.f32.xlu0 %v1747
      %v1749 = vpop.xlane.xlu0 %1748
      %v1750 = vsel %vm1569, %v1501, 0.0
      %1751 = vadd.xlane.f32.xlu0 %v1750
      %v1752 = vpop.xlane.xlu0 %1751
      %v1753 = vsel %vm1569, %v1502, 0.0
      %1754 = vadd.xlane.f32.xlu0 %v1753
      %v1755 = vpop.xlane.xlu0 %1754
      %v1756 = vsel %vm1569, %v1503, 0.0
      %1757 = vadd.xlane.f32.xlu0 %v1756
      %v1758 = vpop.xlane.xlu0 %1757
      %v1759 = vsel %vm1569, %v1504, 0.0
      %1760 = vadd.xlane.f32.xlu0 %v1759
      %v1761 = vpop.xlane.xlu0 %1760
      %v1762 = vsel %vm1569, %v1505, 0.0
      %1763 = vadd.xlane.f32.xlu0 %v1762
      %v1764 = vpop.xlane.xlu0 %1763
      %v1765 = vsel %vm1569, %v1506, 0.0
      %1766 = vadd.xlane.f32.xlu0 %v1765
      %v1767 = vpop.xlane.xlu0 %1766
      %v1768 = vsel %vm1569, %v1507, 0.0
      %1769 = vadd.xlane.f32.xlu0 %v1768
      %v1770 = vpop.xlane.xlu0 %1769
      %v1771 = vsel %vm1569, %v1508, 0.0
      %1772 = vadd.xlane.f32.xlu0 %v1771
      %v1773 = vpop.xlane.xlu0 %1772
      %v1774 = vsel %vm1569, %v1509, 0.0
      %1775 = vadd.xlane.f32.xlu0 %v1774
      %v1776 = vpop.xlane.xlu0 %1775
      %v1777 = vsel %vm1569, %v1510, 0.0
      %1778 = vadd.xlane.f32.xlu0 %v1777
      %v1779 = vpop.xlane.xlu0 %1778
      %v1780 = vsel %vm1569, %v1511, 0.0
      %1781 = vadd.xlane.f32.xlu0 %v1780
      %v1782 = vpop.xlane.xlu0 %1781
      %v1783 = vsel %vm1569, %v1512, 0.0
      %1784 = vadd.xlane.f32.xlu0 %v1783
      %v1785 = vpop.xlane.xlu0 %1784
      %v1786 = vsel %vm1569, %v1513, 0.0
      %1787 = vadd.xlane.f32.xlu0 %v1786
      %v1788 = vpop.xlane.xlu0 %1787
      %v1789 = vsel %vm1569, %v1514, 0.0
      %1790 = vadd.xlane.f32.xlu0 %v1789
      %v1791 = vpop.xlane.xlu0 %1790
      %v1792 = vsel %vm1569, %v1515, 0.0
      %1793 = vadd.xlane.f32.xlu0 %v1792
      %v1794 = vpop.xlane.xlu0 %1793
      %v1795 = vsel %vm1569, %v1516, 0.0
      %1796 = vadd.xlane.f32.xlu0 %v1795
      %v1797 = vpop.xlane.xlu0 %1796
      %v1798 = vsel %vm1569, %v1517, 0.0
      %1799 = vadd.xlane.f32.xlu0 %v1798
      %v1800 = vpop.xlane.xlu0 %1799
      %v1801 = vsel %vm1569, %v1518, 0.0
      %1802 = vadd.xlane.f32.xlu0 %v1801
      %v1803 = vpop.xlane.xlu0 %1802
      %v1804 = vsel %vm1569, %v1519, 0.0
      %1805 = vadd.xlane.f32.xlu0 %v1804
      %v1806 = vpop.xlane.xlu0 %1805
      %v1807 = vsel %vm1569, %v1520, 0.0
      %1808 = vadd.xlane.f32.xlu0 %v1807
      %v1809 = vpop.xlane.xlu0 %1808
      %v1810 = vsel %vm1569, %v1521, 0.0
      %1811 = vadd.xlane.f32.xlu0 %v1810
      %v1812 = vpop.xlane.xlu0 %1811
      %v1813 = vsel %vm1569, %v1522, 0.0
      %1814 = vadd.xlane.f32.xlu0 %v1813
      %v1815 = vpop.xlane.xlu0 %1814
      %v1816 = vsel %vm1569, %v1523, 0.0
      %1817 = vadd.xlane.f32.xlu0 %v1816
      %v1818 = vpop.xlane.xlu0 %1817
      %v1819 = vsel %vm1569, %v1524, 0.0
      %1820 = vadd.xlane.f32.xlu0 %v1819
      %v1821 = vpop.xlane.xlu0 %1820
      %v1822 = vsel %vm1569, %v1525, 0.0
      %1823 = vadd.xlane.f32.xlu0 %v1822
      %v1824 = vpop.xlane.xlu0 %1823
      %v1825 = vsel %vm1569, %v1526, 0.0
      %1826 = vadd.xlane.f32.xlu0 %v1825
      %v1827 = vpop.xlane.xlu0 %1826
      %v1828 = vsel %vm1569, %v1527, 0.0
      %1829 = vadd.xlane.f32.xlu0 %v1828
      %v1830 = vpop.xlane.xlu0 %1829
      %v1831 = vsel %vm1569, %v1528, 0.0
      %1832 = vadd.xlane.f32.xlu0 %v1831
      %v1833 = vpop.xlane.xlu0 %1832
      %v1834 = vsel %vm1569, %v1529, 0.0
      %1835 = vadd.xlane.f32.xlu0 %v1834
      %v1836 = vpop.xlane.xlu0 %1835
      %v1837 = vsel %vm1569, %v1530, 0.0
      %1838 = vadd.xlane.f32.xlu0 %v1837
      %v1839 = vpop.xlane.xlu0 %1838
      %v1840 = vsel %vm1569, %v1531, 0.0
      %1841 = vadd.xlane.f32.xlu0 %v1840
      %v1842 = vpop.xlane.xlu0 %1841
      %v1843 = vsel %vm1569, %v1532, 0.0
      %1844 = vadd.xlane.f32.xlu0 %v1843
      %v1845 = vpop.xlane.xlu0 %1844
      %v1846 = vsel %vm1569, %v1533, 0.0
      %1847 = vadd.xlane.f32.xlu0 %v1846
      %v1848 = vpop.xlane.xlu0 %1847
      %v1849 = vsel %vm1569, %v1534, 0.0
      %1850 = vadd.xlane.f32.xlu0 %v1849
      %v1851 = vpop.xlane.xlu0 %1850
      %v1852 = vsel %vm1569, %v1535, 0.0
      %1853 = vadd.xlane.f32.xlu0 %v1852
      %v1854 = vpop.xlane.xlu0 %1853
      %v1855 = vsel %vm1569, %v1536, 0.0
      %1856 = vadd.xlane.f32.xlu0 %v1855
      %v1857 = vpop.xlane.xlu0 %1856
      %v1858 = vsel %vm1569, %v1537, 0.0
      %1859 = vadd.xlane.f32.xlu0 %v1858
      %v1860 = vpop.xlane.xlu0 %1859
      %v1861 = vsel %vm1569, %v1538, 0.0
      %1862 = vadd.xlane.f32.xlu0 %v1861
      %v1863 = vpop.xlane.xlu0 %1862
      %v1864 = vsel %vm1569, %v1539, 0.0
      %1865 = vadd.xlane.f32.xlu0 %v1864
      %v1866 = vpop.xlane.xlu0 %1865
      %v1867 = vsel %vm1569, %v1540, 0.0
      %1868 = vadd.xlane.f32.xlu0 %v1867
      %v1869 = vpop.xlane.xlu0 %1868
      %v1870 = vsel %vm1569, %v1541, 0.0
      %1871 = vadd.xlane.f32.xlu0 %v1870
      %v1872 = vpop.xlane.xlu0 %1871
      %v1873 = vsel %vm1569, %v1542, 0.0
      %1874 = vadd.xlane.f32.xlu0 %v1873
      %v1875 = vpop.xlane.xlu0 %1874
      %v1876 = vsel %vm1569, %v1543, 0.0
      %1877 = vadd.xlane.f32.xlu0 %v1876
      %v1878 = vpop.xlane.xlu0 %1877
      %v1879 = vsel %vm1569, %v1544, 0.0
      %1880 = vadd.xlane.f32.xlu0 %v1879
      %v1881 = vpop.xlane.xlu0 %1880
      %v1882 = vsel %vm1569, %v1545, 0.0
      %1883 = vadd.xlane.f32.xlu0 %v1882
      %v1884 = vpop.xlane.xlu0 %1883
      %v1885 = vsel %vm1569, %v1546, 0.0
      %1886 = vadd.xlane.f32.xlu0 %v1885
      %v1887 = vpop.xlane.xlu0 %1886
      %v1888 = vsel %vm1569, %v1547, 0.0
      %1889 = vadd.xlane.f32.xlu0 %v1888
      %v1890 = vpop.xlane.xlu0 %1889
      %v1891 = vsel %vm1569, %v1548, 0.0
      %1892 = vadd.xlane.f32.xlu0 %v1891
      %v1893 = vpop.xlane.xlu0 %1892
      %v1894 = vsel %vm1569, %v1549, 0.0
      %1895 = vadd.xlane.f32.xlu0 %v1894
      %v1896 = vpop.xlane.xlu0 %1895
      %v1897 = vsel %vm1569, %v1550, 0.0
      %1898 = vadd.xlane.f32.xlu0 %v1897
      %v1899 = vpop.xlane.xlu0 %1898
      %v1900 = vsel %vm1569, %v1551, 0.0
      %1901 = vadd.xlane.f32.xlu0 %v1900
      %v1902 = vpop.xlane.xlu0 %1901
      %v1903 = vsel %vm1569, %v1552, 0.0
      %1904 = vadd.xlane.f32.xlu0 %v1903
      %v1905 = vpop.xlane.xlu0 %1904
      %v1906 = vsel %vm1569, %v1553, 0.0
      %1907 = vadd.xlane.f32.xlu0 %v1906
      %v1908 = vpop.xlane.xlu0 %1907
      %v1909 = vsel %vm1569, %v1554, 0.0
      %1910 = vadd.xlane.f32.xlu0 %v1909
      %v1911 = vpop.xlane.xlu0 %1910
      %v1912 = vsel %vm1569, %v1555, 0.0
      %1913 = vadd.xlane.f32.xlu0 %v1912
      %v1914 = vpop.xlane.xlu0 %1913
      %v1915 = vsel %vm1569, %v1556, 0.0
      %1916 = vadd.xlane.f32.xlu0 %v1915
      %v1917 = vpop.xlane.xlu0 %1916
      %v1918 = vsel %vm1569, %v1557, 0.0
      %1919 = vadd.xlane.f32.xlu0 %v1918
      %v1920 = vpop.xlane.xlu0 %1919
      %v1921 = vsel %vm1569, %v1558, 0.0
      %1922 = vadd.xlane.f32.xlu0 %v1921
      %v1923 = vpop.xlane.xlu0 %1922
      %v1924 = vsel %vm1569, %v1559, 0.0
      %1925 = vadd.xlane.f32.xlu0 %v1924
      %v1926 = vpop.xlane.xlu0 %1925
      %v1927 = vsel %vm1569, %v1560, 0.0
      %1928 = vadd.xlane.f32.xlu0 %v1927
      %v1929 = vpop.xlane.xlu0 %1928
      %v1930 = vsel %vm1569, %v1561, 0.0
      %1931 = vadd.xlane.f32.xlu0 %v1930
      %v1932 = vpop.xlane.xlu0 %1931
      %v1933 = vsel %vm1569, %v1562, 0.0
      %1934 = vadd.xlane.f32.xlu0 %v1933
      %v1935 = vpop.xlane.xlu0 %1934
      %v1936 = vsel %vm1569, %v1563, 0.0
      %1937 = vadd.xlane.f32.xlu0 %v1936
      %v1938 = vpop.xlane.xlu0 %1937
      %v1939 = vsel %vm1569, %v1564, 0.0
      %1940 = vadd.xlane.f32.xlu0 %v1939
      %v1941 = vpop.xlane.xlu0 %1940
      %v1942 = vsel %vm1569, %v1565, 0.0
      %1943 = vadd.xlane.f32.xlu0 %v1942
      %v1944 = vpop.xlane.xlu0 %1943
      %v1945 = vsel %vm1569, %v1566, 0.0
      %1946 = vadd.xlane.f32.xlu0 %v1945
      %v1947 = vpop.xlane.xlu0 %1946
      %v1948 = vsel %vm1569, %v1567, 0.0
      %1949 = vadd.xlane.f32.xlu0 %v1948
      %v1950 = vpop.xlane.xlu0 %1949
      %v1951 = vsel %vm1569, %v1568, 0.0
      %1952 = vadd.xlane.f32.xlu0 %v1951
      %v1953 = vpop.xlane.xlu0 %1952
      %v1954 = vadd.f32 %v1572, 0.05
      %v1955 = vadd.f32 %v1575, 0.05
      %v1956 = vadd.f32 %v1578, 0.05
      %v1957 = vadd.f32 %v1581, 0.05
      %v1958 = vadd.f32 %v1584, 0.05
      %v1959 = vadd.f32 %v1587, 0.05
      %v1960 = vadd.f32 %v1590, 0.05
      %v1961 = vadd.f32 %v1593, 0.05
      %v1962 = vadd.f32 %v1596, 0.05
      %v1963 = vadd.f32 %v1599, 0.05
      %v1964 = vadd.f32 %v1602, 0.05
      %v1965 = vadd.f32 %v1605, 0.05
      %v1966 = vadd.f32 %v1608, 0.05
      %v1967 = vadd.f32 %v1611, 0.05
      %v1968 = vadd.f32 %v1614, 0.05
      %v1969 = vadd.f32 %v1617, 0.05
      %v1970 = vadd.f32 %v1620, 0.05
      %v1971 = vadd.f32 %v1623, 0.05
      %v1972 = vadd.f32 %v1626, 0.05
      %v1973 = vadd.f32 %v1629, 0.05
      %v1974 = vadd.f32 %v1632, 0.05
      %v1975 = vadd.f32 %v1635, 0.05
      %v1976 = vadd.f32 %v1638, 0.05
      %v1977 = vadd.f32 %v1641, 0.05
      %v1978 = vadd.f32 %v1644, 0.05
      %v1979 = vadd.f32 %v1647, 0.05
      %v1980 = vadd.f32 %v1650, 0.05
      %v1981 = vadd.f32 %v1653, 0.05
      %v1982 = vadd.f32 %v1656, 0.05
      %v1983 = vadd.f32 %v1659, 0.05
      %v1984 = vadd.f32 %v1662, 0.05
      %v1985 = vadd.f32 %v1665, 0.05
      %v1986 = vadd.f32 %v1668, 0.05
      %v1987 = vadd.f32 %v1671, 0.05
      %v1988 = vadd.f32 %v1674, 0.05
      %v1989 = vadd.f32 %v1677, 0.05
      %v1990 = vadd.f32 %v1680, 0.05
      %v1991 = vadd.f32 %v1683, 0.05
      %v1992 = vadd.f32 %v1686, 0.05
      %v1993 = vadd.f32 %v1689, 0.05
      %v1994 = vadd.f32 %v1692, 0.05
      %v1995 = vadd.f32 %v1695, 0.05
      %v1996 = vadd.f32 %v1698, 0.05
      %v1997 = vadd.f32 %v1701, 0.05
      %v1998 = vadd.f32 %v1704, 0.05
      %v1999 = vadd.f32 %v1707, 0.05
      %v2000 = vadd.f32 %v1710, 0.05
      %v2001 = vadd.f32 %v1713, 0.05
      %v2002 = vadd.f32 %v1716, 0.05
      %v2003 = vadd.f32 %v1719, 0.05
      %v2004 = vadd.f32 %v1722, 0.05
      %v2005 = vadd.f32 %v1725, 0.05
      %v2006 = vadd.f32 %v1728, 0.05
      %v2007 = vadd.f32 %v1731, 0.05
      %v2008 = vadd.f32 %v1734, 0.05
      %v2009 = vadd.f32 %v1737, 0.05
      %v2010 = vadd.f32 %v1740, 0.05
      %v2011 = vadd.f32 %v1743, 0.05
      %v2012 = vadd.f32 %v1746, 0.05
      %v2013 = vadd.f32 %v1749, 0.05
      %v2014 = vadd.f32 %v1752, 0.05
      %v2015 = vadd.f32 %v1755, 0.05
      %v2016 = vadd.f32 %v1758, 0.05
      %v2017 = vadd.f32 %v1761, 0.05
      %v2018 = vadd.f32 %v1764, 0.05
      %v2019 = vadd.f32 %v1767, 0.05
      %v2020 = vadd.f32 %v1770, 0.05
      %v2021 = vadd.f32 %v1773, 0.05
      %v2022 = vadd.f32 %v1776, 0.05
      %v2023 = vadd.f32 %v1779, 0.05
      %v2024 = vadd.f32 %v1782, 0.05
      %v2025 = vadd.f32 %v1785, 0.05
      %v2026 = vadd.f32 %v1788, 0.05
      %v2027 = vadd.f32 %v1791, 0.05
      %v2028 = vadd.f32 %v1794, 0.05
      %v2029 = vadd.f32 %v1797, 0.05
      %v2030 = vadd.f32 %v1800, 0.05
      %v2031 = vadd.f32 %v1803, 0.05
      %v2032 = vadd.f32 %v1806, 0.05
      %v2033 = vadd.f32 %v1809, 0.05
      %v2034 = vadd.f32 %v1812, 0.05
      %v2035 = vadd.f32 %v1815, 0.05
      %v2036 = vadd.f32 %v1818, 0.05
      %v2037 = vadd.f32 %v1821, 0.05
      %v2038 = vadd.f32 %v1824, 0.05
      %v2039 = vadd.f32 %v1827, 0.05
      %v2040 = vadd.f32 %v1830, 0.05
      %v2041 = vadd.f32 %v1833, 0.05
      %v2042 = vadd.f32 %v1836, 0.05
      %v2043 = vadd.f32 %v1839, 0.05
      %v2044 = vadd.f32 %v1842, 0.05
      %v2045 = vadd.f32 %v1845, 0.05
      %v2046 = vadd.f32 %v1848, 0.05
      %v2047 = vadd.f32 %v1851, 0.05
      %v2048 = vadd.f32 %v1854, 0.05
      %v2049 = vadd.f32 %v1857, 0.05
      %v2050 = vadd.f32 %v1860, 0.05
      %v2051 = vadd.f32 %v1863, 0.05
      %v2052 = vadd.f32 %v1866, 0.05
      %v2053 = vadd.f32 %v1869, 0.05
      %v2054 = vadd.f32 %v1872, 0.05
      %v2055 = vadd.f32 %v1875, 0.05
      %v2056 = vadd.f32 %v1878, 0.05
      %v2057 = vadd.f32 %v1881, 0.05
      %v2058 = vadd.f32 %v1884, 0.05
      %v2059 = vadd.f32 %v1887, 0.05
      %v2060 = vadd.f32 %v1890, 0.05
      %v2061 = vadd.f32 %v1893, 0.05
      %v2062 = vadd.f32 %v1896, 0.05
      %v2063 = vadd.f32 %v1899, 0.05
      %v2064 = vadd.f32 %v1902, 0.05
      %v2065 = vadd.f32 %v1905, 0.05
      %v2066 = vadd.f32 %v1908, 0.05
      %v2067 = vadd.f32 %v1911, 0.05
      %v2068 = vadd.f32 %v1914, 0.05
      %v2069 = vadd.f32 %v1917, 0.05
      %v2070 = vadd.f32 %v1920, 0.05
      %v2071 = vadd.f32 %v1923, 0.05
      %v2072 = vadd.f32 %v1926, 0.05
      %v2073 = vadd.f32 %v1929, 0.05
      %v2074 = vadd.f32 %v1932, 0.05
      %v2075 = vadd.f32 %v1935, 0.05
      %v2076 = vadd.f32 %v1938, 0.05
      %v2077 = vadd.f32 %v1941, 0.05
      %v2078 = vadd.f32 %v1944, 0.05
      %v2079 = vadd.f32 %v1947, 0.05
      %v2080 = vadd.f32 %v1950, 0.05
      %v2081 = vadd.f32 %v1953, 0.05
      %v2082 = vld [vmem:[%s489] sm:$0xff]
      %v2083 = vld [vmem:[%s489 + $0x8] sm:$0xff]
      %v2084 = vld [vmem:[%s489 + $0x10] sm:$0xff]
      %v2085 = vld [vmem:[%s489 + $0x18] sm:$0xff]
      %v2086 = vld [vmem:[%s489 + $0x20] sm:$0xff]
      %v2087 = vld [vmem:[%s489 + $0x28] sm:$0xff]
      %v2088 = vld [vmem:[%s489 + $0x30] sm:$0xff]
      %v2089 = vld [vmem:[%s489 + $0x38] sm:$0xff]
      %v2090 = vld [vmem:[%s489 + $0x40] sm:$0xff]
      %v2091 = vld [vmem:[%s489 + $0x48] sm:$0xff]
      %v2092 = vld [vmem:[%s489 + $0x50] sm:$0xff]
      %v2093 = vld [vmem:[%s489 + $0x58] sm:$0xff]
      %v2094 = vld [vmem:[%s489 + $0x60] sm:$0xff]
      %v2095 = vld [vmem:[%s489 + $0x68] sm:$0xff]
      %v2096 = vld [vmem:[%s489 + $0x70] sm:$0xff]
      %v2097 = vld [vmem:[%s489 + $0x78] sm:$0xff]
      %v2098 = vld [vmem:[%s489 + $0x80] sm:$0xff]
      %v2099 = vld [vmem:[%s489 + $0x88] sm:$0xff]
      %v2100 = vld [vmem:[%s489 + $0x90] sm:$0xff]
      %v2101 = vld [vmem:[%s489 + $0x98] sm:$0xff]
      %v2102 = vld [vmem:[%s489 + $0xa0] sm:$0xff]
      %v2103 = vld [vmem:[%s489 + $0xa8] sm:$0xff]
      %v2104 = vld [vmem:[%s489 + $0xb0] sm:$0xff]
      %v2105 = vld [vmem:[%s489 + $0xb8] sm:$0xff]
      %v2106 = vld [vmem:[%s489 + $0xc0] sm:$0xff]
      %v2107 = vld [vmem:[%s489 + $0xc8] sm:$0xff]
      %v2108 = vld [vmem:[%s489 + $0xd0] sm:$0xff]
      %v2109 = vld [vmem:[%s489 + $0xd8] sm:$0xff]
      %v2110 = vld [vmem:[%s489 + $0xe0] sm:$0xff]
      %v2111 = vld [vmem:[%s489 + $0xe8] sm:$0xff]
      %v2112 = vld [vmem:[%s489 + $0xf0] sm:$0xff]
      %v2113 = vld [vmem:[%s489 + $0xf8] sm:$0xff]
      %v2114 = vld [vmem:[%s489 + $0x100] sm:$0xff]
      %v2115 = vld [vmem:[%s489 + $0x108] sm:$0xff]
      %v2116 = vld [vmem:[%s489 + $0x110] sm:$0xff]
      %v2117 = vld [vmem:[%s489 + $0x118] sm:$0xff]
      %v2118 = vld [vmem:[%s489 + $0x120] sm:$0xff]
      %v2119 = vld [vmem:[%s489 + $0x128] sm:$0xff]
      %v2120 = vld [vmem:[%s489 + $0x130] sm:$0xff]
      %v2121 = vld [vmem:[%s489 + $0x138] sm:$0xff]
      %v2122 = vld [vmem:[%s489 + $0x140] sm:$0xff]
      %v2123 = vld [vmem:[%s489 + $0x148] sm:$0xff]
      %v2124 = vld [vmem:[%s489 + $0x150] sm:$0xff]
      %v2125 = vld [vmem:[%s489 + $0x158] sm:$0xff]
      %v2126 = vld [vmem:[%s489 + $0x160] sm:$0xff]
      %v2127 = vld [vmem:[%s489 + $0x168] sm:$0xff]
      %v2128 = vld [vmem:[%s489 + $0x170] sm:$0xff]
      %v2129 = vld [vmem:[%s489 + $0x178] sm:$0xff]
      %v2130 = vld [vmem:[%s489 + $0x180] sm:$0xff]
      %v2131 = vld [vmem:[%s489 + $0x188] sm:$0xff]
      %v2132 = vld [vmem:[%s489 + $0x190] sm:$0xff]
      %v2133 = vld [vmem:[%s489 + $0x198] sm:$0xff]
      %v2134 = vld [vmem:[%s489 + $0x1a0] sm:$0xff]
      %v2135 = vld [vmem:[%s489 + $0x1a8] sm:$0xff]
      %v2136 = vld [vmem:[%s489 + $0x1b0] sm:$0xff]
      %v2137 = vld [vmem:[%s489 + $0x1b8] sm:$0xff]
      %v2138 = vld [vmem:[%s489 + $0x1c0] sm:$0xff]
      %v2139 = vld [vmem:[%s489 + $0x1c8] sm:$0xff]
      %v2140 = vld [vmem:[%s489 + $0x1d0] sm:$0xff]
      %v2141 = vld [vmem:[%s489 + $0x1d8] sm:$0xff]
      %v2142 = vld [vmem:[%s489 + $0x1e0] sm:$0xff]
      %v2143 = vld [vmem:[%s489 + $0x1e8] sm:$0xff]
      %v2144 = vld [vmem:[%s489 + $0x1f0] sm:$0xff]
      %v2145 = vld [vmem:[%s489 + $0x1f8] sm:$0xff]
      %v2146 = vld [vmem:[%s489 + $0x200] sm:$0xff]
      %v2147 = vld [vmem:[%s489 + $0x208] sm:$0xff]
      %v2148 = vld [vmem:[%s489 + $0x210] sm:$0xff]
      %v2149 = vld [vmem:[%s489 + $0x218] sm:$0xff]
      %v2150 = vld [vmem:[%s489 + $0x220] sm:$0xff]
      %v2151 = vld [vmem:[%s489 + $0x228] sm:$0xff]
      %v2152 = vld [vmem:[%s489 + $0x230] sm:$0xff]
      %v2153 = vld [vmem:[%s489 + $0x238] sm:$0xff]
      %v2154 = vld [vmem:[%s489 + $0x240] sm:$0xff]
      %v2155 = vld [vmem:[%s489 + $0x248] sm:$0xff]
      %v2156 = vld [vmem:[%s489 + $0x250] sm:$0xff]
      %v2157 = vld [vmem:[%s489 + $0x258] sm:$0xff]
      %v2158 = vld [vmem:[%s489 + $0x260] sm:$0xff]
      %v2159 = vld [vmem:[%s489 + $0x268] sm:$0xff]
      %v2160 = vld [vmem:[%s489 + $0x270] sm:$0xff]
      %v2161 = vld [vmem:[%s489 + $0x278] sm:$0xff]
      %v2162 = vld [vmem:[%s489 + $0x280] sm:$0xff]
      %v2163 = vld [vmem:[%s489 + $0x288] sm:$0xff]
      %v2164 = vld [vmem:[%s489 + $0x290] sm:$0xff]
      %v2165 = vld [vmem:[%s489 + $0x298] sm:$0xff]
      %v2166 = vld [vmem:[%s489 + $0x2a0] sm:$0xff]
      %v2167 = vld [vmem:[%s489 + $0x2a8] sm:$0xff]
      %v2168 = vld [vmem:[%s489 + $0x2b0] sm:$0xff]
      %v2169 = vld [vmem:[%s489 + $0x2b8] sm:$0xff]
      %v2170 = vld [vmem:[%s489 + $0x2c0] sm:$0xff]
      %v2171 = vld [vmem:[%s489 + $0x2c8] sm:$0xff]
      %v2172 = vld [vmem:[%s489 + $0x2d0] sm:$0xff]
      %v2173 = vld [vmem:[%s489 + $0x2d8] sm:$0xff]
      %v2174 = vld [vmem:[%s489 + $0x2e0] sm:$0xff]
      %v2175 = vld [vmem:[%s489 + $0x2e8] sm:$0xff]
      %v2176 = vld [vmem:[%s489 + $0x2f0] sm:$0xff]
      %v2177 = vld [vmem:[%s489 + $0x2f8] sm:$0xff]
      %v2178 = vld [vmem:[%s489 + $0x300] sm:$0xff]
      %v2179 = vld [vmem:[%s489 + $0x308] sm:$0xff]
      %v2180 = vld [vmem:[%s489 + $0x310] sm:$0xff]
      %v2181 = vld [vmem:[%s489 + $0x318] sm:$0xff]
      %v2182 = vld [vmem:[%s489 + $0x320] sm:$0xff]
      %v2183 = vld [vmem:[%s489 + $0x328] sm:$0xff]
      %v2184 = vld [vmem:[%s489 + $0x330] sm:$0xff]
      %v2185 = vld [vmem:[%s489 + $0x338] sm:$0xff]
      %v2186 = vld [vmem:[%s489 + $0x340] sm:$0xff]
      %v2187 = vld [vmem:[%s489 + $0x348] sm:$0xff]
      %v2188 = vld [vmem:[%s489 + $0x350] sm:$0xff]
      %v2189 = vld [vmem:[%s489 + $0x358] sm:$0xff]
      %v2190 = vld [vmem:[%s489 + $0x360] sm:$0xff]
      %v2191 = vld [vmem:[%s489 + $0x368] sm:$0xff]
      %v2192 = vld [vmem:[%s489 + $0x370] sm:$0xff]
      %v2193 = vld [vmem:[%s489 + $0x378] sm:$0xff]
      %v2194 = vld [vmem:[%s489 + $0x380] sm:$0xff]
      %v2195 = vld [vmem:[%s489 + $0x388] sm:$0xff]
      %v2196 = vld [vmem:[%s489 + $0x390] sm:$0xff]
      %v2197 = vld [vmem:[%s489 + $0x398] sm:$0xff]
      %v2198 = vld [vmem:[%s489 + $0x3a0] sm:$0xff]
      %v2199 = vld [vmem:[%s489 + $0x3a8] sm:$0xff]
      %v2200 = vld [vmem:[%s489 + $0x3b0] sm:$0xff]
      %v2201 = vld [vmem:[%s489 + $0x3b8] sm:$0xff]
      %v2202 = vld [vmem:[%s489 + $0x3c0] sm:$0xff]
      %v2203 = vld [vmem:[%s489 + $0x3c8] sm:$0xff]
      %v2204 = vld [vmem:[%s489 + $0x3d0] sm:$0xff]
      %v2205 = vld [vmem:[%s489 + $0x3d8] sm:$0xff]
      %v2206 = vld [vmem:[%s489 + $0x3e0] sm:$0xff]
      %v2207 = vld [vmem:[%s489 + $0x3e8] sm:$0xff]
      %v2208 = vld [vmem:[%s489 + $0x3f0] sm:$0xff]
      %v2209 = vld [vmem:[%s489 + $0x3f8] sm:$0xff]
      %v2210 = vsub.f32 %v2082, %v1185
      %v2211 = vsub.f32 %v2083, %v1186
      %v2212 = vsub.f32 %v2084, %v1187
      %v2213 = vsub.f32 %v2085, %v1188
      %v2214 = vsub.f32 %v2086, %v1189
      %v2215 = vsub.f32 %v2087, %v1190
      %v2216 = vsub.f32 %v2088, %v1191
      %v2217 = vsub.f32 %v2089, %v1192
      %v2218 = vsub.f32 %v2090, %v1193
      %v2219 = vsub.f32 %v2091, %v1194
      %v2220 = vsub.f32 %v2092, %v1195
      %v2221 = vsub.f32 %v2093, %v1196
      %v2222 = vsub.f32 %v2094, %v1197
      %v2223 = vsub.f32 %v2095, %v1198
      %v2224 = vsub.f32 %v2096, %v1199
      %v2225 = vsub.f32 %v2097, %v1200
      %v2226 = vsub.f32 %v2098, %v1201
      %v2227 = vsub.f32 %v2099, %v1202
      %v2228 = vsub.f32 %v2100, %v1203
      %v2229 = vsub.f32 %v2101, %v1204
      %v2230 = vsub.f32 %v2102, %v1205
      %v2231 = vsub.f32 %v2103, %v1206
      %v2232 = vsub.f32 %v2104, %v1207
      %v2233 = vsub.f32 %v2105, %v1208
      %v2234 = vsub.f32 %v2106, %v1209
      %v2235 = vsub.f32 %v2107, %v1210
      %v2236 = vsub.f32 %v2108, %v1211
      %v2237 = vsub.f32 %v2109, %v1212
      %v2238 = vsub.f32 %v2110, %v1213
      %v2239 = vsub.f32 %v2111, %v1214
      %v2240 = vsub.f32 %v2112, %v1215
      %v2241 = vsub.f32 %v2113, %v1216
      %v2242 = vsub.f32 %v2114, %v1217
      %v2243 = vsub.f32 %v2115, %v1218
      %v2244 = vsub.f32 %v2116, %v1219
      %v2245 = vsub.f32 %v2117, %v1220
      %v2246 = vsub.f32 %v2118, %v1221
      %v2247 = vsub.f32 %v2119, %v1222
      %v2248 = vsub.f32 %v2120, %v1223
      %v2249 = vsub.f32 %v2121, %v1224
      %v2250 = vsub.f32 %v2122, %v1225
      %v2251 = vsub.f32 %v2123, %v1226
      %v2252 = vsub.f32 %v2124, %v1227
      %v2253 = vsub.f32 %v2125, %v1228
      %v2254 = vsub.f32 %v2126, %v1229
      %v2255 = vsub.f32 %v2127, %v1230
      %v2256 = vsub.f32 %v2128, %v1231
      %v2257 = vsub.f32 %v2129, %v1232
      %v2258 = vsub.f32 %v2130, %v1233
      %v2259 = vsub.f32 %v2131, %v1234
      %v2260 = vsub.f32 %v2132, %v1235
      %v2261 = vsub.f32 %v2133, %v1236
      %v2262 = vsub.f32 %v2134, %v1237
      %v2263 = vsub.f32 %v2135, %v1238
      %v2264 = vsub.f32 %v2136, %v1239
      %v2265 = vsub.f32 %v2137, %v1240
      %v2266 = vsub.f32 %v2138, %v1241
      %v2267 = vsub.f32 %v2139, %v1242
      %v2268 = vsub.f32 %v2140, %v1243
      %v2269 = vsub.f32 %v2141, %v1244
      %v2270 = vsub.f32 %v2142, %v1245
      %v2271 = vsub.f32 %v2143, %v1246
      %v2272 = vsub.f32 %v2144, %v1247
      %v2273 = vsub.f32 %v2145, %v1248
      %v2274 = vsub.f32 %v2146, %v1249
      %v2275 = vsub.f32 %v2147, %v1250
      %v2276 = vsub.f32 %v2148, %v1251
      %v2277 = vsub.f32 %v2149, %v1252
      %v2278 = vsub.f32 %v2150, %v1253
      %v2279 = vsub.f32 %v2151, %v1254
      %v2280 = vsub.f32 %v2152, %v1255
      %v2281 = vsub.f32 %v2153, %v1256
      %v2282 = vsub.f32 %v2154, %v1257
      %v2283 = vsub.f32 %v2155, %v1258
      %v2284 = vsub.f32 %v2156, %v1259
      %v2285 = vsub.f32 %v2157, %v1260
      %v2286 = vsub.f32 %v2158, %v1261
      %v2287 = vsub.f32 %v2159, %v1262
      %v2288 = vsub.f32 %v2160, %v1263
      %v2289 = vsub.f32 %v2161, %v1264
      %v2290 = vsub.f32 %v2162, %v1265
      %v2291 = vsub.f32 %v2163, %v1266
      %v2292 = vsub.f32 %v2164, %v1267
      %v2293 = vsub.f32 %v2165, %v1268
      %v2294 = vsub.f32 %v2166, %v1269
      %v2295 = vsub.f32 %v2167, %v1270
      %v2296 = vsub.f32 %v2168, %v1271
      %v2297 = vsub.f32 %v2169, %v1272
      %v2298 = vsub.f32 %v2170, %v1273
      %v2299 = vsub.f32 %v2171, %v1274
      %v2300 = vsub.f32 %v2172, %v1275
      %v2301 = vsub.f32 %v2173, %v1276
      %v2302 = vsub.f32 %v2174, %v1277
      %v2303 = vsub.f32 %v2175, %v1278
      %v2304 = vsub.f32 %v2176, %v1279
      %v2305 = vsub.f32 %v2177, %v1280
      %v2306 = vsub.f32 %v2178, %v1281
      %v2307 = vsub.f32 %v2179, %v1282
      %v2308 = vsub.f32 %v2180, %v1283
      %v2309 = vsub.f32 %v2181, %v1284
      %v2310 = vsub.f32 %v2182, %v1285
      %v2311 = vsub.f32 %v2183, %v1286
      %v2312 = vsub.f32 %v2184, %v1287
      %v2313 = vsub.f32 %v2185, %v1288
      %v2314 = vsub.f32 %v2186, %v1289
      %v2315 = vsub.f32 %v2187, %v1290
      %v2316 = vsub.f32 %v2188, %v1291
      %v2317 = vsub.f32 %v2189, %v1292
      %v2318 = vsub.f32 %v2190, %v1293
      %v2319 = vsub.f32 %v2191, %v1294
      %v2320 = vsub.f32 %v2192, %v1295
      %v2321 = vsub.f32 %v2193, %v1296
      %v2322 = vsub.f32 %v2194, %v1297
      %v2323 = vsub.f32 %v2195, %v1298
      %v2324 = vsub.f32 %v2196, %v1299
      %v2325 = vsub.f32 %v2197, %v1300
      %v2326 = vsub.f32 %v2198, %v1301
      %v2327 = vsub.f32 %v2199, %v1302
      %v2328 = vsub.f32 %v2200, %v1303
      %v2329 = vsub.f32 %v2201, %v1304
      %v2330 = vsub.f32 %v2202, %v1305
      %v2331 = vsub.f32 %v2203, %v1306
      %v2332 = vsub.f32 %v2204, %v1307
      %v2333 = vsub.f32 %v2205, %v1308
      %v2334 = vsub.f32 %v2206, %v1309
      %v2335 = vsub.f32 %v2207, %v1310
      %v2336 = vsub.f32 %v2208, %v1311
      %v2337 = vsub.f32 %v2209, %v1312
      %v2338 = vmul.f32 %v2210, %v2210
      %v2339 = vmul.f32 %v2211, %v2211
      %v2340 = vmul.f32 %v2212, %v2212
      %v2341 = vmul.f32 %v2213, %v2213
      %v2342 = vmul.f32 %v2214, %v2214
      %v2343 = vmul.f32 %v2215, %v2215
      %v2344 = vmul.f32 %v2216, %v2216
      %v2345 = vmul.f32 %v2217, %v2217
      %v2346 = vmul.f32 %v2218, %v2218
      %v2347 = vmul.f32 %v2219, %v2219
      %v2348 = vmul.f32 %v2220, %v2220
      %v2349 = vmul.f32 %v2221, %v2221
      %v2350 = vmul.f32 %v2222, %v2222
      %v2351 = vmul.f32 %v2223, %v2223
      %v2352 = vmul.f32 %v2224, %v2224
      %v2353 = vmul.f32 %v2225, %v2225
      %v2354 = vmul.f32 %v2226, %v2226
      %v2355 = vmul.f32 %v2227, %v2227
      %v2356 = vmul.f32 %v2228, %v2228
      %v2357 = vmul.f32 %v2229, %v2229
      %v2358 = vmul.f32 %v2230, %v2230
      %v2359 = vmul.f32 %v2231, %v2231
      %v2360 = vmul.f32 %v2232, %v2232
      %v2361 = vmul.f32 %v2233, %v2233
      %v2362 = vmul.f32 %v2234, %v2234
      %v2363 = vmul.f32 %v2235, %v2235
      %v2364 = vmul.f32 %v2236, %v2236
      %v2365 = vmul.f32 %v2237, %v2237
      %v2366 = vmul.f32 %v2238, %v2238
      %v2367 = vmul.f32 %v2239, %v2239
      %v2368 = vmul.f32 %v2240, %v2240
      %v2369 = vmul.f32 %v2241, %v2241
      %v2370 = vmul.f32 %v2242, %v2242
      %v2371 = vmul.f32 %v2243, %v2243
      %v2372 = vmul.f32 %v2244, %v2244
      %v2373 = vmul.f32 %v2245, %v2245
      %v2374 = vmul.f32 %v2246, %v2246
      %v2375 = vmul.f32 %v2247, %v2247
      %v2376 = vmul.f32 %v2248, %v2248
      %v2377 = vmul.f32 %v2249, %v2249
      %v2378 = vmul.f32 %v2250, %v2250
      %v2379 = vmul.f32 %v2251, %v2251
      %v2380 = vmul.f32 %v2252, %v2252
      %v2381 = vmul.f32 %v2253, %v2253
      %v2382 = vmul.f32 %v2254, %v2254
      %v2383 = vmul.f32 %v2255, %v2255
      %v2384 = vmul.f32 %v2256, %v2256
      %v2385 = vmul.f32 %v2257, %v2257
      %v2386 = vmul.f32 %v2258, %v2258
      %v2387 = vmul.f32 %v2259, %v2259
      %v2388 = vmul.f32 %v2260, %v2260
      %v2389 = vmul.f32 %v2261, %v2261
      %v2390 = vmul.f32 %v2262, %v2262
      %v2391 = vmul.f32 %v2263, %v2263
      %v2392 = vmul.f32 %v2264, %v2264
      %v2393 = vmul.f32 %v2265, %v2265
      %v2394 = vmul.f32 %v2266, %v2266
      %v2395 = vmul.f32 %v2267, %v2267
      %v2396 = vmul.f32 %v2268, %v2268
      %v2397 = vmul.f32 %v2269, %v2269
      %v2398 = vmul.f32 %v2270, %v2270
      %v2399 = vmul.f32 %v2271, %v2271
      %v2400 = vmul.f32 %v2272, %v2272
      %v2401 = vmul.f32 %v2273, %v2273
      %v2402 = vmul.f32 %v2274, %v2274
      %v2403 = vmul.f32 %v2275, %v2275
      %v2404 = vmul.f32 %v2276, %v2276
      %v2405 = vmul.f32 %v2277, %v2277
      %v2406 = vmul.f32 %v2278, %v2278
      %v2407 = vmul.f32 %v2279, %v2279
      %v2408 = vmul.f32 %v2280, %v2280
      %v2409 = vmul.f32 %v2281, %v2281
      %v2410 = vmul.f32 %v2282, %v2282
      %v2411 = vmul.f32 %v2283, %v2283
      %v2412 = vmul.f32 %v2284, %v2284
      %v2413 = vmul.f32 %v2285, %v2285
      %v2414 = vmul.f32 %v2286, %v2286
      %v2415 = vmul.f32 %v2287, %v2287
      %v2416 = vmul.f32 %v2288, %v2288
      %v2417 = vmul.f32 %v2289, %v2289
      %v2418 = vmul.f32 %v2290, %v2290
      %v2419 = vmul.f32 %v2291, %v2291
      %v2420 = vmul.f32 %v2292, %v2292
      %v2421 = vmul.f32 %v2293, %v2293
      %v2422 = vmul.f32 %v2294, %v2294
      %v2423 = vmul.f32 %v2295, %v2295
      %v2424 = vmul.f32 %v2296, %v2296
      %v2425 = vmul.f32 %v2297, %v2297
      %v2426 = vmul.f32 %v2298, %v2298
      %v2427 = vmul.f32 %v2299, %v2299
      %v2428 = vmul.f32 %v2300, %v2300
      %v2429 = vmul.f32 %v2301, %v2301
      %v2430 = vmul.f32 %v2302, %v2302
      %v2431 = vmul.f32 %v2303, %v2303
      %v2432 = vmul.f32 %v2304, %v2304
      %v2433 = vmul.f32 %v2305, %v2305
      %v2434 = vmul.f32 %v2306, %v2306
      %v2435 = vmul.f32 %v2307, %v2307
      %v2436 = vmul.f32 %v2308, %v2308
      %v2437 = vmul.f32 %v2309, %v2309
      %v2438 = vmul.f32 %v2310, %v2310
      %v2439 = vmul.f32 %v2311, %v2311
      %v2440 = vmul.f32 %v2312, %v2312
      %v2441 = vmul.f32 %v2313, %v2313
      %v2442 = vmul.f32 %v2314, %v2314
      %v2443 = vmul.f32 %v2315, %v2315
      %v2444 = vmul.f32 %v2316, %v2316
      %v2445 = vmul.f32 %v2317, %v2317
      %v2446 = vmul.f32 %v2318, %v2318
      %v2447 = vmul.f32 %v2319, %v2319
      %v2448 = vmul.f32 %v2320, %v2320
      %v2449 = vmul.f32 %v2321, %v2321
      %v2450 = vmul.f32 %v2322, %v2322
      %v2451 = vmul.f32 %v2323, %v2323
      %v2452 = vmul.f32 %v2324, %v2324
      %v2453 = vmul.f32 %v2325, %v2325
      %v2454 = vmul.f32 %v2326, %v2326
      %v2455 = vmul.f32 %v2327, %v2327
      %v2456 = vmul.f32 %v2328, %v2328
      %v2457 = vmul.f32 %v2329, %v2329
      %v2458 = vmul.f32 %v2330, %v2330
      %v2459 = vmul.f32 %v2331, %v2331
      %v2460 = vmul.f32 %v2332, %v2332
      %v2461 = vmul.f32 %v2333, %v2333
      %v2462 = vmul.f32 %v2334, %v2334
      %v2463 = vmul.f32 %v2335, %v2335
      %v2464 = vmul.f32 %v2336, %v2336
      %v2465 = vmul.f32 %v2337, %v2337
      %vm2466 = vcmask 23552
      %v2467 = vsel %vm2466, %v2338, 0.0
      %2468 = vadd.xlane.f32.xlu0 %v2467
      %v2469 = vpop.xlane.xlu0 %2468
      %v2470 = vsel %vm2466, %v2339, 0.0
      %2471 = vadd.xlane.f32.xlu0 %v2470
      %v2472 = vpop.xlane.xlu0 %2471
      %v2473 = vsel %vm2466, %v2340, 0.0
      %2474 = vadd.xlane.f32.xlu0 %v2473
      %v2475 = vpop.xlane.xlu0 %2474
      %v2476 = vsel %vm2466, %v2341, 0.0
      %2477 = vadd.xlane.f32.xlu0 %v2476
      %v2478 = vpop.xlane.xlu0 %2477
      %v2479 = vsel %vm2466, %v2342, 0.0
      %2480 = vadd.xlane.f32.xlu0 %v2479
      %v2481 = vpop.xlane.xlu0 %2480
      %v2482 = vsel %vm2466, %v2343, 0.0
      %2483 = vadd.xlane.f32.xlu0 %v2482
      %v2484 = vpop.xlane.xlu0 %2483
      %v2485 = vsel %vm2466, %v2344, 0.0
      %2486 = vadd.xlane.f32.xlu0 %v2485
      %v2487 = vpop.xlane.xlu0 %2486
      %v2488 = vsel %vm2466, %v2345, 0.0
      %2489 = vadd.xlane.f32.xlu0 %v2488
      %v2490 = vpop.xlane.xlu0 %2489
      %v2491 = vsel %vm2466, %v2346, 0.0
      %2492 = vadd.xlane.f32.xlu0 %v2491
      %v2493 = vpop.xlane.xlu0 %2492
      %v2494 = vsel %vm2466, %v2347, 0.0
      %2495 = vadd.xlane.f32.xlu0 %v2494
      %v2496 = vpop.xlane.xlu0 %2495
      %v2497 = vsel %vm2466, %v2348, 0.0
      %2498 = vadd.xlane.f32.xlu0 %v2497
      %v2499 = vpop.xlane.xlu0 %2498
      %v2500 = vsel %vm2466, %v2349, 0.0
      %2501 = vadd.xlane.f32.xlu0 %v2500
      %v2502 = vpop.xlane.xlu0 %2501
      %v2503 = vsel %vm2466, %v2350, 0.0
      %2504 = vadd.xlane.f32.xlu0 %v2503
      %v2505 = vpop.xlane.xlu0 %2504
      %v2506 = vsel %vm2466, %v2351, 0.0
      %2507 = vadd.xlane.f32.xlu0 %v2506
      %v2508 = vpop.xlane.xlu0 %2507
      %v2509 = vsel %vm2466, %v2352, 0.0
      %2510 = vadd.xlane.f32.xlu0 %v2509
      %v2511 = vpop.xlane.xlu0 %2510
      %v2512 = vsel %vm2466, %v2353, 0.0
      %2513 = vadd.xlane.f32.xlu0 %v2512
      %v2514 = vpop.xlane.xlu0 %2513
      %v2515 = vsel %vm2466, %v2354, 0.0
      %2516 = vadd.xlane.f32.xlu0 %v2515
      %v2517 = vpop.xlane.xlu0 %2516
      %v2518 = vsel %vm2466, %v2355, 0.0
      %2519 = vadd.xlane.f32.xlu0 %v2518
      %v2520 = vpop.xlane.xlu0 %2519
      %v2521 = vsel %vm2466, %v2356, 0.0
      %2522 = vadd.xlane.f32.xlu0 %v2521
      %v2523 = vpop.xlane.xlu0 %2522
      %v2524 = vsel %vm2466, %v2357, 0.0
      %2525 = vadd.xlane.f32.xlu0 %v2524
      %v2526 = vpop.xlane.xlu0 %2525
      %v2527 = vsel %vm2466, %v2358, 0.0
      %2528 = vadd.xlane.f32.xlu0 %v2527
      %v2529 = vpop.xlane.xlu0 %2528
      %v2530 = vsel %vm2466, %v2359, 0.0
      %2531 = vadd.xlane.f32.xlu0 %v2530
      %v2532 = vpop.xlane.xlu0 %2531
      %v2533 = vsel %vm2466, %v2360, 0.0
      %2534 = vadd.xlane.f32.xlu0 %v2533
      %v2535 = vpop.xlane.xlu0 %2534
      %v2536 = vsel %vm2466, %v2361, 0.0
      %2537 = vadd.xlane.f32.xlu0 %v2536
      %v2538 = vpop.xlane.xlu0 %2537
      %v2539 = vsel %vm2466, %v2362, 0.0
      %2540 = vadd.xlane.f32.xlu0 %v2539
      %v2541 = vpop.xlane.xlu0 %2540
      %v2542 = vsel %vm2466, %v2363, 0.0
      %2543 = vadd.xlane.f32.xlu0 %v2542
      %v2544 = vpop.xlane.xlu0 %2543
      %v2545 = vsel %vm2466, %v2364, 0.0
      %2546 = vadd.xlane.f32.xlu0 %v2545
      %v2547 = vpop.xlane.xlu0 %2546
      %v2548 = vsel %vm2466, %v2365, 0.0
      %2549 = vadd.xlane.f32.xlu0 %v2548
      %v2550 = vpop.xlane.xlu0 %2549
      %v2551 = vsel %vm2466, %v2366, 0.0
      %2552 = vadd.xlane.f32.xlu0 %v2551
      %v2553 = vpop.xlane.xlu0 %2552
      %v2554 = vsel %vm2466, %v2367, 0.0
      %2555 = vadd.xlane.f32.xlu0 %v2554
      %v2556 = vpop.xlane.xlu0 %2555
      %v2557 = vsel %vm2466, %v2368, 0.0
      %2558 = vadd.xlane.f32.xlu0 %v2557
      %v2559 = vpop.xlane.xlu0 %2558
      %v2560 = vsel %vm2466, %v2369, 0.0
      %2561 = vadd.xlane.f32.xlu0 %v2560
      %v2562 = vpop.xlane.xlu0 %2561
      %v2563 = vsel %vm2466, %v2370, 0.0
      %2564 = vadd.xlane.f32.xlu0 %v2563
      %v2565 = vpop.xlane.xlu0 %2564
      %v2566 = vsel %vm2466, %v2371, 0.0
      %2567 = vadd.xlane.f32.xlu0 %v2566
      %v2568 = vpop.xlane.xlu0 %2567
      %v2569 = vsel %vm2466, %v2372, 0.0
      %2570 = vadd.xlane.f32.xlu0 %v2569
      %v2571 = vpop.xlane.xlu0 %2570
      %v2572 = vsel %vm2466, %v2373, 0.0
      %2573 = vadd.xlane.f32.xlu0 %v2572
      %v2574 = vpop.xlane.xlu0 %2573
      %v2575 = vsel %vm2466, %v2374, 0.0
      %2576 = vadd.xlane.f32.xlu0 %v2575
      %v2577 = vpop.xlane.xlu0 %2576
      %v2578 = vsel %vm2466, %v2375, 0.0
      %2579 = vadd.xlane.f32.xlu0 %v2578
      %v2580 = vpop.xlane.xlu0 %2579
      %v2581 = vsel %vm2466, %v2376, 0.0
      %2582 = vadd.xlane.f32.xlu0 %v2581
      %v2583 = vpop.xlane.xlu0 %2582
      %v2584 = vsel %vm2466, %v2377, 0.0
      %2585 = vadd.xlane.f32.xlu0 %v2584
      %v2586 = vpop.xlane.xlu0 %2585
      %v2587 = vsel %vm2466, %v2378, 0.0
      %2588 = vadd.xlane.f32.xlu0 %v2587
      %v2589 = vpop.xlane.xlu0 %2588
      %v2590 = vsel %vm2466, %v2379, 0.0
      %2591 = vadd.xlane.f32.xlu0 %v2590
      %v2592 = vpop.xlane.xlu0 %2591
      %v2593 = vsel %vm2466, %v2380, 0.0
      %2594 = vadd.xlane.f32.xlu0 %v2593
      %v2595 = vpop.xlane.xlu0 %2594
      %v2596 = vsel %vm2466, %v2381, 0.0
      %2597 = vadd.xlane.f32.xlu0 %v2596
      %v2598 = vpop.xlane.xlu0 %2597
      %v2599 = vsel %vm2466, %v2382, 0.0
      %2600 = vadd.xlane.f32.xlu0 %v2599
      %v2601 = vpop.xlane.xlu0 %2600
      %v2602 = vsel %vm2466, %v2383, 0.0
      %2603 = vadd.xlane.f32.xlu0 %v2602
      %v2604 = vpop.xlane.xlu0 %2603
      %v2605 = vsel %vm2466, %v2384, 0.0
      %2606 = vadd.xlane.f32.xlu0 %v2605
      %v2607 = vpop.xlane.xlu0 %2606
      %v2608 = vsel %vm2466, %v2385, 0.0
      %2609 = vadd.xlane.f32.xlu0 %v2608
      %v2610 = vpop.xlane.xlu0 %2609
      %v2611 = vsel %vm2466, %v2386, 0.0
      %2612 = vadd.xlane.f32.xlu0 %v2611
      %v2613 = vpop.xlane.xlu0 %2612
      %v2614 = vsel %vm2466, %v2387, 0.0
      %2615 = vadd.xlane.f32.xlu0 %v2614
      %v2616 = vpop.xlane.xlu0 %2615
      %v2617 = vsel %vm2466, %v2388, 0.0
      %2618 = vadd.xlane.f32.xlu0 %v2617
      %v2619 = vpop.xlane.xlu0 %2618
      %v2620 = vsel %vm2466, %v2389, 0.0
      %2621 = vadd.xlane.f32.xlu0 %v2620
      %v2622 = vpop.xlane.xlu0 %2621
      %v2623 = vsel %vm2466, %v2390, 0.0
      %2624 = vadd.xlane.f32.xlu0 %v2623
      %v2625 = vpop.xlane.xlu0 %2624
      %v2626 = vsel %vm2466, %v2391, 0.0
      %2627 = vadd.xlane.f32.xlu0 %v2626
      %v2628 = vpop.xlane.xlu0 %2627
      %v2629 = vsel %vm2466, %v2392, 0.0
      %2630 = vadd.xlane.f32.xlu0 %v2629
      %v2631 = vpop.xlane.xlu0 %2630
      %v2632 = vsel %vm2466, %v2393, 0.0
      %2633 = vadd.xlane.f32.xlu0 %v2632
      %v2634 = vpop.xlane.xlu0 %2633
      %v2635 = vsel %vm2466, %v2394, 0.0
      %2636 = vadd.xlane.f32.xlu0 %v2635
      %v2637 = vpop.xlane.xlu0 %2636
      %v2638 = vsel %vm2466, %v2395, 0.0
      %2639 = vadd.xlane.f32.xlu0 %v2638
      %v2640 = vpop.xlane.xlu0 %2639
      %v2641 = vsel %vm2466, %v2396, 0.0
      %2642 = vadd.xlane.f32.xlu0 %v2641
      %v2643 = vpop.xlane.xlu0 %2642
      %v2644 = vsel %vm2466, %v2397, 0.0
      %2645 = vadd.xlane.f32.xlu0 %v2644
      %v2646 = vpop.xlane.xlu0 %2645
      %v2647 = vsel %vm2466, %v2398, 0.0
      %2648 = vadd.xlane.f32.xlu0 %v2647
      %v2649 = vpop.xlane.xlu0 %2648
      %v2650 = vsel %vm2466, %v2399, 0.0
      %2651 = vadd.xlane.f32.xlu0 %v2650
      %v2652 = vpop.xlane.xlu0 %2651
      %v2653 = vsel %vm2466, %v2400, 0.0
      %2654 = vadd.xlane.f32.xlu0 %v2653
      %v2655 = vpop.xlane.xlu0 %2654
      %v2656 = vsel %vm2466, %v2401, 0.0
      %2657 = vadd.xlane.f32.xlu0 %v2656
      %v2658 = vpop.xlane.xlu0 %2657
      %v2659 = vsel %vm2466, %v2402, 0.0
      %2660 = vadd.xlane.f32.xlu0 %v2659
      %v2661 = vpop.xlane.xlu0 %2660
      %v2662 = vsel %vm2466, %v2403, 0.0
      %2663 = vadd.xlane.f32.xlu0 %v2662
      %v2664 = vpop.xlane.xlu0 %2663
      %v2665 = vsel %vm2466, %v2404, 0.0
      %2666 = vadd.xlane.f32.xlu0 %v2665
      %v2667 = vpop.xlane.xlu0 %2666
      %v2668 = vsel %vm2466, %v2405, 0.0
      %2669 = vadd.xlane.f32.xlu0 %v2668
      %v2670 = vpop.xlane.xlu0 %2669
      %v2671 = vsel %vm2466, %v2406, 0.0
      %2672 = vadd.xlane.f32.xlu0 %v2671
      %v2673 = vpop.xlane.xlu0 %2672
      %v2674 = vsel %vm2466, %v2407, 0.0
      %2675 = vadd.xlane.f32.xlu0 %v2674
      %v2676 = vpop.xlane.xlu0 %2675
      %v2677 = vsel %vm2466, %v2408, 0.0
      %2678 = vadd.xlane.f32.xlu0 %v2677
      %v2679 = vpop.xlane.xlu0 %2678
      %v2680 = vsel %vm2466, %v2409, 0.0
      %2681 = vadd.xlane.f32.xlu0 %v2680
      %v2682 = vpop.xlane.xlu0 %2681
      %v2683 = vsel %vm2466, %v2410, 0.0
      %2684 = vadd.xlane.f32.xlu0 %v2683
      %v2685 = vpop.xlane.xlu0 %2684
      %v2686 = vsel %vm2466, %v2411, 0.0
      %2687 = vadd.xlane.f32.xlu0 %v2686
      %v2688 = vpop.xlane.xlu0 %2687
      %v2689 = vsel %vm2466, %v2412, 0.0
      %2690 = vadd.xlane.f32.xlu0 %v2689
      %v2691 = vpop.xlane.xlu0 %2690
      %v2692 = vsel %vm2466, %v2413, 0.0
      %2693 = vadd.xlane.f32.xlu0 %v2692
      %v2694 = vpop.xlane.xlu0 %2693
      %v2695 = vsel %vm2466, %v2414, 0.0
      %2696 = vadd.xlane.f32.xlu0 %v2695
      %v2697 = vpop.xlane.xlu0 %2696
      %v2698 = vsel %vm2466, %v2415, 0.0
      %2699 = vadd.xlane.f32.xlu0 %v2698
      %v2700 = vpop.xlane.xlu0 %2699
      %v2701 = vsel %vm2466, %v2416, 0.0
      %2702 = vadd.xlane.f32.xlu0 %v2701
      %v2703 = vpop.xlane.xlu0 %2702
      %v2704 = vsel %vm2466, %v2417, 0.0
      %2705 = vadd.xlane.f32.xlu0 %v2704
      %v2706 = vpop.xlane.xlu0 %2705
      %v2707 = vsel %vm2466, %v2418, 0.0
      %2708 = vadd.xlane.f32.xlu0 %v2707
      %v2709 = vpop.xlane.xlu0 %2708
      %v2710 = vsel %vm2466, %v2419, 0.0
      %2711 = vadd.xlane.f32.xlu0 %v2710
      %v2712 = vpop.xlane.xlu0 %2711
      %v2713 = vsel %vm2466, %v2420, 0.0
      %2714 = vadd.xlane.f32.xlu0 %v2713
      %v2715 = vpop.xlane.xlu0 %2714
      %v2716 = vsel %vm2466, %v2421, 0.0
      %2717 = vadd.xlane.f32.xlu0 %v2716
      %v2718 = vpop.xlane.xlu0 %2717
      %v2719 = vsel %vm2466, %v2422, 0.0
      %2720 = vadd.xlane.f32.xlu0 %v2719
      %v2721 = vpop.xlane.xlu0 %2720
      %v2722 = vsel %vm2466, %v2423, 0.0
      %2723 = vadd.xlane.f32.xlu0 %v2722
      %v2724 = vpop.xlane.xlu0 %2723
      %v2725 = vsel %vm2466, %v2424, 0.0
      %2726 = vadd.xlane.f32.xlu0 %v2725
      %v2727 = vpop.xlane.xlu0 %2726
      %v2728 = vsel %vm2466, %v2425, 0.0
      %2729 = vadd.xlane.f32.xlu0 %v2728
      %v2730 = vpop.xlane.xlu0 %2729
      %v2731 = vsel %vm2466, %v2426, 0.0
      %2732 = vadd.xlane.f32.xlu0 %v2731
      %v2733 = vpop.xlane.xlu0 %2732
      %v2734 = vsel %vm2466, %v2427, 0.0
      %2735 = vadd.xlane.f32.xlu0 %v2734
      %v2736 = vpop.xlane.xlu0 %2735
      %v2737 = vsel %vm2466, %v2428, 0.0
      %2738 = vadd.xlane.f32.xlu0 %v2737
      %v2739 = vpop.xlane.xlu0 %2738
      %v2740 = vsel %vm2466, %v2429, 0.0
      %2741 = vadd.xlane.f32.xlu0 %v2740
      %v2742 = vpop.xlane.xlu0 %2741
      %v2743 = vsel %vm2466, %v2430, 0.0
      %2744 = vadd.xlane.f32.xlu0 %v2743
      %v2745 = vpop.xlane.xlu0 %2744
      %v2746 = vsel %vm2466, %v2431, 0.0
      %2747 = vadd.xlane.f32.xlu0 %v2746
      %v2748 = vpop.xlane.xlu0 %2747
      %v2749 = vsel %vm2466, %v2432, 0.0
      %2750 = vadd.xlane.f32.xlu0 %v2749
      %v2751 = vpop.xlane.xlu0 %2750
      %v2752 = vsel %vm2466, %v2433, 0.0
      %2753 = vadd.xlane.f32.xlu0 %v2752
      %v2754 = vpop.xlane.xlu0 %2753
      %v2755 = vsel %vm2466, %v2434, 0.0
      %2756 = vadd.xlane.f32.xlu0 %v2755
      %v2757 = vpop.xlane.xlu0 %2756
      %v2758 = vsel %vm2466, %v2435, 0.0
      %2759 = vadd.xlane.f32.xlu0 %v2758
      %v2760 = vpop.xlane.xlu0 %2759
      %v2761 = vsel %vm2466, %v2436, 0.0
      %2762 = vadd.xlane.f32.xlu0 %v2761
      %v2763 = vpop.xlane.xlu0 %2762
      %v2764 = vsel %vm2466, %v2437, 0.0
      %2765 = vadd.xlane.f32.xlu0 %v2764
      %v2766 = vpop.xlane.xlu0 %2765
      %v2767 = vsel %vm2466, %v2438, 0.0
      %2768 = vadd.xlane.f32.xlu0 %v2767
      %v2769 = vpop.xlane.xlu0 %2768
      %v2770 = vsel %vm2466, %v2439, 0.0
      %2771 = vadd.xlane.f32.xlu0 %v2770
      %v2772 = vpop.xlane.xlu0 %2771
      %v2773 = vsel %vm2466, %v2440, 0.0
      %2774 = vadd.xlane.f32.xlu0 %v2773
      %v2775 = vpop.xlane.xlu0 %2774
      %v2776 = vsel %vm2466, %v2441, 0.0
      %2777 = vadd.xlane.f32.xlu0 %v2776
      %v2778 = vpop.xlane.xlu0 %2777
      %v2779 = vsel %vm2466, %v2442, 0.0
      %2780 = vadd.xlane.f32.xlu0 %v2779
      %v2781 = vpop.xlane.xlu0 %2780
      %v2782 = vsel %vm2466, %v2443, 0.0
      %2783 = vadd.xlane.f32.xlu0 %v2782
      %v2784 = vpop.xlane.xlu0 %2783
      %v2785 = vsel %vm2466, %v2444, 0.0
      %2786 = vadd.xlane.f32.xlu0 %v2785
      %v2787 = vpop.xlane.xlu0 %2786
      %v2788 = vsel %vm2466, %v2445, 0.0
      %2789 = vadd.xlane.f32.xlu0 %v2788
      %v2790 = vpop.xlane.xlu0 %2789
      %v2791 = vsel %vm2466, %v2446, 0.0
      %2792 = vadd.xlane.f32.xlu0 %v2791
      %v2793 = vpop.xlane.xlu0 %2792
      %v2794 = vsel %vm2466, %v2447, 0.0
      %2795 = vadd.xlane.f32.xlu0 %v2794
      %v2796 = vpop.xlane.xlu0 %2795
      %v2797 = vsel %vm2466, %v2448, 0.0
      %2798 = vadd.xlane.f32.xlu0 %v2797
      %v2799 = vpop.xlane.xlu0 %2798
      %v2800 = vsel %vm2466, %v2449, 0.0
      %2801 = vadd.xlane.f32.xlu0 %v2800
      %v2802 = vpop.xlane.xlu0 %2801
      %v2803 = vsel %vm2466, %v2450, 0.0
      %2804 = vadd.xlane.f32.xlu0 %v2803
      %v2805 = vpop.xlane.xlu0 %2804
      %v2806 = vsel %vm2466, %v2451, 0.0
      %2807 = vadd.xlane.f32.xlu0 %v2806
      %v2808 = vpop.xlane.xlu0 %2807
      %v2809 = vsel %vm2466, %v2452, 0.0
      %2810 = vadd.xlane.f32.xlu0 %v2809
      %v2811 = vpop.xlane.xlu0 %2810
      %v2812 = vsel %vm2466, %v2453, 0.0
      %2813 = vadd.xlane.f32.xlu0 %v2812
      %v2814 = vpop.xlane.xlu0 %2813
      %v2815 = vsel %vm2466, %v2454, 0.0
      %2816 = vadd.xlane.f32.xlu0 %v2815
      %v2817 = vpop.xlane.xlu0 %2816
      %v2818 = vsel %vm2466, %v2455, 0.0
      %2819 = vadd.xlane.f32.xlu0 %v2818
      %v2820 = vpop.xlane.xlu0 %2819
      %v2821 = vsel %vm2466, %v2456, 0.0
      %2822 = vadd.xlane.f32.xlu0 %v2821
      %v2823 = vpop.xlane.xlu0 %2822
      %v2824 = vsel %vm2466, %v2457, 0.0
      %2825 = vadd.xlane.f32.xlu0 %v2824
      %v2826 = vpop.xlane.xlu0 %2825
      %v2827 = vsel %vm2466, %v2458, 0.0
      %2828 = vadd.xlane.f32.xlu0 %v2827
      %v2829 = vpop.xlane.xlu0 %2828
      %v2830 = vsel %vm2466, %v2459, 0.0
      %2831 = vadd.xlane.f32.xlu0 %v2830
      %v2832 = vpop.xlane.xlu0 %2831
      %v2833 = vsel %vm2466, %v2460, 0.0
      %2834 = vadd.xlane.f32.xlu0 %v2833
      %v2835 = vpop.xlane.xlu0 %2834
      %v2836 = vsel %vm2466, %v2461, 0.0
      %2837 = vadd.xlane.f32.xlu0 %v2836
      %v2838 = vpop.xlane.xlu0 %2837
      %v2839 = vsel %vm2466, %v2462, 0.0
      %2840 = vadd.xlane.f32.xlu0 %v2839
      %v2841 = vpop.xlane.xlu0 %2840
      %v2842 = vsel %vm2466, %v2463, 0.0
      %2843 = vadd.xlane.f32.xlu0 %v2842
      %v2844 = vpop.xlane.xlu0 %2843
      %v2845 = vsel %vm2466, %v2464, 0.0
      %2846 = vadd.xlane.f32.xlu0 %v2845
      %v2847 = vpop.xlane.xlu0 %2846
      %v2848 = vsel %vm2466, %v2465, 0.0
      %2849 = vadd.xlane.f32.xlu0 %v2848
      %v2850 = vpop.xlane.xlu0 %2849
      %v2851 = vmul.f32 %v1954, %v1954
      %v2852 = vmul.f32 %v1955, %v1955
      %v2853 = vmul.f32 %v1956, %v1956
      %v2854 = vmul.f32 %v1957, %v1957
      %v2855 = vmul.f32 %v1958, %v1958
      %v2856 = vmul.f32 %v1959, %v1959
      %v2857 = vmul.f32 %v1960, %v1960
      %v2858 = vmul.f32 %v1961, %v1961
      %v2859 = vmul.f32 %v1962, %v1962
      %v2860 = vmul.f32 %v1963, %v1963
      %v2861 = vmul.f32 %v1964, %v1964
      %v2862 = vmul.f32 %v1965, %v1965
      %v2863 = vmul.f32 %v1966, %v1966
      %v2864 = vmul.f32 %v1967, %v1967
      %v2865 = vmul.f32 %v1968, %v1968
      %v2866 = vmul.f32 %v1969, %v1969
      %v2867 = vmul.f32 %v1970, %v1970
      %v2868 = vmul.f32 %v1971, %v1971
      %v2869 = vmul.f32 %v1972, %v1972
      %v2870 = vmul.f32 %v1973, %v1973
      %v2871 = vmul.f32 %v1974, %v1974
      %v2872 = vmul.f32 %v1975, %v1975
      %v2873 = vmul.f32 %v1976, %v1976
      %v2874 = vmul.f32 %v1977, %v1977
      %v2875 = vmul.f32 %v1978, %v1978
      %v2876 = vmul.f32 %v1979, %v1979
      %v2877 = vmul.f32 %v1980, %v1980
      %v2878 = vmul.f32 %v1981, %v1981
      %v2879 = vmul.f32 %v1982, %v1982
      %v2880 = vmul.f32 %v1983, %v1983
      %v2881 = vmul.f32 %v1984, %v1984
      %v2882 = vmul.f32 %v1985, %v1985
      %v2883 = vmul.f32 %v1986, %v1986
      %v2884 = vmul.f32 %v1987, %v1987
      %v2885 = vmul.f32 %v1988, %v1988
      %v2886 = vmul.f32 %v1989, %v1989
      %v2887 = vmul.f32 %v1990, %v1990
      %v2888 = vmul.f32 %v1991, %v1991
      %v2889 = vmul.f32 %v1992, %v1992
      %v2890 = vmul.f32 %v1993, %v1993
      %v2891 = vmul.f32 %v1994, %v1994
      %v2892 = vmul.f32 %v1995, %v1995
      %v2893 = vmul.f32 %v1996, %v1996
      %v2894 = vmul.f32 %v1997, %v1997
      %v2895 = vmul.f32 %v1998, %v1998
      %v2896 = vmul.f32 %v1999, %v1999
      %v2897 = vmul.f32 %v2000, %v2000
      %v2898 = vmul.f32 %v2001, %v2001
      %v2899 = vmul.f32 %v2002, %v2002
      %v2900 = vmul.f32 %v2003, %v2003
      %v2901 = vmul.f32 %v2004, %v2004
      %v2902 = vmul.f32 %v2005, %v2005
      %v2903 = vmul.f32 %v2006, %v2006
      %v2904 = vmul.f32 %v2007, %v2007
      %v2905 = vmul.f32 %v2008, %v2008
      %v2906 = vmul.f32 %v2009, %v2009
      %v2907 = vmul.f32 %v2010, %v2010
      %v2908 = vmul.f32 %v2011, %v2011
      %v2909 = vmul.f32 %v2012, %v2012
      %v2910 = vmul.f32 %v2013, %v2013
      %v2911 = vmul.f32 %v2014, %v2014
      %v2912 = vmul.f32 %v2015, %v2015
      %v2913 = vmul.f32 %v2016, %v2016
      %v2914 = vmul.f32 %v2017, %v2017
      %v2915 = vmul.f32 %v2018, %v2018
      %v2916 = vmul.f32 %v2019, %v2019
      %v2917 = vmul.f32 %v2020, %v2020
      %v2918 = vmul.f32 %v2021, %v2021
      %v2919 = vmul.f32 %v2022, %v2022
      %v2920 = vmul.f32 %v2023, %v2023
      %v2921 = vmul.f32 %v2024, %v2024
      %v2922 = vmul.f32 %v2025, %v2025
      %v2923 = vmul.f32 %v2026, %v2026
      %v2924 = vmul.f32 %v2027, %v2027
      %v2925 = vmul.f32 %v2028, %v2028
      %v2926 = vmul.f32 %v2029, %v2029
      %v2927 = vmul.f32 %v2030, %v2030
      %v2928 = vmul.f32 %v2031, %v2031
      %v2929 = vmul.f32 %v2032, %v2032
      %v2930 = vmul.f32 %v2033, %v2033
      %v2931 = vmul.f32 %v2034, %v2034
      %v2932 = vmul.f32 %v2035, %v2035
      %v2933 = vmul.f32 %v2036, %v2036
      %v2934 = vmul.f32 %v2037, %v2037
      %v2935 = vmul.f32 %v2038, %v2038
      %v2936 = vmul.f32 %v2039, %v2039
      %v2937 = vmul.f32 %v2040, %v2040
      %v2938 = vmul.f32 %v2041, %v2041
      %v2939 = vmul.f32 %v2042, %v2042
      %v2940 = vmul.f32 %v2043, %v2043
      %v2941 = vmul.f32 %v2044, %v2044
      %v2942 = vmul.f32 %v2045, %v2045
      %v2943 = vmul.f32 %v2046, %v2046
      %v2944 = vmul.f32 %v2047, %v2047
      %v2945 = vmul.f32 %v2048, %v2048
      %v2946 = vmul.f32 %v2049, %v2049
      %v2947 = vmul.f32 %v2050, %v2050
      %v2948 = vmul.f32 %v2051, %v2051
      %v2949 = vmul.f32 %v2052, %v2052
      %v2950 = vmul.f32 %v2053, %v2053
      %v2951 = vmul.f32 %v2054, %v2054
      %v2952 = vmul.f32 %v2055, %v2055
      %v2953 = vmul.f32 %v2056, %v2056
      %v2954 = vmul.f32 %v2057, %v2057
      %v2955 = vmul.f32 %v2058, %v2058
      %v2956 = vmul.f32 %v2059, %v2059
      %v2957 = vmul.f32 %v2060, %v2060
      %v2958 = vmul.f32 %v2061, %v2061
      %v2959 = vmul.f32 %v2062, %v2062
      %v2960 = vmul.f32 %v2063, %v2063
      %v2961 = vmul.f32 %v2064, %v2064
      %v2962 = vmul.f32 %v2065, %v2065
      %v2963 = vmul.f32 %v2066, %v2066
      %v2964 = vmul.f32 %v2067, %v2067
      %v2965 = vmul.f32 %v2068, %v2068
      %v2966 = vmul.f32 %v2069, %v2069
      %v2967 = vmul.f32 %v2070, %v2070
      %v2968 = vmul.f32 %v2071, %v2071
      %v2969 = vmul.f32 %v2072, %v2072
      %v2970 = vmul.f32 %v2073, %v2073
      %v2971 = vmul.f32 %v2074, %v2074
      %v2972 = vmul.f32 %v2075, %v2075
      %v2973 = vmul.f32 %v2076, %v2076
      %v2974 = vmul.f32 %v2077, %v2077
      %v2975 = vmul.f32 %v2078, %v2078
      %v2976 = vmul.f32 %v2079, %v2079
      %v2977 = vmul.f32 %v2080, %v2080
      %v2978 = vmul.f32 %v2081, %v2081
      %v2979 = vrcp.pop %v2851
      %v2980 = vmul.f32 0.5, %v2979
      %v2981 = vrcp.pop %v2852
      %v2982 = vmul.f32 0.5, %v2981
      %v2983 = vrcp.pop %v2853
      %v2984 = vmul.f32 0.5, %v2983
      %v2985 = vrcp.pop %v2854
      %v2986 = vmul.f32 0.5, %v2985
      %v2987 = vrcp.pop %v2855
      %v2988 = vmul.f32 0.5, %v2987
      %v2989 = vrcp.pop %v2856
      %v2990 = vmul.f32 0.5, %v2989
      %v2991 = vrcp.pop %v2857
      %v2992 = vmul.f32 0.5, %v2991
      %v2993 = vrcp.pop %v2858
      %v2994 = vmul.f32 0.5, %v2993
      %v2995 = vrcp.pop %v2859
      %v2996 = vmul.f32 0.5, %v2995
      %v2997 = vrcp.pop %v2860
      %v2998 = vmul.f32 0.5, %v2997
      %v2999 = vrcp.pop %v2861
      %v3000 = vmul.f32 0.5, %v2999
      %v3001 = vrcp.pop %v2862
      %v3002 = vmul.f32 0.5, %v3001
      %v3003 = vrcp.pop %v2863
      %v3004 = vmul.f32 0.5, %v3003
      %v3005 = vrcp.pop %v2864
      %v3006 = vmul.f32 0.5, %v3005
      %v3007 = vrcp.pop %v2865
      %v3008 = vmul.f32 0.5, %v3007
      %v3009 = vrcp.pop %v2866
      %v3010 = vmul.f32 0.5, %v3009
      %v3011 = vrcp.pop %v2867
      %v3012 = vmul.f32 0.5, %v3011
      %v3013 = vrcp.pop %v2868
      %v3014 = vmul.f32 0.5, %v3013
      %v3015 = vrcp.pop %v2869
      %v3016 = vmul.f32 0.5, %v3015
      %v3017 = vrcp.pop %v2870
      %v3018 = vmul.f32 0.5, %v3017
      %v3019 = vrcp.pop %v2871
      %v3020 = vmul.f32 0.5, %v3019
      %v3021 = vrcp.pop %v2872
      %v3022 = vmul.f32 0.5, %v3021
      %v3023 = vrcp.pop %v2873
      %v3024 = vmul.f32 0.5, %v3023
      %v3025 = vrcp.pop %v2874
      %v3026 = vmul.f32 0.5, %v3025
      %v3027 = vrcp.pop %v2875
      %v3028 = vmul.f32 0.5, %v3027
      %v3029 = vrcp.pop %v2876
      %v3030 = vmul.f32 0.5, %v3029
      %v3031 = vrcp.pop %v2877
      %v3032 = vmul.f32 0.5, %v3031
      %v3033 = vrcp.pop %v2878
      %v3034 = vmul.f32 0.5, %v3033
      %v3035 = vrcp.pop %v2879
      %v3036 = vmul.f32 0.5, %v3035
      %v3037 = vrcp.pop %v2880
      %v3038 = vmul.f32 0.5, %v3037
      %v3039 = vrcp.pop %v2881
      %v3040 = vmul.f32 0.5, %v3039
      %v3041 = vrcp.pop %v2882
      %v3042 = vmul.f32 0.5, %v3041
      %v3043 = vrcp.pop %v2883
      %v3044 = vmul.f32 0.5, %v3043
      %v3045 = vrcp.pop %v2884
      %v3046 = vmul.f32 0.5, %v3045
      %v3047 = vrcp.pop %v2885
      %v3048 = vmul.f32 0.5, %v3047
      %v3049 = vrcp.pop %v2886
      %v3050 = vmul.f32 0.5, %v3049
      %v3051 = vrcp.pop %v2887
      %v3052 = vmul.f32 0.5, %v3051
      %v3053 = vrcp.pop %v2888
      %v3054 = vmul.f32 0.5, %v3053
      %v3055 = vrcp.pop %v2889
      %v3056 = vmul.f32 0.5, %v3055
      %v3057 = vrcp.pop %v2890
      %v3058 = vmul.f32 0.5, %v3057
      %v3059 = vrcp.pop %v2891
      %v3060 = vmul.f32 0.5, %v3059
      %v3061 = vrcp.pop %v2892
      %v3062 = vmul.f32 0.5, %v3061
      %v3063 = vrcp.pop %v2893
      %v3064 = vmul.f32 0.5, %v3063
      %v3065 = vrcp.pop %v2894
      %v3066 = vmul.f32 0.5, %v3065
      %v3067 = vrcp.pop %v2895
      %v3068 = vmul.f32 0.5, %v3067
      %v3069 = vrcp.pop %v2896
      %v3070 = vmul.f32 0.5, %v3069
      %v3071 = vrcp.pop %v2897
      %v3072 = vmul.f32 0.5, %v3071
      %v3073 = vrcp.pop %v2898
      %v3074 = vmul.f32 0.5, %v3073
      %v3075 = vrcp.pop %v2899
      %v3076 = vmul.f32 0.5, %v3075
      %v3077 = vrcp.pop %v2900
      %v3078 = vmul.f32 0.5, %v3077
      %v3079 = vrcp.pop %v2901
      %v3080 = vmul.f32 0.5, %v3079
      %v3081 = vrcp.pop %v2902
      %v3082 = vmul.f32 0.5, %v3081
      %v3083 = vrcp.pop %v2903
      %v3084 = vmul.f32 0.5, %v3083
      %v3085 = vrcp.pop %v2904
      %v3086 = vmul.f32 0.5, %v3085
      %v3087 = vrcp.pop %v2905
      %v3088 = vmul.f32 0.5, %v3087
      %v3089 = vrcp.pop %v2906
      %v3090 = vmul.f32 0.5, %v3089
      %v3091 = vrcp.pop %v2907
      %v3092 = vmul.f32 0.5, %v3091
      %v3093 = vrcp.pop %v2908
      %v3094 = vmul.f32 0.5, %v3093
      %v3095 = vrcp.pop %v2909
      %v3096 = vmul.f32 0.5, %v3095
      %v3097 = vrcp.pop %v2910
      %v3098 = vmul.f32 0.5, %v3097
      %v3099 = vrcp.pop %v2911
      %v3100 = vmul.f32 0.5, %v3099
      %v3101 = vrcp.pop %v2912
      %v3102 = vmul.f32 0.5, %v3101
      %v3103 = vrcp.pop %v2913
      %v3104 = vmul.f32 0.5, %v3103
      %v3105 = vrcp.pop %v2914
      %v3106 = vmul.f32 0.5, %v3105
      %v3107 = vrcp.pop %v2915
      %v3108 = vmul.f32 0.5, %v3107
      %v3109 = vrcp.pop %v2916
      %v3110 = vmul.f32 0.5, %v3109
      %v3111 = vrcp.pop %v2917
      %v3112 = vmul.f32 0.5, %v3111
      %v3113 = vrcp.pop %v2918
      %v3114 = vmul.f32 0.5, %v3113
      %v3115 = vrcp.pop %v2919
      %v3116 = vmul.f32 0.5, %v3115
      %v3117 = vrcp.pop %v2920
      %v3118 = vmul.f32 0.5, %v3117
      %v3119 = vrcp.pop %v2921
      %v3120 = vmul.f32 0.5, %v3119
      %v3121 = vrcp.pop %v2922
      %v3122 = vmul.f32 0.5, %v3121
      %v3123 = vrcp.pop %v2923
      %v3124 = vmul.f32 0.5, %v3123
      %v3125 = vrcp.pop %v2924
      %v3126 = vmul.f32 0.5, %v3125
      %v3127 = vrcp.pop %v2925
      %v3128 = vmul.f32 0.5, %v3127
      %v3129 = vrcp.pop %v2926
      %v3130 = vmul.f32 0.5, %v3129
      %v3131 = vrcp.pop %v2927
      %v3132 = vmul.f32 0.5, %v3131
      %v3133 = vrcp.pop %v2928
      %v3134 = vmul.f32 0.5, %v3133
      %v3135 = vrcp.pop %v2929
      %v3136 = vmul.f32 0.5, %v3135
      %v3137 = vrcp.pop %v2930
      %v3138 = vmul.f32 0.5, %v3137
      %v3139 = vrcp.pop %v2931
      %v3140 = vmul.f32 0.5, %v3139
      %v3141 = vrcp.pop %v2932
      %v3142 = vmul.f32 0.5, %v3141
      %v3143 = vrcp.pop %v2933
      %v3144 = vmul.f32 0.5, %v3143
      %v3145 = vrcp.pop %v2934
      %v3146 = vmul.f32 0.5, %v3145
      %v3147 = vrcp.pop %v2935
      %v3148 = vmul.f32 0.5, %v3147
      %v3149 = vrcp.pop %v2936
      %v3150 = vmul.f32 0.5, %v3149
      %v3151 = vrcp.pop %v2937
      %v3152 = vmul.f32 0.5, %v3151
      %v3153 = vrcp.pop %v2938
      %v3154 = vmul.f32 0.5, %v3153
      %v3155 = vrcp.pop %v2939
      %v3156 = vmul.f32 0.5, %v3155
      %v3157 = vrcp.pop %v2940
      %v3158 = vmul.f32 0.5, %v3157
      %v3159 = vrcp.pop %v2941
      %v3160 = vmul.f32 0.5, %v3159
      %v3161 = vrcp.pop %v2942
      %v3162 = vmul.f32 0.5, %v3161
      %v3163 = vrcp.pop %v2943
      %v3164 = vmul.f32 0.5, %v3163
      %v3165 = vrcp.pop %v2944
      %v3166 = vmul.f32 0.5, %v3165
      %v3167 = vrcp.pop %v2945
      %v3168 = vmul.f32 0.5, %v3167
      %v3169 = vrcp.pop %v2946
      %v3170 = vmul.f32 0.5, %v3169
      %v3171 = vrcp.pop %v2947
      %v3172 = vmul.f32 0.5, %v3171
      %v3173 = vrcp.pop %v2948
      %v3174 = vmul.f32 0.5, %v3173
      %v3175 = vrcp.pop %v2949
      %v3176 = vmul.f32 0.5, %v3175
      %v3177 = vrcp.pop %v2950
      %v3178 = vmul.f32 0.5, %v3177
      %v3179 = vrcp.pop %v2951
      %v3180 = vmul.f32 0.5, %v3179
      %v3181 = vrcp.pop %v2952
      %v3182 = vmul.f32 0.5, %v3181
      %v3183 = vrcp.pop %v2953
      %v3184 = vmul.f32 0.5, %v3183
      %v3185 = vrcp.pop %v2954
      %v3186 = vmul.f32 0.5, %v3185
      %v3187 = vrcp.pop %v2955
      %v3188 = vmul.f32 0.5, %v3187
      %v3189 = vrcp.pop %v2956
      %v3190 = vmul.f32 0.5, %v3189
      %v3191 = vrcp.pop %v2957
      %v3192 = vmul.f32 0.5, %v3191
      %v3193 = vrcp.pop %v2958
      %v3194 = vmul.f32 0.5, %v3193
      %v3195 = vrcp.pop %v2959
      %v3196 = vmul.f32 0.5, %v3195
      %v3197 = vrcp.pop %v2960
      %v3198 = vmul.f32 0.5, %v3197
      %v3199 = vrcp.pop %v2961
      %v3200 = vmul.f32 0.5, %v3199
      %v3201 = vrcp.pop %v2962
      %v3202 = vmul.f32 0.5, %v3201
      %v3203 = vrcp.pop %v2963
      %v3204 = vmul.f32 0.5, %v3203
      %v3205 = vrcp.pop %v2964
      %v3206 = vmul.f32 0.5, %v3205
      %v3207 = vrcp.pop %v2965
      %v3208 = vmul.f32 0.5, %v3207
      %v3209 = vrcp.pop %v2966
      %v3210 = vmul.f32 0.5, %v3209
      %v3211 = vrcp.pop %v2967
      %v3212 = vmul.f32 0.5, %v3211
      %v3213 = vrcp.pop %v2968
      %v3214 = vmul.f32 0.5, %v3213
      %v3215 = vrcp.pop %v2969
      %v3216 = vmul.f32 0.5, %v3215
      %v3217 = vrcp.pop %v2970
      %v3218 = vmul.f32 0.5, %v3217
      %v3219 = vrcp.pop %v2971
      %v3220 = vmul.f32 0.5, %v3219
      %v3221 = vrcp.pop %v2972
      %v3222 = vmul.f32 0.5, %v3221
      %v3223 = vrcp.pop %v2973
      %v3224 = vmul.f32 0.5, %v3223
      %v3225 = vrcp.pop %v2974
      %v3226 = vmul.f32 0.5, %v3225
      %v3227 = vrcp.pop %v2975
      %v3228 = vmul.f32 0.5, %v3227
      %v3229 = vrcp.pop %v2976
      %v3230 = vmul.f32 0.5, %v3229
      %v3231 = vrcp.pop %v2977
      %v3232 = vmul.f32 0.5, %v3231
      %v3233 = vrcp.pop %v2978
      %v3234 = vmul.f32 0.5, %v3233
      %v3235 = vld [vmem:[%s520] sm:$0xff]
      %v3236 = vld [vmem:[%s520 + $0x8] sm:$0xff]
      %v3237 = vld [vmem:[%s520 + $0x10] sm:$0xff]
      %v3238 = vld [vmem:[%s520 + $0x18] sm:$0xff]
      %v3239 = vld [vmem:[%s520 + $0x20] sm:$0xff]
      %v3240 = vld [vmem:[%s520 + $0x28] sm:$0xff]
      %v3241 = vld [vmem:[%s520 + $0x30] sm:$0xff]
      %v3242 = vld [vmem:[%s520 + $0x38] sm:$0xff]
      %v3243 = vld [vmem:[%s520 + $0x40] sm:$0xff]
      %v3244 = vld [vmem:[%s520 + $0x48] sm:$0xff]
      %v3245 = vld [vmem:[%s520 + $0x50] sm:$0xff]
      %v3246 = vld [vmem:[%s520 + $0x58] sm:$0xff]
      %v3247 = vld [vmem:[%s520 + $0x60] sm:$0xff]
      %v3248 = vld [vmem:[%s520 + $0x68] sm:$0xff]
      %v3249 = vld [vmem:[%s520 + $0x70] sm:$0xff]
      %v3250 = vld [vmem:[%s520 + $0x78] sm:$0xff]
      %v3251 = vld [vmem:[%s520 + $0x80] sm:$0xff]
      %v3252 = vld [vmem:[%s520 + $0x88] sm:$0xff]
      %v3253 = vld [vmem:[%s520 + $0x90] sm:$0xff]
      %v3254 = vld [vmem:[%s520 + $0x98] sm:$0xff]
      %v3255 = vld [vmem:[%s520 + $0xa0] sm:$0xff]
      %v3256 = vld [vmem:[%s520 + $0xa8] sm:$0xff]
      %v3257 = vld [vmem:[%s520 + $0xb0] sm:$0xff]
      %v3258 = vld [vmem:[%s520 + $0xb8] sm:$0xff]
      %v3259 = vld [vmem:[%s520 + $0xc0] sm:$0xff]
      %v3260 = vld [vmem:[%s520 + $0xc8] sm:$0xff]
      %v3261 = vld [vmem:[%s520 + $0xd0] sm:$0xff]
      %v3262 = vld [vmem:[%s520 + $0xd8] sm:$0xff]
      %v3263 = vld [vmem:[%s520 + $0xe0] sm:$0xff]
      %v3264 = vld [vmem:[%s520 + $0xe8] sm:$0xff]
      %v3265 = vld [vmem:[%s520 + $0xf0] sm:$0xff]
      %v3266 = vld [vmem:[%s520 + $0xf8] sm:$0xff]
      %v3267 = vld [vmem:[%s520 + $0x100] sm:$0xff]
      %v3268 = vld [vmem:[%s520 + $0x108] sm:$0xff]
      %v3269 = vld [vmem:[%s520 + $0x110] sm:$0xff]
      %v3270 = vld [vmem:[%s520 + $0x118] sm:$0xff]
      %v3271 = vld [vmem:[%s520 + $0x120] sm:$0xff]
      %v3272 = vld [vmem:[%s520 + $0x128] sm:$0xff]
      %v3273 = vld [vmem:[%s520 + $0x130] sm:$0xff]
      %v3274 = vld [vmem:[%s520 + $0x138] sm:$0xff]
      %v3275 = vld [vmem:[%s520 + $0x140] sm:$0xff]
      %v3276 = vld [vmem:[%s520 + $0x148] sm:$0xff]
      %v3277 = vld [vmem:[%s520 + $0x150] sm:$0xff]
      %v3278 = vld [vmem:[%s520 + $0x158] sm:$0xff]
      %v3279 = vld [vmem:[%s520 + $0x160] sm:$0xff]
      %v3280 = vld [vmem:[%s520 + $0x168] sm:$0xff]
      %v3281 = vld [vmem:[%s520 + $0x170] sm:$0xff]
      %v3282 = vld [vmem:[%s520 + $0x178] sm:$0xff]
      %v3283 = vld [vmem:[%s520 + $0x180] sm:$0xff]
      %v3284 = vld [vmem:[%s520 + $0x188] sm:$0xff]
      %v3285 = vld [vmem:[%s520 + $0x190] sm:$0xff]
      %v3286 = vld [vmem:[%s520 + $0x198] sm:$0xff]
      %v3287 = vld [vmem:[%s520 + $0x1a0] sm:$0xff]
      %v3288 = vld [vmem:[%s520 + $0x1a8] sm:$0xff]
      %v3289 = vld [vmem:[%s520 + $0x1b0] sm:$0xff]
      %v3290 = vld [vmem:[%s520 + $0x1b8] sm:$0xff]
      %v3291 = vld [vmem:[%s520 + $0x1c0] sm:$0xff]
      %v3292 = vld [vmem:[%s520 + $0x1c8] sm:$0xff]
      %v3293 = vld [vmem:[%s520 + $0x1d0] sm:$0xff]
      %v3294 = vld [vmem:[%s520 + $0x1d8] sm:$0xff]
      %v3295 = vld [vmem:[%s520 + $0x1e0] sm:$0xff]
      %v3296 = vld [vmem:[%s520 + $0x1e8] sm:$0xff]
      %v3297 = vld [vmem:[%s520 + $0x1f0] sm:$0xff]
      %v3298 = vld [vmem:[%s520 + $0x1f8] sm:$0xff]
      %v3299 = vld [vmem:[%s520 + $0x200] sm:$0xff]
      %v3300 = vld [vmem:[%s520 + $0x208] sm:$0xff]
      %v3301 = vld [vmem:[%s520 + $0x210] sm:$0xff]
      %v3302 = vld [vmem:[%s520 + $0x218] sm:$0xff]
      %v3303 = vld [vmem:[%s520 + $0x220] sm:$0xff]
      %v3304 = vld [vmem:[%s520 + $0x228] sm:$0xff]
      %v3305 = vld [vmem:[%s520 + $0x230] sm:$0xff]
      %v3306 = vld [vmem:[%s520 + $0x238] sm:$0xff]
      %v3307 = vld [vmem:[%s520 + $0x240] sm:$0xff]
      %v3308 = vld [vmem:[%s520 + $0x248] sm:$0xff]
      %v3309 = vld [vmem:[%s520 + $0x250] sm:$0xff]
      %v3310 = vld [vmem:[%s520 + $0x258] sm:$0xff]
      %v3311 = vld [vmem:[%s520 + $0x260] sm:$0xff]
      %v3312 = vld [vmem:[%s520 + $0x268] sm:$0xff]
      %v3313 = vld [vmem:[%s520 + $0x270] sm:$0xff]
      %v3314 = vld [vmem:[%s520 + $0x278] sm:$0xff]
      %v3315 = vld [vmem:[%s520 + $0x280] sm:$0xff]
      %v3316 = vld [vmem:[%s520 + $0x288] sm:$0xff]
      %v3317 = vld [vmem:[%s520 + $0x290] sm:$0xff]
      %v3318 = vld [vmem:[%s520 + $0x298] sm:$0xff]
      %v3319 = vld [vmem:[%s520 + $0x2a0] sm:$0xff]
      %v3320 = vld [vmem:[%s520 + $0x2a8] sm:$0xff]
      %v3321 = vld [vmem:[%s520 + $0x2b0] sm:$0xff]
      %v3322 = vld [vmem:[%s520 + $0x2b8] sm:$0xff]
      %v3323 = vld [vmem:[%s520 + $0x2c0] sm:$0xff]
      %v3324 = vld [vmem:[%s520 + $0x2c8] sm:$0xff]
      %v3325 = vld [vmem:[%s520 + $0x2d0] sm:$0xff]
      %v3326 = vld [vmem:[%s520 + $0x2d8] sm:$0xff]
      %v3327 = vld [vmem:[%s520 + $0x2e0] sm:$0xff]
      %v3328 = vld [vmem:[%s520 + $0x2e8] sm:$0xff]
      %v3329 = vld [vmem:[%s520 + $0x2f0] sm:$0xff]
      %v3330 = vld [vmem:[%s520 + $0x2f8] sm:$0xff]
      %v3331 = vld [vmem:[%s520 + $0x300] sm:$0xff]
      %v3332 = vld [vmem:[%s520 + $0x308] sm:$0xff]
      %v3333 = vld [vmem:[%s520 + $0x310] sm:$0xff]
      %v3334 = vld [vmem:[%s520 + $0x318] sm:$0xff]
      %v3335 = vld [vmem:[%s520 + $0x320] sm:$0xff]
      %v3336 = vld [vmem:[%s520 + $0x328] sm:$0xff]
      %v3337 = vld [vmem:[%s520 + $0x330] sm:$0xff]
      %v3338 = vld [vmem:[%s520 + $0x338] sm:$0xff]
      %v3339 = vld [vmem:[%s520 + $0x340] sm:$0xff]
      %v3340 = vld [vmem:[%s520 + $0x348] sm:$0xff]
      %v3341 = vld [vmem:[%s520 + $0x350] sm:$0xff]
      %v3342 = vld [vmem:[%s520 + $0x358] sm:$0xff]
      %v3343 = vld [vmem:[%s520 + $0x360] sm:$0xff]
      %v3344 = vld [vmem:[%s520 + $0x368] sm:$0xff]
      %v3345 = vld [vmem:[%s520 + $0x370] sm:$0xff]
      %v3346 = vld [vmem:[%s520 + $0x378] sm:$0xff]
      %v3347 = vld [vmem:[%s520 + $0x380] sm:$0xff]
      %v3348 = vld [vmem:[%s520 + $0x388] sm:$0xff]
      %v3349 = vld [vmem:[%s520 + $0x390] sm:$0xff]
      %v3350 = vld [vmem:[%s520 + $0x398] sm:$0xff]
      %v3351 = vld [vmem:[%s520 + $0x3a0] sm:$0xff]
      %v3352 = vld [vmem:[%s520 + $0x3a8] sm:$0xff]
      %v3353 = vld [vmem:[%s520 + $0x3b0] sm:$0xff]
      %v3354 = vld [vmem:[%s520 + $0x3b8] sm:$0xff]
      %v3355 = vld [vmem:[%s520 + $0x3c0] sm:$0xff]
      %v3356 = vld [vmem:[%s520 + $0x3c8] sm:$0xff]
      %v3357 = vld [vmem:[%s520 + $0x3d0] sm:$0xff]
      %v3358 = vld [vmem:[%s520 + $0x3d8] sm:$0xff]
      %v3359 = vld [vmem:[%s520 + $0x3e0] sm:$0xff]
      %v3360 = vld [vmem:[%s520 + $0x3e8] sm:$0xff]
      %v3361 = vld [vmem:[%s520 + $0x3f0] sm:$0xff]
      %v3362 = vld [vmem:[%s520 + $0x3f8] sm:$0xff]
      %v3363 = vmul.f32 %v2469, %v2980
      %v3364 = vmul.f32 %v2472, %v2982
      %v3365 = vmul.f32 %v2475, %v2984
      %v3366 = vmul.f32 %v2478, %v2986
      %v3367 = vmul.f32 %v2481, %v2988
      %v3368 = vmul.f32 %v2484, %v2990
      %v3369 = vmul.f32 %v2487, %v2992
      %v3370 = vmul.f32 %v2490, %v2994
      %v3371 = vmul.f32 %v2493, %v2996
      %v3372 = vmul.f32 %v2496, %v2998
      %v3373 = vmul.f32 %v2499, %v3000
      %v3374 = vmul.f32 %v2502, %v3002
      %v3375 = vmul.f32 %v2505, %v3004
      %v3376 = vmul.f32 %v2508, %v3006
      %v3377 = vmul.f32 %v2511, %v3008
      %v3378 = vmul.f32 %v2514, %v3010
      %v3379 = vmul.f32 %v2517, %v3012
      %v3380 = vmul.f32 %v2520, %v3014
      %v3381 = vmul.f32 %v2523, %v3016
      %v3382 = vmul.f32 %v2526, %v3018
      %v3383 = vmul.f32 %v2529, %v3020
      %v3384 = vmul.f32 %v2532, %v3022
      %v3385 = vmul.f32 %v2535, %v3024
      %v3386 = vmul.f32 %v2538, %v3026
      %v3387 = vmul.f32 %v2541, %v3028
      %v3388 = vmul.f32 %v2544, %v3030
      %v3389 = vmul.f32 %v2547, %v3032
      %v3390 = vmul.f32 %v2550, %v3034
      %v3391 = vmul.f32 %v2553, %v3036
      %v3392 = vmul.f32 %v2556, %v3038
      %v3393 = vmul.f32 %v2559, %v3040
      %v3394 = vmul.f32 %v2562, %v3042
      %v3395 = vmul.f32 %v2565, %v3044
      %v3396 = vmul.f32 %v2568, %v3046
      %v3397 = vmul.f32 %v2571, %v3048
      %v3398 = vmul.f32 %v2574, %v3050
      %v3399 = vmul.f32 %v2577, %v3052
      %v3400 = vmul.f32 %v2580, %v3054
      %v3401 = vmul.f32 %v2583, %v3056
      %v3402 = vmul.f32 %v2586, %v3058
      %v3403 = vmul.f32 %v2589, %v3060
      %v3404 = vmul.f32 %v2592, %v3062
      %v3405 = vmul.f32 %v2595, %v3064
      %v3406 = vmul.f32 %v2598, %v3066
      %v3407 = vmul.f32 %v2601, %v3068
      %v3408 = vmul.f32 %v2604, %v3070
      %v3409 = vmul.f32 %v2607, %v3072
      %v3410 = vmul.f32 %v2610, %v3074
      %v3411 = vmul.f32 %v2613, %v3076
      %v3412 = vmul.f32 %v2616, %v3078
      %v3413 = vmul.f32 %v2619, %v3080
      %v3414 = vmul.f32 %v2622, %v3082
      %v3415 = vmul.f32 %v2625, %v3084
      %v3416 = vmul.f32 %v2628, %v3086
      %v3417 = vmul.f32 %v2631, %v3088
      %v3418 = vmul.f32 %v2634, %v3090
      %v3419 = vmul.f32 %v2637, %v3092
      %v3420 = vmul.f32 %v2640, %v3094
      %v3421 = vmul.f32 %v2643, %v3096
      %v3422 = vmul.f32 %v2646, %v3098
      %v3423 = vmul.f32 %v2649, %v3100
      %v3424 = vmul.f32 %v2652, %v3102
      %v3425 = vmul.f32 %v2655, %v3104
      %v3426 = vmul.f32 %v2658, %v3106
      %v3427 = vmul.f32 %v2661, %v3108
      %v3428 = vmul.f32 %v2664, %v3110
      %v3429 = vmul.f32 %v2667, %v3112
      %v3430 = vmul.f32 %v2670, %v3114
      %v3431 = vmul.f32 %v2673, %v3116
      %v3432 = vmul.f32 %v2676, %v3118
      %v3433 = vmul.f32 %v2679, %v3120
      %v3434 = vmul.f32 %v2682, %v3122
      %v3435 = vmul.f32 %v2685, %v3124
      %v3436 = vmul.f32 %v2688, %v3126
      %v3437 = vmul.f32 %v2691, %v3128
      %v3438 = vmul.f32 %v2694, %v3130
      %v3439 = vmul.f32 %v2697, %v3132
      %v3440 = vmul.f32 %v2700, %v3134
      %v3441 = vmul.f32 %v2703, %v3136
      %v3442 = vmul.f32 %v2706, %v3138
      %v3443 = vmul.f32 %v2709, %v3140
      %v3444 = vmul.f32 %v2712, %v3142
      %v3445 = vmul.f32 %v2715, %v3144
      %v3446 = vmul.f32 %v2718, %v3146
      %v3447 = vmul.f32 %v2721, %v3148
      %v3448 = vmul.f32 %v2724, %v3150
      %v3449 = vmul.f32 %v2727, %v3152
      %v3450 = vmul.f32 %v2730, %v3154
      %v3451 = vmul.f32 %v2733, %v3156
      %v3452 = vmul.f32 %v2736, %v3158
      %v3453 = vmul.f32 %v2739, %v3160
      %v3454 = vmul.f32 %v2742, %v3162
      %v3455 = vmul.f32 %v2745, %v3164
      %v3456 = vmul.f32 %v2748, %v3166
      %v3457 = vmul.f32 %v2751, %v3168
      %v3458 = vmul.f32 %v2754, %v3170
      %v3459 = vmul.f32 %v2757, %v3172
      %v3460 = vmul.f32 %v2760, %v3174
      %v3461 = vmul.f32 %v2763, %v3176
      %v3462 = vmul.f32 %v2766, %v3178
      %v3463 = vmul.f32 %v2769, %v3180
      %v3464 = vmul.f32 %v2772, %v3182
      %v3465 = vmul.f32 %v2775, %v3184
      %v3466 = vmul.f32 %v2778, %v3186
      %v3467 = vmul.f32 %v2781, %v3188
      %v3468 = vmul.f32 %v2784, %v3190
      %v3469 = vmul.f32 %v2787, %v3192
      %v3470 = vmul.f32 %v2790, %v3194
      %v3471 = vmul.f32 %v2793, %v3196
      %v3472 = vmul.f32 %v2796, %v3198
      %v3473 = vmul.f32 %v2799, %v3200
      %v3474 = vmul.f32 %v2802, %v3202
      %v3475 = vmul.f32 %v2805, %v3204
      %v3476 = vmul.f32 %v2808, %v3206
      %v3477 = vmul.f32 %v2811, %v3208
      %v3478 = vmul.f32 %v2814, %v3210
      %v3479 = vmul.f32 %v2817, %v3212
      %v3480 = vmul.f32 %v2820, %v3214
      %v3481 = vmul.f32 %v2823, %v3216
      %v3482 = vmul.f32 %v2826, %v3218
      %v3483 = vmul.f32 %v2829, %v3220
      %v3484 = vmul.f32 %v2832, %v3222
      %v3485 = vmul.f32 %v2835, %v3224
      %v3486 = vmul.f32 %v2838, %v3226
      %v3487 = vmul.f32 %v2841, %v3228
      %v3488 = vmul.f32 %v2844, %v3230
      %v3489 = vmul.f32 %v2847, %v3232
      %v3490 = vmul.f32 %v2850, %v3234
      %v3491 = vadd.f32 %v3235, %v3363
      %v3492 = vadd.f32 %v3236, %v3364
      %v3493 = vadd.f32 %v3237, %v3365
      %v3494 = vadd.f32 %v3238, %v3366
      %v3495 = vadd.f32 %v3239, %v3367
      %v3496 = vadd.f32 %v3240, %v3368
      %v3497 = vadd.f32 %v3241, %v3369
      %v3498 = vadd.f32 %v3242, %v3370
      %v3499 = vadd.f32 %v3243, %v3371
      %v3500 = vadd.f32 %v3244, %v3372
      %v3501 = vadd.f32 %v3245, %v3373
      %v3502 = vadd.f32 %v3246, %v3374
      %v3503 = vadd.f32 %v3247, %v3375
      %v3504 = vadd.f32 %v3248, %v3376
      %v3505 = vadd.f32 %v3249, %v3377
      %v3506 = vadd.f32 %v3250, %v3378
      %v3507 = vadd.f32 %v3251, %v3379
      %v3508 = vadd.f32 %v3252, %v3380
      %v3509 = vadd.f32 %v3253, %v3381
      %v3510 = vadd.f32 %v3254, %v3382
      %v3511 = vadd.f32 %v3255, %v3383
      %v3512 = vadd.f32 %v3256, %v3384
      %v3513 = vadd.f32 %v3257, %v3385
      %v3514 = vadd.f32 %v3258, %v3386
      %v3515 = vadd.f32 %v3259, %v3387
      %v3516 = vadd.f32 %v3260, %v3388
      %v3517 = vadd.f32 %v3261, %v3389
      %v3518 = vadd.f32 %v3262, %v3390
      %v3519 = vadd.f32 %v3263, %v3391
      %v3520 = vadd.f32 %v3264, %v3392
      %v3521 = vadd.f32 %v3265, %v3393
      %v3522 = vadd.f32 %v3266, %v3394
      %v3523 = vadd.f32 %v3267, %v3395
      %v3524 = vadd.f32 %v3268, %v3396
      %v3525 = vadd.f32 %v3269, %v3397
      %v3526 = vadd.f32 %v3270, %v3398
      %v3527 = vadd.f32 %v3271, %v3399
      %v3528 = vadd.f32 %v3272, %v3400
      %v3529 = vadd.f32 %v3273, %v3401
      %v3530 = vadd.f32 %v3274, %v3402
      %v3531 = vadd.f32 %v3275, %v3403
      %v3532 = vadd.f32 %v3276, %v3404
      %v3533 = vadd.f32 %v3277, %v3405
      %v3534 = vadd.f32 %v3278, %v3406
      %v3535 = vadd.f32 %v3279, %v3407
      %v3536 = vadd.f32 %v3280, %v3408
      %v3537 = vadd.f32 %v3281, %v3409
      %v3538 = vadd.f32 %v3282, %v3410
      %v3539 = vadd.f32 %v3283, %v3411
      %v3540 = vadd.f32 %v3284, %v3412
      %v3541 = vadd.f32 %v3285, %v3413
      %v3542 = vadd.f32 %v3286, %v3414
      %v3543 = vadd.f32 %v3287, %v3415
      %v3544 = vadd.f32 %v3288, %v3416
      %v3545 = vadd.f32 %v3289, %v3417
      %v3546 = vadd.f32 %v3290, %v3418
      %v3547 = vadd.f32 %v3291, %v3419
      %v3548 = vadd.f32 %v3292, %v3420
      %v3549 = vadd.f32 %v3293, %v3421
      %v3550 = vadd.f32 %v3294, %v3422
      %v3551 = vadd.f32 %v3295, %v3423
      %v3552 = vadd.f32 %v3296, %v3424
      %v3553 = vadd.f32 %v3297, %v3425
      %v3554 = vadd.f32 %v3298, %v3426
      %v3555 = vadd.f32 %v3299, %v3427
      %v3556 = vadd.f32 %v3300, %v3428
      %v3557 = vadd.f32 %v3301, %v3429
      %v3558 = vadd.f32 %v3302, %v3430
      %v3559 = vadd.f32 %v3303, %v3431
      %v3560 = vadd.f32 %v3304, %v3432
      %v3561 = vadd.f32 %v3305, %v3433
      %v3562 = vadd.f32 %v3306, %v3434
      %v3563 = vadd.f32 %v3307, %v3435
      %v3564 = vadd.f32 %v3308, %v3436
      %v3565 = vadd.f32 %v3309, %v3437
      %v3566 = vadd.f32 %v3310, %v3438
      %v3567 = vadd.f32 %v3311, %v3439
      %v3568 = vadd.f32 %v3312, %v3440
      %v3569 = vadd.f32 %v3313, %v3441
      %v3570 = vadd.f32 %v3314, %v3442
      %v3571 = vadd.f32 %v3315, %v3443
      %v3572 = vadd.f32 %v3316, %v3444
      %v3573 = vadd.f32 %v3317, %v3445
      %v3574 = vadd.f32 %v3318, %v3446
      %v3575 = vadd.f32 %v3319, %v3447
      %v3576 = vadd.f32 %v3320, %v3448
      %v3577 = vadd.f32 %v3321, %v3449
      %v3578 = vadd.f32 %v3322, %v3450
      %v3579 = vadd.f32 %v3323, %v3451
      %v3580 = vadd.f32 %v3324, %v3452
      %v3581 = vadd.f32 %v3325, %v3453
      %v3582 = vadd.f32 %v3326, %v3454
      %v3583 = vadd.f32 %v3327, %v3455
      %v3584 = vadd.f32 %v3328, %v3456
      %v3585 = vadd.f32 %v3329, %v3457
      %v3586 = vadd.f32 %v3330, %v3458
      %v3587 = vadd.f32 %v3331, %v3459
      %v3588 = vadd.f32 %v3332, %v3460
      %v3589 = vadd.f32 %v3333, %v3461
      %v3590 = vadd.f32 %v3334, %v3462
      %v3591 = vadd.f32 %v3335, %v3463
      %v3592 = vadd.f32 %v3336, %v3464
      %v3593 = vadd.f32 %v3337, %v3465
      %v3594 = vadd.f32 %v3338, %v3466
      %v3595 = vadd.f32 %v3339, %v3467
      %v3596 = vadd.f32 %v3340, %v3468
      %v3597 = vadd.f32 %v3341, %v3469
      %v3598 = vadd.f32 %v3342, %v3470
      %v3599 = vadd.f32 %v3343, %v3471
      %v3600 = vadd.f32 %v3344, %v3472
      %v3601 = vadd.f32 %v3345, %v3473
      %v3602 = vadd.f32 %v3346, %v3474
      %v3603 = vadd.f32 %v3347, %v3475
      %v3604 = vadd.f32 %v3348, %v3476
      %v3605 = vadd.f32 %v3349, %v3477
      %v3606 = vadd.f32 %v3350, %v3478
      %v3607 = vadd.f32 %v3351, %v3479
      %v3608 = vadd.f32 %v3352, %v3480
      %v3609 = vadd.f32 %v3353, %v3481
      %v3610 = vadd.f32 %v3354, %v3482
      %v3611 = vadd.f32 %v3355, %v3483
      %v3612 = vadd.f32 %v3356, %v3484
      %v3613 = vadd.f32 %v3357, %v3485
      %v3614 = vadd.f32 %v3358, %v3486
      %v3615 = vadd.f32 %v3359, %v3487
      %v3616 = vadd.f32 %v3360, %v3488
      %v3617 = vadd.f32 %v3361, %v3489
      %v3618 = vadd.f32 %v3362, %v3490
      %vm3619 = vcmask 7168
      %3620 = vst.msk [vmem:[%s520] sm:$0xff] %vm3619, %v3491
      %3621 = vst.msk [vmem:[%s520 + $0x8] sm:$0xff] %vm3619, %v3492
      %3622 = vst.msk [vmem:[%s520 + $0x10] sm:$0xff] %vm3619, %v3493
      %3623 = vst.msk [vmem:[%s520 + $0x18] sm:$0xff] %vm3619, %v3494
      %3624 = vst.msk [vmem:[%s520 + $0x20] sm:$0xff] %vm3619, %v3495
      %3625 = vst.msk [vmem:[%s520 + $0x28] sm:$0xff] %vm3619, %v3496
      %3626 = vst.msk [vmem:[%s520 + $0x30] sm:$0xff] %vm3619, %v3497
      %3627 = vst.msk [vmem:[%s520 + $0x38] sm:$0xff] %vm3619, %v3498
      %3628 = vst.msk [vmem:[%s520 + $0x40] sm:$0xff] %vm3619, %v3499
      %3629 = vst.msk [vmem:[%s520 + $0x48] sm:$0xff] %vm3619, %v3500
      %3630 = vst.msk [vmem:[%s520 + $0x50] sm:$0xff] %vm3619, %v3501
      %3631 = vst.msk [vmem:[%s520 + $0x58] sm:$0xff] %vm3619, %v3502
      %3632 = vst.msk [vmem:[%s520 + $0x60] sm:$0xff] %vm3619, %v3503
      %3633 = vst.msk [vmem:[%s520 + $0x68] sm:$0xff] %vm3619, %v3504
      %3634 = vst.msk [vmem:[%s520 + $0x70] sm:$0xff] %vm3619, %v3505
      %3635 = vst.msk [vmem:[%s520 + $0x78] sm:$0xff] %vm3619, %v3506
      %3636 = vst.msk [vmem:[%s520 + $0x80] sm:$0xff] %vm3619, %v3507
      %3637 = vst.msk [vmem:[%s520 + $0x88] sm:$0xff] %vm3619, %v3508
      %3638 = vst.msk [vmem:[%s520 + $0x90] sm:$0xff] %vm3619, %v3509
      %3639 = vst.msk [vmem:[%s520 + $0x98] sm:$0xff] %vm3619, %v3510
      %3640 = vst.msk [vmem:[%s520 + $0xa0] sm:$0xff] %vm3619, %v3511
      %3641 = vst.msk [vmem:[%s520 + $0xa8] sm:$0xff] %vm3619, %v3512
      %3642 = vst.msk [vmem:[%s520 + $0xb0] sm:$0xff] %vm3619, %v3513
      %3643 = vst.msk [vmem:[%s520 + $0xb8] sm:$0xff] %vm3619, %v3514
      %3644 = vst.msk [vmem:[%s520 + $0xc0] sm:$0xff] %vm3619, %v3515
      %3645 = vst.msk [vmem:[%s520 + $0xc8] sm:$0xff] %vm3619, %v3516
      %3646 = vst.msk [vmem:[%s520 + $0xd0] sm:$0xff] %vm3619, %v3517
      %3647 = vst.msk [vmem:[%s520 + $0xd8] sm:$0xff] %vm3619, %v3518
      %3648 = vst.msk [vmem:[%s520 + $0xe0] sm:$0xff] %vm3619, %v3519
      %3649 = vst.msk [vmem:[%s520 + $0xe8] sm:$0xff] %vm3619, %v3520
      %3650 = vst.msk [vmem:[%s520 + $0xf0] sm:$0xff] %vm3619, %v3521
      %3651 = vst.msk [vmem:[%s520 + $0xf8] sm:$0xff] %vm3619, %v3522
      %3652 = vst.msk [vmem:[%s520 + $0x100] sm:$0xff] %vm3619, %v3523
      %3653 = vst.msk [vmem:[%s520 + $0x108] sm:$0xff] %vm3619, %v3524
      %3654 = vst.msk [vmem:[%s520 + $0x110] sm:$0xff] %vm3619, %v3525
      %3655 = vst.msk [vmem:[%s520 + $0x118] sm:$0xff] %vm3619, %v3526
      %3656 = vst.msk [vmem:[%s520 + $0x120] sm:$0xff] %vm3619, %v3527
      %3657 = vst.msk [vmem:[%s520 + $0x128] sm:$0xff] %vm3619, %v3528
      %3658 = vst.msk [vmem:[%s520 + $0x130] sm:$0xff] %vm3619, %v3529
      %3659 = vst.msk [vmem:[%s520 + $0x138] sm:$0xff] %vm3619, %v3530
      %3660 = vst.msk [vmem:[%s520 + $0x140] sm:$0xff] %vm3619, %v3531
      %3661 = vst.msk [vmem:[%s520 + $0x148] sm:$0xff] %vm3619, %v3532
      %3662 = vst.msk [vmem:[%s520 + $0x150] sm:$0xff] %vm3619, %v3533
      %3663 = vst.msk [vmem:[%s520 + $0x158] sm:$0xff] %vm3619, %v3534
      %3664 = vst.msk [vmem:[%s520 + $0x160] sm:$0xff] %vm3619, %v3535
      %3665 = vst.msk [vmem:[%s520 + $0x168] sm:$0xff] %vm3619, %v3536
      %3666 = vst.msk [vmem:[%s520 + $0x170] sm:$0xff] %vm3619, %v3537
      %3667 = vst.msk [vmem:[%s520 + $0x178] sm:$0xff] %vm3619, %v3538
      %3668 = vst.msk [vmem:[%s520 + $0x180] sm:$0xff] %vm3619, %v3539
      %3669 = vst.msk [vmem:[%s520 + $0x188] sm:$0xff] %vm3619, %v3540
      %3670 = vst.msk [vmem:[%s520 + $0x190] sm:$0xff] %vm3619, %v3541
      %3671 = vst.msk [vmem:[%s520 + $0x198] sm:$0xff] %vm3619, %v3542
      %3672 = vst.msk [vmem:[%s520 + $0x1a0] sm:$0xff] %vm3619, %v3543
      %3673 = vst.msk [vmem:[%s520 + $0x1a8] sm:$0xff] %vm3619, %v3544
      %3674 = vst.msk [vmem:[%s520 + $0x1b0] sm:$0xff] %vm3619, %v3545
      %3675 = vst.msk [vmem:[%s520 + $0x1b8] sm:$0xff] %vm3619, %v3546
      %3676 = vst.msk [vmem:[%s520 + $0x1c0] sm:$0xff] %vm3619, %v3547
      %3677 = vst.msk [vmem:[%s520 + $0x1c8] sm:$0xff] %vm3619, %v3548
      %3678 = vst.msk [vmem:[%s520 + $0x1d0] sm:$0xff] %vm3619, %v3549
      %3679 = vst.msk [vmem:[%s520 + $0x1d8] sm:$0xff] %vm3619, %v3550
      %3680 = vst.msk [vmem:[%s520 + $0x1e0] sm:$0xff] %vm3619, %v3551
      %3681 = vst.msk [vmem:[%s520 + $0x1e8] sm:$0xff] %vm3619, %v3552
      %3682 = vst.msk [vmem:[%s520 + $0x1f0] sm:$0xff] %vm3619, %v3553
      %3683 = vst.msk [vmem:[%s520 + $0x1f8] sm:$0xff] %vm3619, %v3554
      %3684 = vst.msk [vmem:[%s520 + $0x200] sm:$0xff] %vm3619, %v3555
      %3685 = vst.msk [vmem:[%s520 + $0x208] sm:$0xff] %vm3619, %v3556
      %3686 = vst.msk [vmem:[%s520 + $0x210] sm:$0xff] %vm3619, %v3557
      %3687 = vst.msk [vmem:[%s520 + $0x218] sm:$0xff] %vm3619, %v3558
      %3688 = vst.msk [vmem:[%s520 + $0x220] sm:$0xff] %vm3619, %v3559
      %3689 = vst.msk [vmem:[%s520 + $0x228] sm:$0xff] %vm3619, %v3560
      %3690 = vst.msk [vmem:[%s520 + $0x230] sm:$0xff] %vm3619, %v3561
      %3691 = vst.msk [vmem:[%s520 + $0x238] sm:$0xff] %vm3619, %v3562
      %3692 = vst.msk [vmem:[%s520 + $0x240] sm:$0xff] %vm3619, %v3563
      %3693 = vst.msk [vmem:[%s520 + $0x248] sm:$0xff] %vm3619, %v3564
      %3694 = vst.msk [vmem:[%s520 + $0x250] sm:$0xff] %vm3619, %v3565
      %3695 = vst.msk [vmem:[%s520 + $0x258] sm:$0xff] %vm3619, %v3566
      %3696 = vst.msk [vmem:[%s520 + $0x260] sm:$0xff] %vm3619, %v3567
      %3697 = vst.msk [vmem:[%s520 + $0x268] sm:$0xff] %vm3619, %v3568
      %3698 = vst.msk [vmem:[%s520 + $0x270] sm:$0xff] %vm3619, %v3569
      %3699 = vst.msk [vmem:[%s520 + $0x278] sm:$0xff] %vm3619, %v3570
      %3700 = vst.msk [vmem:[%s520 + $0x280] sm:$0xff] %vm3619, %v3571
      %3701 = vst.msk [vmem:[%s520 + $0x288] sm:$0xff] %vm3619, %v3572
      %3702 = vst.msk [vmem:[%s520 + $0x290] sm:$0xff] %vm3619, %v3573
      %3703 = vst.msk [vmem:[%s520 + $0x298] sm:$0xff] %vm3619, %v3574
      %3704 = vst.msk [vmem:[%s520 + $0x2a0] sm:$0xff] %vm3619, %v3575
      %3705 = vst.msk [vmem:[%s520 + $0x2a8] sm:$0xff] %vm3619, %v3576
      %3706 = vst.msk [vmem:[%s520 + $0x2b0] sm:$0xff] %vm3619, %v3577
      %3707 = vst.msk [vmem:[%s520 + $0x2b8] sm:$0xff] %vm3619, %v3578
      %3708 = vst.msk [vmem:[%s520 + $0x2c0] sm:$0xff] %vm3619, %v3579
      %3709 = vst.msk [vmem:[%s520 + $0x2c8] sm:$0xff] %vm3619, %v3580
      %3710 = vst.msk [vmem:[%s520 + $0x2d0] sm:$0xff] %vm3619, %v3581
      %3711 = vst.msk [vmem:[%s520 + $0x2d8] sm:$0xff] %vm3619, %v3582
      %3712 = vst.msk [vmem:[%s520 + $0x2e0] sm:$0xff] %vm3619, %v3583
      %3713 = vst.msk [vmem:[%s520 + $0x2e8] sm:$0xff] %vm3619, %v3584
      %3714 = vst.msk [vmem:[%s520 + $0x2f0] sm:$0xff] %vm3619, %v3585
      %3715 = vst.msk [vmem:[%s520 + $0x2f8] sm:$0xff] %vm3619, %v3586
      %3716 = vst.msk [vmem:[%s520 + $0x300] sm:$0xff] %vm3619, %v3587
      %3717 = vst.msk [vmem:[%s520 + $0x308] sm:$0xff] %vm3619, %v3588
      %3718 = vst.msk [vmem:[%s520 + $0x310] sm:$0xff] %vm3619, %v3589
      %3719 = vst.msk [vmem:[%s520 + $0x318] sm:$0xff] %vm3619, %v3590
      %3720 = vst.msk [vmem:[%s520 + $0x320] sm:$0xff] %vm3619, %v3591
      %3721 = vst.msk [vmem:[%s520 + $0x328] sm:$0xff] %vm3619, %v3592
      %3722 = vst.msk [vmem:[%s520 + $0x330] sm:$0xff] %vm3619, %v3593
      %3723 = vst.msk [vmem:[%s520 + $0x338] sm:$0xff] %vm3619, %v3594
      %3724 = vst.msk [vmem:[%s520 + $0x340] sm:$0xff] %vm3619, %v3595
      %3725 = vst.msk [vmem:[%s520 + $0x348] sm:$0xff] %vm3619, %v3596
      %3726 = vst.msk [vmem:[%s520 + $0x350] sm:$0xff] %vm3619, %v3597
      %3727 = vst.msk [vmem:[%s520 + $0x358] sm:$0xff] %vm3619, %v3598
      %3728 = vst.msk [vmem:[%s520 + $0x360] sm:$0xff] %vm3619, %v3599
      %3729 = vst.msk [vmem:[%s520 + $0x368] sm:$0xff] %vm3619, %v3600
      %3730 = vst.msk [vmem:[%s520 + $0x370] sm:$0xff] %vm3619, %v3601
      %3731 = vst.msk [vmem:[%s520 + $0x378] sm:$0xff] %vm3619, %v3602
      %3732 = vst.msk [vmem:[%s520 + $0x380] sm:$0xff] %vm3619, %v3603
      %3733 = vst.msk [vmem:[%s520 + $0x388] sm:$0xff] %vm3619, %v3604
      %3734 = vst.msk [vmem:[%s520 + $0x390] sm:$0xff] %vm3619, %v3605
      %3735 = vst.msk [vmem:[%s520 + $0x398] sm:$0xff] %vm3619, %v3606
      %3736 = vst.msk [vmem:[%s520 + $0x3a0] sm:$0xff] %vm3619, %v3607
      %3737 = vst.msk [vmem:[%s520 + $0x3a8] sm:$0xff] %vm3619, %v3608
      %3738 = vst.msk [vmem:[%s520 + $0x3b0] sm:$0xff] %vm3619, %v3609
      %3739 = vst.msk [vmem:[%s520 + $0x3b8] sm:$0xff] %vm3619, %v3610
      %3740 = vst.msk [vmem:[%s520 + $0x3c0] sm:$0xff] %vm3619, %v3611
      %3741 = vst.msk [vmem:[%s520 + $0x3c8] sm:$0xff] %vm3619, %v3612
      %3742 = vst.msk [vmem:[%s520 + $0x3d0] sm:$0xff] %vm3619, %v3613
      %3743 = vst.msk [vmem:[%s520 + $0x3d8] sm:$0xff] %vm3619, %v3614
      %3744 = vst.msk [vmem:[%s520 + $0x3e0] sm:$0xff] %vm3619, %v3615
      %3745 = vst.msk [vmem:[%s520 + $0x3e8] sm:$0xff] %vm3619, %v3616
      %3746 = vst.msk [vmem:[%s520 + $0x3f0] sm:$0xff] %vm3619, %v3617
      %3747 = vst.msk [vmem:[%s520 + $0x3f8] sm:$0xff] %vm3619, %v3618
      %v3748 = vld [vmem:[%s526] sm:$0xff]
      %v3749 = vld [vmem:[%s526 + $0x8] sm:$0xff]
      %v3750 = vld [vmem:[%s526 + $0x10] sm:$0xff]
      %v3751 = vld [vmem:[%s526 + $0x18] sm:$0xff]
      %v3752 = vld [vmem:[%s526 + $0x20] sm:$0xff]
      %v3753 = vld [vmem:[%s526 + $0x28] sm:$0xff]
      %v3754 = vld [vmem:[%s526 + $0x30] sm:$0xff]
      %v3755 = vld [vmem:[%s526 + $0x38] sm:$0xff]
      %v3756 = vld [vmem:[%s526 + $0x40] sm:$0xff]
      %v3757 = vld [vmem:[%s526 + $0x48] sm:$0xff]
      %v3758 = vld [vmem:[%s526 + $0x50] sm:$0xff]
      %v3759 = vld [vmem:[%s526 + $0x58] sm:$0xff]
      %v3760 = vld [vmem:[%s526 + $0x60] sm:$0xff]
      %v3761 = vld [vmem:[%s526 + $0x68] sm:$0xff]
      %v3762 = vld [vmem:[%s526 + $0x70] sm:$0xff]
      %v3763 = vld [vmem:[%s526 + $0x78] sm:$0xff]
      %v3764 = vld [vmem:[%s526 + $0x80] sm:$0xff]
      %v3765 = vld [vmem:[%s526 + $0x88] sm:$0xff]
      %v3766 = vld [vmem:[%s526 + $0x90] sm:$0xff]
      %v3767 = vld [vmem:[%s526 + $0x98] sm:$0xff]
      %v3768 = vld [vmem:[%s526 + $0xa0] sm:$0xff]
      %v3769 = vld [vmem:[%s526 + $0xa8] sm:$0xff]
      %v3770 = vld [vmem:[%s526 + $0xb0] sm:$0xff]
      %v3771 = vld [vmem:[%s526 + $0xb8] sm:$0xff]
      %v3772 = vld [vmem:[%s526 + $0xc0] sm:$0xff]
      %v3773 = vld [vmem:[%s526 + $0xc8] sm:$0xff]
      %v3774 = vld [vmem:[%s526 + $0xd0] sm:$0xff]
      %v3775 = vld [vmem:[%s526 + $0xd8] sm:$0xff]
      %v3776 = vld [vmem:[%s526 + $0xe0] sm:$0xff]
      %v3777 = vld [vmem:[%s526 + $0xe8] sm:$0xff]
      %v3778 = vld [vmem:[%s526 + $0xf0] sm:$0xff]
      %v3779 = vld [vmem:[%s526 + $0xf8] sm:$0xff]
      %v3780 = vld [vmem:[%s526 + $0x100] sm:$0xff]
      %v3781 = vld [vmem:[%s526 + $0x108] sm:$0xff]
      %v3782 = vld [vmem:[%s526 + $0x110] sm:$0xff]
      %v3783 = vld [vmem:[%s526 + $0x118] sm:$0xff]
      %v3784 = vld [vmem:[%s526 + $0x120] sm:$0xff]
      %v3785 = vld [vmem:[%s526 + $0x128] sm:$0xff]
      %v3786 = vld [vmem:[%s526 + $0x130] sm:$0xff]
      %v3787 = vld [vmem:[%s526 + $0x138] sm:$0xff]
      %v3788 = vld [vmem:[%s526 + $0x140] sm:$0xff]
      %v3789 = vld [vmem:[%s526 + $0x148] sm:$0xff]
      %v3790 = vld [vmem:[%s526 + $0x150] sm:$0xff]
      %v3791 = vld [vmem:[%s526 + $0x158] sm:$0xff]
      %v3792 = vld [vmem:[%s526 + $0x160] sm:$0xff]
      %v3793 = vld [vmem:[%s526 + $0x168] sm:$0xff]
      %v3794 = vld [vmem:[%s526 + $0x170] sm:$0xff]
      %v3795 = vld [vmem:[%s526 + $0x178] sm:$0xff]
      %v3796 = vld [vmem:[%s526 + $0x180] sm:$0xff]
      %v3797 = vld [vmem:[%s526 + $0x188] sm:$0xff]
      %v3798 = vld [vmem:[%s526 + $0x190] sm:$0xff]
      %v3799 = vld [vmem:[%s526 + $0x198] sm:$0xff]
      %v3800 = vld [vmem:[%s526 + $0x1a0] sm:$0xff]
      %v3801 = vld [vmem:[%s526 + $0x1a8] sm:$0xff]
      %v3802 = vld [vmem:[%s526 + $0x1b0] sm:$0xff]
      %v3803 = vld [vmem:[%s526 + $0x1b8] sm:$0xff]
      %v3804 = vld [vmem:[%s526 + $0x1c0] sm:$0xff]
      %v3805 = vld [vmem:[%s526 + $0x1c8] sm:$0xff]
      %v3806 = vld [vmem:[%s526 + $0x1d0] sm:$0xff]
      %v3807 = vld [vmem:[%s526 + $0x1d8] sm:$0xff]
      %v3808 = vld [vmem:[%s526 + $0x1e0] sm:$0xff]
      %v3809 = vld [vmem:[%s526 + $0x1e8] sm:$0xff]
      %v3810 = vld [vmem:[%s526 + $0x1f0] sm:$0xff]
      %v3811 = vld [vmem:[%s526 + $0x1f8] sm:$0xff]
      %v3812 = vld [vmem:[%s526 + $0x200] sm:$0xff]
      %v3813 = vld [vmem:[%s526 + $0x208] sm:$0xff]
      %v3814 = vld [vmem:[%s526 + $0x210] sm:$0xff]
      %v3815 = vld [vmem:[%s526 + $0x218] sm:$0xff]
      %v3816 = vld [vmem:[%s526 + $0x220] sm:$0xff]
      %v3817 = vld [vmem:[%s526 + $0x228] sm:$0xff]
      %v3818 = vld [vmem:[%s526 + $0x230] sm:$0xff]
      %v3819 = vld [vmem:[%s526 + $0x238] sm:$0xff]
      %v3820 = vld [vmem:[%s526 + $0x240] sm:$0xff]
      %v3821 = vld [vmem:[%s526 + $0x248] sm:$0xff]
      %v3822 = vld [vmem:[%s526 + $0x250] sm:$0xff]
      %v3823 = vld [vmem:[%s526 + $0x258] sm:$0xff]
      %v3824 = vld [vmem:[%s526 + $0x260] sm:$0xff]
      %v3825 = vld [vmem:[%s526 + $0x268] sm:$0xff]
      %v3826 = vld [vmem:[%s526 + $0x270] sm:$0xff]
      %v3827 = vld [vmem:[%s526 + $0x278] sm:$0xff]
      %v3828 = vld [vmem:[%s526 + $0x280] sm:$0xff]
      %v3829 = vld [vmem:[%s526 + $0x288] sm:$0xff]
      %v3830 = vld [vmem:[%s526 + $0x290] sm:$0xff]
      %v3831 = vld [vmem:[%s526 + $0x298] sm:$0xff]
      %v3832 = vld [vmem:[%s526 + $0x2a0] sm:$0xff]
      %v3833 = vld [vmem:[%s526 + $0x2a8] sm:$0xff]
      %v3834 = vld [vmem:[%s526 + $0x2b0] sm:$0xff]
      %v3835 = vld [vmem:[%s526 + $0x2b8] sm:$0xff]
      %v3836 = vld [vmem:[%s526 + $0x2c0] sm:$0xff]
      %v3837 = vld [vmem:[%s526 + $0x2c8] sm:$0xff]
      %v3838 = vld [vmem:[%s526 + $0x2d0] sm:$0xff]
      %v3839 = vld [vmem:[%s526 + $0x2d8] sm:$0xff]
      %v3840 = vld [vmem:[%s526 + $0x2e0] sm:$0xff]
      %v3841 = vld [vmem:[%s526 + $0x2e8] sm:$0xff]
      %v3842 = vld [vmem:[%s526 + $0x2f0] sm:$0xff]
      %v3843 = vld [vmem:[%s526 + $0x2f8] sm:$0xff]
      %v3844 = vld [vmem:[%s526 + $0x300] sm:$0xff]
      %v3845 = vld [vmem:[%s526 + $0x308] sm:$0xff]
      %v3846 = vld [vmem:[%s526 + $0x310] sm:$0xff]
      %v3847 = vld [vmem:[%s526 + $0x318] sm:$0xff]
      %v3848 = vld [vmem:[%s526 + $0x320] sm:$0xff]
      %v3849 = vld [vmem:[%s526 + $0x328] sm:$0xff]
      %v3850 = vld [vmem:[%s526 + $0x330] sm:$0xff]
      %v3851 = vld [vmem:[%s526 + $0x338] sm:$0xff]
      %v3852 = vld [vmem:[%s526 + $0x340] sm:$0xff]
      %v3853 = vld [vmem:[%s526 + $0x348] sm:$0xff]
      %v3854 = vld [vmem:[%s526 + $0x350] sm:$0xff]
      %v3855 = vld [vmem:[%s526 + $0x358] sm:$0xff]
      %v3856 = vld [vmem:[%s526 + $0x360] sm:$0xff]
      %v3857 = vld [vmem:[%s526 + $0x368] sm:$0xff]
      %v3858 = vld [vmem:[%s526 + $0x370] sm:$0xff]
      %v3859 = vld [vmem:[%s526 + $0x378] sm:$0xff]
      %v3860 = vld [vmem:[%s526 + $0x380] sm:$0xff]
      %v3861 = vld [vmem:[%s526 + $0x388] sm:$0xff]
      %v3862 = vld [vmem:[%s526 + $0x390] sm:$0xff]
      %v3863 = vld [vmem:[%s526 + $0x398] sm:$0xff]
      %v3864 = vld [vmem:[%s526 + $0x3a0] sm:$0xff]
      %v3865 = vld [vmem:[%s526 + $0x3a8] sm:$0xff]
      %v3866 = vld [vmem:[%s526 + $0x3b0] sm:$0xff]
      %v3867 = vld [vmem:[%s526 + $0x3b8] sm:$0xff]
      %v3868 = vld [vmem:[%s526 + $0x3c0] sm:$0xff]
      %v3869 = vld [vmem:[%s526 + $0x3c8] sm:$0xff]
      %v3870 = vld [vmem:[%s526 + $0x3d0] sm:$0xff]
      %v3871 = vld [vmem:[%s526 + $0x3d8] sm:$0xff]
      %v3872 = vld [vmem:[%s526 + $0x3e0] sm:$0xff]
      %v3873 = vld [vmem:[%s526 + $0x3e8] sm:$0xff]
      %v3874 = vld [vmem:[%s526 + $0x3f0] sm:$0xff]
      %v3875 = vld [vmem:[%s526 + $0x3f8] sm:$0xff]
      %v3876 = vlog2.pop %v1954
      %v3877 = vmul.f32 %v3876, 0.6931472
      %v3878 = vlog2.pop %v1955
      %v3879 = vmul.f32 %v3878, 0.6931472
      %v3880 = vlog2.pop %v1956
      %v3881 = vmul.f32 %v3880, 0.6931472
      %v3882 = vlog2.pop %v1957
      %v3883 = vmul.f32 %v3882, 0.6931472
      %v3884 = vlog2.pop %v1958
      %v3885 = vmul.f32 %v3884, 0.6931472
      %v3886 = vlog2.pop %v1959
      %v3887 = vmul.f32 %v3886, 0.6931472
      %v3888 = vlog2.pop %v1960
      %v3889 = vmul.f32 %v3888, 0.6931472
      %v3890 = vlog2.pop %v1961
      %v3891 = vmul.f32 %v3890, 0.6931472
      %v3892 = vlog2.pop %v1962
      %v3893 = vmul.f32 %v3892, 0.6931472
      %v3894 = vlog2.pop %v1963
      %v3895 = vmul.f32 %v3894, 0.6931472
      %v3896 = vlog2.pop %v1964
      %v3897 = vmul.f32 %v3896, 0.6931472
      %v3898 = vlog2.pop %v1965
      %v3899 = vmul.f32 %v3898, 0.6931472
      %v3900 = vlog2.pop %v1966
      %v3901 = vmul.f32 %v3900, 0.6931472
      %v3902 = vlog2.pop %v1967
      %v3903 = vmul.f32 %v3902, 0.6931472
      %v3904 = vlog2.pop %v1968
      %v3905 = vmul.f32 %v3904, 0.6931472
      %v3906 = vlog2.pop %v1969
      %v3907 = vmul.f32 %v3906, 0.6931472
      %v3908 = vlog2.pop %v1970
      %v3909 = vmul.f32 %v3908, 0.6931472
      %v3910 = vlog2.pop %v1971
      %v3911 = vmul.f32 %v3910, 0.6931472
      %v3912 = vlog2.pop %v1972
      %v3913 = vmul.f32 %v3912, 0.6931472
      %v3914 = vlog2.pop %v1973
      %v3915 = vmul.f32 %v3914, 0.6931472
      %v3916 = vlog2.pop %v1974
      %v3917 = vmul.f32 %v3916, 0.6931472
      %v3918 = vlog2.pop %v1975
      %v3919 = vmul.f32 %v3918, 0.6931472
      %v3920 = vlog2.pop %v1976
      %v3921 = vmul.f32 %v3920, 0.6931472
      %v3922 = vlog2.pop %v1977
      %v3923 = vmul.f32 %v3922, 0.6931472
      %v3924 = vlog2.pop %v1978
      %v3925 = vmul.f32 %v3924, 0.6931472
      %v3926 = vlog2.pop %v1979
      %v3927 = vmul.f32 %v3926, 0.6931472
      %v3928 = vlog2.pop %v1980
      %v3929 = vmul.f32 %v3928, 0.6931472
      %v3930 = vlog2.pop %v1981
      %v3931 = vmul.f32 %v3930, 0.6931472
      %v3932 = vlog2.pop %v1982
      %v3933 = vmul.f32 %v3932, 0.6931472
      %v3934 = vlog2.pop %v1983
      %v3935 = vmul.f32 %v3934, 0.6931472
      %v3936 = vlog2.pop %v1984
      %v3937 = vmul.f32 %v3936, 0.6931472
      %v3938 = vlog2.pop %v1985
      %v3939 = vmul.f32 %v3938, 0.6931472
      %v3940 = vlog2.pop %v1986
      %v3941 = vmul.f32 %v3940, 0.6931472
      %v3942 = vlog2.pop %v1987
      %v3943 = vmul.f32 %v3942, 0.6931472
      %v3944 = vlog2.pop %v1988
      %v3945 = vmul.f32 %v3944, 0.6931472
      %v3946 = vlog2.pop %v1989
      %v3947 = vmul.f32 %v3946, 0.6931472
      %v3948 = vlog2.pop %v1990
      %v3949 = vmul.f32 %v3948, 0.6931472
      %v3950 = vlog2.pop %v1991
      %v3951 = vmul.f32 %v3950, 0.6931472
      %v3952 = vlog2.pop %v1992
      %v3953 = vmul.f32 %v3952, 0.6931472
      %v3954 = vlog2.pop %v1993
      %v3955 = vmul.f32 %v3954, 0.6931472
      %v3956 = vlog2.pop %v1994
      %v3957 = vmul.f32 %v3956, 0.6931472
      %v3958 = vlog2.pop %v1995
      %v3959 = vmul.f32 %v3958, 0.6931472
      %v3960 = vlog2.pop %v1996
      %v3961 = vmul.f32 %v3960, 0.6931472
      %v3962 = vlog2.pop %v1997
      %v3963 = vmul.f32 %v3962, 0.6931472
      %v3964 = vlog2.pop %v1998
      %v3965 = vmul.f32 %v3964, 0.6931472
      %v3966 = vlog2.pop %v1999
      %v3967 = vmul.f32 %v3966, 0.6931472
      %v3968 = vlog2.pop %v2000
      %v3969 = vmul.f32 %v3968, 0.6931472
      %v3970 = vlog2.pop %v2001
      %v3971 = vmul.f32 %v3970, 0.6931472
      %v3972 = vlog2.pop %v2002
      %v3973 = vmul.f32 %v3972, 0.6931472
      %v3974 = vlog2.pop %v2003
      %v3975 = vmul.f32 %v3974, 0.6931472
      %v3976 = vlog2.pop %v2004
      %v3977 = vmul.f32 %v3976, 0.6931472
      %v3978 = vlog2.pop %v2005
      %v3979 = vmul.f32 %v3978, 0.6931472
      %v3980 = vlog2.pop %v2006
      %v3981 = vmul.f32 %v3980, 0.6931472
      %v3982 = vlog2.pop %v2007
      %v3983 = vmul.f32 %v3982, 0.6931472
      %v3984 = vlog2.pop %v2008
      %v3985 = vmul.f32 %v3984, 0.6931472
      %v3986 = vlog2.pop %v2009
      %v3987 = vmul.f32 %v3986, 0.6931472
      %v3988 = vlog2.pop %v2010
      %v3989 = vmul.f32 %v3988, 0.6931472
      %v3990 = vlog2.pop %v2011
      %v3991 = vmul.f32 %v3990, 0.6931472
      %v3992 = vlog2.pop %v2012
      %v3993 = vmul.f32 %v3992, 0.6931472
      %v3994 = vlog2.pop %v2013
      %v3995 = vmul.f32 %v3994, 0.6931472
      %v3996 = vlog2.pop %v2014
      %v3997 = vmul.f32 %v3996, 0.6931472
      %v3998 = vlog2.pop %v2015
      %v3999 = vmul.f32 %v3998, 0.6931472
      %v4000 = vlog2.pop %v2016
      %v4001 = vmul.f32 %v4000, 0.6931472
      %v4002 = vlog2.pop %v2017
      %v4003 = vmul.f32 %v4002, 0.6931472
      %v4004 = vlog2.pop %v2018
      %v4005 = vmul.f32 %v4004, 0.6931472
      %v4006 = vlog2.pop %v2019
      %v4007 = vmul.f32 %v4006, 0.6931472
      %v4008 = vlog2.pop %v2020
      %v4009 = vmul.f32 %v4008, 0.6931472
      %v4010 = vlog2.pop %v2021
      %v4011 = vmul.f32 %v4010, 0.6931472
      %v4012 = vlog2.pop %v2022
      %v4013 = vmul.f32 %v4012, 0.6931472
      %v4014 = vlog2.pop %v2023
      %v4015 = vmul.f32 %v4014, 0.6931472
      %v4016 = vlog2.pop %v2024
      %v4017 = vmul.f32 %v4016, 0.6931472
      %v4018 = vlog2.pop %v2025
      %v4019 = vmul.f32 %v4018, 0.6931472
      %v4020 = vlog2.pop %v2026
      %v4021 = vmul.f32 %v4020, 0.6931472
      %v4022 = vlog2.pop %v2027
      %v4023 = vmul.f32 %v4022, 0.6931472
      %v4024 = vlog2.pop %v2028
      %v4025 = vmul.f32 %v4024, 0.6931472
      %v4026 = vlog2.pop %v2029
      %v4027 = vmul.f32 %v4026, 0.6931472
      %v4028 = vlog2.pop %v2030
      %v4029 = vmul.f32 %v4028, 0.6931472
      %v4030 = vlog2.pop %v2031
      %v4031 = vmul.f32 %v4030, 0.6931472
      %v4032 = vlog2.pop %v2032
      %v4033 = vmul.f32 %v4032, 0.6931472
      %v4034 = vlog2.pop %v2033
      %v4035 = vmul.f32 %v4034, 0.6931472
      %v4036 = vlog2.pop %v2034
      %v4037 = vmul.f32 %v4036, 0.6931472
      %v4038 = vlog2.pop %v2035
      %v4039 = vmul.f32 %v4038, 0.6931472
      %v4040 = vlog2.pop %v2036
      %v4041 = vmul.f32 %v4040, 0.6931472
      %v4042 = vlog2.pop %v2037
      %v4043 = vmul.f32 %v4042, 0.6931472
      %v4044 = vlog2.pop %v2038
      %v4045 = vmul.f32 %v4044, 0.6931472
      %v4046 = vlog2.pop %v2039
      %v4047 = vmul.f32 %v4046, 0.6931472
      %v4048 = vlog2.pop %v2040
      %v4049 = vmul.f32 %v4048, 0.6931472
      %v4050 = vlog2.pop %v2041
      %v4051 = vmul.f32 %v4050, 0.6931472
      %v4052 = vlog2.pop %v2042
      %v4053 = vmul.f32 %v4052, 0.6931472
      %v4054 = vlog2.pop %v2043
      %v4055 = vmul.f32 %v4054, 0.6931472
      %v4056 = vlog2.pop %v2044
      %v4057 = vmul.f32 %v4056, 0.6931472
      %v4058 = vlog2.pop %v2045
      %v4059 = vmul.f32 %v4058, 0.6931472
      %v4060 = vlog2.pop %v2046
      %v4061 = vmul.f32 %v4060, 0.6931472
      %v4062 = vlog2.pop %v2047
      %v4063 = vmul.f32 %v4062, 0.6931472
      %v4064 = vlog2.pop %v2048
      %v4065 = vmul.f32 %v4064, 0.6931472
      %v4066 = vlog2.pop %v2049
      %v4067 = vmul.f32 %v4066, 0.6931472
      %v4068 = vlog2.pop %v2050
      %v4069 = vmul.f32 %v4068, 0.6931472
      %v4070 = vlog2.pop %v2051
      %v4071 = vmul.f32 %v4070, 0.6931472
      %v4072 = vlog2.pop %v2052
      %v4073 = vmul.f32 %v4072, 0.6931472
      %v4074 = vlog2.pop %v2053
      %v4075 = vmul.f32 %v4074, 0.6931472
      %v4076 = vlog2.pop %v2054
      %v4077 = vmul.f32 %v4076, 0.6931472
      %v4078 = vlog2.pop %v2055
      %v4079 = vmul.f32 %v4078, 0.6931472
      %v4080 = vlog2.pop %v2056
      %v4081 = vmul.f32 %v4080, 0.6931472
      %v4082 = vlog2.pop %v2057
      %v4083 = vmul.f32 %v4082, 0.6931472
      %v4084 = vlog2.pop %v2058
      %v4085 = vmul.f32 %v4084, 0.6931472
      %v4086 = vlog2.pop %v2059
      %v4087 = vmul.f32 %v4086, 0.6931472
      %v4088 = vlog2.pop %v2060
      %v4089 = vmul.f32 %v4088, 0.6931472
      %v4090 = vlog2.pop %v2061
      %v4091 = vmul.f32 %v4090, 0.6931472
      %v4092 = vlog2.pop %v2062
      %v4093 = vmul.f32 %v4092, 0.6931472
      %v4094 = vlog2.pop %v2063
      %v4095 = vmul.f32 %v4094, 0.6931472
      %v4096 = vlog2.pop %v2064
      %v4097 = vmul.f32 %v4096, 0.6931472
      %v4098 = vlog2.pop %v2065
      %v4099 = vmul.f32 %v4098, 0.6931472
      %v4100 = vlog2.pop %v2066
      %v4101 = vmul.f32 %v4100, 0.6931472
      %v4102 = vlog2.pop %v2067
      %v4103 = vmul.f32 %v4102, 0.6931472
      %v4104 = vlog2.pop %v2068
      %v4105 = vmul.f32 %v4104, 0.6931472
      %v4106 = vlog2.pop %v2069
      %v4107 = vmul.f32 %v4106, 0.6931472
      %v4108 = vlog2.pop %v2070
      %v4109 = vmul.f32 %v4108, 0.6931472
      %v4110 = vlog2.pop %v2071
      %v4111 = vmul.f32 %v4110, 0.6931472
      %v4112 = vlog2.pop %v2072
      %v4113 = vmul.f32 %v4112, 0.6931472
      %v4114 = vlog2.pop %v2073
      %v4115 = vmul.f32 %v4114, 0.6931472
      %v4116 = vlog2.pop %v2074
      %v4117 = vmul.f32 %v4116, 0.6931472
      %v4118 = vlog2.pop %v2075
      %v4119 = vmul.f32 %v4118, 0.6931472
      %v4120 = vlog2.pop %v2076
      %v4121 = vmul.f32 %v4120, 0.6931472
      %v4122 = vlog2.pop %v2077
      %v4123 = vmul.f32 %v4122, 0.6931472
      %v4124 = vlog2.pop %v2078
      %v4125 = vmul.f32 %v4124, 0.6931472
      %v4126 = vlog2.pop %v2079
      %v4127 = vmul.f32 %v4126, 0.6931472
      %v4128 = vlog2.pop %v2080
      %v4129 = vmul.f32 %v4128, 0.6931472
      %v4130 = vlog2.pop %v2081
      %v4131 = vmul.f32 %v4130, 0.6931472
      %v4132 = vadd.f32 %v3748, %v3877
      %v4133 = vadd.f32 %v3749, %v3879
      %v4134 = vadd.f32 %v3750, %v3881
      %v4135 = vadd.f32 %v3751, %v3883
      %v4136 = vadd.f32 %v3752, %v3885
      %v4137 = vadd.f32 %v3753, %v3887
      %v4138 = vadd.f32 %v3754, %v3889
      %v4139 = vadd.f32 %v3755, %v3891
      %v4140 = vadd.f32 %v3756, %v3893
      %v4141 = vadd.f32 %v3757, %v3895
      %v4142 = vadd.f32 %v3758, %v3897
      %v4143 = vadd.f32 %v3759, %v3899
      %v4144 = vadd.f32 %v3760, %v3901
      %v4145 = vadd.f32 %v3761, %v3903
      %v4146 = vadd.f32 %v3762, %v3905
      %v4147 = vadd.f32 %v3763, %v3907
      %v4148 = vadd.f32 %v3764, %v3909
      %v4149 = vadd.f32 %v3765, %v3911
      %v4150 = vadd.f32 %v3766, %v3913
      %v4151 = vadd.f32 %v3767, %v3915
      %v4152 = vadd.f32 %v3768, %v3917
      %v4153 = vadd.f32 %v3769, %v3919
      %v4154 = vadd.f32 %v3770, %v3921
      %v4155 = vadd.f32 %v3771, %v3923
      %v4156 = vadd.f32 %v3772, %v3925
      %v4157 = vadd.f32 %v3773, %v3927
      %v4158 = vadd.f32 %v3774, %v3929
      %v4159 = vadd.f32 %v3775, %v3931
      %v4160 = vadd.f32 %v3776, %v3933
      %v4161 = vadd.f32 %v3777, %v3935
      %v4162 = vadd.f32 %v3778, %v3937
      %v4163 = vadd.f32 %v3779, %v3939
      %v4164 = vadd.f32 %v3780, %v3941
      %v4165 = vadd.f32 %v3781, %v3943
      %v4166 = vadd.f32 %v3782, %v3945
      %v4167 = vadd.f32 %v3783, %v3947
      %v4168 = vadd.f32 %v3784, %v3949
      %v4169 = vadd.f32 %v3785, %v3951
      %v4170 = vadd.f32 %v3786, %v3953
      %v4171 = vadd.f32 %v3787, %v3955
      %v4172 = vadd.f32 %v3788, %v3957
      %v4173 = vadd.f32 %v3789, %v3959
      %v4174 = vadd.f32 %v3790, %v3961
      %v4175 = vadd.f32 %v3791, %v3963
      %v4176 = vadd.f32 %v3792, %v3965
      %v4177 = vadd.f32 %v3793, %v3967
      %v4178 = vadd.f32 %v3794, %v3969
      %v4179 = vadd.f32 %v3795, %v3971
      %v4180 = vadd.f32 %v3796, %v3973
      %v4181 = vadd.f32 %v3797, %v3975
      %v4182 = vadd.f32 %v3798, %v3977
      %v4183 = vadd.f32 %v3799, %v3979
      %v4184 = vadd.f32 %v3800, %v3981
      %v4185 = vadd.f32 %v3801, %v3983
      %v4186 = vadd.f32 %v3802, %v3985
      %v4187 = vadd.f32 %v3803, %v3987
      %v4188 = vadd.f32 %v3804, %v3989
      %v4189 = vadd.f32 %v3805, %v3991
      %v4190 = vadd.f32 %v3806, %v3993
      %v4191 = vadd.f32 %v3807, %v3995
      %v4192 = vadd.f32 %v3808, %v3997
      %v4193 = vadd.f32 %v3809, %v3999
      %v4194 = vadd.f32 %v3810, %v4001
      %v4195 = vadd.f32 %v3811, %v4003
      %v4196 = vadd.f32 %v3812, %v4005
      %v4197 = vadd.f32 %v3813, %v4007
      %v4198 = vadd.f32 %v3814, %v4009
      %v4199 = vadd.f32 %v3815, %v4011
      %v4200 = vadd.f32 %v3816, %v4013
      %v4201 = vadd.f32 %v3817, %v4015
      %v4202 = vadd.f32 %v3818, %v4017
      %v4203 = vadd.f32 %v3819, %v4019
      %v4204 = vadd.f32 %v3820, %v4021
      %v4205 = vadd.f32 %v3821, %v4023
      %v4206 = vadd.f32 %v3822, %v4025
      %v4207 = vadd.f32 %v3823, %v4027
      %v4208 = vadd.f32 %v3824, %v4029
      %v4209 = vadd.f32 %v3825, %v4031
      %v4210 = vadd.f32 %v3826, %v4033
      %v4211 = vadd.f32 %v3827, %v4035
      %v4212 = vadd.f32 %v3828, %v4037
      %v4213 = vadd.f32 %v3829, %v4039
      %v4214 = vadd.f32 %v3830, %v4041
      %v4215 = vadd.f32 %v3831, %v4043
      %v4216 = vadd.f32 %v3832, %v4045
      %v4217 = vadd.f32 %v3833, %v4047
      %v4218 = vadd.f32 %v3834, %v4049
      %v4219 = vadd.f32 %v3835, %v4051
      %v4220 = vadd.f32 %v3836, %v4053
      %v4221 = vadd.f32 %v3837, %v4055
      %v4222 = vadd.f32 %v3838, %v4057
      %v4223 = vadd.f32 %v3839, %v4059
      %v4224 = vadd.f32 %v3840, %v4061
      %v4225 = vadd.f32 %v3841, %v4063
      %v4226 = vadd.f32 %v3842, %v4065
      %v4227 = vadd.f32 %v3843, %v4067
      %v4228 = vadd.f32 %v3844, %v4069
      %v4229 = vadd.f32 %v3845, %v4071
      %v4230 = vadd.f32 %v3846, %v4073
      %v4231 = vadd.f32 %v3847, %v4075
      %v4232 = vadd.f32 %v3848, %v4077
      %v4233 = vadd.f32 %v3849, %v4079
      %v4234 = vadd.f32 %v3850, %v4081
      %v4235 = vadd.f32 %v3851, %v4083
      %v4236 = vadd.f32 %v3852, %v4085
      %v4237 = vadd.f32 %v3853, %v4087
      %v4238 = vadd.f32 %v3854, %v4089
      %v4239 = vadd.f32 %v3855, %v4091
      %v4240 = vadd.f32 %v3856, %v4093
      %v4241 = vadd.f32 %v3857, %v4095
      %v4242 = vadd.f32 %v3858, %v4097
      %v4243 = vadd.f32 %v3859, %v4099
      %v4244 = vadd.f32 %v3860, %v4101
      %v4245 = vadd.f32 %v3861, %v4103
      %v4246 = vadd.f32 %v3862, %v4105
      %v4247 = vadd.f32 %v3863, %v4107
      %v4248 = vadd.f32 %v3864, %v4109
      %v4249 = vadd.f32 %v3865, %v4111
      %v4250 = vadd.f32 %v3866, %v4113
      %v4251 = vadd.f32 %v3867, %v4115
      %v4252 = vadd.f32 %v3868, %v4117
      %v4253 = vadd.f32 %v3869, %v4119
      %v4254 = vadd.f32 %v3870, %v4121
      %v4255 = vadd.f32 %v3871, %v4123
      %v4256 = vadd.f32 %v3872, %v4125
      %v4257 = vadd.f32 %v3873, %v4127
      %v4258 = vadd.f32 %v3874, %v4129
      %v4259 = vadd.f32 %v3875, %v4131
      %4260 = vst.msk [vmem:[%s526] sm:$0xff] %vm3619, %v4132
      %4261 = vst.msk [vmem:[%s526 + $0x8] sm:$0xff] %vm3619, %v4133
      %4262 = vst.msk [vmem:[%s526 + $0x10] sm:$0xff] %vm3619, %v4134
      %4263 = vst.msk [vmem:[%s526 + $0x18] sm:$0xff] %vm3619, %v4135
      %4264 = vst.msk [vmem:[%s526 + $0x20] sm:$0xff] %vm3619, %v4136
      %4265 = vst.msk [vmem:[%s526 + $0x28] sm:$0xff] %vm3619, %v4137
      %4266 = vst.msk [vmem:[%s526 + $0x30] sm:$0xff] %vm3619, %v4138
      %4267 = vst.msk [vmem:[%s526 + $0x38] sm:$0xff] %vm3619, %v4139
      %4268 = vst.msk [vmem:[%s526 + $0x40] sm:$0xff] %vm3619, %v4140
      %4269 = vst.msk [vmem:[%s526 + $0x48] sm:$0xff] %vm3619, %v4141
      %4270 = vst.msk [vmem:[%s526 + $0x50] sm:$0xff] %vm3619, %v4142
      %4271 = vst.msk [vmem:[%s526 + $0x58] sm:$0xff] %vm3619, %v4143
      %4272 = vst.msk [vmem:[%s526 + $0x60] sm:$0xff] %vm3619, %v4144
      %4273 = vst.msk [vmem:[%s526 + $0x68] sm:$0xff] %vm3619, %v4145
      %4274 = vst.msk [vmem:[%s526 + $0x70] sm:$0xff] %vm3619, %v4146
      %4275 = vst.msk [vmem:[%s526 + $0x78] sm:$0xff] %vm3619, %v4147
      %4276 = vst.msk [vmem:[%s526 + $0x80] sm:$0xff] %vm3619, %v4148
      %4277 = vst.msk [vmem:[%s526 + $0x88] sm:$0xff] %vm3619, %v4149
      %4278 = vst.msk [vmem:[%s526 + $0x90] sm:$0xff] %vm3619, %v4150
      %4279 = vst.msk [vmem:[%s526 + $0x98] sm:$0xff] %vm3619, %v4151
      %4280 = vst.msk [vmem:[%s526 + $0xa0] sm:$0xff] %vm3619, %v4152
      %4281 = vst.msk [vmem:[%s526 + $0xa8] sm:$0xff] %vm3619, %v4153
      %4282 = vst.msk [vmem:[%s526 + $0xb0] sm:$0xff] %vm3619, %v4154
      %4283 = vst.msk [vmem:[%s526 + $0xb8] sm:$0xff] %vm3619, %v4155
      %4284 = vst.msk [vmem:[%s526 + $0xc0] sm:$0xff] %vm3619, %v4156
      %4285 = vst.msk [vmem:[%s526 + $0xc8] sm:$0xff] %vm3619, %v4157
      %4286 = vst.msk [vmem:[%s526 + $0xd0] sm:$0xff] %vm3619, %v4158
      %4287 = vst.msk [vmem:[%s526 + $0xd8] sm:$0xff] %vm3619, %v4159
      %4288 = vst.msk [vmem:[%s526 + $0xe0] sm:$0xff] %vm3619, %v4160
      %4289 = vst.msk [vmem:[%s526 + $0xe8] sm:$0xff] %vm3619, %v4161
      %4290 = vst.msk [vmem:[%s526 + $0xf0] sm:$0xff] %vm3619, %v4162
      %4291 = vst.msk [vmem:[%s526 + $0xf8] sm:$0xff] %vm3619, %v4163
      %4292 = vst.msk [vmem:[%s526 + $0x100] sm:$0xff] %vm3619, %v4164
      %4293 = vst.msk [vmem:[%s526 + $0x108] sm:$0xff] %vm3619, %v4165
      %4294 = vst.msk [vmem:[%s526 + $0x110] sm:$0xff] %vm3619, %v4166
      %4295 = vst.msk [vmem:[%s526 + $0x118] sm:$0xff] %vm3619, %v4167
      %4296 = vst.msk [vmem:[%s526 + $0x120] sm:$0xff] %vm3619, %v4168
      %4297 = vst.msk [vmem:[%s526 + $0x128] sm:$0xff] %vm3619, %v4169
      %4298 = vst.msk [vmem:[%s526 + $0x130] sm:$0xff] %vm3619, %v4170
      %4299 = vst.msk [vmem:[%s526 + $0x138] sm:$0xff] %vm3619, %v4171
      %4300 = vst.msk [vmem:[%s526 + $0x140] sm:$0xff] %vm3619, %v4172
      %4301 = vst.msk [vmem:[%s526 + $0x148] sm:$0xff] %vm3619, %v4173
      %4302 = vst.msk [vmem:[%s526 + $0x150] sm:$0xff] %vm3619, %v4174
      %4303 = vst.msk [vmem:[%s526 + $0x158] sm:$0xff] %vm3619, %v4175
      %4304 = vst.msk [vmem:[%s526 + $0x160] sm:$0xff] %vm3619, %v4176
      %4305 = vst.msk [vmem:[%s526 + $0x168] sm:$0xff] %vm3619, %v4177
      %4306 = vst.msk [vmem:[%s526 + $0x170] sm:$0xff] %vm3619, %v4178
      %4307 = vst.msk [vmem:[%s526 + $0x178] sm:$0xff] %vm3619, %v4179
      %4308 = vst.msk [vmem:[%s526 + $0x180] sm:$0xff] %vm3619, %v4180
      %4309 = vst.msk [vmem:[%s526 + $0x188] sm:$0xff] %vm3619, %v4181
      %4310 = vst.msk [vmem:[%s526 + $0x190] sm:$0xff] %vm3619, %v4182
      %4311 = vst.msk [vmem:[%s526 + $0x198] sm:$0xff] %vm3619, %v4183
      %4312 = vst.msk [vmem:[%s526 + $0x1a0] sm:$0xff] %vm3619, %v4184
      %4313 = vst.msk [vmem:[%s526 + $0x1a8] sm:$0xff] %vm3619, %v4185
      %4314 = vst.msk [vmem:[%s526 + $0x1b0] sm:$0xff] %vm3619, %v4186
      %4315 = vst.msk [vmem:[%s526 + $0x1b8] sm:$0xff] %vm3619, %v4187
      %4316 = vst.msk [vmem:[%s526 + $0x1c0] sm:$0xff] %vm3619, %v4188
      %4317 = vst.msk [vmem:[%s526 + $0x1c8] sm:$0xff] %vm3619, %v4189
      %4318 = vst.msk [vmem:[%s526 + $0x1d0] sm:$0xff] %vm3619, %v4190
      %4319 = vst.msk [vmem:[%s526 + $0x1d8] sm:$0xff] %vm3619, %v4191
      %4320 = vst.msk [vmem:[%s526 + $0x1e0] sm:$0xff] %vm3619, %v4192
      %4321 = vst.msk [vmem:[%s526 + $0x1e8] sm:$0xff] %vm3619, %v4193
      %4322 = vst.msk [vmem:[%s526 + $0x1f0] sm:$0xff] %vm3619, %v4194
      %4323 = vst.msk [vmem:[%s526 + $0x1f8] sm:$0xff] %vm3619, %v4195
      %4324 = vst.msk [vmem:[%s526 + $0x200] sm:$0xff] %vm3619, %v4196
      %4325 = vst.msk [vmem:[%s526 + $0x208] sm:$0xff] %vm3619, %v4197
      %4326 = vst.msk [vmem:[%s526 + $0x210] sm:$0xff] %vm3619, %v4198
      %4327 = vst.msk [vmem:[%s526 + $0x218] sm:$0xff] %vm3619, %v4199
      %4328 = vst.msk [vmem:[%s526 + $0x220] sm:$0xff] %vm3619, %v4200
      %4329 = vst.msk [vmem:[%s526 + $0x228] sm:$0xff] %vm3619, %v4201
      %4330 = vst.msk [vmem:[%s526 + $0x230] sm:$0xff] %vm3619, %v4202
      %4331 = vst.msk [vmem:[%s526 + $0x238] sm:$0xff] %vm3619, %v4203
      %4332 = vst.msk [vmem:[%s526 + $0x240] sm:$0xff] %vm3619, %v4204
      %4333 = vst.msk [vmem:[%s526 + $0x248] sm:$0xff] %vm3619, %v4205
      %4334 = vst.msk [vmem:[%s526 + $0x250] sm:$0xff] %vm3619, %v4206
      %4335 = vst.msk [vmem:[%s526 + $0x258] sm:$0xff] %vm3619, %v4207
      %4336 = vst.msk [vmem:[%s526 + $0x260] sm:$0xff] %vm3619, %v4208
      %4337 = vst.msk [vmem:[%s526 + $0x268] sm:$0xff] %vm3619, %v4209
      %4338 = vst.msk [vmem:[%s526 + $0x270] sm:$0xff] %vm3619, %v4210
      %4339 = vst.msk [vmem:[%s526 + $0x278] sm:$0xff] %vm3619, %v4211
      %4340 = vst.msk [vmem:[%s526 + $0x280] sm:$0xff] %vm3619, %v4212
      %4341 = vst.msk [vmem:[%s526 + $0x288] sm:$0xff] %vm3619, %v4213
      %4342 = vst.msk [vmem:[%s526 + $0x290] sm:$0xff] %vm3619, %v4214
      %4343 = vst.msk [vmem:[%s526 + $0x298] sm:$0xff] %vm3619, %v4215
      %4344 = vst.msk [vmem:[%s526 + $0x2a0] sm:$0xff] %vm3619, %v4216
      %4345 = vst.msk [vmem:[%s526 + $0x2a8] sm:$0xff] %vm3619, %v4217
      %4346 = vst.msk [vmem:[%s526 + $0x2b0] sm:$0xff] %vm3619, %v4218
      %4347 = vst.msk [vmem:[%s526 + $0x2b8] sm:$0xff] %vm3619, %v4219
      %4348 = vst.msk [vmem:[%s526 + $0x2c0] sm:$0xff] %vm3619, %v4220
      %4349 = vst.msk [vmem:[%s526 + $0x2c8] sm:$0xff] %vm3619, %v4221
      %4350 = vst.msk [vmem:[%s526 + $0x2d0] sm:$0xff] %vm3619, %v4222
      %4351 = vst.msk [vmem:[%s526 + $0x2d8] sm:$0xff] %vm3619, %v4223
      %4352 = vst.msk [vmem:[%s526 + $0x2e0] sm:$0xff] %vm3619, %v4224
      %4353 = vst.msk [vmem:[%s526 + $0x2e8] sm:$0xff] %vm3619, %v4225
      %4354 = vst.msk [vmem:[%s526 + $0x2f0] sm:$0xff] %vm3619, %v4226
      %4355 = vst.msk [vmem:[%s526 + $0x2f8] sm:$0xff] %vm3619, %v4227
      %4356 = vst.msk [vmem:[%s526 + $0x300] sm:$0xff] %vm3619, %v4228
      %4357 = vst.msk [vmem:[%s526 + $0x308] sm:$0xff] %vm3619, %v4229
      %4358 = vst.msk [vmem:[%s526 + $0x310] sm:$0xff] %vm3619, %v4230
      %4359 = vst.msk [vmem:[%s526 + $0x318] sm:$0xff] %vm3619, %v4231
      %4360 = vst.msk [vmem:[%s526 + $0x320] sm:$0xff] %vm3619, %v4232
      %4361 = vst.msk [vmem:[%s526 + $0x328] sm:$0xff] %vm3619, %v4233
      %4362 = vst.msk [vmem:[%s526 + $0x330] sm:$0xff] %vm3619, %v4234
      %4363 = vst.msk [vmem:[%s526 + $0x338] sm:$0xff] %vm3619, %v4235
      %4364 = vst.msk [vmem:[%s526 + $0x340] sm:$0xff] %vm3619, %v4236
      %4365 = vst.msk [vmem:[%s526 + $0x348] sm:$0xff] %vm3619, %v4237
      %4366 = vst.msk [vmem:[%s526 + $0x350] sm:$0xff] %vm3619, %v4238
      %4367 = vst.msk [vmem:[%s526 + $0x358] sm:$0xff] %vm3619, %v4239
      %4368 = vst.msk [vmem:[%s526 + $0x360] sm:$0xff] %vm3619, %v4240
      %4369 = vst.msk [vmem:[%s526 + $0x368] sm:$0xff] %vm3619, %v4241
      %4370 = vst.msk [vmem:[%s526 + $0x370] sm:$0xff] %vm3619, %v4242
      %4371 = vst.msk [vmem:[%s526 + $0x378] sm:$0xff] %vm3619, %v4243
      %4372 = vst.msk [vmem:[%s526 + $0x380] sm:$0xff] %vm3619, %v4244
      %4373 = vst.msk [vmem:[%s526 + $0x388] sm:$0xff] %vm3619, %v4245
      %4374 = vst.msk [vmem:[%s526 + $0x390] sm:$0xff] %vm3619, %v4246
      %4375 = vst.msk [vmem:[%s526 + $0x398] sm:$0xff] %vm3619, %v4247
      %4376 = vst.msk [vmem:[%s526 + $0x3a0] sm:$0xff] %vm3619, %v4248
      %4377 = vst.msk [vmem:[%s526 + $0x3a8] sm:$0xff] %vm3619, %v4249
      %4378 = vst.msk [vmem:[%s526 + $0x3b0] sm:$0xff] %vm3619, %v4250
      %4379 = vst.msk [vmem:[%s526 + $0x3b8] sm:$0xff] %vm3619, %v4251
      %4380 = vst.msk [vmem:[%s526 + $0x3c0] sm:$0xff] %vm3619, %v4252
      %4381 = vst.msk [vmem:[%s526 + $0x3c8] sm:$0xff] %vm3619, %v4253
      %4382 = vst.msk [vmem:[%s526 + $0x3d0] sm:$0xff] %vm3619, %v4254
      %4383 = vst.msk [vmem:[%s526 + $0x3d8] sm:$0xff] %vm3619, %v4255
      %4384 = vst.msk [vmem:[%s526 + $0x3e0] sm:$0xff] %vm3619, %v4256
      %4385 = vst.msk [vmem:[%s526 + $0x3e8] sm:$0xff] %vm3619, %v4257
      %4386 = vst.msk [vmem:[%s526 + $0x3f0] sm:$0xff] %vm3619, %v4258
      %4387 = vst.msk [vmem:[%s526 + $0x3f8] sm:$0xff] %vm3619, %v4259
      %v4388 = vld [vmem:[%s505] sm:$0xff]
      %v4389 = vld [vmem:[%s505 + $0x8] sm:$0xff]
      %v4390 = vld [vmem:[%s505 + $0x10] sm:$0xff]
      %v4391 = vld [vmem:[%s505 + $0x18] sm:$0xff]
      %v4392 = vld [vmem:[%s505 + $0x20] sm:$0xff]
      %v4393 = vld [vmem:[%s505 + $0x28] sm:$0xff]
      %v4394 = vld [vmem:[%s505 + $0x30] sm:$0xff]
      %v4395 = vld [vmem:[%s505 + $0x38] sm:$0xff]
      %v4396 = vld [vmem:[%s505 + $0x40] sm:$0xff]
      %v4397 = vld [vmem:[%s505 + $0x48] sm:$0xff]
      %v4398 = vld [vmem:[%s505 + $0x50] sm:$0xff]
      %v4399 = vld [vmem:[%s505 + $0x58] sm:$0xff]
      %v4400 = vld [vmem:[%s505 + $0x60] sm:$0xff]
      %v4401 = vld [vmem:[%s505 + $0x68] sm:$0xff]
      %v4402 = vld [vmem:[%s505 + $0x70] sm:$0xff]
      %v4403 = vld [vmem:[%s505 + $0x78] sm:$0xff]
      %v4404 = vld [vmem:[%s505 + $0x80] sm:$0xff]
      %v4405 = vld [vmem:[%s505 + $0x88] sm:$0xff]
      %v4406 = vld [vmem:[%s505 + $0x90] sm:$0xff]
      %v4407 = vld [vmem:[%s505 + $0x98] sm:$0xff]
      %v4408 = vld [vmem:[%s505 + $0xa0] sm:$0xff]
      %v4409 = vld [vmem:[%s505 + $0xa8] sm:$0xff]
      %v4410 = vld [vmem:[%s505 + $0xb0] sm:$0xff]
      %v4411 = vld [vmem:[%s505 + $0xb8] sm:$0xff]
      %v4412 = vld [vmem:[%s505 + $0xc0] sm:$0xff]
      %v4413 = vld [vmem:[%s505 + $0xc8] sm:$0xff]
      %v4414 = vld [vmem:[%s505 + $0xd0] sm:$0xff]
      %v4415 = vld [vmem:[%s505 + $0xd8] sm:$0xff]
      %v4416 = vld [vmem:[%s505 + $0xe0] sm:$0xff]
      %v4417 = vld [vmem:[%s505 + $0xe8] sm:$0xff]
      %v4418 = vld [vmem:[%s505 + $0xf0] sm:$0xff]
      %v4419 = vld [vmem:[%s505 + $0xf8] sm:$0xff]
      %v4420 = vld [vmem:[%s505 + $0x100] sm:$0xff]
      %v4421 = vld [vmem:[%s505 + $0x108] sm:$0xff]
      %v4422 = vld [vmem:[%s505 + $0x110] sm:$0xff]
      %v4423 = vld [vmem:[%s505 + $0x118] sm:$0xff]
      %v4424 = vld [vmem:[%s505 + $0x120] sm:$0xff]
      %v4425 = vld [vmem:[%s505 + $0x128] sm:$0xff]
      %v4426 = vld [vmem:[%s505 + $0x130] sm:$0xff]
      %v4427 = vld [vmem:[%s505 + $0x138] sm:$0xff]
      %v4428 = vld [vmem:[%s505 + $0x140] sm:$0xff]
      %v4429 = vld [vmem:[%s505 + $0x148] sm:$0xff]
      %v4430 = vld [vmem:[%s505 + $0x150] sm:$0xff]
      %v4431 = vld [vmem:[%s505 + $0x158] sm:$0xff]
      %v4432 = vld [vmem:[%s505 + $0x160] sm:$0xff]
      %v4433 = vld [vmem:[%s505 + $0x168] sm:$0xff]
      %v4434 = vld [vmem:[%s505 + $0x170] sm:$0xff]
      %v4435 = vld [vmem:[%s505 + $0x178] sm:$0xff]
      %v4436 = vld [vmem:[%s505 + $0x180] sm:$0xff]
      %v4437 = vld [vmem:[%s505 + $0x188] sm:$0xff]
      %v4438 = vld [vmem:[%s505 + $0x190] sm:$0xff]
      %v4439 = vld [vmem:[%s505 + $0x198] sm:$0xff]
      %v4440 = vld [vmem:[%s505 + $0x1a0] sm:$0xff]
      %v4441 = vld [vmem:[%s505 + $0x1a8] sm:$0xff]
      %v4442 = vld [vmem:[%s505 + $0x1b0] sm:$0xff]
      %v4443 = vld [vmem:[%s505 + $0x1b8] sm:$0xff]
      %v4444 = vld [vmem:[%s505 + $0x1c0] sm:$0xff]
      %v4445 = vld [vmem:[%s505 + $0x1c8] sm:$0xff]
      %v4446 = vld [vmem:[%s505 + $0x1d0] sm:$0xff]
      %v4447 = vld [vmem:[%s505 + $0x1d8] sm:$0xff]
      %v4448 = vld [vmem:[%s505 + $0x1e0] sm:$0xff]
      %v4449 = vld [vmem:[%s505 + $0x1e8] sm:$0xff]
      %v4450 = vld [vmem:[%s505 + $0x1f0] sm:$0xff]
      %v4451 = vld [vmem:[%s505 + $0x1f8] sm:$0xff]
      %v4452 = vld [vmem:[%s505 + $0x200] sm:$0xff]
      %v4453 = vld [vmem:[%s505 + $0x208] sm:$0xff]
      %v4454 = vld [vmem:[%s505 + $0x210] sm:$0xff]
      %v4455 = vld [vmem:[%s505 + $0x218] sm:$0xff]
      %v4456 = vld [vmem:[%s505 + $0x220] sm:$0xff]
      %v4457 = vld [vmem:[%s505 + $0x228] sm:$0xff]
      %v4458 = vld [vmem:[%s505 + $0x230] sm:$0xff]
      %v4459 = vld [vmem:[%s505 + $0x238] sm:$0xff]
      %v4460 = vld [vmem:[%s505 + $0x240] sm:$0xff]
      %v4461 = vld [vmem:[%s505 + $0x248] sm:$0xff]
      %v4462 = vld [vmem:[%s505 + $0x250] sm:$0xff]
      %v4463 = vld [vmem:[%s505 + $0x258] sm:$0xff]
      %v4464 = vld [vmem:[%s505 + $0x260] sm:$0xff]
      %v4465 = vld [vmem:[%s505 + $0x268] sm:$0xff]
      %v4466 = vld [vmem:[%s505 + $0x270] sm:$0xff]
      %v4467 = vld [vmem:[%s505 + $0x278] sm:$0xff]
      %v4468 = vld [vmem:[%s505 + $0x280] sm:$0xff]
      %v4469 = vld [vmem:[%s505 + $0x288] sm:$0xff]
      %v4470 = vld [vmem:[%s505 + $0x290] sm:$0xff]
      %v4471 = vld [vmem:[%s505 + $0x298] sm:$0xff]
      %v4472 = vld [vmem:[%s505 + $0x2a0] sm:$0xff]
      %v4473 = vld [vmem:[%s505 + $0x2a8] sm:$0xff]
      %v4474 = vld [vmem:[%s505 + $0x2b0] sm:$0xff]
      %v4475 = vld [vmem:[%s505 + $0x2b8] sm:$0xff]
      %v4476 = vld [vmem:[%s505 + $0x2c0] sm:$0xff]
      %v4477 = vld [vmem:[%s505 + $0x2c8] sm:$0xff]
      %v4478 = vld [vmem:[%s505 + $0x2d0] sm:$0xff]
      %v4479 = vld [vmem:[%s505 + $0x2d8] sm:$0xff]
      %v4480 = vld [vmem:[%s505 + $0x2e0] sm:$0xff]
      %v4481 = vld [vmem:[%s505 + $0x2e8] sm:$0xff]
      %v4482 = vld [vmem:[%s505 + $0x2f0] sm:$0xff]
      %v4483 = vld [vmem:[%s505 + $0x2f8] sm:$0xff]
      %v4484 = vld [vmem:[%s505 + $0x300] sm:$0xff]
      %v4485 = vld [vmem:[%s505 + $0x308] sm:$0xff]
      %v4486 = vld [vmem:[%s505 + $0x310] sm:$0xff]
      %v4487 = vld [vmem:[%s505 + $0x318] sm:$0xff]
      %v4488 = vld [vmem:[%s505 + $0x320] sm:$0xff]
      %v4489 = vld [vmem:[%s505 + $0x328] sm:$0xff]
      %v4490 = vld [vmem:[%s505 + $0x330] sm:$0xff]
      %v4491 = vld [vmem:[%s505 + $0x338] sm:$0xff]
      %v4492 = vld [vmem:[%s505 + $0x340] sm:$0xff]
      %v4493 = vld [vmem:[%s505 + $0x348] sm:$0xff]
      %v4494 = vld [vmem:[%s505 + $0x350] sm:$0xff]
      %v4495 = vld [vmem:[%s505 + $0x358] sm:$0xff]
      %v4496 = vld [vmem:[%s505 + $0x360] sm:$0xff]
      %v4497 = vld [vmem:[%s505 + $0x368] sm:$0xff]
      %v4498 = vld [vmem:[%s505 + $0x370] sm:$0xff]
      %v4499 = vld [vmem:[%s505 + $0x378] sm:$0xff]
      %v4500 = vld [vmem:[%s505 + $0x380] sm:$0xff]
      %v4501 = vld [vmem:[%s505 + $0x388] sm:$0xff]
      %v4502 = vld [vmem:[%s505 + $0x390] sm:$0xff]
      %v4503 = vld [vmem:[%s505 + $0x398] sm:$0xff]
      %v4504 = vld [vmem:[%s505 + $0x3a0] sm:$0xff]
      %v4505 = vld [vmem:[%s505 + $0x3a8] sm:$0xff]
      %v4506 = vld [vmem:[%s505 + $0x3b0] sm:$0xff]
      %v4507 = vld [vmem:[%s505 + $0x3b8] sm:$0xff]
      %v4508 = vld [vmem:[%s505 + $0x3c0] sm:$0xff]
      %v4509 = vld [vmem:[%s505 + $0x3c8] sm:$0xff]
      %v4510 = vld [vmem:[%s505 + $0x3d0] sm:$0xff]
      %v4511 = vld [vmem:[%s505 + $0x3d8] sm:$0xff]
      %v4512 = vld [vmem:[%s505 + $0x3e0] sm:$0xff]
      %v4513 = vld [vmem:[%s505 + $0x3e8] sm:$0xff]
      %v4514 = vld [vmem:[%s505 + $0x3f0] sm:$0xff]
      %v4515 = vld [vmem:[%s505 + $0x3f8] sm:$0xff]
      %v4516 = vmul.f32 %v4388, %v1057
      %v4517 = vmul.f32 %v4389, %v1058
      %v4518 = vmul.f32 %v4390, %v1059
      %v4519 = vmul.f32 %v4391, %v1060
      %v4520 = vmul.f32 %v4392, %v1061
      %v4521 = vmul.f32 %v4393, %v1062
      %v4522 = vmul.f32 %v4394, %v1063
      %v4523 = vmul.f32 %v4395, %v1064
      %v4524 = vmul.f32 %v4396, %v1065
      %v4525 = vmul.f32 %v4397, %v1066
      %v4526 = vmul.f32 %v4398, %v1067
      %v4527 = vmul.f32 %v4399, %v1068
      %v4528 = vmul.f32 %v4400, %v1069
      %v4529 = vmul.f32 %v4401, %v1070
      %v4530 = vmul.f32 %v4402, %v1071
      %v4531 = vmul.f32 %v4403, %v1072
      %v4532 = vmul.f32 %v4404, %v1073
      %v4533 = vmul.f32 %v4405, %v1074
      %v4534 = vmul.f32 %v4406, %v1075
      %v4535 = vmul.f32 %v4407, %v1076
      %v4536 = vmul.f32 %v4408, %v1077
      %v4537 = vmul.f32 %v4409, %v1078
      %v4538 = vmul.f32 %v4410, %v1079
      %v4539 = vmul.f32 %v4411, %v1080
      %v4540 = vmul.f32 %v4412, %v1081
      %v4541 = vmul.f32 %v4413, %v1082
      %v4542 = vmul.f32 %v4414, %v1083
      %v4543 = vmul.f32 %v4415, %v1084
      %v4544 = vmul.f32 %v4416, %v1085
      %v4545 = vmul.f32 %v4417, %v1086
      %v4546 = vmul.f32 %v4418, %v1087
      %v4547 = vmul.f32 %v4419, %v1088
      %v4548 = vmul.f32 %v4420, %v1089
      %v4549 = vmul.f32 %v4421, %v1090
      %v4550 = vmul.f32 %v4422, %v1091
      %v4551 = vmul.f32 %v4423, %v1092
      %v4552 = vmul.f32 %v4424, %v1093
      %v4553 = vmul.f32 %v4425, %v1094
      %v4554 = vmul.f32 %v4426, %v1095
      %v4555 = vmul.f32 %v4427, %v1096
      %v4556 = vmul.f32 %v4428, %v1097
      %v4557 = vmul.f32 %v4429, %v1098
      %v4558 = vmul.f32 %v4430, %v1099
      %v4559 = vmul.f32 %v4431, %v1100
      %v4560 = vmul.f32 %v4432, %v1101
      %v4561 = vmul.f32 %v4433, %v1102
      %v4562 = vmul.f32 %v4434, %v1103
      %v4563 = vmul.f32 %v4435, %v1104
      %v4564 = vmul.f32 %v4436, %v1105
      %v4565 = vmul.f32 %v4437, %v1106
      %v4566 = vmul.f32 %v4438, %v1107
      %v4567 = vmul.f32 %v4439, %v1108
      %v4568 = vmul.f32 %v4440, %v1109
      %v4569 = vmul.f32 %v4441, %v1110
      %v4570 = vmul.f32 %v4442, %v1111
      %v4571 = vmul.f32 %v4443, %v1112
      %v4572 = vmul.f32 %v4444, %v1113
      %v4573 = vmul.f32 %v4445, %v1114
      %v4574 = vmul.f32 %v4446, %v1115
      %v4575 = vmul.f32 %v4447, %v1116
      %v4576 = vmul.f32 %v4448, %v1117
      %v4577 = vmul.f32 %v4449, %v1118
      %v4578 = vmul.f32 %v4450, %v1119
      %v4579 = vmul.f32 %v4451, %v1120
      %v4580 = vmul.f32 %v4452, %v1121
      %v4581 = vmul.f32 %v4453, %v1122
      %v4582 = vmul.f32 %v4454, %v1123
      %v4583 = vmul.f32 %v4455, %v1124
      %v4584 = vmul.f32 %v4456, %v1125
      %v4585 = vmul.f32 %v4457, %v1126
      %v4586 = vmul.f32 %v4458, %v1127
      %v4587 = vmul.f32 %v4459, %v1128
      %v4588 = vmul.f32 %v4460, %v1129
      %v4589 = vmul.f32 %v4461, %v1130
      %v4590 = vmul.f32 %v4462, %v1131
      %v4591 = vmul.f32 %v4463, %v1132
      %v4592 = vmul.f32 %v4464, %v1133
      %v4593 = vmul.f32 %v4465, %v1134
      %v4594 = vmul.f32 %v4466, %v1135
      %v4595 = vmul.f32 %v4467, %v1136
      %v4596 = vmul.f32 %v4468, %v1137
      %v4597 = vmul.f32 %v4469, %v1138
      %v4598 = vmul.f32 %v4470, %v1139
      %v4599 = vmul.f32 %v4471, %v1140
      %v4600 = vmul.f32 %v4472, %v1141
      %v4601 = vmul.f32 %v4473, %v1142
      %v4602 = vmul.f32 %v4474, %v1143
      %v4603 = vmul.f32 %v4475, %v1144
      %v4604 = vmul.f32 %v4476, %v1145
      %v4605 = vmul.f32 %v4477, %v1146
      %v4606 = vmul.f32 %v4478, %v1147
      %v4607 = vmul.f32 %v4479, %v1148
      %v4608 = vmul.f32 %v4480, %v1149
      %v4609 = vmul.f32 %v4481, %v1150
      %v4610 = vmul.f32 %v4482, %v1151
      %v4611 = vmul.f32 %v4483, %v1152
      %v4612 = vmul.f32 %v4484, %v1153
      %v4613 = vmul.f32 %v4485, %v1154
      %v4614 = vmul.f32 %v4486, %v1155
      %v4615 = vmul.f32 %v4487, %v1156
      %v4616 = vmul.f32 %v4488, %v1157
      %v4617 = vmul.f32 %v4489, %v1158
      %v4618 = vmul.f32 %v4490, %v1159
      %v4619 = vmul.f32 %v4491, %v1160
      %v4620 = vmul.f32 %v4492, %v1161
      %v4621 = vmul.f32 %v4493, %v1162
      %v4622 = vmul.f32 %v4494, %v1163
      %v4623 = vmul.f32 %v4495, %v1164
      %v4624 = vmul.f32 %v4496, %v1165
      %v4625 = vmul.f32 %v4497, %v1166
      %v4626 = vmul.f32 %v4498, %v1167
      %v4627 = vmul.f32 %v4499, %v1168
      %v4628 = vmul.f32 %v4500, %v1169
      %v4629 = vmul.f32 %v4501, %v1170
      %v4630 = vmul.f32 %v4502, %v1171
      %v4631 = vmul.f32 %v4503, %v1172
      %v4632 = vmul.f32 %v4504, %v1173
      %v4633 = vmul.f32 %v4505, %v1174
      %v4634 = vmul.f32 %v4506, %v1175
      %v4635 = vmul.f32 %v4507, %v1176
      %v4636 = vmul.f32 %v4508, %v1177
      %v4637 = vmul.f32 %v4509, %v1178
      %v4638 = vmul.f32 %v4510, %v1179
      %v4639 = vmul.f32 %v4511, %v1180
      %v4640 = vmul.f32 %v4512, %v1181
      %v4641 = vmul.f32 %v4513, %v1182
      %v4642 = vmul.f32 %v4514, %v1183
      %v4643 = vmul.f32 %v4515, %v1184
      %v4644 = vsel %vm1569, %v4516, 0.0
      %4645 = vadd.xlane.f32.xlu0 %v4644
      %v4646 = vpop.xlane.xlu0 %4645
      %v4647 = vsel %vm1569, %v4517, 0.0
      %4648 = vadd.xlane.f32.xlu0 %v4647
      %v4649 = vpop.xlane.xlu0 %4648
      %v4650 = vsel %vm1569, %v4518, 0.0
      %4651 = vadd.xlane.f32.xlu0 %v4650
      %v4652 = vpop.xlane.xlu0 %4651
      %v4653 = vsel %vm1569, %v4519, 0.0
      %4654 = vadd.xlane.f32.xlu0 %v4653
      %v4655 = vpop.xlane.xlu0 %4654
      %v4656 = vsel %vm1569, %v4520, 0.0
      %4657 = vadd.xlane.f32.xlu0 %v4656
      %v4658 = vpop.xlane.xlu0 %4657
      %v4659 = vsel %vm1569, %v4521, 0.0
      %4660 = vadd.xlane.f32.xlu0 %v4659
      %v4661 = vpop.xlane.xlu0 %4660
      %v4662 = vsel %vm1569, %v4522, 0.0
      %4663 = vadd.xlane.f32.xlu0 %v4662
      %v4664 = vpop.xlane.xlu0 %4663
      %v4665 = vsel %vm1569, %v4523, 0.0
      %4666 = vadd.xlane.f32.xlu0 %v4665
      %v4667 = vpop.xlane.xlu0 %4666
      %v4668 = vsel %vm1569, %v4524, 0.0
      %4669 = vadd.xlane.f32.xlu0 %v4668
      %v4670 = vpop.xlane.xlu0 %4669
      %v4671 = vsel %vm1569, %v4525, 0.0
      %4672 = vadd.xlane.f32.xlu0 %v4671
      %v4673 = vpop.xlane.xlu0 %4672
      %v4674 = vsel %vm1569, %v4526, 0.0
      %4675 = vadd.xlane.f32.xlu0 %v4674
      %v4676 = vpop.xlane.xlu0 %4675
      %v4677 = vsel %vm1569, %v4527, 0.0
      %4678 = vadd.xlane.f32.xlu0 %v4677
      %v4679 = vpop.xlane.xlu0 %4678
      %v4680 = vsel %vm1569, %v4528, 0.0
      %4681 = vadd.xlane.f32.xlu0 %v4680
      %v4682 = vpop.xlane.xlu0 %4681
      %v4683 = vsel %vm1569, %v4529, 0.0
      %4684 = vadd.xlane.f32.xlu0 %v4683
      %v4685 = vpop.xlane.xlu0 %4684
      %v4686 = vsel %vm1569, %v4530, 0.0
      %4687 = vadd.xlane.f32.xlu0 %v4686
      %v4688 = vpop.xlane.xlu0 %4687
      %v4689 = vsel %vm1569, %v4531, 0.0
      %4690 = vadd.xlane.f32.xlu0 %v4689
      %v4691 = vpop.xlane.xlu0 %4690
      %v4692 = vsel %vm1569, %v4532, 0.0
      %4693 = vadd.xlane.f32.xlu0 %v4692
      %v4694 = vpop.xlane.xlu0 %4693
      %v4695 = vsel %vm1569, %v4533, 0.0
      %4696 = vadd.xlane.f32.xlu0 %v4695
      %v4697 = vpop.xlane.xlu0 %4696
      %v4698 = vsel %vm1569, %v4534, 0.0
      %4699 = vadd.xlane.f32.xlu0 %v4698
      %v4700 = vpop.xlane.xlu0 %4699
      %v4701 = vsel %vm1569, %v4535, 0.0
      %4702 = vadd.xlane.f32.xlu0 %v4701
      %v4703 = vpop.xlane.xlu0 %4702
      %v4704 = vsel %vm1569, %v4536, 0.0
      %4705 = vadd.xlane.f32.xlu0 %v4704
      %v4706 = vpop.xlane.xlu0 %4705
      %v4707 = vsel %vm1569, %v4537, 0.0
      %4708 = vadd.xlane.f32.xlu0 %v4707
      %v4709 = vpop.xlane.xlu0 %4708
      %v4710 = vsel %vm1569, %v4538, 0.0
      %4711 = vadd.xlane.f32.xlu0 %v4710
      %v4712 = vpop.xlane.xlu0 %4711
      %v4713 = vsel %vm1569, %v4539, 0.0
      %4714 = vadd.xlane.f32.xlu0 %v4713
      %v4715 = vpop.xlane.xlu0 %4714
      %v4716 = vsel %vm1569, %v4540, 0.0
      %4717 = vadd.xlane.f32.xlu0 %v4716
      %v4718 = vpop.xlane.xlu0 %4717
      %v4719 = vsel %vm1569, %v4541, 0.0
      %4720 = vadd.xlane.f32.xlu0 %v4719
      %v4721 = vpop.xlane.xlu0 %4720
      %v4722 = vsel %vm1569, %v4542, 0.0
      %4723 = vadd.xlane.f32.xlu0 %v4722
      %v4724 = vpop.xlane.xlu0 %4723
      %v4725 = vsel %vm1569, %v4543, 0.0
      %4726 = vadd.xlane.f32.xlu0 %v4725
      %v4727 = vpop.xlane.xlu0 %4726
      %v4728 = vsel %vm1569, %v4544, 0.0
      %4729 = vadd.xlane.f32.xlu0 %v4728
      %v4730 = vpop.xlane.xlu0 %4729
      %v4731 = vsel %vm1569, %v4545, 0.0
      %4732 = vadd.xlane.f32.xlu0 %v4731
      %v4733 = vpop.xlane.xlu0 %4732
      %v4734 = vsel %vm1569, %v4546, 0.0
      %4735 = vadd.xlane.f32.xlu0 %v4734
      %v4736 = vpop.xlane.xlu0 %4735
      %v4737 = vsel %vm1569, %v4547, 0.0
      %4738 = vadd.xlane.f32.xlu0 %v4737
      %v4739 = vpop.xlane.xlu0 %4738
      %v4740 = vsel %vm1569, %v4548, 0.0
      %4741 = vadd.xlane.f32.xlu0 %v4740
      %v4742 = vpop.xlane.xlu0 %4741
      %v4743 = vsel %vm1569, %v4549, 0.0
      %4744 = vadd.xlane.f32.xlu0 %v4743
      %v4745 = vpop.xlane.xlu0 %4744
      %v4746 = vsel %vm1569, %v4550, 0.0
      %4747 = vadd.xlane.f32.xlu0 %v4746
      %v4748 = vpop.xlane.xlu0 %4747
      %v4749 = vsel %vm1569, %v4551, 0.0
      %4750 = vadd.xlane.f32.xlu0 %v4749
      %v4751 = vpop.xlane.xlu0 %4750
      %v4752 = vsel %vm1569, %v4552, 0.0
      %4753 = vadd.xlane.f32.xlu0 %v4752
      %v4754 = vpop.xlane.xlu0 %4753
      %v4755 = vsel %vm1569, %v4553, 0.0
      %4756 = vadd.xlane.f32.xlu0 %v4755
      %v4757 = vpop.xlane.xlu0 %4756
      %v4758 = vsel %vm1569, %v4554, 0.0
      %4759 = vadd.xlane.f32.xlu0 %v4758
      %v4760 = vpop.xlane.xlu0 %4759
      %v4761 = vsel %vm1569, %v4555, 0.0
      %4762 = vadd.xlane.f32.xlu0 %v4761
      %v4763 = vpop.xlane.xlu0 %4762
      %v4764 = vsel %vm1569, %v4556, 0.0
      %4765 = vadd.xlane.f32.xlu0 %v4764
      %v4766 = vpop.xlane.xlu0 %4765
      %v4767 = vsel %vm1569, %v4557, 0.0
      %4768 = vadd.xlane.f32.xlu0 %v4767
      %v4769 = vpop.xlane.xlu0 %4768
      %v4770 = vsel %vm1569, %v4558, 0.0
      %4771 = vadd.xlane.f32.xlu0 %v4770
      %v4772 = vpop.xlane.xlu0 %4771
      %v4773 = vsel %vm1569, %v4559, 0.0
      %4774 = vadd.xlane.f32.xlu0 %v4773
      %v4775 = vpop.xlane.xlu0 %4774
      %v4776 = vsel %vm1569, %v4560, 0.0
      %4777 = vadd.xlane.f32.xlu0 %v4776
      %v4778 = vpop.xlane.xlu0 %4777
      %v4779 = vsel %vm1569, %v4561, 0.0
      %4780 = vadd.xlane.f32.xlu0 %v4779
      %v4781 = vpop.xlane.xlu0 %4780
      %v4782 = vsel %vm1569, %v4562, 0.0
      %4783 = vadd.xlane.f32.xlu0 %v4782
      %v4784 = vpop.xlane.xlu0 %4783
      %v4785 = vsel %vm1569, %v4563, 0.0
      %4786 = vadd.xlane.f32.xlu0 %v4785
      %v4787 = vpop.xlane.xlu0 %4786
      %v4788 = vsel %vm1569, %v4564, 0.0
      %4789 = vadd.xlane.f32.xlu0 %v4788
      %v4790 = vpop.xlane.xlu0 %4789
      %v4791 = vsel %vm1569, %v4565, 0.0
      %4792 = vadd.xlane.f32.xlu0 %v4791
      %v4793 = vpop.xlane.xlu0 %4792
      %v4794 = vsel %vm1569, %v4566, 0.0
      %4795 = vadd.xlane.f32.xlu0 %v4794
      %v4796 = vpop.xlane.xlu0 %4795
      %v4797 = vsel %vm1569, %v4567, 0.0
      %4798 = vadd.xlane.f32.xlu0 %v4797
      %v4799 = vpop.xlane.xlu0 %4798
      %v4800 = vsel %vm1569, %v4568, 0.0
      %4801 = vadd.xlane.f32.xlu0 %v4800
      %v4802 = vpop.xlane.xlu0 %4801
      %v4803 = vsel %vm1569, %v4569, 0.0
      %4804 = vadd.xlane.f32.xlu0 %v4803
      %v4805 = vpop.xlane.xlu0 %4804
      %v4806 = vsel %vm1569, %v4570, 0.0
      %4807 = vadd.xlane.f32.xlu0 %v4806
      %v4808 = vpop.xlane.xlu0 %4807
      %v4809 = vsel %vm1569, %v4571, 0.0
      %4810 = vadd.xlane.f32.xlu0 %v4809
      %v4811 = vpop.xlane.xlu0 %4810
      %v4812 = vsel %vm1569, %v4572, 0.0
      %4813 = vadd.xlane.f32.xlu0 %v4812
      %v4814 = vpop.xlane.xlu0 %4813
      %v4815 = vsel %vm1569, %v4573, 0.0
      %4816 = vadd.xlane.f32.xlu0 %v4815
      %v4817 = vpop.xlane.xlu0 %4816
      %v4818 = vsel %vm1569, %v4574, 0.0
      %4819 = vadd.xlane.f32.xlu0 %v4818
      %v4820 = vpop.xlane.xlu0 %4819
      %v4821 = vsel %vm1569, %v4575, 0.0
      %4822 = vadd.xlane.f32.xlu0 %v4821
      %v4823 = vpop.xlane.xlu0 %4822
      %v4824 = vsel %vm1569, %v4576, 0.0
      %4825 = vadd.xlane.f32.xlu0 %v4824
      %v4826 = vpop.xlane.xlu0 %4825
      %v4827 = vsel %vm1569, %v4577, 0.0
      %4828 = vadd.xlane.f32.xlu0 %v4827
      %v4829 = vpop.xlane.xlu0 %4828
      %v4830 = vsel %vm1569, %v4578, 0.0
      %4831 = vadd.xlane.f32.xlu0 %v4830
      %v4832 = vpop.xlane.xlu0 %4831
      %v4833 = vsel %vm1569, %v4579, 0.0
      %4834 = vadd.xlane.f32.xlu0 %v4833
      %v4835 = vpop.xlane.xlu0 %4834
      %v4836 = vsel %vm1569, %v4580, 0.0
      %4837 = vadd.xlane.f32.xlu0 %v4836
      %v4838 = vpop.xlane.xlu0 %4837
      %v4839 = vsel %vm1569, %v4581, 0.0
      %4840 = vadd.xlane.f32.xlu0 %v4839
      %v4841 = vpop.xlane.xlu0 %4840
      %v4842 = vsel %vm1569, %v4582, 0.0
      %4843 = vadd.xlane.f32.xlu0 %v4842
      %v4844 = vpop.xlane.xlu0 %4843
      %v4845 = vsel %vm1569, %v4583, 0.0
      %4846 = vadd.xlane.f32.xlu0 %v4845
      %v4847 = vpop.xlane.xlu0 %4846
      %v4848 = vsel %vm1569, %v4584, 0.0
      %4849 = vadd.xlane.f32.xlu0 %v4848
      %v4850 = vpop.xlane.xlu0 %4849
      %v4851 = vsel %vm1569, %v4585, 0.0
      %4852 = vadd.xlane.f32.xlu0 %v4851
      %v4853 = vpop.xlane.xlu0 %4852
      %v4854 = vsel %vm1569, %v4586, 0.0
      %4855 = vadd.xlane.f32.xlu0 %v4854
      %v4856 = vpop.xlane.xlu0 %4855
      %v4857 = vsel %vm1569, %v4587, 0.0
      %4858 = vadd.xlane.f32.xlu0 %v4857
      %v4859 = vpop.xlane.xlu0 %4858
      %v4860 = vsel %vm1569, %v4588, 0.0
      %4861 = vadd.xlane.f32.xlu0 %v4860
      %v4862 = vpop.xlane.xlu0 %4861
      %v4863 = vsel %vm1569, %v4589, 0.0
      %4864 = vadd.xlane.f32.xlu0 %v4863
      %v4865 = vpop.xlane.xlu0 %4864
      %v4866 = vsel %vm1569, %v4590, 0.0
      %4867 = vadd.xlane.f32.xlu0 %v4866
      %v4868 = vpop.xlane.xlu0 %4867
      %v4869 = vsel %vm1569, %v4591, 0.0
      %4870 = vadd.xlane.f32.xlu0 %v4869
      %v4871 = vpop.xlane.xlu0 %4870
      %v4872 = vsel %vm1569, %v4592, 0.0
      %4873 = vadd.xlane.f32.xlu0 %v4872
      %v4874 = vpop.xlane.xlu0 %4873
      %v4875 = vsel %vm1569, %v4593, 0.0
      %4876 = vadd.xlane.f32.xlu0 %v4875
      %v4877 = vpop.xlane.xlu0 %4876
      %v4878 = vsel %vm1569, %v4594, 0.0
      %4879 = vadd.xlane.f32.xlu0 %v4878
      %v4880 = vpop.xlane.xlu0 %4879
      %v4881 = vsel %vm1569, %v4595, 0.0
      %4882 = vadd.xlane.f32.xlu0 %v4881
      %v4883 = vpop.xlane.xlu0 %4882
      %v4884 = vsel %vm1569, %v4596, 0.0
      %4885 = vadd.xlane.f32.xlu0 %v4884
      %v4886 = vpop.xlane.xlu0 %4885
      %v4887 = vsel %vm1569, %v4597, 0.0
      %4888 = vadd.xlane.f32.xlu0 %v4887
      %v4889 = vpop.xlane.xlu0 %4888
      %v4890 = vsel %vm1569, %v4598, 0.0
      %4891 = vadd.xlane.f32.xlu0 %v4890
      %v4892 = vpop.xlane.xlu0 %4891
      %v4893 = vsel %vm1569, %v4599, 0.0
      %4894 = vadd.xlane.f32.xlu0 %v4893
      %v4895 = vpop.xlane.xlu0 %4894
      %v4896 = vsel %vm1569, %v4600, 0.0
      %4897 = vadd.xlane.f32.xlu0 %v4896
      %v4898 = vpop.xlane.xlu0 %4897
      %v4899 = vsel %vm1569, %v4601, 0.0
      %4900 = vadd.xlane.f32.xlu0 %v4899
      %v4901 = vpop.xlane.xlu0 %4900
      %v4902 = vsel %vm1569, %v4602, 0.0
      %4903 = vadd.xlane.f32.xlu0 %v4902
      %v4904 = vpop.xlane.xlu0 %4903
      %v4905 = vsel %vm1569, %v4603, 0.0
      %4906 = vadd.xlane.f32.xlu0 %v4905
      %v4907 = vpop.xlane.xlu0 %4906
      %v4908 = vsel %vm1569, %v4604, 0.0
      %4909 = vadd.xlane.f32.xlu0 %v4908
      %v4910 = vpop.xlane.xlu0 %4909
      %v4911 = vsel %vm1569, %v4605, 0.0
      %4912 = vadd.xlane.f32.xlu0 %v4911
      %v4913 = vpop.xlane.xlu0 %4912
      %v4914 = vsel %vm1569, %v4606, 0.0
      %4915 = vadd.xlane.f32.xlu0 %v4914
      %v4916 = vpop.xlane.xlu0 %4915
      %v4917 = vsel %vm1569, %v4607, 0.0
      %4918 = vadd.xlane.f32.xlu0 %v4917
      %v4919 = vpop.xlane.xlu0 %4918
      %v4920 = vsel %vm1569, %v4608, 0.0
      %4921 = vadd.xlane.f32.xlu0 %v4920
      %v4922 = vpop.xlane.xlu0 %4921
      %v4923 = vsel %vm1569, %v4609, 0.0
      %4924 = vadd.xlane.f32.xlu0 %v4923
      %v4925 = vpop.xlane.xlu0 %4924
      %v4926 = vsel %vm1569, %v4610, 0.0
      %4927 = vadd.xlane.f32.xlu0 %v4926
      %v4928 = vpop.xlane.xlu0 %4927
      %v4929 = vsel %vm1569, %v4611, 0.0
      %4930 = vadd.xlane.f32.xlu0 %v4929
      %v4931 = vpop.xlane.xlu0 %4930
      %v4932 = vsel %vm1569, %v4612, 0.0
      %4933 = vadd.xlane.f32.xlu0 %v4932
      %v4934 = vpop.xlane.xlu0 %4933
      %v4935 = vsel %vm1569, %v4613, 0.0
      %4936 = vadd.xlane.f32.xlu0 %v4935
      %v4937 = vpop.xlane.xlu0 %4936
      %v4938 = vsel %vm1569, %v4614, 0.0
      %4939 = vadd.xlane.f32.xlu0 %v4938
      %v4940 = vpop.xlane.xlu0 %4939
      %v4941 = vsel %vm1569, %v4615, 0.0
      %4942 = vadd.xlane.f32.xlu0 %v4941
      %v4943 = vpop.xlane.xlu0 %4942
      %v4944 = vsel %vm1569, %v4616, 0.0
      %4945 = vadd.xlane.f32.xlu0 %v4944
      %v4946 = vpop.xlane.xlu0 %4945
      %v4947 = vsel %vm1569, %v4617, 0.0
      %4948 = vadd.xlane.f32.xlu0 %v4947
      %v4949 = vpop.xlane.xlu0 %4948
      %v4950 = vsel %vm1569, %v4618, 0.0
      %4951 = vadd.xlane.f32.xlu0 %v4950
      %v4952 = vpop.xlane.xlu0 %4951
      %v4953 = vsel %vm1569, %v4619, 0.0
      %4954 = vadd.xlane.f32.xlu0 %v4953
      %v4955 = vpop.xlane.xlu0 %4954
      %v4956 = vsel %vm1569, %v4620, 0.0
      %4957 = vadd.xlane.f32.xlu0 %v4956
      %v4958 = vpop.xlane.xlu0 %4957
      %v4959 = vsel %vm1569, %v4621, 0.0
      %4960 = vadd.xlane.f32.xlu0 %v4959
      %v4961 = vpop.xlane.xlu0 %4960
      %v4962 = vsel %vm1569, %v4622, 0.0
      %4963 = vadd.xlane.f32.xlu0 %v4962
      %v4964 = vpop.xlane.xlu0 %4963
      %v4965 = vsel %vm1569, %v4623, 0.0
      %4966 = vadd.xlane.f32.xlu0 %v4965
      %v4967 = vpop.xlane.xlu0 %4966
      %v4968 = vsel %vm1569, %v4624, 0.0
      %4969 = vadd.xlane.f32.xlu0 %v4968
      %v4970 = vpop.xlane.xlu0 %4969
      %v4971 = vsel %vm1569, %v4625, 0.0
      %4972 = vadd.xlane.f32.xlu0 %v4971
      %v4973 = vpop.xlane.xlu0 %4972
      %v4974 = vsel %vm1569, %v4626, 0.0
      %4975 = vadd.xlane.f32.xlu0 %v4974
      %v4976 = vpop.xlane.xlu0 %4975
      %v4977 = vsel %vm1569, %v4627, 0.0
      %4978 = vadd.xlane.f32.xlu0 %v4977
      %v4979 = vpop.xlane.xlu0 %4978
      %v4980 = vsel %vm1569, %v4628, 0.0
      %4981 = vadd.xlane.f32.xlu0 %v4980
      %v4982 = vpop.xlane.xlu0 %4981
      %v4983 = vsel %vm1569, %v4629, 0.0
      %4984 = vadd.xlane.f32.xlu0 %v4983
      %v4985 = vpop.xlane.xlu0 %4984
      %v4986 = vsel %vm1569, %v4630, 0.0
      %4987 = vadd.xlane.f32.xlu0 %v4986
      %v4988 = vpop.xlane.xlu0 %4987
      %v4989 = vsel %vm1569, %v4631, 0.0
      %4990 = vadd.xlane.f32.xlu0 %v4989
      %v4991 = vpop.xlane.xlu0 %4990
      %v4992 = vsel %vm1569, %v4632, 0.0
      %4993 = vadd.xlane.f32.xlu0 %v4992
      %v4994 = vpop.xlane.xlu0 %4993
      %v4995 = vsel %vm1569, %v4633, 0.0
      %4996 = vadd.xlane.f32.xlu0 %v4995
      %v4997 = vpop.xlane.xlu0 %4996
      %v4998 = vsel %vm1569, %v4634, 0.0
      %4999 = vadd.xlane.f32.xlu0 %v4998
      %v5000 = vpop.xlane.xlu0 %4999
      %v5001 = vsel %vm1569, %v4635, 0.0
      %5002 = vadd.xlane.f32.xlu0 %v5001
      %v5003 = vpop.xlane.xlu0 %5002
      %v5004 = vsel %vm1569, %v4636, 0.0
      %5005 = vadd.xlane.f32.xlu0 %v5004
      %v5006 = vpop.xlane.xlu0 %5005
      %v5007 = vsel %vm1569, %v4637, 0.0
      %5008 = vadd.xlane.f32.xlu0 %v5007
      %v5009 = vpop.xlane.xlu0 %5008
      %v5010 = vsel %vm1569, %v4638, 0.0
      %5011 = vadd.xlane.f32.xlu0 %v5010
      %v5012 = vpop.xlane.xlu0 %5011
      %v5013 = vsel %vm1569, %v4639, 0.0
      %5014 = vadd.xlane.f32.xlu0 %v5013
      %v5015 = vpop.xlane.xlu0 %5014
      %v5016 = vsel %vm1569, %v4640, 0.0
      %5017 = vadd.xlane.f32.xlu0 %v5016
      %v5018 = vpop.xlane.xlu0 %5017
      %v5019 = vsel %vm1569, %v4641, 0.0
      %5020 = vadd.xlane.f32.xlu0 %v5019
      %v5021 = vpop.xlane.xlu0 %5020
      %v5022 = vsel %vm1569, %v4642, 0.0
      %5023 = vadd.xlane.f32.xlu0 %v5022
      %v5024 = vpop.xlane.xlu0 %5023
      %v5025 = vsel %vm1569, %v4643, 0.0
      %5026 = vadd.xlane.f32.xlu0 %v5025
      %v5027 = vpop.xlane.xlu0 %5026
      %v5028 = vadd.f32 %v4646, 0.05
      %v5029 = vadd.f32 %v4649, 0.05
      %v5030 = vadd.f32 %v4652, 0.05
      %v5031 = vadd.f32 %v4655, 0.05
      %v5032 = vadd.f32 %v4658, 0.05
      %v5033 = vadd.f32 %v4661, 0.05
      %v5034 = vadd.f32 %v4664, 0.05
      %v5035 = vadd.f32 %v4667, 0.05
      %v5036 = vadd.f32 %v4670, 0.05
      %v5037 = vadd.f32 %v4673, 0.05
      %v5038 = vadd.f32 %v4676, 0.05
      %v5039 = vadd.f32 %v4679, 0.05
      %v5040 = vadd.f32 %v4682, 0.05
      %v5041 = vadd.f32 %v4685, 0.05
      %v5042 = vadd.f32 %v4688, 0.05
      %v5043 = vadd.f32 %v4691, 0.05
      %v5044 = vadd.f32 %v4694, 0.05
      %v5045 = vadd.f32 %v4697, 0.05
      %v5046 = vadd.f32 %v4700, 0.05
      %v5047 = vadd.f32 %v4703, 0.05
      %v5048 = vadd.f32 %v4706, 0.05
      %v5049 = vadd.f32 %v4709, 0.05
      %v5050 = vadd.f32 %v4712, 0.05
      %v5051 = vadd.f32 %v4715, 0.05
      %v5052 = vadd.f32 %v4718, 0.05
      %v5053 = vadd.f32 %v4721, 0.05
      %v5054 = vadd.f32 %v4724, 0.05
      %v5055 = vadd.f32 %v4727, 0.05
      %v5056 = vadd.f32 %v4730, 0.05
      %v5057 = vadd.f32 %v4733, 0.05
      %v5058 = vadd.f32 %v4736, 0.05
      %v5059 = vadd.f32 %v4739, 0.05
      %v5060 = vadd.f32 %v4742, 0.05
      %v5061 = vadd.f32 %v4745, 0.05
      %v5062 = vadd.f32 %v4748, 0.05
      %v5063 = vadd.f32 %v4751, 0.05
      %v5064 = vadd.f32 %v4754, 0.05
      %v5065 = vadd.f32 %v4757, 0.05
      %v5066 = vadd.f32 %v4760, 0.05
      %v5067 = vadd.f32 %v4763, 0.05
      %v5068 = vadd.f32 %v4766, 0.05
      %v5069 = vadd.f32 %v4769, 0.05
      %v5070 = vadd.f32 %v4772, 0.05
      %v5071 = vadd.f32 %v4775, 0.05
      %v5072 = vadd.f32 %v4778, 0.05
      %v5073 = vadd.f32 %v4781, 0.05
      %v5074 = vadd.f32 %v4784, 0.05
      %v5075 = vadd.f32 %v4787, 0.05
      %v5076 = vadd.f32 %v4790, 0.05
      %v5077 = vadd.f32 %v4793, 0.05
      %v5078 = vadd.f32 %v4796, 0.05
      %v5079 = vadd.f32 %v4799, 0.05
      %v5080 = vadd.f32 %v4802, 0.05
      %v5081 = vadd.f32 %v4805, 0.05
      %v5082 = vadd.f32 %v4808, 0.05
      %v5083 = vadd.f32 %v4811, 0.05
      %v5084 = vadd.f32 %v4814, 0.05
      %v5085 = vadd.f32 %v4817, 0.05
      %v5086 = vadd.f32 %v4820, 0.05
      %v5087 = vadd.f32 %v4823, 0.05
      %v5088 = vadd.f32 %v4826, 0.05
      %v5089 = vadd.f32 %v4829, 0.05
      %v5090 = vadd.f32 %v4832, 0.05
      %v5091 = vadd.f32 %v4835, 0.05
      %v5092 = vadd.f32 %v4838, 0.05
      %v5093 = vadd.f32 %v4841, 0.05
      %v5094 = vadd.f32 %v4844, 0.05
      %v5095 = vadd.f32 %v4847, 0.05
      %v5096 = vadd.f32 %v4850, 0.05
      %v5097 = vadd.f32 %v4853, 0.05
      %v5098 = vadd.f32 %v4856, 0.05
      %v5099 = vadd.f32 %v4859, 0.05
      %v5100 = vadd.f32 %v4862, 0.05
      %v5101 = vadd.f32 %v4865, 0.05
      %v5102 = vadd.f32 %v4868, 0.05
      %v5103 = vadd.f32 %v4871, 0.05
      %v5104 = vadd.f32 %v4874, 0.05
      %v5105 = vadd.f32 %v4877, 0.05
      %v5106 = vadd.f32 %v4880, 0.05
      %v5107 = vadd.f32 %v4883, 0.05
      %v5108 = vadd.f32 %v4886, 0.05
      %v5109 = vadd.f32 %v4889, 0.05
      %v5110 = vadd.f32 %v4892, 0.05
      %v5111 = vadd.f32 %v4895, 0.05
      %v5112 = vadd.f32 %v4898, 0.05
      %v5113 = vadd.f32 %v4901, 0.05
      %v5114 = vadd.f32 %v4904, 0.05
      %v5115 = vadd.f32 %v4907, 0.05
      %v5116 = vadd.f32 %v4910, 0.05
      %v5117 = vadd.f32 %v4913, 0.05
      %v5118 = vadd.f32 %v4916, 0.05
      %v5119 = vadd.f32 %v4919, 0.05
      %v5120 = vadd.f32 %v4922, 0.05
      %v5121 = vadd.f32 %v4925, 0.05
      %v5122 = vadd.f32 %v4928, 0.05
      %v5123 = vadd.f32 %v4931, 0.05
      %v5124 = vadd.f32 %v4934, 0.05
      %v5125 = vadd.f32 %v4937, 0.05
      %v5126 = vadd.f32 %v4940, 0.05
      %v5127 = vadd.f32 %v4943, 0.05
      %v5128 = vadd.f32 %v4946, 0.05
      %v5129 = vadd.f32 %v4949, 0.05
      %v5130 = vadd.f32 %v4952, 0.05
      %v5131 = vadd.f32 %v4955, 0.05
      %v5132 = vadd.f32 %v4958, 0.05
      %v5133 = vadd.f32 %v4961, 0.05
      %v5134 = vadd.f32 %v4964, 0.05
      %v5135 = vadd.f32 %v4967, 0.05
      %v5136 = vadd.f32 %v4970, 0.05
      %v5137 = vadd.f32 %v4973, 0.05
      %v5138 = vadd.f32 %v4976, 0.05
      %v5139 = vadd.f32 %v4979, 0.05
      %v5140 = vadd.f32 %v4982, 0.05
      %v5141 = vadd.f32 %v4985, 0.05
      %v5142 = vadd.f32 %v4988, 0.05
      %v5143 = vadd.f32 %v4991, 0.05
      %v5144 = vadd.f32 %v4994, 0.05
      %v5145 = vadd.f32 %v4997, 0.05
      %v5146 = vadd.f32 %v5000, 0.05
      %v5147 = vadd.f32 %v5003, 0.05
      %v5148 = vadd.f32 %v5006, 0.05
      %v5149 = vadd.f32 %v5009, 0.05
      %v5150 = vadd.f32 %v5012, 0.05
      %v5151 = vadd.f32 %v5015, 0.05
      %v5152 = vadd.f32 %v5018, 0.05
      %v5153 = vadd.f32 %v5021, 0.05
      %v5154 = vadd.f32 %v5024, 0.05
      %v5155 = vadd.f32 %v5027, 0.05
      %v5156 = vld [vmem:[%s513] sm:$0xff]
      %v5157 = vld [vmem:[%s513 + $0x8] sm:$0xff]
      %v5158 = vld [vmem:[%s513 + $0x10] sm:$0xff]
      %v5159 = vld [vmem:[%s513 + $0x18] sm:$0xff]
      %v5160 = vld [vmem:[%s513 + $0x20] sm:$0xff]
      %v5161 = vld [vmem:[%s513 + $0x28] sm:$0xff]
      %v5162 = vld [vmem:[%s513 + $0x30] sm:$0xff]
      %v5163 = vld [vmem:[%s513 + $0x38] sm:$0xff]
      %v5164 = vld [vmem:[%s513 + $0x40] sm:$0xff]
      %v5165 = vld [vmem:[%s513 + $0x48] sm:$0xff]
      %v5166 = vld [vmem:[%s513 + $0x50] sm:$0xff]
      %v5167 = vld [vmem:[%s513 + $0x58] sm:$0xff]
      %v5168 = vld [vmem:[%s513 + $0x60] sm:$0xff]
      %v5169 = vld [vmem:[%s513 + $0x68] sm:$0xff]
      %v5170 = vld [vmem:[%s513 + $0x70] sm:$0xff]
      %v5171 = vld [vmem:[%s513 + $0x78] sm:$0xff]
      %v5172 = vld [vmem:[%s513 + $0x80] sm:$0xff]
      %v5173 = vld [vmem:[%s513 + $0x88] sm:$0xff]
      %v5174 = vld [vmem:[%s513 + $0x90] sm:$0xff]
      %v5175 = vld [vmem:[%s513 + $0x98] sm:$0xff]
      %v5176 = vld [vmem:[%s513 + $0xa0] sm:$0xff]
      %v5177 = vld [vmem:[%s513 + $0xa8] sm:$0xff]
      %v5178 = vld [vmem:[%s513 + $0xb0] sm:$0xff]
      %v5179 = vld [vmem:[%s513 + $0xb8] sm:$0xff]
      %v5180 = vld [vmem:[%s513 + $0xc0] sm:$0xff]
      %v5181 = vld [vmem:[%s513 + $0xc8] sm:$0xff]
      %v5182 = vld [vmem:[%s513 + $0xd0] sm:$0xff]
      %v5183 = vld [vmem:[%s513 + $0xd8] sm:$0xff]
      %v5184 = vld [vmem:[%s513 + $0xe0] sm:$0xff]
      %v5185 = vld [vmem:[%s513 + $0xe8] sm:$0xff]
      %v5186 = vld [vmem:[%s513 + $0xf0] sm:$0xff]
      %v5187 = vld [vmem:[%s513 + $0xf8] sm:$0xff]
      %v5188 = vld [vmem:[%s513 + $0x100] sm:$0xff]
      %v5189 = vld [vmem:[%s513 + $0x108] sm:$0xff]
      %v5190 = vld [vmem:[%s513 + $0x110] sm:$0xff]
      %v5191 = vld [vmem:[%s513 + $0x118] sm:$0xff]
      %v5192 = vld [vmem:[%s513 + $0x120] sm:$0xff]
      %v5193 = vld [vmem:[%s513 + $0x128] sm:$0xff]
      %v5194 = vld [vmem:[%s513 + $0x130] sm:$0xff]
      %v5195 = vld [vmem:[%s513 + $0x138] sm:$0xff]
      %v5196 = vld [vmem:[%s513 + $0x140] sm:$0xff]
      %v5197 = vld [vmem:[%s513 + $0x148] sm:$0xff]
      %v5198 = vld [vmem:[%s513 + $0x150] sm:$0xff]
      %v5199 = vld [vmem:[%s513 + $0x158] sm:$0xff]
      %v5200 = vld [vmem:[%s513 + $0x160] sm:$0xff]
      %v5201 = vld [vmem:[%s513 + $0x168] sm:$0xff]
      %v5202 = vld [vmem:[%s513 + $0x170] sm:$0xff]
      %v5203 = vld [vmem:[%s513 + $0x178] sm:$0xff]
      %v5204 = vld [vmem:[%s513 + $0x180] sm:$0xff]
      %v5205 = vld [vmem:[%s513 + $0x188] sm:$0xff]
      %v5206 = vld [vmem:[%s513 + $0x190] sm:$0xff]
      %v5207 = vld [vmem:[%s513 + $0x198] sm:$0xff]
      %v5208 = vld [vmem:[%s513 + $0x1a0] sm:$0xff]
      %v5209 = vld [vmem:[%s513 + $0x1a8] sm:$0xff]
      %v5210 = vld [vmem:[%s513 + $0x1b0] sm:$0xff]
      %v5211 = vld [vmem:[%s513 + $0x1b8] sm:$0xff]
      %v5212 = vld [vmem:[%s513 + $0x1c0] sm:$0xff]
      %v5213 = vld [vmem:[%s513 + $0x1c8] sm:$0xff]
      %v5214 = vld [vmem:[%s513 + $0x1d0] sm:$0xff]
      %v5215 = vld [vmem:[%s513 + $0x1d8] sm:$0xff]
      %v5216 = vld [vmem:[%s513 + $0x1e0] sm:$0xff]
      %v5217 = vld [vmem:[%s513 + $0x1e8] sm:$0xff]
      %v5218 = vld [vmem:[%s513 + $0x1f0] sm:$0xff]
      %v5219 = vld [vmem:[%s513 + $0x1f8] sm:$0xff]
      %v5220 = vld [vmem:[%s513 + $0x200] sm:$0xff]
      %v5221 = vld [vmem:[%s513 + $0x208] sm:$0xff]
      %v5222 = vld [vmem:[%s513 + $0x210] sm:$0xff]
      %v5223 = vld [vmem:[%s513 + $0x218] sm:$0xff]
      %v5224 = vld [vmem:[%s513 + $0x220] sm:$0xff]
      %v5225 = vld [vmem:[%s513 + $0x228] sm:$0xff]
      %v5226 = vld [vmem:[%s513 + $0x230] sm:$0xff]
      %v5227 = vld [vmem:[%s513 + $0x238] sm:$0xff]
      %v5228 = vld [vmem:[%s513 + $0x240] sm:$0xff]
      %v5229 = vld [vmem:[%s513 + $0x248] sm:$0xff]
      %v5230 = vld [vmem:[%s513 + $0x250] sm:$0xff]
      %v5231 = vld [vmem:[%s513 + $0x258] sm:$0xff]
      %v5232 = vld [vmem:[%s513 + $0x260] sm:$0xff]
      %v5233 = vld [vmem:[%s513 + $0x268] sm:$0xff]
      %v5234 = vld [vmem:[%s513 + $0x270] sm:$0xff]
      %v5235 = vld [vmem:[%s513 + $0x278] sm:$0xff]
      %v5236 = vld [vmem:[%s513 + $0x280] sm:$0xff]
      %v5237 = vld [vmem:[%s513 + $0x288] sm:$0xff]
      %v5238 = vld [vmem:[%s513 + $0x290] sm:$0xff]
      %v5239 = vld [vmem:[%s513 + $0x298] sm:$0xff]
      %v5240 = vld [vmem:[%s513 + $0x2a0] sm:$0xff]
      %v5241 = vld [vmem:[%s513 + $0x2a8] sm:$0xff]
      %v5242 = vld [vmem:[%s513 + $0x2b0] sm:$0xff]
      %v5243 = vld [vmem:[%s513 + $0x2b8] sm:$0xff]
      %v5244 = vld [vmem:[%s513 + $0x2c0] sm:$0xff]
      %v5245 = vld [vmem:[%s513 + $0x2c8] sm:$0xff]
      %v5246 = vld [vmem:[%s513 + $0x2d0] sm:$0xff]
      %v5247 = vld [vmem:[%s513 + $0x2d8] sm:$0xff]
      %v5248 = vld [vmem:[%s513 + $0x2e0] sm:$0xff]
      %v5249 = vld [vmem:[%s513 + $0x2e8] sm:$0xff]
      %v5250 = vld [vmem:[%s513 + $0x2f0] sm:$0xff]
      %v5251 = vld [vmem:[%s513 + $0x2f8] sm:$0xff]
      %v5252 = vld [vmem:[%s513 + $0x300] sm:$0xff]
      %v5253 = vld [vmem:[%s513 + $0x308] sm:$0xff]
      %v5254 = vld [vmem:[%s513 + $0x310] sm:$0xff]
      %v5255 = vld [vmem:[%s513 + $0x318] sm:$0xff]
      %v5256 = vld [vmem:[%s513 + $0x320] sm:$0xff]
      %v5257 = vld [vmem:[%s513 + $0x328] sm:$0xff]
      %v5258 = vld [vmem:[%s513 + $0x330] sm:$0xff]
      %v5259 = vld [vmem:[%s513 + $0x338] sm:$0xff]
      %v5260 = vld [vmem:[%s513 + $0x340] sm:$0xff]
      %v5261 = vld [vmem:[%s513 + $0x348] sm:$0xff]
      %v5262 = vld [vmem:[%s513 + $0x350] sm:$0xff]
      %v5263 = vld [vmem:[%s513 + $0x358] sm:$0xff]
      %v5264 = vld [vmem:[%s513 + $0x360] sm:$0xff]
      %v5265 = vld [vmem:[%s513 + $0x368] sm:$0xff]
      %v5266 = vld [vmem:[%s513 + $0x370] sm:$0xff]
      %v5267 = vld [vmem:[%s513 + $0x378] sm:$0xff]
      %v5268 = vld [vmem:[%s513 + $0x380] sm:$0xff]
      %v5269 = vld [vmem:[%s513 + $0x388] sm:$0xff]
      %v5270 = vld [vmem:[%s513 + $0x390] sm:$0xff]
      %v5271 = vld [vmem:[%s513 + $0x398] sm:$0xff]
      %v5272 = vld [vmem:[%s513 + $0x3a0] sm:$0xff]
      %v5273 = vld [vmem:[%s513 + $0x3a8] sm:$0xff]
      %v5274 = vld [vmem:[%s513 + $0x3b0] sm:$0xff]
      %v5275 = vld [vmem:[%s513 + $0x3b8] sm:$0xff]
      %v5276 = vld [vmem:[%s513 + $0x3c0] sm:$0xff]
      %v5277 = vld [vmem:[%s513 + $0x3c8] sm:$0xff]
      %v5278 = vld [vmem:[%s513 + $0x3d0] sm:$0xff]
      %v5279 = vld [vmem:[%s513 + $0x3d8] sm:$0xff]
      %v5280 = vld [vmem:[%s513 + $0x3e0] sm:$0xff]
      %v5281 = vld [vmem:[%s513 + $0x3e8] sm:$0xff]
      %v5282 = vld [vmem:[%s513 + $0x3f0] sm:$0xff]
      %v5283 = vld [vmem:[%s513 + $0x3f8] sm:$0xff]
      %v5284 = vsub.f32 %v5156, %v1185
      %v5285 = vsub.f32 %v5157, %v1186
      %v5286 = vsub.f32 %v5158, %v1187
      %v5287 = vsub.f32 %v5159, %v1188
      %v5288 = vsub.f32 %v5160, %v1189
      %v5289 = vsub.f32 %v5161, %v1190
      %v5290 = vsub.f32 %v5162, %v1191
      %v5291 = vsub.f32 %v5163, %v1192
      %v5292 = vsub.f32 %v5164, %v1193
      %v5293 = vsub.f32 %v5165, %v1194
      %v5294 = vsub.f32 %v5166, %v1195
      %v5295 = vsub.f32 %v5167, %v1196
      %v5296 = vsub.f32 %v5168, %v1197
      %v5297 = vsub.f32 %v5169, %v1198
      %v5298 = vsub.f32 %v5170, %v1199
      %v5299 = vsub.f32 %v5171, %v1200
      %v5300 = vsub.f32 %v5172, %v1201
      %v5301 = vsub.f32 %v5173, %v1202
      %v5302 = vsub.f32 %v5174, %v1203
      %v5303 = vsub.f32 %v5175, %v1204
      %v5304 = vsub.f32 %v5176, %v1205
      %v5305 = vsub.f32 %v5177, %v1206
      %v5306 = vsub.f32 %v5178, %v1207
      %v5307 = vsub.f32 %v5179, %v1208
      %v5308 = vsub.f32 %v5180, %v1209
      %v5309 = vsub.f32 %v5181, %v1210
      %v5310 = vsub.f32 %v5182, %v1211
      %v5311 = vsub.f32 %v5183, %v1212
      %v5312 = vsub.f32 %v5184, %v1213
      %v5313 = vsub.f32 %v5185, %v1214
      %v5314 = vsub.f32 %v5186, %v1215
      %v5315 = vsub.f32 %v5187, %v1216
      %v5316 = vsub.f32 %v5188, %v1217
      %v5317 = vsub.f32 %v5189, %v1218
      %v5318 = vsub.f32 %v5190, %v1219
      %v5319 = vsub.f32 %v5191, %v1220
      %v5320 = vsub.f32 %v5192, %v1221
      %v5321 = vsub.f32 %v5193, %v1222
      %v5322 = vsub.f32 %v5194, %v1223
      %v5323 = vsub.f32 %v5195, %v1224
      %v5324 = vsub.f32 %v5196, %v1225
      %v5325 = vsub.f32 %v5197, %v1226
      %v5326 = vsub.f32 %v5198, %v1227
      %v5327 = vsub.f32 %v5199, %v1228
      %v5328 = vsub.f32 %v5200, %v1229
      %v5329 = vsub.f32 %v5201, %v1230
      %v5330 = vsub.f32 %v5202, %v1231
      %v5331 = vsub.f32 %v5203, %v1232
      %v5332 = vsub.f32 %v5204, %v1233
      %v5333 = vsub.f32 %v5205, %v1234
      %v5334 = vsub.f32 %v5206, %v1235
      %v5335 = vsub.f32 %v5207, %v1236
      %v5336 = vsub.f32 %v5208, %v1237
      %v5337 = vsub.f32 %v5209, %v1238
      %v5338 = vsub.f32 %v5210, %v1239
      %v5339 = vsub.f32 %v5211, %v1240
      %v5340 = vsub.f32 %v5212, %v1241
      %v5341 = vsub.f32 %v5213, %v1242
      %v5342 = vsub.f32 %v5214, %v1243
      %v5343 = vsub.f32 %v5215, %v1244
      %v5344 = vsub.f32 %v5216, %v1245
      %v5345 = vsub.f32 %v5217, %v1246
      %v5346 = vsub.f32 %v5218, %v1247
      %v5347 = vsub.f32 %v5219, %v1248
      %v5348 = vsub.f32 %v5220, %v1249
      %v5349 = vsub.f32 %v5221, %v1250
      %v5350 = vsub.f32 %v5222, %v1251
      %v5351 = vsub.f32 %v5223, %v1252
      %v5352 = vsub.f32 %v5224, %v1253
      %v5353 = vsub.f32 %v5225, %v1254
      %v5354 = vsub.f32 %v5226, %v1255
      %v5355 = vsub.f32 %v5227, %v1256
      %v5356 = vsub.f32 %v5228, %v1257
      %v5357 = vsub.f32 %v5229, %v1258
      %v5358 = vsub.f32 %v5230, %v1259
      %v5359 = vsub.f32 %v5231, %v1260
      %v5360 = vsub.f32 %v5232, %v1261
      %v5361 = vsub.f32 %v5233, %v1262
      %v5362 = vsub.f32 %v5234, %v1263
      %v5363 = vsub.f32 %v5235, %v1264
      %v5364 = vsub.f32 %v5236, %v1265
      %v5365 = vsub.f32 %v5237, %v1266
      %v5366 = vsub.f32 %v5238, %v1267
      %v5367 = vsub.f32 %v5239, %v1268
      %v5368 = vsub.f32 %v5240, %v1269
      %v5369 = vsub.f32 %v5241, %v1270
      %v5370 = vsub.f32 %v5242, %v1271
      %v5371 = vsub.f32 %v5243, %v1272
      %v5372 = vsub.f32 %v5244, %v1273
      %v5373 = vsub.f32 %v5245, %v1274
      %v5374 = vsub.f32 %v5246, %v1275
      %v5375 = vsub.f32 %v5247, %v1276
      %v5376 = vsub.f32 %v5248, %v1277
      %v5377 = vsub.f32 %v5249, %v1278
      %v5378 = vsub.f32 %v5250, %v1279
      %v5379 = vsub.f32 %v5251, %v1280
      %v5380 = vsub.f32 %v5252, %v1281
      %v5381 = vsub.f32 %v5253, %v1282
      %v5382 = vsub.f32 %v5254, %v1283
      %v5383 = vsub.f32 %v5255, %v1284
      %v5384 = vsub.f32 %v5256, %v1285
      %v5385 = vsub.f32 %v5257, %v1286
      %v5386 = vsub.f32 %v5258, %v1287
      %v5387 = vsub.f32 %v5259, %v1288
      %v5388 = vsub.f32 %v5260, %v1289
      %v5389 = vsub.f32 %v5261, %v1290
      %v5390 = vsub.f32 %v5262, %v1291
      %v5391 = vsub.f32 %v5263, %v1292
      %v5392 = vsub.f32 %v5264, %v1293
      %v5393 = vsub.f32 %v5265, %v1294
      %v5394 = vsub.f32 %v5266, %v1295
      %v5395 = vsub.f32 %v5267, %v1296
      %v5396 = vsub.f32 %v5268, %v1297
      %v5397 = vsub.f32 %v5269, %v1298
      %v5398 = vsub.f32 %v5270, %v1299
      %v5399 = vsub.f32 %v5271, %v1300
      %v5400 = vsub.f32 %v5272, %v1301
      %v5401 = vsub.f32 %v5273, %v1302
      %v5402 = vsub.f32 %v5274, %v1303
      %v5403 = vsub.f32 %v5275, %v1304
      %v5404 = vsub.f32 %v5276, %v1305
      %v5405 = vsub.f32 %v5277, %v1306
      %v5406 = vsub.f32 %v5278, %v1307
      %v5407 = vsub.f32 %v5279, %v1308
      %v5408 = vsub.f32 %v5280, %v1309
      %v5409 = vsub.f32 %v5281, %v1310
      %v5410 = vsub.f32 %v5282, %v1311
      %v5411 = vsub.f32 %v5283, %v1312
      %v5412 = vmul.f32 %v5284, %v5284
      %v5413 = vmul.f32 %v5285, %v5285
      %v5414 = vmul.f32 %v5286, %v5286
      %v5415 = vmul.f32 %v5287, %v5287
      %v5416 = vmul.f32 %v5288, %v5288
      %v5417 = vmul.f32 %v5289, %v5289
      %v5418 = vmul.f32 %v5290, %v5290
      %v5419 = vmul.f32 %v5291, %v5291
      %v5420 = vmul.f32 %v5292, %v5292
      %v5421 = vmul.f32 %v5293, %v5293
      %v5422 = vmul.f32 %v5294, %v5294
      %v5423 = vmul.f32 %v5295, %v5295
      %v5424 = vmul.f32 %v5296, %v5296
      %v5425 = vmul.f32 %v5297, %v5297
      %v5426 = vmul.f32 %v5298, %v5298
      %v5427 = vmul.f32 %v5299, %v5299
      %v5428 = vmul.f32 %v5300, %v5300
      %v5429 = vmul.f32 %v5301, %v5301
      %v5430 = vmul.f32 %v5302, %v5302
      %v5431 = vmul.f32 %v5303, %v5303
      %v5432 = vmul.f32 %v5304, %v5304
      %v5433 = vmul.f32 %v5305, %v5305
      %v5434 = vmul.f32 %v5306, %v5306
      %v5435 = vmul.f32 %v5307, %v5307
      %v5436 = vmul.f32 %v5308, %v5308
      %v5437 = vmul.f32 %v5309, %v5309
      %v5438 = vmul.f32 %v5310, %v5310
      %v5439 = vmul.f32 %v5311, %v5311
      %v5440 = vmul.f32 %v5312, %v5312
      %v5441 = vmul.f32 %v5313, %v5313
      %v5442 = vmul.f32 %v5314, %v5314
      %v5443 = vmul.f32 %v5315, %v5315
      %v5444 = vmul.f32 %v5316, %v5316
      %v5445 = vmul.f32 %v5317, %v5317
      %v5446 = vmul.f32 %v5318, %v5318
      %v5447 = vmul.f32 %v5319, %v5319
      %v5448 = vmul.f32 %v5320, %v5320
      %v5449 = vmul.f32 %v5321, %v5321
      %v5450 = vmul.f32 %v5322, %v5322
      %v5451 = vmul.f32 %v5323, %v5323
      %v5452 = vmul.f32 %v5324, %v5324
      %v5453 = vmul.f32 %v5325, %v5325
      %v5454 = vmul.f32 %v5326, %v5326
      %v5455 = vmul.f32 %v5327, %v5327
      %v5456 = vmul.f32 %v5328, %v5328
      %v5457 = vmul.f32 %v5329, %v5329
      %v5458 = vmul.f32 %v5330, %v5330
      %v5459 = vmul.f32 %v5331, %v5331
      %v5460 = vmul.f32 %v5332, %v5332
      %v5461 = vmul.f32 %v5333, %v5333
      %v5462 = vmul.f32 %v5334, %v5334
      %v5463 = vmul.f32 %v5335, %v5335
      %v5464 = vmul.f32 %v5336, %v5336
      %v5465 = vmul.f32 %v5337, %v5337
      %v5466 = vmul.f32 %v5338, %v5338
      %v5467 = vmul.f32 %v5339, %v5339
      %v5468 = vmul.f32 %v5340, %v5340
      %v5469 = vmul.f32 %v5341, %v5341
      %v5470 = vmul.f32 %v5342, %v5342
      %v5471 = vmul.f32 %v5343, %v5343
      %v5472 = vmul.f32 %v5344, %v5344
      %v5473 = vmul.f32 %v5345, %v5345
      %v5474 = vmul.f32 %v5346, %v5346
      %v5475 = vmul.f32 %v5347, %v5347
      %v5476 = vmul.f32 %v5348, %v5348
      %v5477 = vmul.f32 %v5349, %v5349
      %v5478 = vmul.f32 %v5350, %v5350
      %v5479 = vmul.f32 %v5351, %v5351
      %v5480 = vmul.f32 %v5352, %v5352
      %v5481 = vmul.f32 %v5353, %v5353
      %v5482 = vmul.f32 %v5354, %v5354
      %v5483 = vmul.f32 %v5355, %v5355
      %v5484 = vmul.f32 %v5356, %v5356
      %v5485 = vmul.f32 %v5357, %v5357
      %v5486 = vmul.f32 %v5358, %v5358
      %v5487 = vmul.f32 %v5359, %v5359
      %v5488 = vmul.f32 %v5360, %v5360
      %v5489 = vmul.f32 %v5361, %v5361
      %v5490 = vmul.f32 %v5362, %v5362
      %v5491 = vmul.f32 %v5363, %v5363
      %v5492 = vmul.f32 %v5364, %v5364
      %v5493 = vmul.f32 %v5365, %v5365
      %v5494 = vmul.f32 %v5366, %v5366
      %v5495 = vmul.f32 %v5367, %v5367
      %v5496 = vmul.f32 %v5368, %v5368
      %v5497 = vmul.f32 %v5369, %v5369
      %v5498 = vmul.f32 %v5370, %v5370
      %v5499 = vmul.f32 %v5371, %v5371
      %v5500 = vmul.f32 %v5372, %v5372
      %v5501 = vmul.f32 %v5373, %v5373
      %v5502 = vmul.f32 %v5374, %v5374
      %v5503 = vmul.f32 %v5375, %v5375
      %v5504 = vmul.f32 %v5376, %v5376
      %v5505 = vmul.f32 %v5377, %v5377
      %v5506 = vmul.f32 %v5378, %v5378
      %v5507 = vmul.f32 %v5379, %v5379
      %v5508 = vmul.f32 %v5380, %v5380
      %v5509 = vmul.f32 %v5381, %v5381
      %v5510 = vmul.f32 %v5382, %v5382
      %v5511 = vmul.f32 %v5383, %v5383
      %v5512 = vmul.f32 %v5384, %v5384
      %v5513 = vmul.f32 %v5385, %v5385
      %v5514 = vmul.f32 %v5386, %v5386
      %v5515 = vmul.f32 %v5387, %v5387
      %v5516 = vmul.f32 %v5388, %v5388
      %v5517 = vmul.f32 %v5389, %v5389
      %v5518 = vmul.f32 %v5390, %v5390
      %v5519 = vmul.f32 %v5391, %v5391
      %v5520 = vmul.f32 %v5392, %v5392
      %v5521 = vmul.f32 %v5393, %v5393
      %v5522 = vmul.f32 %v5394, %v5394
      %v5523 = vmul.f32 %v5395, %v5395
      %v5524 = vmul.f32 %v5396, %v5396
      %v5525 = vmul.f32 %v5397, %v5397
      %v5526 = vmul.f32 %v5398, %v5398
      %v5527 = vmul.f32 %v5399, %v5399
      %v5528 = vmul.f32 %v5400, %v5400
      %v5529 = vmul.f32 %v5401, %v5401
      %v5530 = vmul.f32 %v5402, %v5402
      %v5531 = vmul.f32 %v5403, %v5403
      %v5532 = vmul.f32 %v5404, %v5404
      %v5533 = vmul.f32 %v5405, %v5405
      %v5534 = vmul.f32 %v5406, %v5406
      %v5535 = vmul.f32 %v5407, %v5407
      %v5536 = vmul.f32 %v5408, %v5408
      %v5537 = vmul.f32 %v5409, %v5409
      %v5538 = vmul.f32 %v5410, %v5410
      %v5539 = vmul.f32 %v5411, %v5411
      %v5540 = vsel %vm2466, %v5412, 0.0
      %5541 = vadd.xlane.f32.xlu0 %v5540
      %v5542 = vpop.xlane.xlu0 %5541
      %v5543 = vsel %vm2466, %v5413, 0.0
      %5544 = vadd.xlane.f32.xlu0 %v5543
      %v5545 = vpop.xlane.xlu0 %5544
      %v5546 = vsel %vm2466, %v5414, 0.0
      %5547 = vadd.xlane.f32.xlu0 %v5546
      %v5548 = vpop.xlane.xlu0 %5547
      %v5549 = vsel %vm2466, %v5415, 0.0
      %5550 = vadd.xlane.f32.xlu0 %v5549
      %v5551 = vpop.xlane.xlu0 %5550
      %v5552 = vsel %vm2466, %v5416, 0.0
      %5553 = vadd.xlane.f32.xlu0 %v5552
      %v5554 = vpop.xlane.xlu0 %5553
      %v5555 = vsel %vm2466, %v5417, 0.0
      %5556 = vadd.xlane.f32.xlu0 %v5555
      %v5557 = vpop.xlane.xlu0 %5556
      %v5558 = vsel %vm2466, %v5418, 0.0
      %5559 = vadd.xlane.f32.xlu0 %v5558
      %v5560 = vpop.xlane.xlu0 %5559
      %v5561 = vsel %vm2466, %v5419, 0.0
      %5562 = vadd.xlane.f32.xlu0 %v5561
      %v5563 = vpop.xlane.xlu0 %5562
      %v5564 = vsel %vm2466, %v5420, 0.0
      %5565 = vadd.xlane.f32.xlu0 %v5564
      %v5566 = vpop.xlane.xlu0 %5565
      %v5567 = vsel %vm2466, %v5421, 0.0
      %5568 = vadd.xlane.f32.xlu0 %v5567
      %v5569 = vpop.xlane.xlu0 %5568
      %v5570 = vsel %vm2466, %v5422, 0.0
      %5571 = vadd.xlane.f32.xlu0 %v5570
      %v5572 = vpop.xlane.xlu0 %5571
      %v5573 = vsel %vm2466, %v5423, 0.0
      %5574 = vadd.xlane.f32.xlu0 %v5573
      %v5575 = vpop.xlane.xlu0 %5574
      %v5576 = vsel %vm2466, %v5424, 0.0
      %5577 = vadd.xlane.f32.xlu0 %v5576
      %v5578 = vpop.xlane.xlu0 %5577
      %v5579 = vsel %vm2466, %v5425, 0.0
      %5580 = vadd.xlane.f32.xlu0 %v5579
      %v5581 = vpop.xlane.xlu0 %5580
      %v5582 = vsel %vm2466, %v5426, 0.0
      %5583 = vadd.xlane.f32.xlu0 %v5582
      %v5584 = vpop.xlane.xlu0 %5583
      %v5585 = vsel %vm2466, %v5427, 0.0
      %5586 = vadd.xlane.f32.xlu0 %v5585
      %v5587 = vpop.xlane.xlu0 %5586
      %v5588 = vsel %vm2466, %v5428, 0.0
      %5589 = vadd.xlane.f32.xlu0 %v5588
      %v5590 = vpop.xlane.xlu0 %5589
      %v5591 = vsel %vm2466, %v5429, 0.0
      %5592 = vadd.xlane.f32.xlu0 %v5591
      %v5593 = vpop.xlane.xlu0 %5592
      %v5594 = vsel %vm2466, %v5430, 0.0
      %5595 = vadd.xlane.f32.xlu0 %v5594
      %v5596 = vpop.xlane.xlu0 %5595
      %v5597 = vsel %vm2466, %v5431, 0.0
      %5598 = vadd.xlane.f32.xlu0 %v5597
      %v5599 = vpop.xlane.xlu0 %5598
      %v5600 = vsel %vm2466, %v5432, 0.0
      %5601 = vadd.xlane.f32.xlu0 %v5600
      %v5602 = vpop.xlane.xlu0 %5601
      %v5603 = vsel %vm2466, %v5433, 0.0
      %5604 = vadd.xlane.f32.xlu0 %v5603
      %v5605 = vpop.xlane.xlu0 %5604
      %v5606 = vsel %vm2466, %v5434, 0.0
      %5607 = vadd.xlane.f32.xlu0 %v5606
      %v5608 = vpop.xlane.xlu0 %5607
      %v5609 = vsel %vm2466, %v5435, 0.0
      %5610 = vadd.xlane.f32.xlu0 %v5609
      %v5611 = vpop.xlane.xlu0 %5610
      %v5612 = vsel %vm2466, %v5436, 0.0
      %5613 = vadd.xlane.f32.xlu0 %v5612
      %v5614 = vpop.xlane.xlu0 %5613
      %v5615 = vsel %vm2466, %v5437, 0.0
      %5616 = vadd.xlane.f32.xlu0 %v5615
      %v5617 = vpop.xlane.xlu0 %5616
      %v5618 = vsel %vm2466, %v5438, 0.0
      %5619 = vadd.xlane.f32.xlu0 %v5618
      %v5620 = vpop.xlane.xlu0 %5619
      %v5621 = vsel %vm2466, %v5439, 0.0
      %5622 = vadd.xlane.f32.xlu0 %v5621
      %v5623 = vpop.xlane.xlu0 %5622
      %v5624 = vsel %vm2466, %v5440, 0.0
      %5625 = vadd.xlane.f32.xlu0 %v5624
      %v5626 = vpop.xlane.xlu0 %5625
      %v5627 = vsel %vm2466, %v5441, 0.0
      %5628 = vadd.xlane.f32.xlu0 %v5627
      %v5629 = vpop.xlane.xlu0 %5628
      %v5630 = vsel %vm2466, %v5442, 0.0
      %5631 = vadd.xlane.f32.xlu0 %v5630
      %v5632 = vpop.xlane.xlu0 %5631
      %v5633 = vsel %vm2466, %v5443, 0.0
      %5634 = vadd.xlane.f32.xlu0 %v5633
      %v5635 = vpop.xlane.xlu0 %5634
      %v5636 = vsel %vm2466, %v5444, 0.0
      %5637 = vadd.xlane.f32.xlu0 %v5636
      %v5638 = vpop.xlane.xlu0 %5637
      %v5639 = vsel %vm2466, %v5445, 0.0
      %5640 = vadd.xlane.f32.xlu0 %v5639
      %v5641 = vpop.xlane.xlu0 %5640
      %v5642 = vsel %vm2466, %v5446, 0.0
      %5643 = vadd.xlane.f32.xlu0 %v5642
      %v5644 = vpop.xlane.xlu0 %5643
      %v5645 = vsel %vm2466, %v5447, 0.0
      %5646 = vadd.xlane.f32.xlu0 %v5645
      %v5647 = vpop.xlane.xlu0 %5646
      %v5648 = vsel %vm2466, %v5448, 0.0
      %5649 = vadd.xlane.f32.xlu0 %v5648
      %v5650 = vpop.xlane.xlu0 %5649
      %v5651 = vsel %vm2466, %v5449, 0.0
      %5652 = vadd.xlane.f32.xlu0 %v5651
      %v5653 = vpop.xlane.xlu0 %5652
      %v5654 = vsel %vm2466, %v5450, 0.0
      %5655 = vadd.xlane.f32.xlu0 %v5654
      %v5656 = vpop.xlane.xlu0 %5655
      %v5657 = vsel %vm2466, %v5451, 0.0
      %5658 = vadd.xlane.f32.xlu0 %v5657
      %v5659 = vpop.xlane.xlu0 %5658
      %v5660 = vsel %vm2466, %v5452, 0.0
      %5661 = vadd.xlane.f32.xlu0 %v5660
      %v5662 = vpop.xlane.xlu0 %5661
      %v5663 = vsel %vm2466, %v5453, 0.0
      %5664 = vadd.xlane.f32.xlu0 %v5663
      %v5665 = vpop.xlane.xlu0 %5664
      %v5666 = vsel %vm2466, %v5454, 0.0
      %5667 = vadd.xlane.f32.xlu0 %v5666
      %v5668 = vpop.xlane.xlu0 %5667
      %v5669 = vsel %vm2466, %v5455, 0.0
      %5670 = vadd.xlane.f32.xlu0 %v5669
      %v5671 = vpop.xlane.xlu0 %5670
      %v5672 = vsel %vm2466, %v5456, 0.0
      %5673 = vadd.xlane.f32.xlu0 %v5672
      %v5674 = vpop.xlane.xlu0 %5673
      %v5675 = vsel %vm2466, %v5457, 0.0
      %5676 = vadd.xlane.f32.xlu0 %v5675
      %v5677 = vpop.xlane.xlu0 %5676
      %v5678 = vsel %vm2466, %v5458, 0.0
      %5679 = vadd.xlane.f32.xlu0 %v5678
      %v5680 = vpop.xlane.xlu0 %5679
      %v5681 = vsel %vm2466, %v5459, 0.0
      %5682 = vadd.xlane.f32.xlu0 %v5681
      %v5683 = vpop.xlane.xlu0 %5682
      %v5684 = vsel %vm2466, %v5460, 0.0
      %5685 = vadd.xlane.f32.xlu0 %v5684
      %v5686 = vpop.xlane.xlu0 %5685
      %v5687 = vsel %vm2466, %v5461, 0.0
      %5688 = vadd.xlane.f32.xlu0 %v5687
      %v5689 = vpop.xlane.xlu0 %5688
      %v5690 = vsel %vm2466, %v5462, 0.0
      %5691 = vadd.xlane.f32.xlu0 %v5690
      %v5692 = vpop.xlane.xlu0 %5691
      %v5693 = vsel %vm2466, %v5463, 0.0
      %5694 = vadd.xlane.f32.xlu0 %v5693
      %v5695 = vpop.xlane.xlu0 %5694
      %v5696 = vsel %vm2466, %v5464, 0.0
      %5697 = vadd.xlane.f32.xlu0 %v5696
      %v5698 = vpop.xlane.xlu0 %5697
      %v5699 = vsel %vm2466, %v5465, 0.0
      %5700 = vadd.xlane.f32.xlu0 %v5699
      %v5701 = vpop.xlane.xlu0 %5700
      %v5702 = vsel %vm2466, %v5466, 0.0
      %5703 = vadd.xlane.f32.xlu0 %v5702
      %v5704 = vpop.xlane.xlu0 %5703
      %v5705 = vsel %vm2466, %v5467, 0.0
      %5706 = vadd.xlane.f32.xlu0 %v5705
      %v5707 = vpop.xlane.xlu0 %5706
      %v5708 = vsel %vm2466, %v5468, 0.0
      %5709 = vadd.xlane.f32.xlu0 %v5708
      %v5710 = vpop.xlane.xlu0 %5709
      %v5711 = vsel %vm2466, %v5469, 0.0
      %5712 = vadd.xlane.f32.xlu0 %v5711
      %v5713 = vpop.xlane.xlu0 %5712
      %v5714 = vsel %vm2466, %v5470, 0.0
      %5715 = vadd.xlane.f32.xlu0 %v5714
      %v5716 = vpop.xlane.xlu0 %5715
      %v5717 = vsel %vm2466, %v5471, 0.0
      %5718 = vadd.xlane.f32.xlu0 %v5717
      %v5719 = vpop.xlane.xlu0 %5718
      %v5720 = vsel %vm2466, %v5472, 0.0
      %5721 = vadd.xlane.f32.xlu0 %v5720
      %v5722 = vpop.xlane.xlu0 %5721
      %v5723 = vsel %vm2466, %v5473, 0.0
      %5724 = vadd.xlane.f32.xlu0 %v5723
      %v5725 = vpop.xlane.xlu0 %5724
      %v5726 = vsel %vm2466, %v5474, 0.0
      %5727 = vadd.xlane.f32.xlu0 %v5726
      %v5728 = vpop.xlane.xlu0 %5727
      %v5729 = vsel %vm2466, %v5475, 0.0
      %5730 = vadd.xlane.f32.xlu0 %v5729
      %v5731 = vpop.xlane.xlu0 %5730
      %v5732 = vsel %vm2466, %v5476, 0.0
      %5733 = vadd.xlane.f32.xlu0 %v5732
      %v5734 = vpop.xlane.xlu0 %5733
      %v5735 = vsel %vm2466, %v5477, 0.0
      %5736 = vadd.xlane.f32.xlu0 %v5735
      %v5737 = vpop.xlane.xlu0 %5736
      %v5738 = vsel %vm2466, %v5478, 0.0
      %5739 = vadd.xlane.f32.xlu0 %v5738
      %v5740 = vpop.xlane.xlu0 %5739
      %v5741 = vsel %vm2466, %v5479, 0.0
      %5742 = vadd.xlane.f32.xlu0 %v5741
      %v5743 = vpop.xlane.xlu0 %5742
      %v5744 = vsel %vm2466, %v5480, 0.0
      %5745 = vadd.xlane.f32.xlu0 %v5744
      %v5746 = vpop.xlane.xlu0 %5745
      %v5747 = vsel %vm2466, %v5481, 0.0
      %5748 = vadd.xlane.f32.xlu0 %v5747
      %v5749 = vpop.xlane.xlu0 %5748
      %v5750 = vsel %vm2466, %v5482, 0.0
      %5751 = vadd.xlane.f32.xlu0 %v5750
      %v5752 = vpop.xlane.xlu0 %5751
      %v5753 = vsel %vm2466, %v5483, 0.0
      %5754 = vadd.xlane.f32.xlu0 %v5753
      %v5755 = vpop.xlane.xlu0 %5754
      %v5756 = vsel %vm2466, %v5484, 0.0
      %5757 = vadd.xlane.f32.xlu0 %v5756
      %v5758 = vpop.xlane.xlu0 %5757
      %v5759 = vsel %vm2466, %v5485, 0.0
      %5760 = vadd.xlane.f32.xlu0 %v5759
      %v5761 = vpop.xlane.xlu0 %5760
      %v5762 = vsel %vm2466, %v5486, 0.0
      %5763 = vadd.xlane.f32.xlu0 %v5762
      %v5764 = vpop.xlane.xlu0 %5763
      %v5765 = vsel %vm2466, %v5487, 0.0
      %5766 = vadd.xlane.f32.xlu0 %v5765
      %v5767 = vpop.xlane.xlu0 %5766
      %v5768 = vsel %vm2466, %v5488, 0.0
      %5769 = vadd.xlane.f32.xlu0 %v5768
      %v5770 = vpop.xlane.xlu0 %5769
      %v5771 = vsel %vm2466, %v5489, 0.0
      %5772 = vadd.xlane.f32.xlu0 %v5771
      %v5773 = vpop.xlane.xlu0 %5772
      %v5774 = vsel %vm2466, %v5490, 0.0
      %5775 = vadd.xlane.f32.xlu0 %v5774
      %v5776 = vpop.xlane.xlu0 %5775
      %v5777 = vsel %vm2466, %v5491, 0.0
      %5778 = vadd.xlane.f32.xlu0 %v5777
      %v5779 = vpop.xlane.xlu0 %5778
      %v5780 = vsel %vm2466, %v5492, 0.0
      %5781 = vadd.xlane.f32.xlu0 %v5780
      %v5782 = vpop.xlane.xlu0 %5781
      %v5783 = vsel %vm2466, %v5493, 0.0
      %5784 = vadd.xlane.f32.xlu0 %v5783
      %v5785 = vpop.xlane.xlu0 %5784
      %v5786 = vsel %vm2466, %v5494, 0.0
      %5787 = vadd.xlane.f32.xlu0 %v5786
      %v5788 = vpop.xlane.xlu0 %5787
      %v5789 = vsel %vm2466, %v5495, 0.0
      %5790 = vadd.xlane.f32.xlu0 %v5789
      %v5791 = vpop.xlane.xlu0 %5790
      %v5792 = vsel %vm2466, %v5496, 0.0
      %5793 = vadd.xlane.f32.xlu0 %v5792
      %v5794 = vpop.xlane.xlu0 %5793
      %v5795 = vsel %vm2466, %v5497, 0.0
      %5796 = vadd.xlane.f32.xlu0 %v5795
      %v5797 = vpop.xlane.xlu0 %5796
      %v5798 = vsel %vm2466, %v5498, 0.0
      %5799 = vadd.xlane.f32.xlu0 %v5798
      %v5800 = vpop.xlane.xlu0 %5799
      %v5801 = vsel %vm2466, %v5499, 0.0
      %5802 = vadd.xlane.f32.xlu0 %v5801
      %v5803 = vpop.xlane.xlu0 %5802
      %v5804 = vsel %vm2466, %v5500, 0.0
      %5805 = vadd.xlane.f32.xlu0 %v5804
      %v5806 = vpop.xlane.xlu0 %5805
      %v5807 = vsel %vm2466, %v5501, 0.0
      %5808 = vadd.xlane.f32.xlu0 %v5807
      %v5809 = vpop.xlane.xlu0 %5808
      %v5810 = vsel %vm2466, %v5502, 0.0
      %5811 = vadd.xlane.f32.xlu0 %v5810
      %v5812 = vpop.xlane.xlu0 %5811
      %v5813 = vsel %vm2466, %v5503, 0.0
      %5814 = vadd.xlane.f32.xlu0 %v5813
      %v5815 = vpop.xlane.xlu0 %5814
      %v5816 = vsel %vm2466, %v5504, 0.0
      %5817 = vadd.xlane.f32.xlu0 %v5816
      %v5818 = vpop.xlane.xlu0 %5817
      %v5819 = vsel %vm2466, %v5505, 0.0
      %5820 = vadd.xlane.f32.xlu0 %v5819
      %v5821 = vpop.xlane.xlu0 %5820
      %v5822 = vsel %vm2466, %v5506, 0.0
      %5823 = vadd.xlane.f32.xlu0 %v5822
      %v5824 = vpop.xlane.xlu0 %5823
      %v5825 = vsel %vm2466, %v5507, 0.0
      %5826 = vadd.xlane.f32.xlu0 %v5825
      %v5827 = vpop.xlane.xlu0 %5826
      %v5828 = vsel %vm2466, %v5508, 0.0
      %5829 = vadd.xlane.f32.xlu0 %v5828
      %v5830 = vpop.xlane.xlu0 %5829
      %v5831 = vsel %vm2466, %v5509, 0.0
      %5832 = vadd.xlane.f32.xlu0 %v5831
      %v5833 = vpop.xlane.xlu0 %5832
      %v5834 = vsel %vm2466, %v5510, 0.0
      %5835 = vadd.xlane.f32.xlu0 %v5834
      %v5836 = vpop.xlane.xlu0 %5835
      %v5837 = vsel %vm2466, %v5511, 0.0
      %5838 = vadd.xlane.f32.xlu0 %v5837
      %v5839 = vpop.xlane.xlu0 %5838
      %v5840 = vsel %vm2466, %v5512, 0.0
      %5841 = vadd.xlane.f32.xlu0 %v5840
      %v5842 = vpop.xlane.xlu0 %5841
      %v5843 = vsel %vm2466, %v5513, 0.0
      %5844 = vadd.xlane.f32.xlu0 %v5843
      %v5845 = vpop.xlane.xlu0 %5844
      %v5846 = vsel %vm2466, %v5514, 0.0
      %5847 = vadd.xlane.f32.xlu0 %v5846
      %v5848 = vpop.xlane.xlu0 %5847
      %v5849 = vsel %vm2466, %v5515, 0.0
      %5850 = vadd.xlane.f32.xlu0 %v5849
      %v5851 = vpop.xlane.xlu0 %5850
      %v5852 = vsel %vm2466, %v5516, 0.0
      %5853 = vadd.xlane.f32.xlu0 %v5852
      %v5854 = vpop.xlane.xlu0 %5853
      %v5855 = vsel %vm2466, %v5517, 0.0
      %5856 = vadd.xlane.f32.xlu0 %v5855
      %v5857 = vpop.xlane.xlu0 %5856
      %v5858 = vsel %vm2466, %v5518, 0.0
      %5859 = vadd.xlane.f32.xlu0 %v5858
      %v5860 = vpop.xlane.xlu0 %5859
      %v5861 = vsel %vm2466, %v5519, 0.0
      %5862 = vadd.xlane.f32.xlu0 %v5861
      %v5863 = vpop.xlane.xlu0 %5862
      %v5864 = vsel %vm2466, %v5520, 0.0
      %5865 = vadd.xlane.f32.xlu0 %v5864
      %v5866 = vpop.xlane.xlu0 %5865
      %v5867 = vsel %vm2466, %v5521, 0.0
      %5868 = vadd.xlane.f32.xlu0 %v5867
      %v5869 = vpop.xlane.xlu0 %5868
      %v5870 = vsel %vm2466, %v5522, 0.0
      %5871 = vadd.xlane.f32.xlu0 %v5870
      %v5872 = vpop.xlane.xlu0 %5871
      %v5873 = vsel %vm2466, %v5523, 0.0
      %5874 = vadd.xlane.f32.xlu0 %v5873
      %v5875 = vpop.xlane.xlu0 %5874
      %v5876 = vsel %vm2466, %v5524, 0.0
      %5877 = vadd.xlane.f32.xlu0 %v5876
      %v5878 = vpop.xlane.xlu0 %5877
      %v5879 = vsel %vm2466, %v5525, 0.0
      %5880 = vadd.xlane.f32.xlu0 %v5879
      %v5881 = vpop.xlane.xlu0 %5880
      %v5882 = vsel %vm2466, %v5526, 0.0
      %5883 = vadd.xlane.f32.xlu0 %v5882
      %v5884 = vpop.xlane.xlu0 %5883
      %v5885 = vsel %vm2466, %v5527, 0.0
      %5886 = vadd.xlane.f32.xlu0 %v5885
      %v5887 = vpop.xlane.xlu0 %5886
      %v5888 = vsel %vm2466, %v5528, 0.0
      %5889 = vadd.xlane.f32.xlu0 %v5888
      %v5890 = vpop.xlane.xlu0 %5889
      %v5891 = vsel %vm2466, %v5529, 0.0
      %5892 = vadd.xlane.f32.xlu0 %v5891
      %v5893 = vpop.xlane.xlu0 %5892
      %v5894 = vsel %vm2466, %v5530, 0.0
      %5895 = vadd.xlane.f32.xlu0 %v5894
      %v5896 = vpop.xlane.xlu0 %5895
      %v5897 = vsel %vm2466, %v5531, 0.0
      %5898 = vadd.xlane.f32.xlu0 %v5897
      %v5899 = vpop.xlane.xlu0 %5898
      %v5900 = vsel %vm2466, %v5532, 0.0
      %5901 = vadd.xlane.f32.xlu0 %v5900
      %v5902 = vpop.xlane.xlu0 %5901
      %v5903 = vsel %vm2466, %v5533, 0.0
      %5904 = vadd.xlane.f32.xlu0 %v5903
      %v5905 = vpop.xlane.xlu0 %5904
      %v5906 = vsel %vm2466, %v5534, 0.0
      %5907 = vadd.xlane.f32.xlu0 %v5906
      %v5908 = vpop.xlane.xlu0 %5907
      %v5909 = vsel %vm2466, %v5535, 0.0
      %5910 = vadd.xlane.f32.xlu0 %v5909
      %v5911 = vpop.xlane.xlu0 %5910
      %v5912 = vsel %vm2466, %v5536, 0.0
      %5913 = vadd.xlane.f32.xlu0 %v5912
      %v5914 = vpop.xlane.xlu0 %5913
      %v5915 = vsel %vm2466, %v5537, 0.0
      %5916 = vadd.xlane.f32.xlu0 %v5915
      %v5917 = vpop.xlane.xlu0 %5916
      %v5918 = vsel %vm2466, %v5538, 0.0
      %5919 = vadd.xlane.f32.xlu0 %v5918
      %v5920 = vpop.xlane.xlu0 %5919
      %v5921 = vsel %vm2466, %v5539, 0.0
      %5922 = vadd.xlane.f32.xlu0 %v5921
      %v5923 = vpop.xlane.xlu0 %5922
      %v5924 = vmul.f32 %v5028, %v5028
      %v5925 = vmul.f32 %v5029, %v5029
      %v5926 = vmul.f32 %v5030, %v5030
      %v5927 = vmul.f32 %v5031, %v5031
      %v5928 = vmul.f32 %v5032, %v5032
      %v5929 = vmul.f32 %v5033, %v5033
      %v5930 = vmul.f32 %v5034, %v5034
      %v5931 = vmul.f32 %v5035, %v5035
      %v5932 = vmul.f32 %v5036, %v5036
      %v5933 = vmul.f32 %v5037, %v5037
      %v5934 = vmul.f32 %v5038, %v5038
      %v5935 = vmul.f32 %v5039, %v5039
      %v5936 = vmul.f32 %v5040, %v5040
      %v5937 = vmul.f32 %v5041, %v5041
      %v5938 = vmul.f32 %v5042, %v5042
      %v5939 = vmul.f32 %v5043, %v5043
      %v5940 = vmul.f32 %v5044, %v5044
      %v5941 = vmul.f32 %v5045, %v5045
      %v5942 = vmul.f32 %v5046, %v5046
      %v5943 = vmul.f32 %v5047, %v5047
      %v5944 = vmul.f32 %v5048, %v5048
      %v5945 = vmul.f32 %v5049, %v5049
      %v5946 = vmul.f32 %v5050, %v5050
      %v5947 = vmul.f32 %v5051, %v5051
      %v5948 = vmul.f32 %v5052, %v5052
      %v5949 = vmul.f32 %v5053, %v5053
      %v5950 = vmul.f32 %v5054, %v5054
      %v5951 = vmul.f32 %v5055, %v5055
      %v5952 = vmul.f32 %v5056, %v5056
      %v5953 = vmul.f32 %v5057, %v5057
      %v5954 = vmul.f32 %v5058, %v5058
      %v5955 = vmul.f32 %v5059, %v5059
      %v5956 = vmul.f32 %v5060, %v5060
      %v5957 = vmul.f32 %v5061, %v5061
      %v5958 = vmul.f32 %v5062, %v5062
      %v5959 = vmul.f32 %v5063, %v5063
      %v5960 = vmul.f32 %v5064, %v5064
      %v5961 = vmul.f32 %v5065, %v5065
      %v5962 = vmul.f32 %v5066, %v5066
      %v5963 = vmul.f32 %v5067, %v5067
      %v5964 = vmul.f32 %v5068, %v5068
      %v5965 = vmul.f32 %v5069, %v5069
      %v5966 = vmul.f32 %v5070, %v5070
      %v5967 = vmul.f32 %v5071, %v5071
      %v5968 = vmul.f32 %v5072, %v5072
      %v5969 = vmul.f32 %v5073, %v5073
      %v5970 = vmul.f32 %v5074, %v5074
      %v5971 = vmul.f32 %v5075, %v5075
      %v5972 = vmul.f32 %v5076, %v5076
      %v5973 = vmul.f32 %v5077, %v5077
      %v5974 = vmul.f32 %v5078, %v5078
      %v5975 = vmul.f32 %v5079, %v5079
      %v5976 = vmul.f32 %v5080, %v5080
      %v5977 = vmul.f32 %v5081, %v5081
      %v5978 = vmul.f32 %v5082, %v5082
      %v5979 = vmul.f32 %v5083, %v5083
      %v5980 = vmul.f32 %v5084, %v5084
      %v5981 = vmul.f32 %v5085, %v5085
      %v5982 = vmul.f32 %v5086, %v5086
      %v5983 = vmul.f32 %v5087, %v5087
      %v5984 = vmul.f32 %v5088, %v5088
      %v5985 = vmul.f32 %v5089, %v5089
      %v5986 = vmul.f32 %v5090, %v5090
      %v5987 = vmul.f32 %v5091, %v5091
      %v5988 = vmul.f32 %v5092, %v5092
      %v5989 = vmul.f32 %v5093, %v5093
      %v5990 = vmul.f32 %v5094, %v5094
      %v5991 = vmul.f32 %v5095, %v5095
      %v5992 = vmul.f32 %v5096, %v5096
      %v5993 = vmul.f32 %v5097, %v5097
      %v5994 = vmul.f32 %v5098, %v5098
      %v5995 = vmul.f32 %v5099, %v5099
      %v5996 = vmul.f32 %v5100, %v5100
      %v5997 = vmul.f32 %v5101, %v5101
      %v5998 = vmul.f32 %v5102, %v5102
      %v5999 = vmul.f32 %v5103, %v5103
      %v6000 = vmul.f32 %v5104, %v5104
      %v6001 = vmul.f32 %v5105, %v5105
      %v6002 = vmul.f32 %v5106, %v5106
      %v6003 = vmul.f32 %v5107, %v5107
      %v6004 = vmul.f32 %v5108, %v5108
      %v6005 = vmul.f32 %v5109, %v5109
      %v6006 = vmul.f32 %v5110, %v5110
      %v6007 = vmul.f32 %v5111, %v5111
      %v6008 = vmul.f32 %v5112, %v5112
      %v6009 = vmul.f32 %v5113, %v5113
      %v6010 = vmul.f32 %v5114, %v5114
      %v6011 = vmul.f32 %v5115, %v5115
      %v6012 = vmul.f32 %v5116, %v5116
      %v6013 = vmul.f32 %v5117, %v5117
      %v6014 = vmul.f32 %v5118, %v5118
      %v6015 = vmul.f32 %v5119, %v5119
      %v6016 = vmul.f32 %v5120, %v5120
      %v6017 = vmul.f32 %v5121, %v5121
      %v6018 = vmul.f32 %v5122, %v5122
      %v6019 = vmul.f32 %v5123, %v5123
      %v6020 = vmul.f32 %v5124, %v5124
      %v6021 = vmul.f32 %v5125, %v5125
      %v6022 = vmul.f32 %v5126, %v5126
      %v6023 = vmul.f32 %v5127, %v5127
      %v6024 = vmul.f32 %v5128, %v5128
      %v6025 = vmul.f32 %v5129, %v5129
      %v6026 = vmul.f32 %v5130, %v5130
      %v6027 = vmul.f32 %v5131, %v5131
      %v6028 = vmul.f32 %v5132, %v5132
      %v6029 = vmul.f32 %v5133, %v5133
      %v6030 = vmul.f32 %v5134, %v5134
      %v6031 = vmul.f32 %v5135, %v5135
      %v6032 = vmul.f32 %v5136, %v5136
      %v6033 = vmul.f32 %v5137, %v5137
      %v6034 = vmul.f32 %v5138, %v5138
      %v6035 = vmul.f32 %v5139, %v5139
      %v6036 = vmul.f32 %v5140, %v5140
      %v6037 = vmul.f32 %v5141, %v5141
      %v6038 = vmul.f32 %v5142, %v5142
      %v6039 = vmul.f32 %v5143, %v5143
      %v6040 = vmul.f32 %v5144, %v5144
      %v6041 = vmul.f32 %v5145, %v5145
      %v6042 = vmul.f32 %v5146, %v5146
      %v6043 = vmul.f32 %v5147, %v5147
      %v6044 = vmul.f32 %v5148, %v5148
      %v6045 = vmul.f32 %v5149, %v5149
      %v6046 = vmul.f32 %v5150, %v5150
      %v6047 = vmul.f32 %v5151, %v5151
      %v6048 = vmul.f32 %v5152, %v5152
      %v6049 = vmul.f32 %v5153, %v5153
      %v6050 = vmul.f32 %v5154, %v5154
      %v6051 = vmul.f32 %v5155, %v5155
      %v6052 = vrcp.pop %v5924
      %v6053 = vmul.f32 0.5, %v6052
      %v6054 = vrcp.pop %v5925
      %v6055 = vmul.f32 0.5, %v6054
      %v6056 = vrcp.pop %v5926
      %v6057 = vmul.f32 0.5, %v6056
      %v6058 = vrcp.pop %v5927
      %v6059 = vmul.f32 0.5, %v6058
      %v6060 = vrcp.pop %v5928
      %v6061 = vmul.f32 0.5, %v6060
      %v6062 = vrcp.pop %v5929
      %v6063 = vmul.f32 0.5, %v6062
      %v6064 = vrcp.pop %v5930
      %v6065 = vmul.f32 0.5, %v6064
      %v6066 = vrcp.pop %v5931
      %v6067 = vmul.f32 0.5, %v6066
      %v6068 = vrcp.pop %v5932
      %v6069 = vmul.f32 0.5, %v6068
      %v6070 = vrcp.pop %v5933
      %v6071 = vmul.f32 0.5, %v6070
      %v6072 = vrcp.pop %v5934
      %v6073 = vmul.f32 0.5, %v6072
      %v6074 = vrcp.pop %v5935
      %v6075 = vmul.f32 0.5, %v6074
      %v6076 = vrcp.pop %v5936
      %v6077 = vmul.f32 0.5, %v6076
      %v6078 = vrcp.pop %v5937
      %v6079 = vmul.f32 0.5, %v6078
      %v6080 = vrcp.pop %v5938
      %v6081 = vmul.f32 0.5, %v6080
      %v6082 = vrcp.pop %v5939
      %v6083 = vmul.f32 0.5, %v6082
      %v6084 = vrcp.pop %v5940
      %v6085 = vmul.f32 0.5, %v6084
      %v6086 = vrcp.pop %v5941
      %v6087 = vmul.f32 0.5, %v6086
      %v6088 = vrcp.pop %v5942
      %v6089 = vmul.f32 0.5, %v6088
      %v6090 = vrcp.pop %v5943
      %v6091 = vmul.f32 0.5, %v6090
      %v6092 = vrcp.pop %v5944
      %v6093 = vmul.f32 0.5, %v6092
      %v6094 = vrcp.pop %v5945
      %v6095 = vmul.f32 0.5, %v6094
      %v6096 = vrcp.pop %v5946
      %v6097 = vmul.f32 0.5, %v6096
      %v6098 = vrcp.pop %v5947
      %v6099 = vmul.f32 0.5, %v6098
      %v6100 = vrcp.pop %v5948
      %v6101 = vmul.f32 0.5, %v6100
      %v6102 = vrcp.pop %v5949
      %v6103 = vmul.f32 0.5, %v6102
      %v6104 = vrcp.pop %v5950
      %v6105 = vmul.f32 0.5, %v6104
      %v6106 = vrcp.pop %v5951
      %v6107 = vmul.f32 0.5, %v6106
      %v6108 = vrcp.pop %v5952
      %v6109 = vmul.f32 0.5, %v6108
      %v6110 = vrcp.pop %v5953
      %v6111 = vmul.f32 0.5, %v6110
      %v6112 = vrcp.pop %v5954
      %v6113 = vmul.f32 0.5, %v6112
      %v6114 = vrcp.pop %v5955
      %v6115 = vmul.f32 0.5, %v6114
      %v6116 = vrcp.pop %v5956
      %v6117 = vmul.f32 0.5, %v6116
      %v6118 = vrcp.pop %v5957
      %v6119 = vmul.f32 0.5, %v6118
      %v6120 = vrcp.pop %v5958
      %v6121 = vmul.f32 0.5, %v6120
      %v6122 = vrcp.pop %v5959
      %v6123 = vmul.f32 0.5, %v6122
      %v6124 = vrcp.pop %v5960
      %v6125 = vmul.f32 0.5, %v6124
      %v6126 = vrcp.pop %v5961
      %v6127 = vmul.f32 0.5, %v6126
      %v6128 = vrcp.pop %v5962
      %v6129 = vmul.f32 0.5, %v6128
      %v6130 = vrcp.pop %v5963
      %v6131 = vmul.f32 0.5, %v6130
      %v6132 = vrcp.pop %v5964
      %v6133 = vmul.f32 0.5, %v6132
      %v6134 = vrcp.pop %v5965
      %v6135 = vmul.f32 0.5, %v6134
      %v6136 = vrcp.pop %v5966
      %v6137 = vmul.f32 0.5, %v6136
      %v6138 = vrcp.pop %v5967
      %v6139 = vmul.f32 0.5, %v6138
      %v6140 = vrcp.pop %v5968
      %v6141 = vmul.f32 0.5, %v6140
      %v6142 = vrcp.pop %v5969
      %v6143 = vmul.f32 0.5, %v6142
      %v6144 = vrcp.pop %v5970
      %v6145 = vmul.f32 0.5, %v6144
      %v6146 = vrcp.pop %v5971
      %v6147 = vmul.f32 0.5, %v6146
      %v6148 = vrcp.pop %v5972
      %v6149 = vmul.f32 0.5, %v6148
      %v6150 = vrcp.pop %v5973
      %v6151 = vmul.f32 0.5, %v6150
      %v6152 = vrcp.pop %v5974
      %v6153 = vmul.f32 0.5, %v6152
      %v6154 = vrcp.pop %v5975
      %v6155 = vmul.f32 0.5, %v6154
      %v6156 = vrcp.pop %v5976
      %v6157 = vmul.f32 0.5, %v6156
      %v6158 = vrcp.pop %v5977
      %v6159 = vmul.f32 0.5, %v6158
      %v6160 = vrcp.pop %v5978
      %v6161 = vmul.f32 0.5, %v6160
      %v6162 = vrcp.pop %v5979
      %v6163 = vmul.f32 0.5, %v6162
      %v6164 = vrcp.pop %v5980
      %v6165 = vmul.f32 0.5, %v6164
      %v6166 = vrcp.pop %v5981
      %v6167 = vmul.f32 0.5, %v6166
      %v6168 = vrcp.pop %v5982
      %v6169 = vmul.f32 0.5, %v6168
      %v6170 = vrcp.pop %v5983
      %v6171 = vmul.f32 0.5, %v6170
      %v6172 = vrcp.pop %v5984
      %v6173 = vmul.f32 0.5, %v6172
      %v6174 = vrcp.pop %v5985
      %v6175 = vmul.f32 0.5, %v6174
      %v6176 = vrcp.pop %v5986
      %v6177 = vmul.f32 0.5, %v6176
      %v6178 = vrcp.pop %v5987
      %v6179 = vmul.f32 0.5, %v6178
      %v6180 = vrcp.pop %v5988
      %v6181 = vmul.f32 0.5, %v6180
      %v6182 = vrcp.pop %v5989
      %v6183 = vmul.f32 0.5, %v6182
      %v6184 = vrcp.pop %v5990
      %v6185 = vmul.f32 0.5, %v6184
      %v6186 = vrcp.pop %v5991
      %v6187 = vmul.f32 0.5, %v6186
      %v6188 = vrcp.pop %v5992
      %v6189 = vmul.f32 0.5, %v6188
      %v6190 = vrcp.pop %v5993
      %v6191 = vmul.f32 0.5, %v6190
      %v6192 = vrcp.pop %v5994
      %v6193 = vmul.f32 0.5, %v6192
      %v6194 = vrcp.pop %v5995
      %v6195 = vmul.f32 0.5, %v6194
      %v6196 = vrcp.pop %v5996
      %v6197 = vmul.f32 0.5, %v6196
      %v6198 = vrcp.pop %v5997
      %v6199 = vmul.f32 0.5, %v6198
      %v6200 = vrcp.pop %v5998
      %v6201 = vmul.f32 0.5, %v6200
      %v6202 = vrcp.pop %v5999
      %v6203 = vmul.f32 0.5, %v6202
      %v6204 = vrcp.pop %v6000
      %v6205 = vmul.f32 0.5, %v6204
      %v6206 = vrcp.pop %v6001
      %v6207 = vmul.f32 0.5, %v6206
      %v6208 = vrcp.pop %v6002
      %v6209 = vmul.f32 0.5, %v6208
      %v6210 = vrcp.pop %v6003
      %v6211 = vmul.f32 0.5, %v6210
      %v6212 = vrcp.pop %v6004
      %v6213 = vmul.f32 0.5, %v6212
      %v6214 = vrcp.pop %v6005
      %v6215 = vmul.f32 0.5, %v6214
      %v6216 = vrcp.pop %v6006
      %v6217 = vmul.f32 0.5, %v6216
      %v6218 = vrcp.pop %v6007
      %v6219 = vmul.f32 0.5, %v6218
      %v6220 = vrcp.pop %v6008
      %v6221 = vmul.f32 0.5, %v6220
      %v6222 = vrcp.pop %v6009
      %v6223 = vmul.f32 0.5, %v6222
      %v6224 = vrcp.pop %v6010
      %v6225 = vmul.f32 0.5, %v6224
      %v6226 = vrcp.pop %v6011
      %v6227 = vmul.f32 0.5, %v6226
      %v6228 = vrcp.pop %v6012
      %v6229 = vmul.f32 0.5, %v6228
      %v6230 = vrcp.pop %v6013
      %v6231 = vmul.f32 0.5, %v6230
      %v6232 = vrcp.pop %v6014
      %v6233 = vmul.f32 0.5, %v6232
      %v6234 = vrcp.pop %v6015
      %v6235 = vmul.f32 0.5, %v6234
      %v6236 = vrcp.pop %v6016
      %v6237 = vmul.f32 0.5, %v6236
      %v6238 = vrcp.pop %v6017
      %v6239 = vmul.f32 0.5, %v6238
      %v6240 = vrcp.pop %v6018
      %v6241 = vmul.f32 0.5, %v6240
      %v6242 = vrcp.pop %v6019
      %v6243 = vmul.f32 0.5, %v6242
      %v6244 = vrcp.pop %v6020
      %v6245 = vmul.f32 0.5, %v6244
      %v6246 = vrcp.pop %v6021
      %v6247 = vmul.f32 0.5, %v6246
      %v6248 = vrcp.pop %v6022
      %v6249 = vmul.f32 0.5, %v6248
      %v6250 = vrcp.pop %v6023
      %v6251 = vmul.f32 0.5, %v6250
      %v6252 = vrcp.pop %v6024
      %v6253 = vmul.f32 0.5, %v6252
      %v6254 = vrcp.pop %v6025
      %v6255 = vmul.f32 0.5, %v6254
      %v6256 = vrcp.pop %v6026
      %v6257 = vmul.f32 0.5, %v6256
      %v6258 = vrcp.pop %v6027
      %v6259 = vmul.f32 0.5, %v6258
      %v6260 = vrcp.pop %v6028
      %v6261 = vmul.f32 0.5, %v6260
      %v6262 = vrcp.pop %v6029
      %v6263 = vmul.f32 0.5, %v6262
      %v6264 = vrcp.pop %v6030
      %v6265 = vmul.f32 0.5, %v6264
      %v6266 = vrcp.pop %v6031
      %v6267 = vmul.f32 0.5, %v6266
      %v6268 = vrcp.pop %v6032
      %v6269 = vmul.f32 0.5, %v6268
      %v6270 = vrcp.pop %v6033
      %v6271 = vmul.f32 0.5, %v6270
      %v6272 = vrcp.pop %v6034
      %v6273 = vmul.f32 0.5, %v6272
      %v6274 = vrcp.pop %v6035
      %v6275 = vmul.f32 0.5, %v6274
      %v6276 = vrcp.pop %v6036
      %v6277 = vmul.f32 0.5, %v6276
      %v6278 = vrcp.pop %v6037
      %v6279 = vmul.f32 0.5, %v6278
      %v6280 = vrcp.pop %v6038
      %v6281 = vmul.f32 0.5, %v6280
      %v6282 = vrcp.pop %v6039
      %v6283 = vmul.f32 0.5, %v6282
      %v6284 = vrcp.pop %v6040
      %v6285 = vmul.f32 0.5, %v6284
      %v6286 = vrcp.pop %v6041
      %v6287 = vmul.f32 0.5, %v6286
      %v6288 = vrcp.pop %v6042
      %v6289 = vmul.f32 0.5, %v6288
      %v6290 = vrcp.pop %v6043
      %v6291 = vmul.f32 0.5, %v6290
      %v6292 = vrcp.pop %v6044
      %v6293 = vmul.f32 0.5, %v6292
      %v6294 = vrcp.pop %v6045
      %v6295 = vmul.f32 0.5, %v6294
      %v6296 = vrcp.pop %v6046
      %v6297 = vmul.f32 0.5, %v6296
      %v6298 = vrcp.pop %v6047
      %v6299 = vmul.f32 0.5, %v6298
      %v6300 = vrcp.pop %v6048
      %v6301 = vmul.f32 0.5, %v6300
      %v6302 = vrcp.pop %v6049
      %v6303 = vmul.f32 0.5, %v6302
      %v6304 = vrcp.pop %v6050
      %v6305 = vmul.f32 0.5, %v6304
      %v6306 = vrcp.pop %v6051
      %v6307 = vmul.f32 0.5, %v6306
      %v6308 = vld [vmem:[%s532] sm:$0xff]
      %v6309 = vld [vmem:[%s532 + $0x8] sm:$0xff]
      %v6310 = vld [vmem:[%s532 + $0x10] sm:$0xff]
      %v6311 = vld [vmem:[%s532 + $0x18] sm:$0xff]
      %v6312 = vld [vmem:[%s532 + $0x20] sm:$0xff]
      %v6313 = vld [vmem:[%s532 + $0x28] sm:$0xff]
      %v6314 = vld [vmem:[%s532 + $0x30] sm:$0xff]
      %v6315 = vld [vmem:[%s532 + $0x38] sm:$0xff]
      %v6316 = vld [vmem:[%s532 + $0x40] sm:$0xff]
      %v6317 = vld [vmem:[%s532 + $0x48] sm:$0xff]
      %v6318 = vld [vmem:[%s532 + $0x50] sm:$0xff]
      %v6319 = vld [vmem:[%s532 + $0x58] sm:$0xff]
      %v6320 = vld [vmem:[%s532 + $0x60] sm:$0xff]
      %v6321 = vld [vmem:[%s532 + $0x68] sm:$0xff]
      %v6322 = vld [vmem:[%s532 + $0x70] sm:$0xff]
      %v6323 = vld [vmem:[%s532 + $0x78] sm:$0xff]
      %v6324 = vld [vmem:[%s532 + $0x80] sm:$0xff]
      %v6325 = vld [vmem:[%s532 + $0x88] sm:$0xff]
      %v6326 = vld [vmem:[%s532 + $0x90] sm:$0xff]
      %v6327 = vld [vmem:[%s532 + $0x98] sm:$0xff]
      %v6328 = vld [vmem:[%s532 + $0xa0] sm:$0xff]
      %v6329 = vld [vmem:[%s532 + $0xa8] sm:$0xff]
      %v6330 = vld [vmem:[%s532 + $0xb0] sm:$0xff]
      %v6331 = vld [vmem:[%s532 + $0xb8] sm:$0xff]
      %v6332 = vld [vmem:[%s532 + $0xc0] sm:$0xff]
      %v6333 = vld [vmem:[%s532 + $0xc8] sm:$0xff]
      %v6334 = vld [vmem:[%s532 + $0xd0] sm:$0xff]
      %v6335 = vld [vmem:[%s532 + $0xd8] sm:$0xff]
      %v6336 = vld [vmem:[%s532 + $0xe0] sm:$0xff]
      %v6337 = vld [vmem:[%s532 + $0xe8] sm:$0xff]
      %v6338 = vld [vmem:[%s532 + $0xf0] sm:$0xff]
      %v6339 = vld [vmem:[%s532 + $0xf8] sm:$0xff]
      %v6340 = vld [vmem:[%s532 + $0x100] sm:$0xff]
      %v6341 = vld [vmem:[%s532 + $0x108] sm:$0xff]
      %v6342 = vld [vmem:[%s532 + $0x110] sm:$0xff]
      %v6343 = vld [vmem:[%s532 + $0x118] sm:$0xff]
      %v6344 = vld [vmem:[%s532 + $0x120] sm:$0xff]
      %v6345 = vld [vmem:[%s532 + $0x128] sm:$0xff]
      %v6346 = vld [vmem:[%s532 + $0x130] sm:$0xff]
      %v6347 = vld [vmem:[%s532 + $0x138] sm:$0xff]
      %v6348 = vld [vmem:[%s532 + $0x140] sm:$0xff]
      %v6349 = vld [vmem:[%s532 + $0x148] sm:$0xff]
      %v6350 = vld [vmem:[%s532 + $0x150] sm:$0xff]
      %v6351 = vld [vmem:[%s532 + $0x158] sm:$0xff]
      %v6352 = vld [vmem:[%s532 + $0x160] sm:$0xff]
      %v6353 = vld [vmem:[%s532 + $0x168] sm:$0xff]
      %v6354 = vld [vmem:[%s532 + $0x170] sm:$0xff]
      %v6355 = vld [vmem:[%s532 + $0x178] sm:$0xff]
      %v6356 = vld [vmem:[%s532 + $0x180] sm:$0xff]
      %v6357 = vld [vmem:[%s532 + $0x188] sm:$0xff]
      %v6358 = vld [vmem:[%s532 + $0x190] sm:$0xff]
      %v6359 = vld [vmem:[%s532 + $0x198] sm:$0xff]
      %v6360 = vld [vmem:[%s532 + $0x1a0] sm:$0xff]
      %v6361 = vld [vmem:[%s532 + $0x1a8] sm:$0xff]
      %v6362 = vld [vmem:[%s532 + $0x1b0] sm:$0xff]
      %v6363 = vld [vmem:[%s532 + $0x1b8] sm:$0xff]
      %v6364 = vld [vmem:[%s532 + $0x1c0] sm:$0xff]
      %v6365 = vld [vmem:[%s532 + $0x1c8] sm:$0xff]
      %v6366 = vld [vmem:[%s532 + $0x1d0] sm:$0xff]
      %v6367 = vld [vmem:[%s532 + $0x1d8] sm:$0xff]
      %v6368 = vld [vmem:[%s532 + $0x1e0] sm:$0xff]
      %v6369 = vld [vmem:[%s532 + $0x1e8] sm:$0xff]
      %v6370 = vld [vmem:[%s532 + $0x1f0] sm:$0xff]
      %v6371 = vld [vmem:[%s532 + $0x1f8] sm:$0xff]
      %v6372 = vld [vmem:[%s532 + $0x200] sm:$0xff]
      %v6373 = vld [vmem:[%s532 + $0x208] sm:$0xff]
      %v6374 = vld [vmem:[%s532 + $0x210] sm:$0xff]
      %v6375 = vld [vmem:[%s532 + $0x218] sm:$0xff]
      %v6376 = vld [vmem:[%s532 + $0x220] sm:$0xff]
      %v6377 = vld [vmem:[%s532 + $0x228] sm:$0xff]
      %v6378 = vld [vmem:[%s532 + $0x230] sm:$0xff]
      %v6379 = vld [vmem:[%s532 + $0x238] sm:$0xff]
      %v6380 = vld [vmem:[%s532 + $0x240] sm:$0xff]
      %v6381 = vld [vmem:[%s532 + $0x248] sm:$0xff]
      %v6382 = vld [vmem:[%s532 + $0x250] sm:$0xff]
      %v6383 = vld [vmem:[%s532 + $0x258] sm:$0xff]
      %v6384 = vld [vmem:[%s532 + $0x260] sm:$0xff]
      %v6385 = vld [vmem:[%s532 + $0x268] sm:$0xff]
      %v6386 = vld [vmem:[%s532 + $0x270] sm:$0xff]
      %v6387 = vld [vmem:[%s532 + $0x278] sm:$0xff]
      %v6388 = vld [vmem:[%s532 + $0x280] sm:$0xff]
      %v6389 = vld [vmem:[%s532 + $0x288] sm:$0xff]
      %v6390 = vld [vmem:[%s532 + $0x290] sm:$0xff]
      %v6391 = vld [vmem:[%s532 + $0x298] sm:$0xff]
      %v6392 = vld [vmem:[%s532 + $0x2a0] sm:$0xff]
      %v6393 = vld [vmem:[%s532 + $0x2a8] sm:$0xff]
      %v6394 = vld [vmem:[%s532 + $0x2b0] sm:$0xff]
      %v6395 = vld [vmem:[%s532 + $0x2b8] sm:$0xff]
      %v6396 = vld [vmem:[%s532 + $0x2c0] sm:$0xff]
      %v6397 = vld [vmem:[%s532 + $0x2c8] sm:$0xff]
      %v6398 = vld [vmem:[%s532 + $0x2d0] sm:$0xff]
      %v6399 = vld [vmem:[%s532 + $0x2d8] sm:$0xff]
      %v6400 = vld [vmem:[%s532 + $0x2e0] sm:$0xff]
      %v6401 = vld [vmem:[%s532 + $0x2e8] sm:$0xff]
      %v6402 = vld [vmem:[%s532 + $0x2f0] sm:$0xff]
      %v6403 = vld [vmem:[%s532 + $0x2f8] sm:$0xff]
      %v6404 = vld [vmem:[%s532 + $0x300] sm:$0xff]
      %v6405 = vld [vmem:[%s532 + $0x308] sm:$0xff]
      %v6406 = vld [vmem:[%s532 + $0x310] sm:$0xff]
      %v6407 = vld [vmem:[%s532 + $0x318] sm:$0xff]
      %v6408 = vld [vmem:[%s532 + $0x320] sm:$0xff]
      %v6409 = vld [vmem:[%s532 + $0x328] sm:$0xff]
      %v6410 = vld [vmem:[%s532 + $0x330] sm:$0xff]
      %v6411 = vld [vmem:[%s532 + $0x338] sm:$0xff]
      %v6412 = vld [vmem:[%s532 + $0x340] sm:$0xff]
      %v6413 = vld [vmem:[%s532 + $0x348] sm:$0xff]
      %v6414 = vld [vmem:[%s532 + $0x350] sm:$0xff]
      %v6415 = vld [vmem:[%s532 + $0x358] sm:$0xff]
      %v6416 = vld [vmem:[%s532 + $0x360] sm:$0xff]
      %v6417 = vld [vmem:[%s532 + $0x368] sm:$0xff]
      %v6418 = vld [vmem:[%s532 + $0x370] sm:$0xff]
      %v6419 = vld [vmem:[%s532 + $0x378] sm:$0xff]
      %v6420 = vld [vmem:[%s532 + $0x380] sm:$0xff]
      %v6421 = vld [vmem:[%s532 + $0x388] sm:$0xff]
      %v6422 = vld [vmem:[%s532 + $0x390] sm:$0xff]
      %v6423 = vld [vmem:[%s532 + $0x398] sm:$0xff]
      %v6424 = vld [vmem:[%s532 + $0x3a0] sm:$0xff]
      %v6425 = vld [vmem:[%s532 + $0x3a8] sm:$0xff]
      %v6426 = vld [vmem:[%s532 + $0x3b0] sm:$0xff]
      %v6427 = vld [vmem:[%s532 + $0x3b8] sm:$0xff]
      %v6428 = vld [vmem:[%s532 + $0x3c0] sm:$0xff]
      %v6429 = vld [vmem:[%s532 + $0x3c8] sm:$0xff]
      %v6430 = vld [vmem:[%s532 + $0x3d0] sm:$0xff]
      %v6431 = vld [vmem:[%s532 + $0x3d8] sm:$0xff]
      %v6432 = vld [vmem:[%s532 + $0x3e0] sm:$0xff]
      %v6433 = vld [vmem:[%s532 + $0x3e8] sm:$0xff]
      %v6434 = vld [vmem:[%s532 + $0x3f0] sm:$0xff]
      %v6435 = vld [vmem:[%s532 + $0x3f8] sm:$0xff]
      %v6436 = vmul.f32 %v5542, %v6053
      %v6437 = vmul.f32 %v5545, %v6055
      %v6438 = vmul.f32 %v5548, %v6057
      %v6439 = vmul.f32 %v5551, %v6059
      %v6440 = vmul.f32 %v5554, %v6061
      %v6441 = vmul.f32 %v5557, %v6063
      %v6442 = vmul.f32 %v5560, %v6065
      %v6443 = vmul.f32 %v5563, %v6067
      %v6444 = vmul.f32 %v5566, %v6069
      %v6445 = vmul.f32 %v5569, %v6071
      %v6446 = vmul.f32 %v5572, %v6073
      %v6447 = vmul.f32 %v5575, %v6075
      %v6448 = vmul.f32 %v5578, %v6077
      %v6449 = vmul.f32 %v5581, %v6079
      %v6450 = vmul.f32 %v5584, %v6081
      %v6451 = vmul.f32 %v5587, %v6083
      %v6452 = vmul.f32 %v5590, %v6085
      %v6453 = vmul.f32 %v5593, %v6087
      %v6454 = vmul.f32 %v5596, %v6089
      %v6455 = vmul.f32 %v5599, %v6091
      %v6456 = vmul.f32 %v5602, %v6093
      %v6457 = vmul.f32 %v5605, %v6095
      %v6458 = vmul.f32 %v5608, %v6097
      %v6459 = vmul.f32 %v5611, %v6099
      %v6460 = vmul.f32 %v5614, %v6101
      %v6461 = vmul.f32 %v5617, %v6103
      %v6462 = vmul.f32 %v5620, %v6105
      %v6463 = vmul.f32 %v5623, %v6107
      %v6464 = vmul.f32 %v5626, %v6109
      %v6465 = vmul.f32 %v5629, %v6111
      %v6466 = vmul.f32 %v5632, %v6113
      %v6467 = vmul.f32 %v5635, %v6115
      %v6468 = vmul.f32 %v5638, %v6117
      %v6469 = vmul.f32 %v5641, %v6119
      %v6470 = vmul.f32 %v5644, %v6121
      %v6471 = vmul.f32 %v5647, %v6123
      %v6472 = vmul.f32 %v5650, %v6125
      %v6473 = vmul.f32 %v5653, %v6127
      %v6474 = vmul.f32 %v5656, %v6129
      %v6475 = vmul.f32 %v5659, %v6131
      %v6476 = vmul.f32 %v5662, %v6133
      %v6477 = vmul.f32 %v5665, %v6135
      %v6478 = vmul.f32 %v5668, %v6137
      %v6479 = vmul.f32 %v5671, %v6139
      %v6480 = vmul.f32 %v5674, %v6141
      %v6481 = vmul.f32 %v5677, %v6143
      %v6482 = vmul.f32 %v5680, %v6145
      %v6483 = vmul.f32 %v5683, %v6147
      %v6484 = vmul.f32 %v5686, %v6149
      %v6485 = vmul.f32 %v5689, %v6151
      %v6486 = vmul.f32 %v5692, %v6153
      %v6487 = vmul.f32 %v5695, %v6155
      %v6488 = vmul.f32 %v5698, %v6157
      %v6489 = vmul.f32 %v5701, %v6159
      %v6490 = vmul.f32 %v5704, %v6161
      %v6491 = vmul.f32 %v5707, %v6163
      %v6492 = vmul.f32 %v5710, %v6165
      %v6493 = vmul.f32 %v5713, %v6167
      %v6494 = vmul.f32 %v5716, %v6169
      %v6495 = vmul.f32 %v5719, %v6171
      %v6496 = vmul.f32 %v5722, %v6173
      %v6497 = vmul.f32 %v5725, %v6175
      %v6498 = vmul.f32 %v5728, %v6177
      %v6499 = vmul.f32 %v5731, %v6179
      %v6500 = vmul.f32 %v5734, %v6181
      %v6501 = vmul.f32 %v5737, %v6183
      %v6502 = vmul.f32 %v5740, %v6185
      %v6503 = vmul.f32 %v5743, %v6187
      %v6504 = vmul.f32 %v5746, %v6189
      %v6505 = vmul.f32 %v5749, %v6191
      %v6506 = vmul.f32 %v5752, %v6193
      %v6507 = vmul.f32 %v5755, %v6195
      %v6508 = vmul.f32 %v5758, %v6197
      %v6509 = vmul.f32 %v5761, %v6199
      %v6510 = vmul.f32 %v5764, %v6201
      %v6511 = vmul.f32 %v5767, %v6203
      %v6512 = vmul.f32 %v5770, %v6205
      %v6513 = vmul.f32 %v5773, %v6207
      %v6514 = vmul.f32 %v5776, %v6209
      %v6515 = vmul.f32 %v5779, %v6211
      %v6516 = vmul.f32 %v5782, %v6213
      %v6517 = vmul.f32 %v5785, %v6215
      %v6518 = vmul.f32 %v5788, %v6217
      %v6519 = vmul.f32 %v5791, %v6219
      %v6520 = vmul.f32 %v5794, %v6221
      %v6521 = vmul.f32 %v5797, %v6223
      %v6522 = vmul.f32 %v5800, %v6225
      %v6523 = vmul.f32 %v5803, %v6227
      %v6524 = vmul.f32 %v5806, %v6229
      %v6525 = vmul.f32 %v5809, %v6231
      %v6526 = vmul.f32 %v5812, %v6233
      %v6527 = vmul.f32 %v5815, %v6235
      %v6528 = vmul.f32 %v5818, %v6237
      %v6529 = vmul.f32 %v5821, %v6239
      %v6530 = vmul.f32 %v5824, %v6241
      %v6531 = vmul.f32 %v5827, %v6243
      %v6532 = vmul.f32 %v5830, %v6245
      %v6533 = vmul.f32 %v5833, %v6247
      %v6534 = vmul.f32 %v5836, %v6249
      %v6535 = vmul.f32 %v5839, %v6251
      %v6536 = vmul.f32 %v5842, %v6253
      %v6537 = vmul.f32 %v5845, %v6255
      %v6538 = vmul.f32 %v5848, %v6257
      %v6539 = vmul.f32 %v5851, %v6259
      %v6540 = vmul.f32 %v5854, %v6261
      %v6541 = vmul.f32 %v5857, %v6263
      %v6542 = vmul.f32 %v5860, %v6265
      %v6543 = vmul.f32 %v5863, %v6267
      %v6544 = vmul.f32 %v5866, %v6269
      %v6545 = vmul.f32 %v5869, %v6271
      %v6546 = vmul.f32 %v5872, %v6273
      %v6547 = vmul.f32 %v5875, %v6275
      %v6548 = vmul.f32 %v5878, %v6277
      %v6549 = vmul.f32 %v5881, %v6279
      %v6550 = vmul.f32 %v5884, %v6281
      %v6551 = vmul.f32 %v5887, %v6283
      %v6552 = vmul.f32 %v5890, %v6285
      %v6553 = vmul.f32 %v5893, %v6287
      %v6554 = vmul.f32 %v5896, %v6289
      %v6555 = vmul.f32 %v5899, %v6291
      %v6556 = vmul.f32 %v5902, %v6293
      %v6557 = vmul.f32 %v5905, %v6295
      %v6558 = vmul.f32 %v5908, %v6297
      %v6559 = vmul.f32 %v5911, %v6299
      %v6560 = vmul.f32 %v5914, %v6301
      %v6561 = vmul.f32 %v5917, %v6303
      %v6562 = vmul.f32 %v5920, %v6305
      %v6563 = vmul.f32 %v5923, %v6307
      %v6564 = vadd.f32 %v6308, %v6436
      %v6565 = vadd.f32 %v6309, %v6437
      %v6566 = vadd.f32 %v6310, %v6438
      %v6567 = vadd.f32 %v6311, %v6439
      %v6568 = vadd.f32 %v6312, %v6440
      %v6569 = vadd.f32 %v6313, %v6441
      %v6570 = vadd.f32 %v6314, %v6442
      %v6571 = vadd.f32 %v6315, %v6443
      %v6572 = vadd.f32 %v6316, %v6444
      %v6573 = vadd.f32 %v6317, %v6445
      %v6574 = vadd.f32 %v6318, %v6446
      %v6575 = vadd.f32 %v6319, %v6447
      %v6576 = vadd.f32 %v6320, %v6448
      %v6577 = vadd.f32 %v6321, %v6449
      %v6578 = vadd.f32 %v6322, %v6450
      %v6579 = vadd.f32 %v6323, %v6451
      %v6580 = vadd.f32 %v6324, %v6452
      %v6581 = vadd.f32 %v6325, %v6453
      %v6582 = vadd.f32 %v6326, %v6454
      %v6583 = vadd.f32 %v6327, %v6455
      %v6584 = vadd.f32 %v6328, %v6456
      %v6585 = vadd.f32 %v6329, %v6457
      %v6586 = vadd.f32 %v6330, %v6458
      %v6587 = vadd.f32 %v6331, %v6459
      %v6588 = vadd.f32 %v6332, %v6460
      %v6589 = vadd.f32 %v6333, %v6461
      %v6590 = vadd.f32 %v6334, %v6462
      %v6591 = vadd.f32 %v6335, %v6463
      %v6592 = vadd.f32 %v6336, %v6464
      %v6593 = vadd.f32 %v6337, %v6465
      %v6594 = vadd.f32 %v6338, %v6466
      %v6595 = vadd.f32 %v6339, %v6467
      %v6596 = vadd.f32 %v6340, %v6468
      %v6597 = vadd.f32 %v6341, %v6469
      %v6598 = vadd.f32 %v6342, %v6470
      %v6599 = vadd.f32 %v6343, %v6471
      %v6600 = vadd.f32 %v6344, %v6472
      %v6601 = vadd.f32 %v6345, %v6473
      %v6602 = vadd.f32 %v6346, %v6474
      %v6603 = vadd.f32 %v6347, %v6475
      %v6604 = vadd.f32 %v6348, %v6476
      %v6605 = vadd.f32 %v6349, %v6477
      %v6606 = vadd.f32 %v6350, %v6478
      %v6607 = vadd.f32 %v6351, %v6479
      %v6608 = vadd.f32 %v6352, %v6480
      %v6609 = vadd.f32 %v6353, %v6481
      %v6610 = vadd.f32 %v6354, %v6482
      %v6611 = vadd.f32 %v6355, %v6483
      %v6612 = vadd.f32 %v6356, %v6484
      %v6613 = vadd.f32 %v6357, %v6485
      %v6614 = vadd.f32 %v6358, %v6486
      %v6615 = vadd.f32 %v6359, %v6487
      %v6616 = vadd.f32 %v6360, %v6488
      %v6617 = vadd.f32 %v6361, %v6489
      %v6618 = vadd.f32 %v6362, %v6490
      %v6619 = vadd.f32 %v6363, %v6491
      %v6620 = vadd.f32 %v6364, %v6492
      %v6621 = vadd.f32 %v6365, %v6493
      %v6622 = vadd.f32 %v6366, %v6494
      %v6623 = vadd.f32 %v6367, %v6495
      %v6624 = vadd.f32 %v6368, %v6496
      %v6625 = vadd.f32 %v6369, %v6497
      %v6626 = vadd.f32 %v6370, %v6498
      %v6627 = vadd.f32 %v6371, %v6499
      %v6628 = vadd.f32 %v6372, %v6500
      %v6629 = vadd.f32 %v6373, %v6501
      %v6630 = vadd.f32 %v6374, %v6502
      %v6631 = vadd.f32 %v6375, %v6503
      %v6632 = vadd.f32 %v6376, %v6504
      %v6633 = vadd.f32 %v6377, %v6505
      %v6634 = vadd.f32 %v6378, %v6506
      %v6635 = vadd.f32 %v6379, %v6507
      %v6636 = vadd.f32 %v6380, %v6508
      %v6637 = vadd.f32 %v6381, %v6509
      %v6638 = vadd.f32 %v6382, %v6510
      %v6639 = vadd.f32 %v6383, %v6511
      %v6640 = vadd.f32 %v6384, %v6512
      %v6641 = vadd.f32 %v6385, %v6513
      %v6642 = vadd.f32 %v6386, %v6514
      %v6643 = vadd.f32 %v6387, %v6515
      %v6644 = vadd.f32 %v6388, %v6516
      %v6645 = vadd.f32 %v6389, %v6517
      %v6646 = vadd.f32 %v6390, %v6518
      %v6647 = vadd.f32 %v6391, %v6519
      %v6648 = vadd.f32 %v6392, %v6520
      %v6649 = vadd.f32 %v6393, %v6521
      %v6650 = vadd.f32 %v6394, %v6522
      %v6651 = vadd.f32 %v6395, %v6523
      %v6652 = vadd.f32 %v6396, %v6524
      %v6653 = vadd.f32 %v6397, %v6525
      %v6654 = vadd.f32 %v6398, %v6526
      %v6655 = vadd.f32 %v6399, %v6527
      %v6656 = vadd.f32 %v6400, %v6528
      %v6657 = vadd.f32 %v6401, %v6529
      %v6658 = vadd.f32 %v6402, %v6530
      %v6659 = vadd.f32 %v6403, %v6531
      %v6660 = vadd.f32 %v6404, %v6532
      %v6661 = vadd.f32 %v6405, %v6533
      %v6662 = vadd.f32 %v6406, %v6534
      %v6663 = vadd.f32 %v6407, %v6535
      %v6664 = vadd.f32 %v6408, %v6536
      %v6665 = vadd.f32 %v6409, %v6537
      %v6666 = vadd.f32 %v6410, %v6538
      %v6667 = vadd.f32 %v6411, %v6539
      %v6668 = vadd.f32 %v6412, %v6540
      %v6669 = vadd.f32 %v6413, %v6541
      %v6670 = vadd.f32 %v6414, %v6542
      %v6671 = vadd.f32 %v6415, %v6543
      %v6672 = vadd.f32 %v6416, %v6544
      %v6673 = vadd.f32 %v6417, %v6545
      %v6674 = vadd.f32 %v6418, %v6546
      %v6675 = vadd.f32 %v6419, %v6547
      %v6676 = vadd.f32 %v6420, %v6548
      %v6677 = vadd.f32 %v6421, %v6549
      %v6678 = vadd.f32 %v6422, %v6550
      %v6679 = vadd.f32 %v6423, %v6551
      %v6680 = vadd.f32 %v6424, %v6552
      %v6681 = vadd.f32 %v6425, %v6553
      %v6682 = vadd.f32 %v6426, %v6554
      %v6683 = vadd.f32 %v6427, %v6555
      %v6684 = vadd.f32 %v6428, %v6556
      %v6685 = vadd.f32 %v6429, %v6557
      %v6686 = vadd.f32 %v6430, %v6558
      %v6687 = vadd.f32 %v6431, %v6559
      %v6688 = vadd.f32 %v6432, %v6560
      %v6689 = vadd.f32 %v6433, %v6561
      %v6690 = vadd.f32 %v6434, %v6562
      %v6691 = vadd.f32 %v6435, %v6563
      %6692 = vst.msk [vmem:[%s532] sm:$0xff] %vm3619, %v6564
      %6693 = vst.msk [vmem:[%s532 + $0x8] sm:$0xff] %vm3619, %v6565
      %6694 = vst.msk [vmem:[%s532 + $0x10] sm:$0xff] %vm3619, %v6566
      %6695 = vst.msk [vmem:[%s532 + $0x18] sm:$0xff] %vm3619, %v6567
      %6696 = vst.msk [vmem:[%s532 + $0x20] sm:$0xff] %vm3619, %v6568
      %6697 = vst.msk [vmem:[%s532 + $0x28] sm:$0xff] %vm3619, %v6569
      %6698 = vst.msk [vmem:[%s532 + $0x30] sm:$0xff] %vm3619, %v6570
      %6699 = vst.msk [vmem:[%s532 + $0x38] sm:$0xff] %vm3619, %v6571
      %6700 = vst.msk [vmem:[%s532 + $0x40] sm:$0xff] %vm3619, %v6572
      %6701 = vst.msk [vmem:[%s532 + $0x48] sm:$0xff] %vm3619, %v6573
      %6702 = vst.msk [vmem:[%s532 + $0x50] sm:$0xff] %vm3619, %v6574
      %6703 = vst.msk [vmem:[%s532 + $0x58] sm:$0xff] %vm3619, %v6575
      %6704 = vst.msk [vmem:[%s532 + $0x60] sm:$0xff] %vm3619, %v6576
      %6705 = vst.msk [vmem:[%s532 + $0x68] sm:$0xff] %vm3619, %v6577
      %6706 = vst.msk [vmem:[%s532 + $0x70] sm:$0xff] %vm3619, %v6578
      %6707 = vst.msk [vmem:[%s532 + $0x78] sm:$0xff] %vm3619, %v6579
      %6708 = vst.msk [vmem:[%s532 + $0x80] sm:$0xff] %vm3619, %v6580
      %6709 = vst.msk [vmem:[%s532 + $0x88] sm:$0xff] %vm3619, %v6581
      %6710 = vst.msk [vmem:[%s532 + $0x90] sm:$0xff] %vm3619, %v6582
      %6711 = vst.msk [vmem:[%s532 + $0x98] sm:$0xff] %vm3619, %v6583
      %6712 = vst.msk [vmem:[%s532 + $0xa0] sm:$0xff] %vm3619, %v6584
      %6713 = vst.msk [vmem:[%s532 + $0xa8] sm:$0xff] %vm3619, %v6585
      %6714 = vst.msk [vmem:[%s532 + $0xb0] sm:$0xff] %vm3619, %v6586
      %6715 = vst.msk [vmem:[%s532 + $0xb8] sm:$0xff] %vm3619, %v6587
      %6716 = vst.msk [vmem:[%s532 + $0xc0] sm:$0xff] %vm3619, %v6588
      %6717 = vst.msk [vmem:[%s532 + $0xc8] sm:$0xff] %vm3619, %v6589
      %6718 = vst.msk [vmem:[%s532 + $0xd0] sm:$0xff] %vm3619, %v6590
      %6719 = vst.msk [vmem:[%s532 + $0xd8] sm:$0xff] %vm3619, %v6591
      %6720 = vst.msk [vmem:[%s532 + $0xe0] sm:$0xff] %vm3619, %v6592
      %6721 = vst.msk [vmem:[%s532 + $0xe8] sm:$0xff] %vm3619, %v6593
      %6722 = vst.msk [vmem:[%s532 + $0xf0] sm:$0xff] %vm3619, %v6594
      %6723 = vst.msk [vmem:[%s532 + $0xf8] sm:$0xff] %vm3619, %v6595
      %6724 = vst.msk [vmem:[%s532 + $0x100] sm:$0xff] %vm3619, %v6596
      %6725 = vst.msk [vmem:[%s532 + $0x108] sm:$0xff] %vm3619, %v6597
      %6726 = vst.msk [vmem:[%s532 + $0x110] sm:$0xff] %vm3619, %v6598
      %6727 = vst.msk [vmem:[%s532 + $0x118] sm:$0xff] %vm3619, %v6599
      %6728 = vst.msk [vmem:[%s532 + $0x120] sm:$0xff] %vm3619, %v6600
      %6729 = vst.msk [vmem:[%s532 + $0x128] sm:$0xff] %vm3619, %v6601
      %6730 = vst.msk [vmem:[%s532 + $0x130] sm:$0xff] %vm3619, %v6602
      %6731 = vst.msk [vmem:[%s532 + $0x138] sm:$0xff] %vm3619, %v6603
      %6732 = vst.msk [vmem:[%s532 + $0x140] sm:$0xff] %vm3619, %v6604
      %6733 = vst.msk [vmem:[%s532 + $0x148] sm:$0xff] %vm3619, %v6605
      %6734 = vst.msk [vmem:[%s532 + $0x150] sm:$0xff] %vm3619, %v6606
      %6735 = vst.msk [vmem:[%s532 + $0x158] sm:$0xff] %vm3619, %v6607
      %6736 = vst.msk [vmem:[%s532 + $0x160] sm:$0xff] %vm3619, %v6608
      %6737 = vst.msk [vmem:[%s532 + $0x168] sm:$0xff] %vm3619, %v6609
      %6738 = vst.msk [vmem:[%s532 + $0x170] sm:$0xff] %vm3619, %v6610
      %6739 = vst.msk [vmem:[%s532 + $0x178] sm:$0xff] %vm3619, %v6611
      %6740 = vst.msk [vmem:[%s532 + $0x180] sm:$0xff] %vm3619, %v6612
      %6741 = vst.msk [vmem:[%s532 + $0x188] sm:$0xff] %vm3619, %v6613
      %6742 = vst.msk [vmem:[%s532 + $0x190] sm:$0xff] %vm3619, %v6614
      %6743 = vst.msk [vmem:[%s532 + $0x198] sm:$0xff] %vm3619, %v6615
      %6744 = vst.msk [vmem:[%s532 + $0x1a0] sm:$0xff] %vm3619, %v6616
      %6745 = vst.msk [vmem:[%s532 + $0x1a8] sm:$0xff] %vm3619, %v6617
      %6746 = vst.msk [vmem:[%s532 + $0x1b0] sm:$0xff] %vm3619, %v6618
      %6747 = vst.msk [vmem:[%s532 + $0x1b8] sm:$0xff] %vm3619, %v6619
      %6748 = vst.msk [vmem:[%s532 + $0x1c0] sm:$0xff] %vm3619, %v6620
      %6749 = vst.msk [vmem:[%s532 + $0x1c8] sm:$0xff] %vm3619, %v6621
      %6750 = vst.msk [vmem:[%s532 + $0x1d0] sm:$0xff] %vm3619, %v6622
      %6751 = vst.msk [vmem:[%s532 + $0x1d8] sm:$0xff] %vm3619, %v6623
      %6752 = vst.msk [vmem:[%s532 + $0x1e0] sm:$0xff] %vm3619, %v6624
      %6753 = vst.msk [vmem:[%s532 + $0x1e8] sm:$0xff] %vm3619, %v6625
      %6754 = vst.msk [vmem:[%s532 + $0x1f0] sm:$0xff] %vm3619, %v6626
      %6755 = vst.msk [vmem:[%s532 + $0x1f8] sm:$0xff] %vm3619, %v6627
      %6756 = vst.msk [vmem:[%s532 + $0x200] sm:$0xff] %vm3619, %v6628
      %6757 = vst.msk [vmem:[%s532 + $0x208] sm:$0xff] %vm3619, %v6629
      %6758 = vst.msk [vmem:[%s532 + $0x210] sm:$0xff] %vm3619, %v6630
      %6759 = vst.msk [vmem:[%s532 + $0x218] sm:$0xff] %vm3619, %v6631
      %6760 = vst.msk [vmem:[%s532 + $0x220] sm:$0xff] %vm3619, %v6632
      %6761 = vst.msk [vmem:[%s532 + $0x228] sm:$0xff] %vm3619, %v6633
      %6762 = vst.msk [vmem:[%s532 + $0x230] sm:$0xff] %vm3619, %v6634
      %6763 = vst.msk [vmem:[%s532 + $0x238] sm:$0xff] %vm3619, %v6635
      %6764 = vst.msk [vmem:[%s532 + $0x240] sm:$0xff] %vm3619, %v6636
      %6765 = vst.msk [vmem:[%s532 + $0x248] sm:$0xff] %vm3619, %v6637
      %6766 = vst.msk [vmem:[%s532 + $0x250] sm:$0xff] %vm3619, %v6638
      %6767 = vst.msk [vmem:[%s532 + $0x258] sm:$0xff] %vm3619, %v6639
      %6768 = vst.msk [vmem:[%s532 + $0x260] sm:$0xff] %vm3619, %v6640
      %6769 = vst.msk [vmem:[%s532 + $0x268] sm:$0xff] %vm3619, %v6641
      %6770 = vst.msk [vmem:[%s532 + $0x270] sm:$0xff] %vm3619, %v6642
      %6771 = vst.msk [vmem:[%s532 + $0x278] sm:$0xff] %vm3619, %v6643
      %6772 = vst.msk [vmem:[%s532 + $0x280] sm:$0xff] %vm3619, %v6644
      %6773 = vst.msk [vmem:[%s532 + $0x288] sm:$0xff] %vm3619, %v6645
      %6774 = vst.msk [vmem:[%s532 + $0x290] sm:$0xff] %vm3619, %v6646
      %6775 = vst.msk [vmem:[%s532 + $0x298] sm:$0xff] %vm3619, %v6647
      %6776 = vst.msk [vmem:[%s532 + $0x2a0] sm:$0xff] %vm3619, %v6648
      %6777 = vst.msk [vmem:[%s532 + $0x2a8] sm:$0xff] %vm3619, %v6649
      %6778 = vst.msk [vmem:[%s532 + $0x2b0] sm:$0xff] %vm3619, %v6650
      %6779 = vst.msk [vmem:[%s532 + $0x2b8] sm:$0xff] %vm3619, %v6651
      %6780 = vst.msk [vmem:[%s532 + $0x2c0] sm:$0xff] %vm3619, %v6652
      %6781 = vst.msk [vmem:[%s532 + $0x2c8] sm:$0xff] %vm3619, %v6653
      %6782 = vst.msk [vmem:[%s532 + $0x2d0] sm:$0xff] %vm3619, %v6654
      %6783 = vst.msk [vmem:[%s532 + $0x2d8] sm:$0xff] %vm3619, %v6655
      %6784 = vst.msk [vmem:[%s532 + $0x2e0] sm:$0xff] %vm3619, %v6656
      %6785 = vst.msk [vmem:[%s532 + $0x2e8] sm:$0xff] %vm3619, %v6657
      %6786 = vst.msk [vmem:[%s532 + $0x2f0] sm:$0xff] %vm3619, %v6658
      %6787 = vst.msk [vmem:[%s532 + $0x2f8] sm:$0xff] %vm3619, %v6659
      %6788 = vst.msk [vmem:[%s532 + $0x300] sm:$0xff] %vm3619, %v6660
      %6789 = vst.msk [vmem:[%s532 + $0x308] sm:$0xff] %vm3619, %v6661
      %6790 = vst.msk [vmem:[%s532 + $0x310] sm:$0xff] %vm3619, %v6662
      %6791 = vst.msk [vmem:[%s532 + $0x318] sm:$0xff] %vm3619, %v6663
      %6792 = vst.msk [vmem:[%s532 + $0x320] sm:$0xff] %vm3619, %v6664
      %6793 = vst.msk [vmem:[%s532 + $0x328] sm:$0xff] %vm3619, %v6665
      %6794 = vst.msk [vmem:[%s532 + $0x330] sm:$0xff] %vm3619, %v6666
      %6795 = vst.msk [vmem:[%s532 + $0x338] sm:$0xff] %vm3619, %v6667
      %6796 = vst.msk [vmem:[%s532 + $0x340] sm:$0xff] %vm3619, %v6668
      %6797 = vst.msk [vmem:[%s532 + $0x348] sm:$0xff] %vm3619, %v6669
      %6798 = vst.msk [vmem:[%s532 + $0x350] sm:$0xff] %vm3619, %v6670
      %6799 = vst.msk [vmem:[%s532 + $0x358] sm:$0xff] %vm3619, %v6671
      %6800 = vst.msk [vmem:[%s532 + $0x360] sm:$0xff] %vm3619, %v6672
      %6801 = vst.msk [vmem:[%s532 + $0x368] sm:$0xff] %vm3619, %v6673
      %6802 = vst.msk [vmem:[%s532 + $0x370] sm:$0xff] %vm3619, %v6674
      %6803 = vst.msk [vmem:[%s532 + $0x378] sm:$0xff] %vm3619, %v6675
      %6804 = vst.msk [vmem:[%s532 + $0x380] sm:$0xff] %vm3619, %v6676
      %6805 = vst.msk [vmem:[%s532 + $0x388] sm:$0xff] %vm3619, %v6677
      %6806 = vst.msk [vmem:[%s532 + $0x390] sm:$0xff] %vm3619, %v6678
      %6807 = vst.msk [vmem:[%s532 + $0x398] sm:$0xff] %vm3619, %v6679
      %6808 = vst.msk [vmem:[%s532 + $0x3a0] sm:$0xff] %vm3619, %v6680
      %6809 = vst.msk [vmem:[%s532 + $0x3a8] sm:$0xff] %vm3619, %v6681
      %6810 = vst.msk [vmem:[%s532 + $0x3b0] sm:$0xff] %vm3619, %v6682
      %6811 = vst.msk [vmem:[%s532 + $0x3b8] sm:$0xff] %vm3619, %v6683
      %6812 = vst.msk [vmem:[%s532 + $0x3c0] sm:$0xff] %vm3619, %v6684
      %6813 = vst.msk [vmem:[%s532 + $0x3c8] sm:$0xff] %vm3619, %v6685
      %6814 = vst.msk [vmem:[%s532 + $0x3d0] sm:$0xff] %vm3619, %v6686
      %6815 = vst.msk [vmem:[%s532 + $0x3d8] sm:$0xff] %vm3619, %v6687
      %6816 = vst.msk [vmem:[%s532 + $0x3e0] sm:$0xff] %vm3619, %v6688
      %6817 = vst.msk [vmem:[%s532 + $0x3e8] sm:$0xff] %vm3619, %v6689
      %6818 = vst.msk [vmem:[%s532 + $0x3f0] sm:$0xff] %vm3619, %v6690
      %6819 = vst.msk [vmem:[%s532 + $0x3f8] sm:$0xff] %vm3619, %v6691
      %v6820 = vld [vmem:[%s538] sm:$0xff]
      %v6821 = vld [vmem:[%s538 + $0x8] sm:$0xff]
      %v6822 = vld [vmem:[%s538 + $0x10] sm:$0xff]
      %v6823 = vld [vmem:[%s538 + $0x18] sm:$0xff]
      %v6824 = vld [vmem:[%s538 + $0x20] sm:$0xff]
      %v6825 = vld [vmem:[%s538 + $0x28] sm:$0xff]
      %v6826 = vld [vmem:[%s538 + $0x30] sm:$0xff]
      %v6827 = vld [vmem:[%s538 + $0x38] sm:$0xff]
      %v6828 = vld [vmem:[%s538 + $0x40] sm:$0xff]
      %v6829 = vld [vmem:[%s538 + $0x48] sm:$0xff]
      %v6830 = vld [vmem:[%s538 + $0x50] sm:$0xff]
      %v6831 = vld [vmem:[%s538 + $0x58] sm:$0xff]
      %v6832 = vld [vmem:[%s538 + $0x60] sm:$0xff]
      %v6833 = vld [vmem:[%s538 + $0x68] sm:$0xff]
      %v6834 = vld [vmem:[%s538 + $0x70] sm:$0xff]
      %v6835 = vld [vmem:[%s538 + $0x78] sm:$0xff]
      %v6836 = vld [vmem:[%s538 + $0x80] sm:$0xff]
      %v6837 = vld [vmem:[%s538 + $0x88] sm:$0xff]
      %v6838 = vld [vmem:[%s538 + $0x90] sm:$0xff]
      %v6839 = vld [vmem:[%s538 + $0x98] sm:$0xff]
      %v6840 = vld [vmem:[%s538 + $0xa0] sm:$0xff]
      %v6841 = vld [vmem:[%s538 + $0xa8] sm:$0xff]
      %v6842 = vld [vmem:[%s538 + $0xb0] sm:$0xff]
      %v6843 = vld [vmem:[%s538 + $0xb8] sm:$0xff]
      %v6844 = vld [vmem:[%s538 + $0xc0] sm:$0xff]
      %v6845 = vld [vmem:[%s538 + $0xc8] sm:$0xff]
      %v6846 = vld [vmem:[%s538 + $0xd0] sm:$0xff]
      %v6847 = vld [vmem:[%s538 + $0xd8] sm:$0xff]
      %v6848 = vld [vmem:[%s538 + $0xe0] sm:$0xff]
      %v6849 = vld [vmem:[%s538 + $0xe8] sm:$0xff]
      %v6850 = vld [vmem:[%s538 + $0xf0] sm:$0xff]
      %v6851 = vld [vmem:[%s538 + $0xf8] sm:$0xff]
      %v6852 = vld [vmem:[%s538 + $0x100] sm:$0xff]
      %v6853 = vld [vmem:[%s538 + $0x108] sm:$0xff]
      %v6854 = vld [vmem:[%s538 + $0x110] sm:$0xff]
      %v6855 = vld [vmem:[%s538 + $0x118] sm:$0xff]
      %v6856 = vld [vmem:[%s538 + $0x120] sm:$0xff]
      %v6857 = vld [vmem:[%s538 + $0x128] sm:$0xff]
      %v6858 = vld [vmem:[%s538 + $0x130] sm:$0xff]
      %v6859 = vld [vmem:[%s538 + $0x138] sm:$0xff]
      %v6860 = vld [vmem:[%s538 + $0x140] sm:$0xff]
      %v6861 = vld [vmem:[%s538 + $0x148] sm:$0xff]
      %v6862 = vld [vmem:[%s538 + $0x150] sm:$0xff]
      %v6863 = vld [vmem:[%s538 + $0x158] sm:$0xff]
      %v6864 = vld [vmem:[%s538 + $0x160] sm:$0xff]
      %v6865 = vld [vmem:[%s538 + $0x168] sm:$0xff]
      %v6866 = vld [vmem:[%s538 + $0x170] sm:$0xff]
      %v6867 = vld [vmem:[%s538 + $0x178] sm:$0xff]
      %v6868 = vld [vmem:[%s538 + $0x180] sm:$0xff]
      %v6869 = vld [vmem:[%s538 + $0x188] sm:$0xff]
      %v6870 = vld [vmem:[%s538 + $0x190] sm:$0xff]
      %v6871 = vld [vmem:[%s538 + $0x198] sm:$0xff]
      %v6872 = vld [vmem:[%s538 + $0x1a0] sm:$0xff]
      %v6873 = vld [vmem:[%s538 + $0x1a8] sm:$0xff]
      %v6874 = vld [vmem:[%s538 + $0x1b0] sm:$0xff]
      %v6875 = vld [vmem:[%s538 + $0x1b8] sm:$0xff]
      %v6876 = vld [vmem:[%s538 + $0x1c0] sm:$0xff]
      %v6877 = vld [vmem:[%s538 + $0x1c8] sm:$0xff]
      %v6878 = vld [vmem:[%s538 + $0x1d0] sm:$0xff]
      %v6879 = vld [vmem:[%s538 + $0x1d8] sm:$0xff]
      %v6880 = vld [vmem:[%s538 + $0x1e0] sm:$0xff]
      %v6881 = vld [vmem:[%s538 + $0x1e8] sm:$0xff]
      %v6882 = vld [vmem:[%s538 + $0x1f0] sm:$0xff]
      %v6883 = vld [vmem:[%s538 + $0x1f8] sm:$0xff]
      %v6884 = vld [vmem:[%s538 + $0x200] sm:$0xff]
      %v6885 = vld [vmem:[%s538 + $0x208] sm:$0xff]
      %v6886 = vld [vmem:[%s538 + $0x210] sm:$0xff]
      %v6887 = vld [vmem:[%s538 + $0x218] sm:$0xff]
      %v6888 = vld [vmem:[%s538 + $0x220] sm:$0xff]
      %v6889 = vld [vmem:[%s538 + $0x228] sm:$0xff]
      %v6890 = vld [vmem:[%s538 + $0x230] sm:$0xff]
      %v6891 = vld [vmem:[%s538 + $0x238] sm:$0xff]
      %v6892 = vld [vmem:[%s538 + $0x240] sm:$0xff]
      %v6893 = vld [vmem:[%s538 + $0x248] sm:$0xff]
      %v6894 = vld [vmem:[%s538 + $0x250] sm:$0xff]
      %v6895 = vld [vmem:[%s538 + $0x258] sm:$0xff]
      %v6896 = vld [vmem:[%s538 + $0x260] sm:$0xff]
      %v6897 = vld [vmem:[%s538 + $0x268] sm:$0xff]
      %v6898 = vld [vmem:[%s538 + $0x270] sm:$0xff]
      %v6899 = vld [vmem:[%s538 + $0x278] sm:$0xff]
      %v6900 = vld [vmem:[%s538 + $0x280] sm:$0xff]
      %v6901 = vld [vmem:[%s538 + $0x288] sm:$0xff]
      %v6902 = vld [vmem:[%s538 + $0x290] sm:$0xff]
      %v6903 = vld [vmem:[%s538 + $0x298] sm:$0xff]
      %v6904 = vld [vmem:[%s538 + $0x2a0] sm:$0xff]
      %v6905 = vld [vmem:[%s538 + $0x2a8] sm:$0xff]
      %v6906 = vld [vmem:[%s538 + $0x2b0] sm:$0xff]
      %v6907 = vld [vmem:[%s538 + $0x2b8] sm:$0xff]
      %v6908 = vld [vmem:[%s538 + $0x2c0] sm:$0xff]
      %v6909 = vld [vmem:[%s538 + $0x2c8] sm:$0xff]
      %v6910 = vld [vmem:[%s538 + $0x2d0] sm:$0xff]
      %v6911 = vld [vmem:[%s538 + $0x2d8] sm:$0xff]
      %v6912 = vld [vmem:[%s538 + $0x2e0] sm:$0xff]
      %v6913 = vld [vmem:[%s538 + $0x2e8] sm:$0xff]
      %v6914 = vld [vmem:[%s538 + $0x2f0] sm:$0xff]
      %v6915 = vld [vmem:[%s538 + $0x2f8] sm:$0xff]
      %v6916 = vld [vmem:[%s538 + $0x300] sm:$0xff]
      %v6917 = vld [vmem:[%s538 + $0x308] sm:$0xff]
      %v6918 = vld [vmem:[%s538 + $0x310] sm:$0xff]
      %v6919 = vld [vmem:[%s538 + $0x318] sm:$0xff]
      %v6920 = vld [vmem:[%s538 + $0x320] sm:$0xff]
      %v6921 = vld [vmem:[%s538 + $0x328] sm:$0xff]
      %v6922 = vld [vmem:[%s538 + $0x330] sm:$0xff]
      %v6923 = vld [vmem:[%s538 + $0x338] sm:$0xff]
      %v6924 = vld [vmem:[%s538 + $0x340] sm:$0xff]
      %v6925 = vld [vmem:[%s538 + $0x348] sm:$0xff]
      %v6926 = vld [vmem:[%s538 + $0x350] sm:$0xff]
      %v6927 = vld [vmem:[%s538 + $0x358] sm:$0xff]
      %v6928 = vld [vmem:[%s538 + $0x360] sm:$0xff]
      %v6929 = vld [vmem:[%s538 + $0x368] sm:$0xff]
      %v6930 = vld [vmem:[%s538 + $0x370] sm:$0xff]
      %v6931 = vld [vmem:[%s538 + $0x378] sm:$0xff]
      %v6932 = vld [vmem:[%s538 + $0x380] sm:$0xff]
      %v6933 = vld [vmem:[%s538 + $0x388] sm:$0xff]
      %v6934 = vld [vmem:[%s538 + $0x390] sm:$0xff]
      %v6935 = vld [vmem:[%s538 + $0x398] sm:$0xff]
      %v6936 = vld [vmem:[%s538 + $0x3a0] sm:$0xff]
      %v6937 = vld [vmem:[%s538 + $0x3a8] sm:$0xff]
      %v6938 = vld [vmem:[%s538 + $0x3b0] sm:$0xff]
      %v6939 = vld [vmem:[%s538 + $0x3b8] sm:$0xff]
      %v6940 = vld [vmem:[%s538 + $0x3c0] sm:$0xff]
      %v6941 = vld [vmem:[%s538 + $0x3c8] sm:$0xff]
      %v6942 = vld [vmem:[%s538 + $0x3d0] sm:$0xff]
      %v6943 = vld [vmem:[%s538 + $0x3d8] sm:$0xff]
      %v6944 = vld [vmem:[%s538 + $0x3e0] sm:$0xff]
      %v6945 = vld [vmem:[%s538 + $0x3e8] sm:$0xff]
      %v6946 = vld [vmem:[%s538 + $0x3f0] sm:$0xff]
      %v6947 = vld [vmem:[%s538 + $0x3f8] sm:$0xff]
      %v6948 = vlog2.pop %v5028
      %v6949 = vmul.f32 %v6948, 0.6931472
      %v6950 = vlog2.pop %v5029
      %v6951 = vmul.f32 %v6950, 0.6931472
      %v6952 = vlog2.pop %v5030
      %v6953 = vmul.f32 %v6952, 0.6931472
      %v6954 = vlog2.pop %v5031
      %v6955 = vmul.f32 %v6954, 0.6931472
      %v6956 = vlog2.pop %v5032
      %v6957 = vmul.f32 %v6956, 0.6931472
      %v6958 = vlog2.pop %v5033
      %v6959 = vmul.f32 %v6958, 0.6931472
      %v6960 = vlog2.pop %v5034
      %v6961 = vmul.f32 %v6960, 0.6931472
      %v6962 = vlog2.pop %v5035
      %v6963 = vmul.f32 %v6962, 0.6931472
      %v6964 = vlog2.pop %v5036
      %v6965 = vmul.f32 %v6964, 0.6931472
      %v6966 = vlog2.pop %v5037
      %v6967 = vmul.f32 %v6966, 0.6931472
      %v6968 = vlog2.pop %v5038
      %v6969 = vmul.f32 %v6968, 0.6931472
      %v6970 = vlog2.pop %v5039
      %v6971 = vmul.f32 %v6970, 0.6931472
      %v6972 = vlog2.pop %v5040
      %v6973 = vmul.f32 %v6972, 0.6931472
      %v6974 = vlog2.pop %v5041
      %v6975 = vmul.f32 %v6974, 0.6931472
      %v6976 = vlog2.pop %v5042
      %v6977 = vmul.f32 %v6976, 0.6931472
      %v6978 = vlog2.pop %v5043
      %v6979 = vmul.f32 %v6978, 0.6931472
      %v6980 = vlog2.pop %v5044
      %v6981 = vmul.f32 %v6980, 0.6931472
      %v6982 = vlog2.pop %v5045
      %v6983 = vmul.f32 %v6982, 0.6931472
      %v6984 = vlog2.pop %v5046
      %v6985 = vmul.f32 %v6984, 0.6931472
      %v6986 = vlog2.pop %v5047
      %v6987 = vmul.f32 %v6986, 0.6931472
      %v6988 = vlog2.pop %v5048
      %v6989 = vmul.f32 %v6988, 0.6931472
      %v6990 = vlog2.pop %v5049
      %v6991 = vmul.f32 %v6990, 0.6931472
      %v6992 = vlog2.pop %v5050
      %v6993 = vmul.f32 %v6992, 0.6931472
      %v6994 = vlog2.pop %v5051
      %v6995 = vmul.f32 %v6994, 0.6931472
      %v6996 = vlog2.pop %v5052
      %v6997 = vmul.f32 %v6996, 0.6931472
      %v6998 = vlog2.pop %v5053
      %v6999 = vmul.f32 %v6998, 0.6931472
      %v7000 = vlog2.pop %v5054
      %v7001 = vmul.f32 %v7000, 0.6931472
      %v7002 = vlog2.pop %v5055
      %v7003 = vmul.f32 %v7002, 0.6931472
      %v7004 = vlog2.pop %v5056
      %v7005 = vmul.f32 %v7004, 0.6931472
      %v7006 = vlog2.pop %v5057
      %v7007 = vmul.f32 %v7006, 0.6931472
      %v7008 = vlog2.pop %v5058
      %v7009 = vmul.f32 %v7008, 0.6931472
      %v7010 = vlog2.pop %v5059
      %v7011 = vmul.f32 %v7010, 0.6931472
      %v7012 = vlog2.pop %v5060
      %v7013 = vmul.f32 %v7012, 0.6931472
      %v7014 = vlog2.pop %v5061
      %v7015 = vmul.f32 %v7014, 0.6931472
      %v7016 = vlog2.pop %v5062
      %v7017 = vmul.f32 %v7016, 0.6931472
      %v7018 = vlog2.pop %v5063
      %v7019 = vmul.f32 %v7018, 0.6931472
      %v7020 = vlog2.pop %v5064
      %v7021 = vmul.f32 %v7020, 0.6931472
      %v7022 = vlog2.pop %v5065
      %v7023 = vmul.f32 %v7022, 0.6931472
      %v7024 = vlog2.pop %v5066
      %v7025 = vmul.f32 %v7024, 0.6931472
      %v7026 = vlog2.pop %v5067
      %v7027 = vmul.f32 %v7026, 0.6931472
      %v7028 = vlog2.pop %v5068
      %v7029 = vmul.f32 %v7028, 0.6931472
      %v7030 = vlog2.pop %v5069
      %v7031 = vmul.f32 %v7030, 0.6931472
      %v7032 = vlog2.pop %v5070
      %v7033 = vmul.f32 %v7032, 0.6931472
      %v7034 = vlog2.pop %v5071
      %v7035 = vmul.f32 %v7034, 0.6931472
      %v7036 = vlog2.pop %v5072
      %v7037 = vmul.f32 %v7036, 0.6931472
      %v7038 = vlog2.pop %v5073
      %v7039 = vmul.f32 %v7038, 0.6931472
      %v7040 = vlog2.pop %v5074
      %v7041 = vmul.f32 %v7040, 0.6931472
      %v7042 = vlog2.pop %v5075
      %v7043 = vmul.f32 %v7042, 0.6931472
      %v7044 = vlog2.pop %v5076
      %v7045 = vmul.f32 %v7044, 0.6931472
      %v7046 = vlog2.pop %v5077
      %v7047 = vmul.f32 %v7046, 0.6931472
      %v7048 = vlog2.pop %v5078
      %v7049 = vmul.f32 %v7048, 0.6931472
      %v7050 = vlog2.pop %v5079
      %v7051 = vmul.f32 %v7050, 0.6931472
      %v7052 = vlog2.pop %v5080
      %v7053 = vmul.f32 %v7052, 0.6931472
      %v7054 = vlog2.pop %v5081
      %v7055 = vmul.f32 %v7054, 0.6931472
      %v7056 = vlog2.pop %v5082
      %v7057 = vmul.f32 %v7056, 0.6931472
      %v7058 = vlog2.pop %v5083
      %v7059 = vmul.f32 %v7058, 0.6931472
      %v7060 = vlog2.pop %v5084
      %v7061 = vmul.f32 %v7060, 0.6931472
      %v7062 = vlog2.pop %v5085
      %v7063 = vmul.f32 %v7062, 0.6931472
      %v7064 = vlog2.pop %v5086
      %v7065 = vmul.f32 %v7064, 0.6931472
      %v7066 = vlog2.pop %v5087
      %v7067 = vmul.f32 %v7066, 0.6931472
      %v7068 = vlog2.pop %v5088
      %v7069 = vmul.f32 %v7068, 0.6931472
      %v7070 = vlog2.pop %v5089
      %v7071 = vmul.f32 %v7070, 0.6931472
      %v7072 = vlog2.pop %v5090
      %v7073 = vmul.f32 %v7072, 0.6931472
      %v7074 = vlog2.pop %v5091
      %v7075 = vmul.f32 %v7074, 0.6931472
      %v7076 = vlog2.pop %v5092
      %v7077 = vmul.f32 %v7076, 0.6931472
      %v7078 = vlog2.pop %v5093
      %v7079 = vmul.f32 %v7078, 0.6931472
      %v7080 = vlog2.pop %v5094
      %v7081 = vmul.f32 %v7080, 0.6931472
      %v7082 = vlog2.pop %v5095
      %v7083 = vmul.f32 %v7082, 0.6931472
      %v7084 = vlog2.pop %v5096
      %v7085 = vmul.f32 %v7084, 0.6931472
      %v7086 = vlog2.pop %v5097
      %v7087 = vmul.f32 %v7086, 0.6931472
      %v7088 = vlog2.pop %v5098
      %v7089 = vmul.f32 %v7088, 0.6931472
      %v7090 = vlog2.pop %v5099
      %v7091 = vmul.f32 %v7090, 0.6931472
      %v7092 = vlog2.pop %v5100
      %v7093 = vmul.f32 %v7092, 0.6931472
      %v7094 = vlog2.pop %v5101
      %v7095 = vmul.f32 %v7094, 0.6931472
      %v7096 = vlog2.pop %v5102
      %v7097 = vmul.f32 %v7096, 0.6931472
      %v7098 = vlog2.pop %v5103
      %v7099 = vmul.f32 %v7098, 0.6931472
      %v7100 = vlog2.pop %v5104
      %v7101 = vmul.f32 %v7100, 0.6931472
      %v7102 = vlog2.pop %v5105
      %v7103 = vmul.f32 %v7102, 0.6931472
      %v7104 = vlog2.pop %v5106
      %v7105 = vmul.f32 %v7104, 0.6931472
      %v7106 = vlog2.pop %v5107
      %v7107 = vmul.f32 %v7106, 0.6931472
      %v7108 = vlog2.pop %v5108
      %v7109 = vmul.f32 %v7108, 0.6931472
      %v7110 = vlog2.pop %v5109
      %v7111 = vmul.f32 %v7110, 0.6931472
      %v7112 = vlog2.pop %v5110
      %v7113 = vmul.f32 %v7112, 0.6931472
      %v7114 = vlog2.pop %v5111
      %v7115 = vmul.f32 %v7114, 0.6931472
      %v7116 = vlog2.pop %v5112
      %v7117 = vmul.f32 %v7116, 0.6931472
      %v7118 = vlog2.pop %v5113
      %v7119 = vmul.f32 %v7118, 0.6931472
      %v7120 = vlog2.pop %v5114
      %v7121 = vmul.f32 %v7120, 0.6931472
      %v7122 = vlog2.pop %v5115
      %v7123 = vmul.f32 %v7122, 0.6931472
      %v7124 = vlog2.pop %v5116
      %v7125 = vmul.f32 %v7124, 0.6931472
      %v7126 = vlog2.pop %v5117
      %v7127 = vmul.f32 %v7126, 0.6931472
      %v7128 = vlog2.pop %v5118
      %v7129 = vmul.f32 %v7128, 0.6931472
      %v7130 = vlog2.pop %v5119
      %v7131 = vmul.f32 %v7130, 0.6931472
      %v7132 = vlog2.pop %v5120
      %v7133 = vmul.f32 %v7132, 0.6931472
      %v7134 = vlog2.pop %v5121
      %v7135 = vmul.f32 %v7134, 0.6931472
      %v7136 = vlog2.pop %v5122
      %v7137 = vmul.f32 %v7136, 0.6931472
      %v7138 = vlog2.pop %v5123
      %v7139 = vmul.f32 %v7138, 0.6931472
      %v7140 = vlog2.pop %v5124
      %v7141 = vmul.f32 %v7140, 0.6931472
      %v7142 = vlog2.pop %v5125
      %v7143 = vmul.f32 %v7142, 0.6931472
      %v7144 = vlog2.pop %v5126
      %v7145 = vmul.f32 %v7144, 0.6931472
      %v7146 = vlog2.pop %v5127
      %v7147 = vmul.f32 %v7146, 0.6931472
      %v7148 = vlog2.pop %v5128
      %v7149 = vmul.f32 %v7148, 0.6931472
      %v7150 = vlog2.pop %v5129
      %v7151 = vmul.f32 %v7150, 0.6931472
      %v7152 = vlog2.pop %v5130
      %v7153 = vmul.f32 %v7152, 0.6931472
      %v7154 = vlog2.pop %v5131
      %v7155 = vmul.f32 %v7154, 0.6931472
      %v7156 = vlog2.pop %v5132
      %v7157 = vmul.f32 %v7156, 0.6931472
      %v7158 = vlog2.pop %v5133
      %v7159 = vmul.f32 %v7158, 0.6931472
      %v7160 = vlog2.pop %v5134
      %v7161 = vmul.f32 %v7160, 0.6931472
      %v7162 = vlog2.pop %v5135
      %v7163 = vmul.f32 %v7162, 0.6931472
      %v7164 = vlog2.pop %v5136
      %v7165 = vmul.f32 %v7164, 0.6931472
      %v7166 = vlog2.pop %v5137
      %v7167 = vmul.f32 %v7166, 0.6931472
      %v7168 = vlog2.pop %v5138
      %v7169 = vmul.f32 %v7168, 0.6931472
      %v7170 = vlog2.pop %v5139
      %v7171 = vmul.f32 %v7170, 0.6931472
      %v7172 = vlog2.pop %v5140
      %v7173 = vmul.f32 %v7172, 0.6931472
      %v7174 = vlog2.pop %v5141
      %v7175 = vmul.f32 %v7174, 0.6931472
      %v7176 = vlog2.pop %v5142
      %v7177 = vmul.f32 %v7176, 0.6931472
      %v7178 = vlog2.pop %v5143
      %v7179 = vmul.f32 %v7178, 0.6931472
      %v7180 = vlog2.pop %v5144
      %v7181 = vmul.f32 %v7180, 0.6931472
      %v7182 = vlog2.pop %v5145
      %v7183 = vmul.f32 %v7182, 0.6931472
      %v7184 = vlog2.pop %v5146
      %v7185 = vmul.f32 %v7184, 0.6931472
      %v7186 = vlog2.pop %v5147
      %v7187 = vmul.f32 %v7186, 0.6931472
      %v7188 = vlog2.pop %v5148
      %v7189 = vmul.f32 %v7188, 0.6931472
      %v7190 = vlog2.pop %v5149
      %v7191 = vmul.f32 %v7190, 0.6931472
      %v7192 = vlog2.pop %v5150
      %v7193 = vmul.f32 %v7192, 0.6931472
      %v7194 = vlog2.pop %v5151
      %v7195 = vmul.f32 %v7194, 0.6931472
      %v7196 = vlog2.pop %v5152
      %v7197 = vmul.f32 %v7196, 0.6931472
      %v7198 = vlog2.pop %v5153
      %v7199 = vmul.f32 %v7198, 0.6931472
      %v7200 = vlog2.pop %v5154
      %v7201 = vmul.f32 %v7200, 0.6931472
      %v7202 = vlog2.pop %v5155
      %v7203 = vmul.f32 %v7202, 0.6931472
      %v7204 = vadd.f32 %v6820, %v6949
      %v7205 = vadd.f32 %v6821, %v6951
      %v7206 = vadd.f32 %v6822, %v6953
      %v7207 = vadd.f32 %v6823, %v6955
      %v7208 = vadd.f32 %v6824, %v6957
      %v7209 = vadd.f32 %v6825, %v6959
      %v7210 = vadd.f32 %v6826, %v6961
      %v7211 = vadd.f32 %v6827, %v6963
      %v7212 = vadd.f32 %v6828, %v6965
      %v7213 = vadd.f32 %v6829, %v6967
      %v7214 = vadd.f32 %v6830, %v6969
      %v7215 = vadd.f32 %v6831, %v6971
      %v7216 = vadd.f32 %v6832, %v6973
      %v7217 = vadd.f32 %v6833, %v6975
      %v7218 = vadd.f32 %v6834, %v6977
      %v7219 = vadd.f32 %v6835, %v6979
      %v7220 = vadd.f32 %v6836, %v6981
      %v7221 = vadd.f32 %v6837, %v6983
      %v7222 = vadd.f32 %v6838, %v6985
      %v7223 = vadd.f32 %v6839, %v6987
      %v7224 = vadd.f32 %v6840, %v6989
      %v7225 = vadd.f32 %v6841, %v6991
      %v7226 = vadd.f32 %v6842, %v6993
      %v7227 = vadd.f32 %v6843, %v6995
      %v7228 = vadd.f32 %v6844, %v6997
      %v7229 = vadd.f32 %v6845, %v6999
      %v7230 = vadd.f32 %v6846, %v7001
      %v7231 = vadd.f32 %v6847, %v7003
      %v7232 = vadd.f32 %v6848, %v7005
      %v7233 = vadd.f32 %v6849, %v7007
      %v7234 = vadd.f32 %v6850, %v7009
      %v7235 = vadd.f32 %v6851, %v7011
      %v7236 = vadd.f32 %v6852, %v7013
      %v7237 = vadd.f32 %v6853, %v7015
      %v7238 = vadd.f32 %v6854, %v7017
      %v7239 = vadd.f32 %v6855, %v7019
      %v7240 = vadd.f32 %v6856, %v7021
      %v7241 = vadd.f32 %v6857, %v7023
      %v7242 = vadd.f32 %v6858, %v7025
      %v7243 = vadd.f32 %v6859, %v7027
      %v7244 = vadd.f32 %v6860, %v7029
      %v7245 = vadd.f32 %v6861, %v7031
      %v7246 = vadd.f32 %v6862, %v7033
      %v7247 = vadd.f32 %v6863, %v7035
      %v7248 = vadd.f32 %v6864, %v7037
      %v7249 = vadd.f32 %v6865, %v7039
      %v7250 = vadd.f32 %v6866, %v7041
      %v7251 = vadd.f32 %v6867, %v7043
      %v7252 = vadd.f32 %v6868, %v7045
      %v7253 = vadd.f32 %v6869, %v7047
      %v7254 = vadd.f32 %v6870, %v7049
      %v7255 = vadd.f32 %v6871, %v7051
      %v7256 = vadd.f32 %v6872, %v7053
      %v7257 = vadd.f32 %v6873, %v7055
      %v7258 = vadd.f32 %v6874, %v7057
      %v7259 = vadd.f32 %v6875, %v7059
      %v7260 = vadd.f32 %v6876, %v7061
      %v7261 = vadd.f32 %v6877, %v7063
      %v7262 = vadd.f32 %v6878, %v7065
      %v7263 = vadd.f32 %v6879, %v7067
      %v7264 = vadd.f32 %v6880, %v7069
      %v7265 = vadd.f32 %v6881, %v7071
      %v7266 = vadd.f32 %v6882, %v7073
      %v7267 = vadd.f32 %v6883, %v7075
      %v7268 = vadd.f32 %v6884, %v7077
      %v7269 = vadd.f32 %v6885, %v7079
      %v7270 = vadd.f32 %v6886, %v7081
      %v7271 = vadd.f32 %v6887, %v7083
      %v7272 = vadd.f32 %v6888, %v7085
      %v7273 = vadd.f32 %v6889, %v7087
      %v7274 = vadd.f32 %v6890, %v7089
      %v7275 = vadd.f32 %v6891, %v7091
      %v7276 = vadd.f32 %v6892, %v7093
      %v7277 = vadd.f32 %v6893, %v7095
      %v7278 = vadd.f32 %v6894, %v7097
      %v7279 = vadd.f32 %v6895, %v7099
      %v7280 = vadd.f32 %v6896, %v7101
      %v7281 = vadd.f32 %v6897, %v7103
      %v7282 = vadd.f32 %v6898, %v7105
      %v7283 = vadd.f32 %v6899, %v7107
      %v7284 = vadd.f32 %v6900, %v7109
      %v7285 = vadd.f32 %v6901, %v7111
      %v7286 = vadd.f32 %v6902, %v7113
      %v7287 = vadd.f32 %v6903, %v7115
      %v7288 = vadd.f32 %v6904, %v7117
      %v7289 = vadd.f32 %v6905, %v7119
      %v7290 = vadd.f32 %v6906, %v7121
      %v7291 = vadd.f32 %v6907, %v7123
      %v7292 = vadd.f32 %v6908, %v7125
      %v7293 = vadd.f32 %v6909, %v7127
      %v7294 = vadd.f32 %v6910, %v7129
      %v7295 = vadd.f32 %v6911, %v7131
      %v7296 = vadd.f32 %v6912, %v7133
      %v7297 = vadd.f32 %v6913, %v7135
      %v7298 = vadd.f32 %v6914, %v7137
      %v7299 = vadd.f32 %v6915, %v7139
      %v7300 = vadd.f32 %v6916, %v7141
      %v7301 = vadd.f32 %v6917, %v7143
      %v7302 = vadd.f32 %v6918, %v7145
      %v7303 = vadd.f32 %v6919, %v7147
      %v7304 = vadd.f32 %v6920, %v7149
      %v7305 = vadd.f32 %v6921, %v7151
      %v7306 = vadd.f32 %v6922, %v7153
      %v7307 = vadd.f32 %v6923, %v7155
      %v7308 = vadd.f32 %v6924, %v7157
      %v7309 = vadd.f32 %v6925, %v7159
      %v7310 = vadd.f32 %v6926, %v7161
      %v7311 = vadd.f32 %v6927, %v7163
      %v7312 = vadd.f32 %v6928, %v7165
      %v7313 = vadd.f32 %v6929, %v7167
      %v7314 = vadd.f32 %v6930, %v7169
      %v7315 = vadd.f32 %v6931, %v7171
      %v7316 = vadd.f32 %v6932, %v7173
      %v7317 = vadd.f32 %v6933, %v7175
      %v7318 = vadd.f32 %v6934, %v7177
      %v7319 = vadd.f32 %v6935, %v7179
      %v7320 = vadd.f32 %v6936, %v7181
      %v7321 = vadd.f32 %v6937, %v7183
      %v7322 = vadd.f32 %v6938, %v7185
      %v7323 = vadd.f32 %v6939, %v7187
      %v7324 = vadd.f32 %v6940, %v7189
      %v7325 = vadd.f32 %v6941, %v7191
      %v7326 = vadd.f32 %v6942, %v7193
      %v7327 = vadd.f32 %v6943, %v7195
      %v7328 = vadd.f32 %v6944, %v7197
      %v7329 = vadd.f32 %v6945, %v7199
      %v7330 = vadd.f32 %v6946, %v7201
      %v7331 = vadd.f32 %v6947, %v7203
      %7332 = vst.msk [vmem:[%s538] sm:$0xff] %vm3619, %v7204
      %7333 = vst.msk [vmem:[%s538 + $0x8] sm:$0xff] %vm3619, %v7205
      %7334 = vst.msk [vmem:[%s538 + $0x10] sm:$0xff] %vm3619, %v7206
      %7335 = vst.msk [vmem:[%s538 + $0x18] sm:$0xff] %vm3619, %v7207
      %7336 = vst.msk [vmem:[%s538 + $0x20] sm:$0xff] %vm3619, %v7208
      %7337 = vst.msk [vmem:[%s538 + $0x28] sm:$0xff] %vm3619, %v7209
      %7338 = vst.msk [vmem:[%s538 + $0x30] sm:$0xff] %vm3619, %v7210
      %7339 = vst.msk [vmem:[%s538 + $0x38] sm:$0xff] %vm3619, %v7211
      %7340 = vst.msk [vmem:[%s538 + $0x40] sm:$0xff] %vm3619, %v7212
      %7341 = vst.msk [vmem:[%s538 + $0x48] sm:$0xff] %vm3619, %v7213
      %7342 = vst.msk [vmem:[%s538 + $0x50] sm:$0xff] %vm3619, %v7214
      %7343 = vst.msk [vmem:[%s538 + $0x58] sm:$0xff] %vm3619, %v7215
      %7344 = vst.msk [vmem:[%s538 + $0x60] sm:$0xff] %vm3619, %v7216
      %7345 = vst.msk [vmem:[%s538 + $0x68] sm:$0xff] %vm3619, %v7217
      %7346 = vst.msk [vmem:[%s538 + $0x70] sm:$0xff] %vm3619, %v7218
      %7347 = vst.msk [vmem:[%s538 + $0x78] sm:$0xff] %vm3619, %v7219
      %7348 = vst.msk [vmem:[%s538 + $0x80] sm:$0xff] %vm3619, %v7220
      %7349 = vst.msk [vmem:[%s538 + $0x88] sm:$0xff] %vm3619, %v7221
      %7350 = vst.msk [vmem:[%s538 + $0x90] sm:$0xff] %vm3619, %v7222
      %7351 = vst.msk [vmem:[%s538 + $0x98] sm:$0xff] %vm3619, %v7223
      %7352 = vst.msk [vmem:[%s538 + $0xa0] sm:$0xff] %vm3619, %v7224
      %7353 = vst.msk [vmem:[%s538 + $0xa8] sm:$0xff] %vm3619, %v7225
      %7354 = vst.msk [vmem:[%s538 + $0xb0] sm:$0xff] %vm3619, %v7226
      %7355 = vst.msk [vmem:[%s538 + $0xb8] sm:$0xff] %vm3619, %v7227
      %7356 = vst.msk [vmem:[%s538 + $0xc0] sm:$0xff] %vm3619, %v7228
      %7357 = vst.msk [vmem:[%s538 + $0xc8] sm:$0xff] %vm3619, %v7229
      %7358 = vst.msk [vmem:[%s538 + $0xd0] sm:$0xff] %vm3619, %v7230
      %7359 = vst.msk [vmem:[%s538 + $0xd8] sm:$0xff] %vm3619, %v7231
      %7360 = vst.msk [vmem:[%s538 + $0xe0] sm:$0xff] %vm3619, %v7232
      %7361 = vst.msk [vmem:[%s538 + $0xe8] sm:$0xff] %vm3619, %v7233
      %7362 = vst.msk [vmem:[%s538 + $0xf0] sm:$0xff] %vm3619, %v7234
      %7363 = vst.msk [vmem:[%s538 + $0xf8] sm:$0xff] %vm3619, %v7235
      %7364 = vst.msk [vmem:[%s538 + $0x100] sm:$0xff] %vm3619, %v7236
      %7365 = vst.msk [vmem:[%s538 + $0x108] sm:$0xff] %vm3619, %v7237
      %7366 = vst.msk [vmem:[%s538 + $0x110] sm:$0xff] %vm3619, %v7238
      %7367 = vst.msk [vmem:[%s538 + $0x118] sm:$0xff] %vm3619, %v7239
      %7368 = vst.msk [vmem:[%s538 + $0x120] sm:$0xff] %vm3619, %v7240
      %7369 = vst.msk [vmem:[%s538 + $0x128] sm:$0xff] %vm3619, %v7241
      %7370 = vst.msk [vmem:[%s538 + $0x130] sm:$0xff] %vm3619, %v7242
      %7371 = vst.msk [vmem:[%s538 + $0x138] sm:$0xff] %vm3619, %v7243
      %7372 = vst.msk [vmem:[%s538 + $0x140] sm:$0xff] %vm3619, %v7244
      %7373 = vst.msk [vmem:[%s538 + $0x148] sm:$0xff] %vm3619, %v7245
      %7374 = vst.msk [vmem:[%s538 + $0x150] sm:$0xff] %vm3619, %v7246
      %7375 = vst.msk [vmem:[%s538 + $0x158] sm:$0xff] %vm3619, %v7247
      %7376 = vst.msk [vmem:[%s538 + $0x160] sm:$0xff] %vm3619, %v7248
      %7377 = vst.msk [vmem:[%s538 + $0x168] sm:$0xff] %vm3619, %v7249
      %7378 = vst.msk [vmem:[%s538 + $0x170] sm:$0xff] %vm3619, %v7250
      %7379 = vst.msk [vmem:[%s538 + $0x178] sm:$0xff] %vm3619, %v7251
      %7380 = vst.msk [vmem:[%s538 + $0x180] sm:$0xff] %vm3619, %v7252
      %7381 = vst.msk [vmem:[%s538 + $0x188] sm:$0xff] %vm3619, %v7253
      %7382 = vst.msk [vmem:[%s538 + $0x190] sm:$0xff] %vm3619, %v7254
      %7383 = vst.msk [vmem:[%s538 + $0x198] sm:$0xff] %vm3619, %v7255
      %7384 = vst.msk [vmem:[%s538 + $0x1a0] sm:$0xff] %vm3619, %v7256
      %7385 = vst.msk [vmem:[%s538 + $0x1a8] sm:$0xff] %vm3619, %v7257
      %7386 = vst.msk [vmem:[%s538 + $0x1b0] sm:$0xff] %vm3619, %v7258
      %7387 = vst.msk [vmem:[%s538 + $0x1b8] sm:$0xff] %vm3619, %v7259
      %7388 = vst.msk [vmem:[%s538 + $0x1c0] sm:$0xff] %vm3619, %v7260
      %7389 = vst.msk [vmem:[%s538 + $0x1c8] sm:$0xff] %vm3619, %v7261
      %7390 = vst.msk [vmem:[%s538 + $0x1d0] sm:$0xff] %vm3619, %v7262
      %7391 = vst.msk [vmem:[%s538 + $0x1d8] sm:$0xff] %vm3619, %v7263
      %7392 = vst.msk [vmem:[%s538 + $0x1e0] sm:$0xff] %vm3619, %v7264
      %7393 = vst.msk [vmem:[%s538 + $0x1e8] sm:$0xff] %vm3619, %v7265
      %7394 = vst.msk [vmem:[%s538 + $0x1f0] sm:$0xff] %vm3619, %v7266
      %7395 = vst.msk [vmem:[%s538 + $0x1f8] sm:$0xff] %vm3619, %v7267
      %7396 = vst.msk [vmem:[%s538 + $0x200] sm:$0xff] %vm3619, %v7268
      %7397 = vst.msk [vmem:[%s538 + $0x208] sm:$0xff] %vm3619, %v7269
      %7398 = vst.msk [vmem:[%s538 + $0x210] sm:$0xff] %vm3619, %v7270
      %7399 = vst.msk [vmem:[%s538 + $0x218] sm:$0xff] %vm3619, %v7271
      %7400 = vst.msk [vmem:[%s538 + $0x220] sm:$0xff] %vm3619, %v7272
      %7401 = vst.msk [vmem:[%s538 + $0x228] sm:$0xff] %vm3619, %v7273
      %7402 = vst.msk [vmem:[%s538 + $0x230] sm:$0xff] %vm3619, %v7274
      %7403 = vst.msk [vmem:[%s538 + $0x238] sm:$0xff] %vm3619, %v7275
      %7404 = vst.msk [vmem:[%s538 + $0x240] sm:$0xff] %vm3619, %v7276
      %7405 = vst.msk [vmem:[%s538 + $0x248] sm:$0xff] %vm3619, %v7277
      %7406 = vst.msk [vmem:[%s538 + $0x250] sm:$0xff] %vm3619, %v7278
      %7407 = vst.msk [vmem:[%s538 + $0x258] sm:$0xff] %vm3619, %v7279
      %7408 = vst.msk [vmem:[%s538 + $0x260] sm:$0xff] %vm3619, %v7280
      %7409 = vst.msk [vmem:[%s538 + $0x268] sm:$0xff] %vm3619, %v7281
      %7410 = vst.msk [vmem:[%s538 + $0x270] sm:$0xff] %vm3619, %v7282
      %7411 = vst.msk [vmem:[%s538 + $0x278] sm:$0xff] %vm3619, %v7283
      %7412 = vst.msk [vmem:[%s538 + $0x280] sm:$0xff] %vm3619, %v7284
      %7413 = vst.msk [vmem:[%s538 + $0x288] sm:$0xff] %vm3619, %v7285
      %7414 = vst.msk [vmem:[%s538 + $0x290] sm:$0xff] %vm3619, %v7286
      %7415 = vst.msk [vmem:[%s538 + $0x298] sm:$0xff] %vm3619, %v7287
      %7416 = vst.msk [vmem:[%s538 + $0x2a0] sm:$0xff] %vm3619, %v7288
      %7417 = vst.msk [vmem:[%s538 + $0x2a8] sm:$0xff] %vm3619, %v7289
      %7418 = vst.msk [vmem:[%s538 + $0x2b0] sm:$0xff] %vm3619, %v7290
      %7419 = vst.msk [vmem:[%s538 + $0x2b8] sm:$0xff] %vm3619, %v7291
      %7420 = vst.msk [vmem:[%s538 + $0x2c0] sm:$0xff] %vm3619, %v7292
      %7421 = vst.msk [vmem:[%s538 + $0x2c8] sm:$0xff] %vm3619, %v7293
      %7422 = vst.msk [vmem:[%s538 + $0x2d0] sm:$0xff] %vm3619, %v7294
      %7423 = vst.msk [vmem:[%s538 + $0x2d8] sm:$0xff] %vm3619, %v7295
      %7424 = vst.msk [vmem:[%s538 + $0x2e0] sm:$0xff] %vm3619, %v7296
      %7425 = vst.msk [vmem:[%s538 + $0x2e8] sm:$0xff] %vm3619, %v7297
      %7426 = vst.msk [vmem:[%s538 + $0x2f0] sm:$0xff] %vm3619, %v7298
      %7427 = vst.msk [vmem:[%s538 + $0x2f8] sm:$0xff] %vm3619, %v7299
      %7428 = vst.msk [vmem:[%s538 + $0x300] sm:$0xff] %vm3619, %v7300
      %7429 = vst.msk [vmem:[%s538 + $0x308] sm:$0xff] %vm3619, %v7301
      %7430 = vst.msk [vmem:[%s538 + $0x310] sm:$0xff] %vm3619, %v7302
      %7431 = vst.msk [vmem:[%s538 + $0x318] sm:$0xff] %vm3619, %v7303
      %7432 = vst.msk [vmem:[%s538 + $0x320] sm:$0xff] %vm3619, %v7304
      %7433 = vst.msk [vmem:[%s538 + $0x328] sm:$0xff] %vm3619, %v7305
      %7434 = vst.msk [vmem:[%s538 + $0x330] sm:$0xff] %vm3619, %v7306
      %7435 = vst.msk [vmem:[%s538 + $0x338] sm:$0xff] %vm3619, %v7307
      %7436 = vst.msk [vmem:[%s538 + $0x340] sm:$0xff] %vm3619, %v7308
      %7437 = vst.msk [vmem:[%s538 + $0x348] sm:$0xff] %vm3619, %v7309
      %7438 = vst.msk [vmem:[%s538 + $0x350] sm:$0xff] %vm3619, %v7310
      %7439 = vst.msk [vmem:[%s538 + $0x358] sm:$0xff] %vm3619, %v7311
      %7440 = vst.msk [vmem:[%s538 + $0x360] sm:$0xff] %vm3619, %v7312
      %7441 = vst.msk [vmem:[%s538 + $0x368] sm:$0xff] %vm3619, %v7313
      %7442 = vst.msk [vmem:[%s538 + $0x370] sm:$0xff] %vm3619, %v7314
      %7443 = vst.msk [vmem:[%s538 + $0x378] sm:$0xff] %vm3619, %v7315
      %7444 = vst.msk [vmem:[%s538 + $0x380] sm:$0xff] %vm3619, %v7316
      %7445 = vst.msk [vmem:[%s538 + $0x388] sm:$0xff] %vm3619, %v7317
      %7446 = vst.msk [vmem:[%s538 + $0x390] sm:$0xff] %vm3619, %v7318
      %7447 = vst.msk [vmem:[%s538 + $0x398] sm:$0xff] %vm3619, %v7319
      %7448 = vst.msk [vmem:[%s538 + $0x3a0] sm:$0xff] %vm3619, %v7320
      %7449 = vst.msk [vmem:[%s538 + $0x3a8] sm:$0xff] %vm3619, %v7321
      %7450 = vst.msk [vmem:[%s538 + $0x3b0] sm:$0xff] %vm3619, %v7322
      %7451 = vst.msk [vmem:[%s538 + $0x3b8] sm:$0xff] %vm3619, %v7323
      %7452 = vst.msk [vmem:[%s538 + $0x3c0] sm:$0xff] %vm3619, %v7324
      %7453 = vst.msk [vmem:[%s538 + $0x3c8] sm:$0xff] %vm3619, %v7325
      %7454 = vst.msk [vmem:[%s538 + $0x3d0] sm:$0xff] %vm3619, %v7326
      %7455 = vst.msk [vmem:[%s538 + $0x3d8] sm:$0xff] %vm3619, %v7327
      %7456 = vst.msk [vmem:[%s538 + $0x3e0] sm:$0xff] %vm3619, %v7328
      %7457 = vst.msk [vmem:[%s538 + $0x3e8] sm:$0xff] %vm3619, %v7329
      %7458 = vst.msk [vmem:[%s538 + $0x3f0] sm:$0xff] %vm3619, %v7330
      %7459 = vst.msk [vmem:[%s538 + $0x3f8] sm:$0xff] %vm3619, %v7331
      %s7460 = smul.u32 128, %s25
      %p7461 = scmp.lt.s32.totalorder %s7460, 255
      %s7462 = scalar_select %p7461, %s7460, 255
      %s7463 = smul.addr %s7462, 8
      %s7464 = scalar_lea.vmem %s6, %s7463
      %s7465 = smul.u32 128, %s25
      %p7466 = scmp.lt.s32.totalorder %s7465, 255
      %s7467 = scalar_select %p7466, %s7465, 255
      %s7468 = smul.addr %s7467, 8
      %s7469 = scalar_lea.vmem %s7, %s7468
      %s7470 = smul.u32 128, %s25
      %p7471 = scmp.lt.s32.totalorder %s7470, 255
      %s7472 = scalar_select %p7471, %s7470, 255
      %s7473 = smul.addr %s7472, 8
      %s7474 = scalar_lea.vmem %s8, %s7473
      %s7475 = smul.u32 128, %s25
      %p7476 = scmp.lt.s32.totalorder %s7475, 255
      %s7477 = scalar_select %p7476, %s7475, 255
      %s7478 = smul.addr %s7477, 8
      %s7479 = scalar_lea.vmem %s9, %s7478
      // Predicated region
      $region49: #{_satnerf_terms_pallas.1} parent=43 // pred_check
        %p7480 = pneg %p219
      $region50: #{_satnerf_terms_pallas.1} parent=43 // pred_check_branch
        %7482 = sbr.rel (%p7480) target = $region52
      $region51: #{_satnerf_terms_pallas.1} parent=43 // pred_region
        %s7483 = smul.u32 128, %s25
      $region52: #{_satnerf_terms_pallas.1} parent=43 // pred_fallthru
        _
      // Predicated region
      $region53: #{_satnerf_terms_pallas.1} parent=43 // pred_check
        %p7484 = pneg %p245
      $region54: #{_satnerf_terms_pallas.1} parent=43 // pred_check_branch
        %7486 = sbr.rel (%p7484) target = $region56
      $region55: #{_satnerf_terms_pallas.1} parent=43 // pred_region
        %s7487 = smul.u32 128, %s25
      $region56: #{_satnerf_terms_pallas.1} parent=43 // pred_fallthru
        _
      // Predicated region
      $region57: #{_satnerf_terms_pallas.1} parent=43 // pred_check
        %p7488 = pneg %p271
      $region58: #{_satnerf_terms_pallas.1} parent=43 // pred_check_branch
        %7490 = sbr.rel (%p7488) target = $region60
      $region59: #{_satnerf_terms_pallas.1} parent=43 // pred_region
        %s7491 = smul.u32 128, %s25
      $region60: #{_satnerf_terms_pallas.1} parent=43 // pred_fallthru
        _
      // Predicated region
      $region61: #{_satnerf_terms_pallas.1} parent=43 // pred_check
        %p7492 = pneg %p297
      $region62: #{_satnerf_terms_pallas.1} parent=43 // pred_check_branch
        %7494 = sbr.rel (%p7492) target = $region64
      $region63: #{_satnerf_terms_pallas.1} parent=43 // pred_region
        %s7495 = smul.u32 128, %s25
      $region64: #{_satnerf_terms_pallas.1} parent=43 // pred_fallthru
        _
    $region44: #{_satnerf_terms_pallas.1} parent=5 // pred_fallthru
      _
    %p7496 = scmp.le.s32.totalorder 2, %s16
    // Predicated region
    $region65: #{_satnerf_terms_pallas.1} parent=5 // pred_check
      %p7497 = pneg %p7496
    $region66: #{_satnerf_terms_pallas.1} parent=5 // pred_check_branch
      %7499 = sbr.rel (%p7497) target = $region68
    $region67: #{_satnerf_terms_pallas.1} parent=5 // pred_region
      %s7500 = ssub.s32 %s16, 2
      // Predicated region
      $region69: #{_satnerf_terms_pallas.1} parent=67 // pred_check
        %p7501 = pneg %p225
      $region70: #{_satnerf_terms_pallas.1} parent=67 // pred_check_branch
        %7503 = sbr.rel (%p7501) target = $region72
      $region71: #{_satnerf_terms_pallas.1} parent=67 // pred_region
        %s7504 = smul.u32 128, %s27
        %p7505 = scmp.lt.s32.totalorder %s7504, 255
        %s7506 = scalar_select %p7505, %s7504, 255
        %s7507 = smul.addr %s7506, 8
        %s7508 = scalar_lea.vmem %s6, %s7507
      $region72: #{_satnerf_terms_pallas.1} parent=67 // pred_fallthru
        _
      // Predicated region
      $region73: #{_satnerf_terms_pallas.1} parent=67 // pred_check
        %p7509 = pneg %p251
      $region74: #{_satnerf_terms_pallas.1} parent=67 // pred_check_branch
        %7511 = sbr.rel (%p7509) target = $region76
      $region75: #{_satnerf_terms_pallas.1} parent=67 // pred_region
        %s7512 = smul.u32 128, %s27
        %p7513 = scmp.lt.s32.totalorder %s7512, 255
        %s7514 = scalar_select %p7513, %s7512, 255
        %s7515 = smul.addr %s7514, 8
        %s7516 = scalar_lea.vmem %s7, %s7515
      $region76: #{_satnerf_terms_pallas.1} parent=67 // pred_fallthru
        _
      // Predicated region
      $region77: #{_satnerf_terms_pallas.1} parent=67 // pred_check
        %p7517 = pneg %p277
      $region78: #{_satnerf_terms_pallas.1} parent=67 // pred_check_branch
        %7519 = sbr.rel (%p7517) target = $region80
      $region79: #{_satnerf_terms_pallas.1} parent=67 // pred_region
        %s7520 = smul.u32 128, %s27
        %p7521 = scmp.lt.s32.totalorder %s7520, 255
        %s7522 = scalar_select %p7521, %s7520, 255
        %s7523 = smul.addr %s7522, 8
        %s7524 = scalar_lea.vmem %s8, %s7523
      $region80: #{_satnerf_terms_pallas.1} parent=67 // pred_fallthru
        _
      // Predicated region
      $region81: #{_satnerf_terms_pallas.1} parent=67 // pred_check
        %p7525 = pneg %p303
      $region82: #{_satnerf_terms_pallas.1} parent=67 // pred_check_branch
        %7527 = sbr.rel (%p7525) target = $region84
      $region83: #{_satnerf_terms_pallas.1} parent=67 // pred_region
        %s7528 = smul.u32 128, %s27
        %p7529 = scmp.lt.s32.totalorder %s7528, 255
        %s7530 = scalar_select %p7529, %s7528, 255
        %s7531 = smul.addr %s7530, 8
        %s7532 = scalar_lea.vmem %s9, %s7531
      $region84: #{_satnerf_terms_pallas.1} parent=67 // pred_fallthru
        _
    $region68: #{_satnerf_terms_pallas.1} parent=5 // pred_fallthru
      _
  $region6: #{_satnerf_terms_pallas.1} parent=0 // loop_footer
    %s20 = sadd.s32 1, %s16
  $region7: #{_satnerf_terms_pallas.1} parent=0 // loop_footer_branch
    %15 = sbr.rel target = $region3
  $region8: #{_satnerf_terms_pallas.1} parent=0 // loop_exit
    _

</llo_original>
